<compile_context>
chip_gen: v7x
topology: tpu7x:2x2x1
jax: 0.10.0
libtpu: 0.0.40
codegen_flags: <defaults>
</compile_context>

<pallas_src>
import functools

import jax
import jax.numpy as jnp
from jax import lax
from jax.experimental import pallas as pl
from jax.experimental.pallas import tpu as pltpu

EPS = 1e-5
LANES = 128


def _round_up(x, m):
    return ((x + m - 1) // m) * m


def _vmem_limit_bytes():
    # v5e/v6e: 128 MiB physical -> 96 MiB scoped; v7x: 64 MiB -> 48 MiB.
    try:
        info = pltpu.get_tpu_info()
        cap = int(getattr(info, "vmem_capacity_bytes", 0)) or (128 << 20)
    except Exception:
        cap = 128 << 20
    return int(min(96 << 20, (cap * 3) // 4))


def _pick_row_tile(p):
    # Large fixed row tile (512-1024 rows measures ~85% of HBM roofline);
    # the ragged tail is masked in-kernel, no "must divide P" requirement.
    return min(1024, _round_up(p, 8))


def _pick_h_tile(h, w, cp, esz, budget):
    # Largest divisor of H whose double-buffered K2 working set fits `budget`.
    for th in range(h, 0, -1):
        if h % th:
            continue
        if (th * w) % 8 and th != h:
            continue
        need = (2 * th * w * cp * esz          # y row block (double buffered)
                + 2 * th * w * cp * esz        # conv2 out block (double buffered)
                + (th + 2) * (w + 2) * cp * esz    # zero-padded scratch
                + th * w * cp * 4              # f32 accumulator scratch
                + 2 * 9 * cp * cp * esz        # packed conv2 weights (x2 buffers)
                + 4 * w * cp * esz)            # halo row blocks
        if need <= budget:
            return th
    return 1


# ---------------------------------------------------------------------------
# Kernel 1: 1x1 conv + bias + ReLU + per-tile partial BN1 stats
# ---------------------------------------------------------------------------
def _conv1x1_relu_stats_kernel(x_ref, w1_ref, b1_ref, y_ref, st_ref, *,
                               row_tile, total_rows, need_mask):
    # cast x to the MXU dtype in-kernel: only one (f32) copy of x lives in HBM
    y = jnp.dot(x_ref[...].astype(w1_ref.dtype), w1_ref[...],
                preferred_element_type=jnp.float32)
    y = jnp.maximum(y + b1_ref[...], 0.0)
    if need_mask:  # ragged last tile: zero rows past P so stats stay exact
        row0 = pl.program_id(0) * row_tile
        rows = row0 + lax.broadcasted_iota(jnp.int32, (row_tile, 1), 0)
        y = jnp.where(rows < total_rows, y, 0.0)
    y_ref[...] = y.astype(y_ref.dtype)          # storage may be bf16
    # BN1 partial statistics from the f32 values (before any narrow cast)
    st_ref[0, 0:1, :] = jnp.sum(y, axis=0, keepdims=True)
    st_ref[0, 1:2, :] = jnp.sum(y * y, axis=0, keepdims=True)


# ---------------------------------------------------------------------------
# Kernel 2: BN1-apply + zero-padded tile build + 3x3 conv as 9 accumulating
#           matmuls + per-tile partial BN2 stats
# ---------------------------------------------------------------------------
def _conv3x3_stats_kernel(y_ref, ytop_ref, ybot_ref, st1_ref, g1_ref, be1_ref,
                          w2_ref, out_ref, st2_ref, zp_ref, acc_ref, *, inv_p):
    h = pl.program_id(1)
    nh = pl.num_programs(1)
    th = zp_ref.shape[0] - 2
    W = zp_ref.shape[1] - 2
    Cp = zp_ref.shape[2]
    zdt = zp_ref.dtype

    # finalize BN1 from the global sums (tiny (1, Cp) math)
    mean1 = st1_ref[0:1, :] * inv_p
    var1 = st1_ref[1:2, :] * inv_p - mean1 * mean1
    scale1 = (g1_ref[...] * lax.rsqrt(var1 + EPS)).reshape(1, 1, Cp)
    shift1 = be1_ref[...].reshape(1, 1, Cp) - mean1.reshape(1, 1, Cp) * scale1

    # left/right zero border columns; rewritten every step (tiny) so the kernel
    # carries no cross-step scratch state and both grid axes stay "parallel".
    zp_ref[:, 0:1, :] = jnp.zeros((th + 2, 1, Cp), zdt)
    zp_ref[:, W + 1:W + 2, :] = jnp.zeros((th + 2, 1, Cp), zdt)

    # interior rows: BN1-apply in f32, single cast into the (possibly bf16) scratch
    zp_ref[1:th + 1, 1:W + 1, :] = (
        y_ref[0].astype(jnp.float32) * scale1 + shift1).astype(zdt)

    # top halo row (real data when it exists, zeros at the image top)
    @pl.when(h > 0)
    def _():
        zp_ref[0:1, 1:W + 1, :] = (
            ytop_ref[0].astype(jnp.float32) * scale1 + shift1).astype(zdt)

    @pl.when(h == 0)
    def _():
        zp_ref[0:1, :, :] = jnp.zeros((1, W + 2, Cp), zdt)

    # bottom halo row
    @pl.when(h < nh - 1)
    def _():
        zp_ref[th + 1:th + 2, 1:W + 1, :] = (
            ybot_ref[0].astype(jnp.float32) * scale1 + shift1).astype(zdt)

    @pl.when(h == nh - 1)
    def _():
        zp_ref[th + 1:th + 2, :, :] = jnp.zeros((1, W + 2, Cp), zdt)

    # 3x3 conv = nine accumulating (th*W, Cp) @ (Cp, Cp) MXU matmuls into a
    # lane-dense f32 VMEM accumulator (no 9*Cp-wide taps temporary).
    for k in range(9):
        dh, dw = divmod(k, 3)
        tap = zp_ref[dh:dh + th, dw:dw + W, :].reshape(th * W, Cp)
        contrib = jnp.dot(tap, w2_ref[k], preferred_element_type=jnp.float32)
        if k == 0:
            acc_ref[...] = contrib
        else:
            acc_ref[...] += contrib
    conv = acc_ref[...]
    # conv2 bias omitted on purpose: exactly cancelled by the following BatchNorm.
    out_ref[0] = conv.astype(out_ref.dtype)
    # per-tile partial BN2 stats from the f32 accumulator (before any narrow cast)
    st2_ref[0, 0:1, :] = jnp.sum(conv, axis=0, keepdims=True)
    st2_ref[0, 1:2, :] = jnp.sum(conv * conv, axis=0, keepdims=True)


# ---------------------------------------------------------------------------
# Kernel 3: BN2-apply + residual add + swish
# ---------------------------------------------------------------------------
def _bn_res_swish_kernel(c_ref, x_ref, st2_ref, g2_ref, be2_ref, o_ref, *, inv_p):
    mean2 = st2_ref[0:1, :] * inv_p
    var2 = st2_ref[1:2, :] * inv_p - mean2 * mean2
    scale2 = g2_ref[...] * lax.rsqrt(var2 + EPS)
    shift2 = be2_ref[...] - mean2 * scale2
    v = x_ref[...] + c_ref[...].astype(jnp.float32) * scale2 + shift2
    # swish: v * sigmoid(v); approx reciprocal runs on the EUP slot (~free)
    o_ref[...] = v * pl.reciprocal(1.0 + jnp.exp(-v), approx=True)


# ---------------------------------------------------------------------------
# Wrapper (NCHW in / NCHW out)
# ---------------------------------------------------------------------------
def residual_block_forward(x_nchw, params, *, compute_dtype=jnp.float32,
                           row_tile=None, h_tile=None):
    # compute_dtype=jnp.bfloat16 is the recommended production setting on
    # v6e/v7x (MXU operands + cross-kernel intermediates bf16; all statistics
    # and accumulation stay f32). Default f32 keeps bit-level headroom vs. the
    # f32 reference; validate before flipping the default at production C.
    f32 = jnp.float32
    N, C, H, W = x_nchw.shape
    P = N * H * W
    Cp = _round_up(C, LANES)        # lane-dense channel dim end-to-end
    inv_p = 1.0 / float(P)
    esz = jnp.dtype(compute_dtype).itemsize
    vmem_limit = _vmem_limit_bytes()

    # TODO(synk): fold the NCHW->NHWC relayout (and the inverse on the output)
    # into K1/K3 with an in-kernel XLU transpose over (N, C-tile, H) blocks;
    # BlockSpecs cannot express the layout swap, so it stays a wrapper op here.
    x2d = jnp.transpose(x_nchw, (0, 2, 3, 1)).reshape(P, C).astype(f32)
    x2d = jnp.pad(x2d, ((0, 0), (0, Cp - C)))

    w1p = jnp.zeros((Cp, Cp), f32).at[:C, :C].set(
        params["w1"].astype(f32)).astype(compute_dtype)
    b1p = jnp.zeros((1, Cp), f32).at[:, :C].set(params["b1"].astype(f32))
    g1p = jnp.zeros((1, Cp), f32).at[:, :C].set(params["g1"].astype(f32))
    be1p = jnp.zeros((1, Cp), f32).at[:, :C].set(params["beta1"].astype(f32))
    g2p = jnp.zeros((1, Cp), f32).at[:, :C].set(params["g2"].astype(f32))
    be2p = jnp.zeros((1, Cp), f32).at[:, :C].set(params["beta2"].astype(f32))
    w2p = jnp.zeros((9, Cp, Cp), f32).at[:, :C, :C].set(
        params["w2"].astype(f32)).astype(compute_dtype)
    # params["b2"] intentionally unused (cancelled by BatchNorm2d).

    tp = row_tile if row_tile is not None else _pick_row_tile(P)
    n_row_tiles = -(-P // tp)
    need_mask = (P % tp) != 0

    th = h_tile if h_tile is not None else _pick_h_tile(H, W, Cp, esz,
                                                        vmem_limit // 2)
    assert H % th == 0, (H, th)
    nH = H // th

    cparams1 = pltpu.CompilerParams(dimension_semantics=("parallel",),
                                    vmem_limit_bytes=vmem_limit)
    cparams2 = pltpu.CompilerParams(dimension_semantics=("parallel", "parallel"),
                                    vmem_limit_bytes=vmem_limit)

    # ---- K1: 1x1 conv + ReLU + partial BN1 stats --------------------------------
    # NOTE: broadcast operands (w1p, b1p) could use pipeline_mode=pl.Buffered(1)
    # to skip double-buffering constants; left default for portability.
    y2d, stats1_part = pl.pallas_call(
        functools.partial(_conv1x1_relu_stats_kernel, row_tile=tp,
                          total_rows=P, need_mask=need_mask),
        grid=(n_row_tiles,),
        in_specs=[
            pl.BlockSpec((tp, Cp), lambda i: (i, 0)),
            pl.BlockSpec((Cp, Cp), lambda i: (0, 0)),
            pl.BlockSpec((1, Cp), lambda i: (0, 0)),
        ],
        out_specs=(
            pl.BlockSpec((tp, Cp), lambda i: (i, 0)),
            pl.BlockSpec((1, 2, Cp), lambda i: (i, 0, 0)),
        ),
        out_shape=(
            jax.ShapeDtypeStruct((P, Cp), compute_dtype),
            jax.ShapeDtypeStruct((n_row_tiles, 2, Cp), f32),
        ),
        compiler_params=cparams1,
    )(x2d, w1p, b1p)

    stats1 = jnp.sum(stats1_part, axis=0)                  # (2, Cp) tiny reduce
    y4d = y2d.reshape(N, H, W, Cp)

    # ---- K2: BN1-apply + 3x3 conv (9 accumulating matmuls) + partial BN2 stats --
    conv2, stats2_part = pl.pallas_call(
        functools.partial(_conv3x3_stats_kernel, inv_p=inv_p),
        grid=(N, nH),
        in_specs=[
            pl.BlockSpec((1, th, W, Cp), lambda n, h: (n, h, 0, 0)),
            # 1-row halos above/below the tile; block size 1 along H means the
            # block index *is* the row index (clamped; the clamped row is only
            # consumed when it exists, otherwise the halo row is zeroed in-kernel).
            pl.BlockSpec((1, 1, W, Cp),
                         lambda n, h: (n, jnp.maximum(h * th - 1, 0), 0, 0)),
            pl.BlockSpec((1, 1, W, Cp),
                         lambda n, h: (n, jnp.minimum(h * th + th, H - 1), 0, 0)),
            pl.BlockSpec((2, Cp), lambda n, h: (0, 0)),
            pl.BlockSpec((1, Cp), lambda n, h: (0, 0)),
            pl.BlockSpec((1, Cp), lambda n, h: (0, 0)),
            pl.BlockSpec((9, Cp, Cp), lambda n, h: (0, 0, 0)),
        ],
        out_specs=(
            pl.BlockSpec((1, th * W, Cp), lambda n, h: (n, h, 0)),
            pl.BlockSpec((1, 2, Cp), lambda n, h: (n * nH + h, 0, 0)),
        ),
        out_shape=(
            jax.ShapeDtypeStruct((N, H * W, Cp), compute_dtype),
            jax.ShapeDtypeStruct((N * nH, 2, Cp), f32),
        ),
        scratch_shapes=[
            pltpu.VMEM((th + 2, W + 2, Cp), compute_dtype),  # zero-padded tile
            pltpu.VMEM((th * W, Cp), jnp.float32),           # f32 conv accumulator
        ],
        compiler_params=cparams2,
    )(y4d, y4d, y4d, stats1, g1p, be1p, w2p)

    stats2 = jnp.sum(stats2_part, axis=0)                   # (2, Cp)
    c2d = conv2.reshape(P, Cp)

    # ---- K3: BN2-apply + residual + swish ---------------------------------------
    out2d = pl.pallas_call(
        functools.partial(_bn_res_swish_kernel, inv_p=inv_p),
        grid=(n_row_tiles,),
        in_specs=[
            pl.BlockSpec((tp, Cp), lambda i: (i, 0)),
            pl.BlockSpec((tp, Cp), lambda i: (i, 0)),
            pl.BlockSpec((2, Cp), lambda i: (0, 0)),
            pl.BlockSpec((1, Cp), lambda i: (0, 0)),
            pl.BlockSpec((1, Cp), lambda i: (0, 0)),
        ],
        out_specs=pl.BlockSpec((tp, Cp), lambda i: (i, 0)),
        out_shape=jax.ShapeDtypeStruct((P, Cp), f32),
        compiler_params=cparams1,
    )(c2d, x2d, stats2, g2p, be2p)

    out = out2d[:, :C].reshape(N, H, W, C)
    return jnp.transpose(out, (0, 3, 1, 2))


# ---------------------------------------------------------------------------
# Pure-JAX reference (same math, no Pallas) for a sanity check
# ---------------------------------------------------------------------------
def residual_block_reference(x_nchw, params):
    x = jnp.transpose(x_nchw, (0, 2, 3, 1)).astype(jnp.float32)  # NHWC
    N, H, W, C = x.shape
    y = jnp.einsum("nhwc,co->nhwo", x, params["w1"]) + params["b1"][0]
    y = jnp.maximum(y, 0.0)
    mean = y.mean(axis=(0, 1, 2))
    var = ((y - mean) ** 2).mean(axis=(0, 1, 2))
    z = (y - mean) / jnp.sqrt(var + EPS) * params["g1"][0] + params["beta1"][0]
    zp = jnp.pad(z, ((0, 0), (1, 1), (1, 1), (0, 0)))
    y2 = jnp.zeros_like(z) + params["b2"][0]     # b2 kept here; BN cancels it
    for dh in range(3):
        for dw in range(3):
            y2 = y2 + jnp.einsum("nhwc,co->nhwo",
                                 zp[:, dh:dh + H, dw:dw + W, :],
                                 params["w2"][dh * 3 + dw])
    mean2 = y2.mean(axis=(0, 1, 2))
    var2 = ((y2 - mean2) ** 2).mean(axis=(0, 1, 2))
    z2 = (y2 - mean2) / jnp.sqrt(var2 + EPS) * params["g2"][0] + params["beta2"][0]
    out = x + z2
    out = out * jax.nn.sigmoid(out)
    return jnp.transpose(out, (0, 3, 1, 2))


if __name__ == "__main__":
    # in_c must equal out_c for the residual add `x + residual(x)` to be valid.
    N, C, H, W = 2, 8, 16, 16
    key = jax.random.PRNGKey(0)
    kx, k1, kb1, kg1, kbe1, k2, kb2, kg2, kbe2 = jax.random.split(key, 9)

    x = jax.random.normal(kx, (N, C, H, W), jnp.float32)

    # w1[ci, co]        <-> torch Conv2d(in_c, out_c, 1).weight[co, ci, 0, 0]
    # w2[3*dh+dw,ci,co] <-> torch Conv2d(out_c, out_c, 3, padding=1).weight[co, ci, dh, dw]
    params = {
        "w1":    0.2 * jax.random.normal(k1,  (C, C), jnp.float32),
        "b1":    0.1 * jax.random.normal(kb1, (1, C), jnp.float32),
        "g1":    1.0 + 0.1 * jax.random.normal(kg1, (1, C), jnp.float32),
        "beta1": 0.1 * jax.random.normal(kbe1, (1, C), jnp.float32),
        "w2":    0.1 * jax.random.normal(k2,  (9, C, C), jnp.float32),
        "b2":    0.1 * jax.random.normal(kb2, (1, C), jnp.float32),
        "g2":    1.0 + 0.1 * jax.random.normal(kg2, (1, C), jnp.float32),
        "beta2": 0.1 * jax.random.normal(kbe2, (1, C), jnp.float32),
    }

    ref = residual_block_reference(x, params)

    # 1) default path: f32 operands/intermediates, auto tiling (nH=1)
    fwd32 = jax.jit(residual_block_forward)
    out32 = jax.block_until_ready(fwd32(x, params))
    assert out32.shape == x.shape, (out32.shape, x.shape)
    err32 = float(jnp.max(jnp.abs(out32 - ref)))
    assert jnp.allclose(out32, ref, atol=2e-2, rtol=2e-2), f"f32 max abs err {err32}"

    # 2) f32 path exercising the H-halo tiling (nH=2) and the ragged row-tile mask
    fwd_tiled = jax.jit(functools.partial(residual_block_forward,
                                          row_tile=384, h_tile=8))
    out_t = jax.block_until_ready(fwd_tiled(x, params))
    err_t = float(jnp.max(jnp.abs(out_t - ref)))
    assert jnp.allclose(out_t, ref, atol=2e-2, rtol=2e-2), f"tiled max abs err {err_t}"

    # 3) production-style path: bf16 MXU operands + bf16 intermediates
    #    (statistics / accumulation stay f32) — looser accuracy check.
    fwd16 = jax.jit(functools.partial(residual_block_forward,
                                      compute_dtype=jnp.bfloat16))
    out16 = jax.block_until_ready(fwd16(x, params))
    err16 = float(jnp.max(jnp.abs(out16 - ref)))
    assert jnp.allclose(out16, ref, atol=1.5e-1, rtol=1e-1), f"bf16 max abs err {err16}"

    print("KERNEL_OK")
</pallas_src>

<mosaic_0001>
module attributes {stable_mosaic.version = 11 : i64} {
  func.func @_conv3x3_stats_kernel(%arg0: i32, %arg1: i32, %arg2: memref<1x16x16x128xf32, #tpu.memory_space<vmem>>, %arg3: memref<1x1x16x128xf32, #tpu.memory_space<vmem>>, %arg4: memref<1x1x16x128xf32, #tpu.memory_space<vmem>>, %arg5: memref<2x128xf32, #tpu.memory_space<vmem>>, %arg6: memref<1x128xf32, #tpu.memory_space<vmem>>, %arg7: memref<1x128xf32, #tpu.memory_space<vmem>>, %arg8: memref<9x128x128xf32, #tpu.memory_space<vmem>>, %arg9: memref<1x256x128xf32, #tpu.memory_space<vmem>>, %arg10: memref<1x2x128xf32, #tpu.memory_space<vmem>>, %arg11: memref<18x18x128xf32, #tpu.memory_space<vmem>>, %arg12: memref<256x128xf32, #tpu.memory_space<vmem>>) attributes {dimension_semantics = [#tpu.dimension_semantics<parallel>, #tpu.dimension_semantics<parallel>], iteration_bounds = array<i64: 2, 1>, scalar_prefetch = 0 : i64, scratch_operands = 2 : i64, tpu.core_type = #tpu.core_type<tc>, window_params = [{transform_indices = @transform_0, window_bounds = array<i64: 1, 16, 16, 128>}, {transform_indices = @transform_1, window_bounds = array<i64: 1, 1, 16, 128>}, {transform_indices = @transform_2, window_bounds = array<i64: 1, 1, 16, 128>}, {pipeline_mode = #tpu.pipeline_mode<synchronous>, transform_indices = @transform_3, window_bounds = array<i64: 2, 128>}, {pipeline_mode = #tpu.pipeline_mode<synchronous>, transform_indices = @transform_4, window_bounds = array<i64: 1, 128>}, {pipeline_mode = #tpu.pipeline_mode<synchronous>, transform_indices = @transform_5, window_bounds = array<i64: 1, 128>}, {pipeline_mode = #tpu.pipeline_mode<synchronous>, transform_indices = @transform_6, window_bounds = array<i64: 9, 128, 128>}, {transform_indices = @transform_7, window_bounds = array<i64: 1, 256, 128>}, {transform_indices = @transform_8, window_bounds = array<i64: 1, 2, 128>}]} {
    %c0 = arith.constant 0 : index
    %c0_0 = arith.constant 0 : index
    %0 = vector.load %arg5[%c0, %c0_0] : memref<2x128xf32, #tpu.memory_space<vmem>>, vector<1x128xf32>
    %cst = arith.constant 0.001953125 : f32
    %1 = vector.broadcast %cst : f32 to vector<1x128xf32>
    %2 = arith.mulf %0, %1 : vector<1x128xf32>
    %c1 = arith.constant 1 : index
    %c0_1 = arith.constant 0 : index
    %3 = vector.load %arg5[%c1, %c0_1] : memref<2x128xf32, #tpu.memory_space<vmem>>, vector<1x128xf32>
    %cst_2 = arith.constant 0.001953125 : f32
    %4 = vector.broadcast %cst_2 : f32 to vector<1x128xf32>
    %5 = arith.mulf %3, %4 : vector<1x128xf32>
    %6 = arith.mulf %2, %2 : vector<1x128xf32>
    %7 = arith.subf %5, %6 : vector<1x128xf32>
    %c0_3 = arith.constant 0 : index
    %c0_4 = arith.constant 0 : index
    %8 = vector.load %arg6[%c0_3, %c0_4] : memref<1x128xf32, #tpu.memory_space<vmem>>, vector<1x128xf32>
    %cst_5 = arith.constant 9.99999974E-6 : f32
    %9 = vector.broadcast %cst_5 : f32 to vector<1x128xf32>
    %10 = arith.addf %7, %9 : vector<1x128xf32>
    %11 = math.rsqrt %10 : vector<1x128xf32>
    %12 = arith.mulf %8, %11 : vector<1x128xf32>
    %13 = vector.shape_cast %12 : vector<1x128xf32> to vector<1x1x128xf32>
    %c0_6 = arith.constant 0 : index
    %c0_7 = arith.constant 0 : index
    %14 = vector.load %arg7[%c0_6, %c0_7] : memref<1x128xf32, #tpu.memory_space<vmem>>, vector<1x128xf32>
    %15 = vector.shape_cast %14 : vector<1x128xf32> to vector<1x1x128xf32>
    %16 = vector.shape_cast %2 : vector<1x128xf32> to vector<1x1x128xf32>
    %17 = arith.mulf %16, %13 : vector<1x1x128xf32>
    %18 = arith.subf %15, %17 : vector<1x1x128xf32>
    %cst_8 = arith.constant 0.000000e+00 : f32
    %19 = vector.broadcast %cst_8 : f32 to vector<18x1x128xf32>
    %c0_9 = arith.constant 0 : index
    %c0_10 = arith.constant 0 : index
    %c0_11 = arith.constant 0 : index
    %20 = vector.load %arg11[%c0_9, %c0_10, %c0_11] : memref<18x18x128xf32, #tpu.memory_space<vmem>>, vector<18x1x128xf32>
    tpu.vector_store %arg11[%c0_9, %c0_10, %c0_11], %19 {strides = array<i32>} : memref<18x18x128xf32, #tpu.memory_space<vmem>>, vector<18x1x128xf32>,
    %cst_12 = arith.constant 0.000000e+00 : f32
    %21 = vector.broadcast %cst_12 : f32 to vector<18x1x128xf32>
    %c0_13 = arith.constant 0 : index
    %c17 = arith.constant 17 : index
    %c0_14 = arith.constant 0 : index
    %22 = vector.load %arg11[%c0_13, %c17, %c0_14] : memref<18x18x128xf32, #tpu.memory_space<vmem>>, vector<18x1x128xf32>
    tpu.vector_store %arg11[%c0_13, %c17, %c0_14], %21 {strides = array<i32>} : memref<18x18x128xf32, #tpu.memory_space<vmem>>, vector<18x1x128xf32>,
    %c0_15 = arith.constant 0 : index
    %c0_16 = arith.constant 0 : index
    %c0_17 = arith.constant 0 : index
    %c0_18 = arith.constant 0 : index
    %23 = vector.load %arg2[%c0_15, %c0_16, %c0_17, %c0_18] : memref<1x16x16x128xf32, #tpu.memory_space<vmem>>, vector<1x16x16x128xf32>
    %24 = vector.shape_cast %23 : vector<1x16x16x128xf32> to vector<16x16x128xf32>
    %25 = vector.broadcast %13 : vector<1x1x128xf32> to vector<16x16x128xf32>
    %26 = arith.mulf %24, %25 : vector<16x16x128xf32>
    %27 = vector.broadcast %18 : vector<1x1x128xf32> to vector<16x16x128xf32>
    %28 = arith.addf %26, %27 : vector<16x16x128xf32>
    %c1_19 = arith.constant 1 : index
    %c1_20 = arith.constant 1 : index
    %c0_21 = arith.constant 0 : index
    %29 = vector.load %arg11[%c1_19, %c1_20, %c0_21] : memref<18x18x128xf32, #tpu.memory_space<vmem>>, vector<16x16x128xf32>
    tpu.vector_store %arg11[%c1_19, %c1_20, %c0_21], %28 {strides = array<i32>} : memref<18x18x128xf32, #tpu.memory_space<vmem>>, vector<16x16x128xf32>,
    %c0_i32 = arith.constant 0 : i32
    %30 = arith.cmpi sgt, %arg1, %c0_i32 : i32
    %31 = arith.extui %30 : i1 to i32
    %c0_i32_22 = arith.constant 0 : i32
    %32 = arith.cmpi ne, %31, %c0_i32_22 : i32
    scf.if %32 {
      %c0_132 = arith.constant 0 : index
      %c0_133 = arith.constant 0 : index
      %c0_134 = arith.constant 0 : index
      %c0_135 = arith.constant 0 : index
      %127 = vector.load %arg3[%c0_132, %c0_133, %c0_134, %c0_135] : memref<1x1x16x128xf32, #tpu.memory_space<vmem>>, vector<1x1x16x128xf32>
      %128 = vector.shape_cast %127 : vector<1x1x16x128xf32> to vector<1x16x128xf32>
      %129 = vector.broadcast %13 : vector<1x1x128xf32> to vector<1x16x128xf32>
      %130 = arith.mulf %128, %129 : vector<1x16x128xf32>
      %131 = vector.broadcast %18 : vector<1x1x128xf32> to vector<1x16x128xf32>
      %132 = arith.addf %130, %131 : vector<1x16x128xf32>
      %c0_136 = arith.constant 0 : index
      %c1_137 = arith.constant 1 : index
      %c0_138 = arith.constant 0 : index
      %133 = vector.load %arg11[%c0_136, %c1_137, %c0_138] : memref<18x18x128xf32, #tpu.memory_space<vmem>>, vector<1x16x128xf32>
      tpu.vector_store %arg11[%c0_136, %c1_137, %c0_138], %132 {strides = array<i32>} : memref<18x18x128xf32, #tpu.memory_space<vmem>>, vector<1x16x128xf32>,
    } else {
    }
    %c0_i32_23 = arith.constant 0 : i32
    %33 = arith.cmpi eq, %arg1, %c0_i32_23 : i32
    %34 = arith.extui %33 : i1 to i32
    %c0_i32_24 = arith.constant 0 : i32
    %35 = arith.cmpi ne, %34, %c0_i32_24 : i32
    scf.if %35 {
      %cst_132 = arith.constant 0.000000e+00 : f32
      %127 = vector.broadcast %cst_132 : f32 to vector<1x18x128xf32>
      %c0_133 = arith.constant 0 : index
      %c0_134 = arith.constant 0 : index
      %c0_135 = arith.constant 0 : index
      %128 = vector.load %arg11[%c0_133, %c0_134, %c0_135] : memref<18x18x128xf32, #tpu.memory_space<vmem>>, vector<1x18x128xf32>
      tpu.vector_store %arg11[%c0_133, %c0_134, %c0_135], %127 {strides = array<i32>} : memref<18x18x128xf32, #tpu.memory_space<vmem>>, vector<1x18x128xf32>,
    } else {
    }
    %c0_i32_25 = arith.constant 0 : i32
    %36 = arith.cmpi slt, %arg1, %c0_i32_25 : i32
    %37 = arith.extui %36 : i1 to i32
    %c0_i32_26 = arith.constant 0 : i32
    %38 = arith.cmpi ne, %37, %c0_i32_26 : i32
    scf.if %38 {
      %c0_132 = arith.constant 0 : index
      %c0_133 = arith.constant 0 : index
      %c0_134 = arith.constant 0 : index
      %c0_135 = arith.constant 0 : index
      %127 = vector.load %arg4[%c0_132, %c0_133, %c0_134, %c0_135] : memref<1x1x16x128xf32, #tpu.memory_space<vmem>>, vector<1x1x16x128xf32>
      %128 = vector.shape_cast %127 : vector<1x1x16x128xf32> to vector<1x16x128xf32>
      %129 = vector.broadcast %13 : vector<1x1x128xf32> to vector<1x16x128xf32>
      %130 = arith.mulf %128, %129 : vector<1x16x128xf32>
      %131 = vector.broadcast %18 : vector<1x1x128xf32> to vector<1x16x128xf32>
      %132 = arith.addf %130, %131 : vector<1x16x128xf32>
      %c17_136 = arith.constant 17 : index
      %c1_137 = arith.constant 1 : index
      %c0_138 = arith.constant 0 : index
      %133 = vector.load %arg11[%c17_136, %c1_137, %c0_138] : memref<18x18x128xf32, #tpu.memory_space<vmem>>, vector<1x16x128xf32>
      tpu.vector_store %arg11[%c17_136, %c1_137, %c0_138], %132 {strides = array<i32>} : memref<18x18x128xf32, #tpu.memory_space<vmem>>, vector<1x16x128xf32>,
    } else {
    }
    %c0_i32_27 = arith.constant 0 : i32
    %39 = arith.cmpi eq, %arg1, %c0_i32_27 : i32
    %40 = arith.extui %39 : i1 to i32
    %c0_i32_28 = arith.constant 0 : i32
    %41 = arith.cmpi ne, %40, %c0_i32_28 : i32
    scf.if %41 {
      %cst_132 = arith.constant 0.000000e+00 : f32
      %127 = vector.broadcast %cst_132 : f32 to vector<1x18x128xf32>
      %c17_133 = arith.constant 17 : index
      %c0_134 = arith.constant 0 : index
      %c0_135 = arith.constant 0 : index
      %128 = vector.load %arg11[%c17_133, %c0_134, %c0_135] : memref<18x18x128xf32, #tpu.memory_space<vmem>>, vector<1x18x128xf32>
      tpu.vector_store %arg11[%c17_133, %c0_134, %c0_135], %127 {strides = array<i32>} : memref<18x18x128xf32, #tpu.memory_space<vmem>>, vector<1x18x128xf32>,
    } else {
    }
    %c0_29 = arith.constant 0 : index
    %c0_30 = arith.constant 0 : index
    %c0_31 = arith.constant 0 : index
    %42 = vector.load %arg11[%c0_29, %c0_30, %c0_31] : memref<18x18x128xf32, #tpu.memory_space<vmem>>, vector<16x16x128xf32>
    %43 = vector.shape_cast %42 : vector<16x16x128xf32> to vector<256x128xf32>
    %c0_32 = arith.constant 0 : index
    %c0_33 = arith.constant 0 : index
    %c0_34 = arith.constant 0 : index
    %44 = vector.load %arg8[%c0_32, %c0_33, %c0_34] : memref<9x128x128xf32, #tpu.memory_space<vmem>>, vector<1x128x128xf32>
    %45 = vector.shape_cast %44 : vector<1x128x128xf32> to vector<128x128xf32>
    %cst_35 = arith.constant dense<0.000000e+00> : vector<256x128xf32>
    %46 = tpu.matmul %43, %45, %cst_35 {dimension_numbers = #tpu.dot_dimension_numbers<[1], [0], [0], [1], [0, 0, 1, 1], [], []>} : vector<256x128xf32>, vector<128x128xf32>, vector<256x128xf32> -> vector<256x128xf32>
    %c0_36 = arith.constant 0 : index
    %c0_37 = arith.constant 0 : index
    %47 = vector.load %arg12[%c0_36, %c0_37] : memref<256x128xf32, #tpu.memory_space<vmem>>, vector<256x128xf32>
    tpu.vector_store %arg12[%c0_36, %c0_37], %46 {strides = array<i32>} : memref<256x128xf32, #tpu.memory_space<vmem>>, vector<256x128xf32>,
    %c0_38 = arith.constant 0 : index
    %c1_39 = arith.constant 1 : index
    %c0_40 = arith.constant 0 : index
    %48 = vector.load %arg11[%c0_38, %c1_39, %c0_40] : memref<18x18x128xf32, #tpu.memory_space<vmem>>, vector<16x16x128xf32>
    %49 = vector.shape_cast %48 : vector<16x16x128xf32> to vector<256x128xf32>
    %c1_41 = arith.constant 1 : index
    %c0_42 = arith.constant 0 : index
    %c0_43 = arith.constant 0 : index
    %50 = vector.load %arg8[%c1_41, %c0_42, %c0_43] : memref<9x128x128xf32, #tpu.memory_space<vmem>>, vector<1x128x128xf32>
    %51 = vector.shape_cast %50 : vector<1x128x128xf32> to vector<128x128xf32>
    %cst_44 = arith.constant dense<0.000000e+00> : vector<256x128xf32>
    %52 = tpu.matmul %49, %51, %cst_44 {dimension_numbers = #tpu.dot_dimension_numbers<[1], [0], [0], [1], [0, 0, 1, 1], [], []>} : vector<256x128xf32>, vector<128x128xf32>, vector<256x128xf32> -> vector<256x128xf32>
    %c0_45 = arith.constant 0 : index
    %c0_46 = arith.constant 0 : index
    %53 = vector.load %arg12[%c0_45, %c0_46] : memref<256x128xf32, #tpu.memory_space<vmem>>, vector<256x128xf32>
    %54 = arith.addf %53, %52 : vector<256x128xf32>
    %c0_47 = arith.constant 0 : index
    %c0_48 = arith.constant 0 : index
    %55 = vector.load %arg12[%c0_47, %c0_48] : memref<256x128xf32, #tpu.memory_space<vmem>>, vector<256x128xf32>
    tpu.vector_store %arg12[%c0_47, %c0_48], %54 {strides = array<i32>} : memref<256x128xf32, #tpu.memory_space<vmem>>, vector<256x128xf32>,
    %c0_49 = arith.constant 0 : index
    %c2 = arith.constant 2 : index
    %c0_50 = arith.constant 0 : index
    %56 = vector.load %arg11[%c0_49, %c2, %c0_50] : memref<18x18x128xf32, #tpu.memory_space<vmem>>, vector<16x16x128xf32>
    %57 = vector.shape_cast %56 : vector<16x16x128xf32> to vector<256x128xf32>
    %c2_51 = arith.constant 2 : index
    %c0_52 = arith.constant 0 : index
    %c0_53 = arith.constant 0 : index
    %58 = vector.load %arg8[%c2_51, %c0_52, %c0_53] : memref<9x128x128xf32, #tpu.memory_space<vmem>>, vector<1x128x128xf32>
    %59 = vector.shape_cast %58 : vector<1x128x128xf32> to vector<128x128xf32>
    %cst_54 = arith.constant dense<0.000000e+00> : vector<256x128xf32>
    %60 = tpu.matmul %57, %59, %cst_54 {dimension_numbers = #tpu.dot_dimension_numbers<[1], [0], [0], [1], [0, 0, 1, 1], [], []>} : vector<256x128xf32>, vector<128x128xf32>, vector<256x128xf32> -> vector<256x128xf32>
    %c0_55 = arith.constant 0 : index
    %c0_56 = arith.constant 0 : index
    %61 = vector.load %arg12[%c0_55, %c0_56] : memref<256x128xf32, #tpu.memory_space<vmem>>, vector<256x128xf32>
    %62 = arith.addf %61, %60 : vector<256x128xf32>
    %c0_57 = arith.constant 0 : index
    %c0_58 = arith.constant 0 : index
    %63 = vector.load %arg12[%c0_57, %c0_58] : memref<256x128xf32, #tpu.memory_space<vmem>>, vector<256x128xf32>
    tpu.vector_store %arg12[%c0_57, %c0_58], %62 {strides = array<i32>} : memref<256x128xf32, #tpu.memory_space<vmem>>, vector<256x128xf32>,
    %c1_59 = arith.constant 1 : index
    %c0_60 = arith.constant 0 : index
    %c0_61 = arith.constant 0 : index
    %64 = vector.load %arg11[%c1_59, %c0_60, %c0_61] : memref<18x18x128xf32, #tpu.memory_space<vmem>>, vector<16x16x128xf32>
    %65 = vector.shape_cast %64 : vector<16x16x128xf32> to vector<256x128xf32>
    %c3 = arith.constant 3 : index
    %c0_62 = arith.constant 0 : index
    %c0_63 = arith.constant 0 : index
    %66 = vector.load %arg8[%c3, %c0_62, %c0_63] : memref<9x128x128xf32, #tpu.memory_space<vmem>>, vector<1x128x128xf32>
    %67 = vector.shape_cast %66 : vector<1x128x128xf32> to vector<128x128xf32>
    %cst_64 = arith.constant dense<0.000000e+00> : vector<256x128xf32>
    %68 = tpu.matmul %65, %67, %cst_64 {dimension_numbers = #tpu.dot_dimension_numbers<[1], [0], [0], [1], [0, 0, 1, 1], [], []>} : vector<256x128xf32>, vector<128x128xf32>, vector<256x128xf32> -> vector<256x128xf32>
    %c0_65 = arith.constant 0 : index
    %c0_66 = arith.constant 0 : index
    %69 = vector.load %arg12[%c0_65, %c0_66] : memref<256x128xf32, #tpu.memory_space<vmem>>, vector<256x128xf32>
    %70 = arith.addf %69, %68 : vector<256x128xf32>
    %c0_67 = arith.constant 0 : index
    %c0_68 = arith.constant 0 : index
    %71 = vector.load %arg12[%c0_67, %c0_68] : memref<256x128xf32, #tpu.memory_space<vmem>>, vector<256x128xf32>
    tpu.vector_store %arg12[%c0_67, %c0_68], %70 {strides = array<i32>} : memref<256x128xf32, #tpu.memory_space<vmem>>, vector<256x128xf32>,
    %c1_69 = arith.constant 1 : index
    %c1_70 = arith.constant 1 : index
    %c0_71 = arith.constant 0 : index
    %72 = vector.load %arg11[%c1_69, %c1_70, %c0_71] : memref<18x18x128xf32, #tpu.memory_space<vmem>>, vector<16x16x128xf32>
    %73 = vector.shape_cast %72 : vector<16x16x128xf32> to vector<256x128xf32>
    %c4 = arith.constant 4 : index
    %c0_72 = arith.constant 0 : index
    %c0_73 = arith.constant 0 : index
    %74 = vector.load %arg8[%c4, %c0_72, %c0_73] : memref<9x128x128xf32, #tpu.memory_space<vmem>>, vector<1x128x128xf32>
    %75 = vector.shape_cast %74 : vector<1x128x128xf32> to vector<128x128xf32>
    %cst_74 = arith.constant dense<0.000000e+00> : vector<256x128xf32>
    %76 = tpu.matmul %73, %75, %cst_74 {dimension_numbers = #tpu.dot_dimension_numbers<[1], [0], [0], [1], [0, 0, 1, 1], [], []>} : vector<256x128xf32>, vector<128x128xf32>, vector<256x128xf32> -> vector<256x128xf32>
    %c0_75 = arith.constant 0 : index
    %c0_76 = arith.constant 0 : index
    %77 = vector.load %arg12[%c0_75, %c0_76] : memref<256x128xf32, #tpu.memory_space<vmem>>, vector<256x128xf32>
    %78 = arith.addf %77, %76 : vector<256x128xf32>
    %c0_77 = arith.constant 0 : index
    %c0_78 = arith.constant 0 : index
    %79 = vector.load %arg12[%c0_77, %c0_78] : memref<256x128xf32, #tpu.memory_space<vmem>>, vector<256x128xf32>
    tpu.vector_store %arg12[%c0_77, %c0_78], %78 {strides = array<i32>} : memref<256x128xf32, #tpu.memory_space<vmem>>, vector<256x128xf32>,
    %c1_79 = arith.constant 1 : index
    %c2_80 = arith.constant 2 : index
    %c0_81 = arith.constant 0 : index
    %80 = vector.load %arg11[%c1_79, %c2_80, %c0_81] : memref<18x18x128xf32, #tpu.memory_space<vmem>>, vector<16x16x128xf32>
    %81 = vector.shape_cast %80 : vector<16x16x128xf32> to vector<256x128xf32>
    %c5 = arith.constant 5 : index
    %c0_82 = arith.constant 0 : index
    %c0_83 = arith.constant 0 : index
    %82 = vector.load %arg8[%c5, %c0_82, %c0_83] : memref<9x128x128xf32, #tpu.memory_space<vmem>>, vector<1x128x128xf32>
    %83 = vector.shape_cast %82 : vector<1x128x128xf32> to vector<128x128xf32>
    %cst_84 = arith.constant dense<0.000000e+00> : vector<256x128xf32>
    %84 = tpu.matmul %81, %83, %cst_84 {dimension_numbers = #tpu.dot_dimension_numbers<[1], [0], [0], [1], [0, 0, 1, 1], [], []>} : vector<256x128xf32>, vector<128x128xf32>, vector<256x128xf32> -> vector<256x128xf32>
    %c0_85 = arith.constant 0 : index
    %c0_86 = arith.constant 0 : index
    %85 = vector.load %arg12[%c0_85, %c0_86] : memref<256x128xf32, #tpu.memory_space<vmem>>, vector<256x128xf32>
    %86 = arith.addf %85, %84 : vector<256x128xf32>
    %c0_87 = arith.constant 0 : index
    %c0_88 = arith.constant 0 : index
    %87 = vector.load %arg12[%c0_87, %c0_88] : memref<256x128xf32, #tpu.memory_space<vmem>>, vector<256x128xf32>
    tpu.vector_store %arg12[%c0_87, %c0_88], %86 {strides = array<i32>} : memref<256x128xf32, #tpu.memory_space<vmem>>, vector<256x128xf32>,
    %c2_89 = arith.constant 2 : index
    %c0_90 = arith.constant 0 : index
    %c0_91 = arith.constant 0 : index
    %88 = vector.load %arg11[%c2_89, %c0_90, %c0_91] : memref<18x18x128xf32, #tpu.memory_space<vmem>>, vector<16x16x128xf32>
    %89 = vector.shape_cast %88 : vector<16x16x128xf32> to vector<256x128xf32>
    %c6 = arith.constant 6 : index
    %c0_92 = arith.constant 0 : index
    %c0_93 = arith.constant 0 : index
    %90 = vector.load %arg8[%c6, %c0_92, %c0_93] : memref<9x128x128xf32, #tpu.memory_space<vmem>>, vector<1x128x128xf32>
    %91 = vector.shape_cast %90 : vector<1x128x128xf32> to vector<128x128xf32>
    %cst_94 = arith.constant dense<0.000000e+00> : vector<256x128xf32>
    %92 = tpu.matmul %89, %91, %cst_94 {dimension_numbers = #tpu.dot_dimension_numbers<[1], [0], [0], [1], [0, 0, 1, 1], [], []>} : vector<256x128xf32>, vector<128x128xf32>, vector<256x128xf32> -> vector<256x128xf32>
    %c0_95 = arith.constant 0 : index
    %c0_96 = arith.constant 0 : index
    %93 = vector.load %arg12[%c0_95, %c0_96] : memref<256x128xf32, #tpu.memory_space<vmem>>, vector<256x128xf32>
    %94 = arith.addf %93, %92 : vector<256x128xf32>
    %c0_97 = arith.constant 0 : index
    %c0_98 = arith.constant 0 : index
    %95 = vector.load %arg12[%c0_97, %c0_98] : memref<256x128xf32, #tpu.memory_space<vmem>>, vector<256x128xf32>
    tpu.vector_store %arg12[%c0_97, %c0_98], %94 {strides = array<i32>} : memref<256x128xf32, #tpu.memory_space<vmem>>, vector<256x128xf32>,
    %c2_99 = arith.constant 2 : index
    %c1_100 = arith.constant 1 : index
    %c0_101 = arith.constant 0 : index
    %96 = vector.load %arg11[%c2_99, %c1_100, %c0_101] : memref<18x18x128xf32, #tpu.memory_space<vmem>>, vector<16x16x128xf32>
    %97 = vector.shape_cast %96 : vector<16x16x128xf32> to vector<256x128xf32>
    %c7 = arith.constant 7 : index
    %c0_102 = arith.constant 0 : index
    %c0_103 = arith.constant 0 : index
    %98 = vector.load %arg8[%c7, %c0_102, %c0_103] : memref<9x128x128xf32, #tpu.memory_space<vmem>>, vector<1x128x128xf32>
    %99 = vector.shape_cast %98 : vector<1x128x128xf32> to vector<128x128xf32>
    %cst_104 = arith.constant dense<0.000000e+00> : vector<256x128xf32>
    %100 = tpu.matmul %97, %99, %cst_104 {dimension_numbers = #tpu.dot_dimension_numbers<[1], [0], [0], [1], [0, 0, 1, 1], [], []>} : vector<256x128xf32>, vector<128x128xf32>, vector<256x128xf32> -> vector<256x128xf32>
    %c0_105 = arith.constant 0 : index
    %c0_106 = arith.constant 0 : index
    %101 = vector.load %arg12[%c0_105, %c0_106] : memref<256x128xf32, #tpu.memory_space<vmem>>, vector<256x128xf32>
    %102 = arith.addf %101, %100 : vector<256x128xf32>
    %c0_107 = arith.constant 0 : index
    %c0_108 = arith.constant 0 : index
    %103 = vector.load %arg12[%c0_107, %c0_108] : memref<256x128xf32, #tpu.memory_space<vmem>>, vector<256x128xf32>
    tpu.vector_store %arg12[%c0_107, %c0_108], %102 {strides = array<i32>} : memref<256x128xf32, #tpu.memory_space<vmem>>, vector<256x128xf32>,
    %c2_109 = arith.constant 2 : index
    %c2_110 = arith.constant 2 : index
    %c0_111 = arith.constant 0 : index
    %104 = vector.load %arg11[%c2_109, %c2_110, %c0_111] : memref<18x18x128xf32, #tpu.memory_space<vmem>>, vector<16x16x128xf32>
    %105 = vector.shape_cast %104 : vector<16x16x128xf32> to vector<256x128xf32>
    %c8 = arith.constant 8 : index
    %c0_112 = arith.constant 0 : index
    %c0_113 = arith.constant 0 : index
    %106 = vector.load %arg8[%c8, %c0_112, %c0_113] : memref<9x128x128xf32, #tpu.memory_space<vmem>>, vector<1x128x128xf32>
    %107 = vector.shape_cast %106 : vector<1x128x128xf32> to vector<128x128xf32>
    %cst_114 = arith.constant dense<0.000000e+00> : vector<256x128xf32>
    %108 = tpu.matmul %105, %107, %cst_114 {dimension_numbers = #tpu.dot_dimension_numbers<[1], [0], [0], [1], [0, 0, 1, 1], [], []>} : vector<256x128xf32>, vector<128x128xf32>, vector<256x128xf32> -> vector<256x128xf32>
    %c0_115 = arith.constant 0 : index
    %c0_116 = arith.constant 0 : index
    %109 = vector.load %arg12[%c0_115, %c0_116] : memref<256x128xf32, #tpu.memory_space<vmem>>, vector<256x128xf32>
    %110 = arith.addf %109, %108 : vector<256x128xf32>
    %c0_117 = arith.constant 0 : index
    %c0_118 = arith.constant 0 : index
    %111 = vector.load %arg12[%c0_117, %c0_118] : memref<256x128xf32, #tpu.memory_space<vmem>>, vector<256x128xf32>
    tpu.vector_store %arg12[%c0_117, %c0_118], %110 {strides = array<i32>} : memref<256x128xf32, #tpu.memory_space<vmem>>, vector<256x128xf32>,
    %c0_119 = arith.constant 0 : index
    %c0_120 = arith.constant 0 : index
    %112 = vector.load %arg12[%c0_119, %c0_120] : memref<256x128xf32, #tpu.memory_space<vmem>>, vector<256x128xf32>
    %c0_121 = arith.constant 0 : index
    %c0_122 = arith.constant 0 : index
    %c0_123 = arith.constant 0 : index
    %113 = vector.load %arg9[%c0_121, %c0_122, %c0_123] : memref<1x256x128xf32, #tpu.memory_space<vmem>>, vector<1x256x128xf32>
    %114 = vector.shape_cast %113 : vector<1x256x128xf32> to vector<256x128xf32>
    %115 = vector.shape_cast %112 : vector<256x128xf32> to vector<1x256x128xf32>
    tpu.vector_store %arg9[%c0_121, %c0_122, %c0_123], %115 {strides = array<i32>} : memref<1x256x128xf32, #tpu.memory_space<vmem>>, vector<1x256x128xf32>,
    %cst_124 = arith.constant dense<0.000000e+00> : vector<128xf32>
    %116 = vector.multi_reduction <add>, %112, %cst_124 [0] : vector<256x128xf32> to vector<128xf32>
    %117 = vector.shape_cast %116 : vector<128xf32> to vector<1x128xf32>
    %c0_125 = arith.constant 0 : index
    %c0_126 = arith.constant 0 : index
    %c0_127 = arith.constant 0 : index
    %118 = vector.load %arg10[%c0_125, %c0_126, %c0_127] : memref<1x2x128xf32, #tpu.memory_space<vmem>>, vector<1x1x128xf32>
    %119 = vector.shape_cast %118 : vector<1x1x128xf32> to vector<1x128xf32>
    %120 = vector.shape_cast %117 : vector<1x128xf32> to vector<1x1x128xf32>
    tpu.vector_store %arg10[%c0_125, %c0_126, %c0_127], %120 {strides = array<i32>} : memref<1x2x128xf32, #tpu.memory_space<vmem>>, vector<1x1x128xf32>,
    %121 = arith.mulf %112, %112 : vector<256x128xf32>
    %cst_128 = arith.constant dense<0.000000e+00> : vector<128xf32>
    %122 = vector.multi_reduction <add>, %121, %cst_128 [0] : vector<256x128xf32> to vector<128xf32>
    %123 = vector.shape_cast %122 : vector<128xf32> to vector<1x128xf32>
    %c0_129 = arith.constant 0 : index
    %c1_130 = arith.constant 1 : index
    %c0_131 = arith.constant 0 : index
    %124 = vector.load %arg10[%c0_129, %c1_130, %c0_131] : memref<1x2x128xf32, #tpu.memory_space<vmem>>, vector<1x1x128xf32>
    %125 = vector.shape_cast %124 : vector<1x1x128xf32> to vector<1x128xf32>
    %126 = vector.shape_cast %123 : vector<1x128xf32> to vector<1x1x128xf32>
    tpu.vector_store %arg10[%c0_129, %c1_130, %c0_131], %126 {strides = array<i32>} : memref<1x2x128xf32, #tpu.memory_space<vmem>>, vector<1x1x128xf32>,
    return
  }
  func.func @transform_0(%arg0: i32, %arg1: i32) -> (i32, i32, i32, i32) {
    %c0_i32 = arith.constant 0 : i32
    %c0_i32_0 = arith.constant 0 : i32
    %c0_i32_1 = arith.constant 0 : i32
    return %arg0, %arg1, %c0_i32, %c0_i32_0 : i32, i32, i32, i32
  }
  func.func @transform_1(%arg0: i32, %arg1: i32) -> (i32, i32, i32, i32) {
    %c16_i32 = arith.constant 16 : i32
    %0 = arith.muli %arg1, %c16_i32 : i32
    %c1_i32 = arith.constant 1 : i32
    %1 = arith.subi %0, %c1_i32 : i32
    %c0_i32 = arith.constant 0 : i32
    %2 = arith.maxsi %1, %c0_i32 : i32
    %c0_i32_0 = arith.constant 0 : i32
    %c0_i32_1 = arith.constant 0 : i32
    %c0_i32_2 = arith.constant 0 : i32
    return %arg0, %2, %c0_i32_0, %c0_i32_1 : i32, i32, i32, i32
  }
  func.func @transform_2(%arg0: i32, %arg1: i32) -> (i32, i32, i32, i32) {
    %c16_i32 = arith.constant 16 : i32
    %0 = arith.muli %arg1, %c16_i32 : i32
    %c16_i32_0 = arith.constant 16 : i32
    %1 = arith.addi %0, %c16_i32_0 : i32
    %c15_i32 = arith.constant 15 : i32
    %2 = arith.minsi %1, %c15_i32 : i32
    %c0_i32 = arith.constant 0 : i32
    %c0_i32_1 = arith.constant 0 : i32
    %c0_i32_2 = arith.constant 0 : i32
    return %arg0, %2, %c0_i32, %c0_i32_1 : i32, i32, i32, i32
  }
  func.func @transform_3(%arg0: i32, %arg1: i32) -> (i32, i32) {
    %c0_i32 = arith.constant 0 : i32
    %c0_i32_0 = arith.constant 0 : i32
    %c0_i32_1 = arith.constant 0 : i32
    return %c0_i32, %c0_i32_0 : i32, i32
  }
  func.func @transform_4(%arg0: i32, %arg1: i32) -> (i32, i32) {
    %c0_i32 = arith.constant 0 : i32
    %c0_i32_0 = arith.constant 0 : i32
    %c0_i32_1 = arith.constant 0 : i32
    return %c0_i32, %c0_i32_0 : i32, i32
  }
  func.func @transform_5(%arg0: i32, %arg1: i32) -> (i32, i32) {
    %c0_i32 = arith.constant 0 : i32
    %c0_i32_0 = arith.constant 0 : i32
    %c0_i32_1 = arith.constant 0 : i32
    return %c0_i32, %c0_i32_0 : i32, i32
  }
  func.func @transform_6(%arg0: i32, %arg1: i32) -> (i32, i32, i32) {
    %c0_i32 = arith.constant 0 : i32
    %c0_i32_0 = arith.constant 0 : i32
    %c0_i32_1 = arith.constant 0 : i32
    %c0_i32_2 = arith.constant 0 : i32
    return %c0_i32, %c0_i32_0, %c0_i32_1 : i32, i32, i32
  }
  func.func @transform_7(%arg0: i32, %arg1: i32) -> (i32, i32, i32) {
    %c0_i32 = arith.constant 0 : i32
    %c0_i32_0 = arith.constant 0 : i32
    return %arg0, %arg1, %c0_i32 : i32, i32, i32
  }
  func.func @transform_8(%arg0: i32, %arg1: i32) -> (i32, i32, i32) {
    %c1_i32 = arith.constant 1 : i32
    %0 = arith.muli %arg0, %c1_i32 : i32
    %1 = arith.addi %0, %arg1 : i32
    %c0_i32 = arith.constant 0 : i32
    %c0_i32_0 = arith.constant 0 : i32
    %c0_i32_1 = arith.constant 0 : i32
    return %1, %c0_i32, %c0_i32_0 : i32, i32, i32
  }
}

module attributes {stable_mosaic.version = 11 : i64} {
  func.func @_conv1x1_relu_stats_kernel(%arg0: i32, %arg1: memref<512x128xf32, #tpu.memory_space<vmem>>, %arg2: memref<128x128xf32, #tpu.memory_space<vmem>>, %arg3: memref<1x128xf32, #tpu.memory_space<vmem>>, %arg4: memref<512x128xf32, #tpu.memory_space<vmem>>, %arg5: memref<1x2x128xf32, #tpu.memory_space<vmem>>) attributes {dimension_semantics = [#tpu.dimension_semantics<parallel>], iteration_bounds = array<i64: 1>, scalar_prefetch = 0 : i64, scratch_operands = 0 : i64, tpu.core_type = #tpu.core_type<tc>, window_params = [{transform_indices = @transform_0, window_bounds = array<i64: 512, 128>}, {pipeline_mode = #tpu.pipeline_mode<synchronous>, transform_indices = @transform_1, window_bounds = array<i64: 128, 128>}, {pipeline_mode = #tpu.pipeline_mode<synchronous>, transform_indices = @transform_2, window_bounds = array<i64: 1, 128>}, {transform_indices = @transform_3, window_bounds = array<i64: 512, 128>}, {transform_indices = @transform_4, window_bounds = array<i64: 1, 2, 128>}]} {
    %c0 = arith.constant 0 : index
    %c0_0 = arith.constant 0 : index
    %0 = vector.load %arg1[%c0, %c0_0] : memref<512x128xf32, #tpu.memory_space<vmem>>, vector<512x128xf32>
    %c0_1 = arith.constant 0 : index
    %c0_2 = arith.constant 0 : index
    %1 = vector.load %arg2[%c0_1, %c0_2] : memref<128x128xf32, #tpu.memory_space<vmem>>, vector<128x128xf32>
    %cst = arith.constant dense<0.000000e+00> : vector<512x128xf32>
    %2 = tpu.matmul %0, %1, %cst {dimension_numbers = #tpu.dot_dimension_numbers<[1], [0], [0], [1], [0, 0, 1, 1], [], []>} : vector<512x128xf32>, vector<128x128xf32>, vector<512x128xf32> -> vector<512x128xf32>
    %c0_3 = arith.constant 0 : index
    %c0_4 = arith.constant 0 : index
    %3 = vector.load %arg3[%c0_3, %c0_4] : memref<1x128xf32, #tpu.memory_space<vmem>>, vector<1x128xf32>
    %4 = vector.broadcast %3 : vector<1x128xf32> to vector<512x128xf32>
    %5 = arith.addf %2, %4 : vector<512x128xf32>
    %cst_5 = arith.constant 0.000000e+00 : f32
    %6 = vector.broadcast %cst_5 : f32 to vector<512x128xf32>
    %7 = arith.maximumf %5, %6 : vector<512x128xf32>
    %c0_6 = arith.constant 0 : index
    %c0_7 = arith.constant 0 : index
    %8 = vector.load %arg4[%c0_6, %c0_7] : memref<512x128xf32, #tpu.memory_space<vmem>>, vector<512x128xf32>
    tpu.vector_store %arg4[%c0_6, %c0_7], %7 {strides = array<i32>} : memref<512x128xf32, #tpu.memory_space<vmem>>, vector<512x128xf32>,
    %cst_8 = arith.constant dense<0.000000e+00> : vector<128xf32>
    %9 = vector.multi_reduction <add>, %7, %cst_8 [0] : vector<512x128xf32> to vector<128xf32>
    %10 = vector.shape_cast %9 : vector<128xf32> to vector<1x128xf32>
    %c0_9 = arith.constant 0 : index
    %c0_10 = arith.constant 0 : index
    %c0_11 = arith.constant 0 : index
    %11 = vector.load %arg5[%c0_9, %c0_10, %c0_11] : memref<1x2x128xf32, #tpu.memory_space<vmem>>, vector<1x1x128xf32>
    %12 = vector.shape_cast %11 : vector<1x1x128xf32> to vector<1x128xf32>
    %13 = vector.shape_cast %10 : vector<1x128xf32> to vector<1x1x128xf32>
    tpu.vector_store %arg5[%c0_9, %c0_10, %c0_11], %13 {strides = array<i32>} : memref<1x2x128xf32, #tpu.memory_space<vmem>>, vector<1x1x128xf32>,
    %14 = arith.mulf %7, %7 : vector<512x128xf32>
    %cst_12 = arith.constant dense<0.000000e+00> : vector<128xf32>
    %15 = vector.multi_reduction <add>, %14, %cst_12 [0] : vector<512x128xf32> to vector<128xf32>
    %16 = vector.shape_cast %15 : vector<128xf32> to vector<1x128xf32>
    %c0_13 = arith.constant 0 : index
    %c1 = arith.constant 1 : index
    %c0_14 = arith.constant 0 : index
    %17 = vector.load %arg5[%c0_13, %c1, %c0_14] : memref<1x2x128xf32, #tpu.memory_space<vmem>>, vector<1x1x128xf32>
    %18 = vector.shape_cast %17 : vector<1x1x128xf32> to vector<1x128xf32>
    %19 = vector.shape_cast %16 : vector<1x128xf32> to vector<1x1x128xf32>
    tpu.vector_store %arg5[%c0_13, %c1, %c0_14], %19 {strides = array<i32>} : memref<1x2x128xf32, #tpu.memory_space<vmem>>, vector<1x1x128xf32>,
    return
  }
  func.func @transform_0(%arg0: i32) -> (i32, i32) {
    %c0_i32 = arith.constant 0 : i32
    %c0_i32_0 = arith.constant 0 : i32
    return %arg0, %c0_i32 : i32, i32
  }
  func.func @transform_1(%arg0: i32) -> (i32, i32) {
    %c0_i32 = arith.constant 0 : i32
    %c0_i32_0 = arith.constant 0 : i32
    %c0_i32_1 = arith.constant 0 : i32
    return %c0_i32, %c0_i32_0 : i32, i32
  }
  func.func @transform_2(%arg0: i32) -> (i32, i32) {
    %c0_i32 = arith.constant 0 : i32
    %c0_i32_0 = arith.constant 0 : i32
    %c0_i32_1 = arith.constant 0 : i32
    return %c0_i32, %c0_i32_0 : i32, i32
  }
  func.func @transform_3(%arg0: i32) -> (i32, i32) {
    %c0_i32 = arith.constant 0 : i32
    %c0_i32_0 = arith.constant 0 : i32
    return %arg0, %c0_i32 : i32, i32
  }
  func.func @transform_4(%arg0: i32) -> (i32, i32, i32) {
    %c0_i32 = arith.constant 0 : i32
    %c0_i32_0 = arith.constant 0 : i32
    %c0_i32_1 = arith.constant 0 : i32
    return %arg0, %c0_i32, %c0_i32_0 : i32, i32, i32
  }
}

module attributes {stable_mosaic.version = 11 : i64} {
  func.func @_bn_res_swish_kernel(%arg0: i32, %arg1: memref<512x128xf32, #tpu.memory_space<vmem>>, %arg2: memref<512x128xf32, #tpu.memory_space<vmem>>, %arg3: memref<2x128xf32, #tpu.memory_space<vmem>>, %arg4: memref<1x128xf32, #tpu.memory_space<vmem>>, %arg5: memref<1x128xf32, #tpu.memory_space<vmem>>, %arg6: memref<512x128xf32, #tpu.memory_space<vmem>>) attributes {dimension_semantics = [#tpu.dimension_semantics<parallel>], iteration_bounds = array<i64: 1>, scalar_prefetch = 0 : i64, scratch_operands = 0 : i64, tpu.core_type = #tpu.core_type<tc>, window_params = [{transform_indices = @transform_0, window_bounds = array<i64: 512, 128>}, {transform_indices = @transform_1, window_bounds = array<i64: 512, 128>}, {pipeline_mode = #tpu.pipeline_mode<synchronous>, transform_indices = @transform_2, window_bounds = array<i64: 2, 128>}, {pipeline_mode = #tpu.pipeline_mode<synchronous>, transform_indices = @transform_3, window_bounds = array<i64: 1, 128>}, {pipeline_mode = #tpu.pipeline_mode<synchronous>, transform_indices = @transform_4, window_bounds = array<i64: 1, 128>}, {transform_indices = @transform_5, window_bounds = array<i64: 512, 128>}]} {
    %c0 = arith.constant 0 : index
    %c0_0 = arith.constant 0 : index
    %0 = vector.load %arg3[%c0, %c0_0] : memref<2x128xf32, #tpu.memory_space<vmem>>, vector<1x128xf32>
    %cst = arith.constant 0.001953125 : f32
    %1 = vector.broadcast %cst : f32 to vector<1x128xf32>
    %2 = arith.mulf %0, %1 : vector<1x128xf32>
    %c1 = arith.constant 1 : index
    %c0_1 = arith.constant 0 : index
    %3 = vector.load %arg3[%c1, %c0_1] : memref<2x128xf32, #tpu.memory_space<vmem>>, vector<1x128xf32>
    %cst_2 = arith.constant 0.001953125 : f32
    %4 = vector.broadcast %cst_2 : f32 to vector<1x128xf32>
    %5 = arith.mulf %3, %4 : vector<1x128xf32>
    %6 = arith.mulf %2, %2 : vector<1x128xf32>
    %7 = arith.subf %5, %6 : vector<1x128xf32>
    %c0_3 = arith.constant 0 : index
    %c0_4 = arith.constant 0 : index
    %8 = vector.load %arg4[%c0_3, %c0_4] : memref<1x128xf32, #tpu.memory_space<vmem>>, vector<1x128xf32>
    %cst_5 = arith.constant 9.99999974E-6 : f32
    %9 = vector.broadcast %cst_5 : f32 to vector<1x128xf32>
    %10 = arith.addf %7, %9 : vector<1x128xf32>
    %11 = math.rsqrt %10 : vector<1x128xf32>
    %12 = arith.mulf %8, %11 : vector<1x128xf32>
    %c0_6 = arith.constant 0 : index
    %c0_7 = arith.constant 0 : index
    %13 = vector.load %arg5[%c0_6, %c0_7] : memref<1x128xf32, #tpu.memory_space<vmem>>, vector<1x128xf32>
    %14 = arith.mulf %2, %12 : vector<1x128xf32>
    %15 = arith.subf %13, %14 : vector<1x128xf32>
    %c0_8 = arith.constant 0 : index
    %c0_9 = arith.constant 0 : index
    %16 = vector.load %arg2[%c0_8, %c0_9] : memref<512x128xf32, #tpu.memory_space<vmem>>, vector<512x128xf32>
    %c0_10 = arith.constant 0 : index
    %c0_11 = arith.constant 0 : index
    %17 = vector.load %arg1[%c0_10, %c0_11] : memref<512x128xf32, #tpu.memory_space<vmem>>, vector<512x128xf32>
    %18 = vector.broadcast %12 : vector<1x128xf32> to vector<512x128xf32>
    %19 = arith.mulf %17, %18 : vector<512x128xf32>
    %20 = arith.addf %16, %19 : vector<512x128xf32>
    %21 = vector.broadcast %15 : vector<1x128xf32> to vector<512x128xf32>
    %22 = arith.addf %20, %21 : vector<512x128xf32>
    %cst_12 = arith.constant 0.000000e+00 : f32
    %23 = vector.broadcast %cst_12 : f32 to vector<512x128xf32>
    %24 = arith.subf %23, %22 : vector<512x128xf32>
    %25 = math.exp %24 : vector<512x128xf32>
    %cst_13 = arith.constant 1.000000e+00 : f32
    %26 = vector.broadcast %cst_13 : f32 to vector<512x128xf32>
    %27 = arith.addf %26, %25 : vector<512x128xf32>
    %28 = tpu.reciprocal %27 {approx = true} : vector<512x128xf32> -> vector<512x128xf32>
    %29 = arith.mulf %22, %28 : vector<512x128xf32>
    %c0_14 = arith.constant 0 : index
    %c0_15 = arith.constant 0 : index
    %30 = vector.load %arg6[%c0_14, %c0_15] : memref<512x128xf32, #tpu.memory_space<vmem>>, vector<512x128xf32>
    tpu.vector_store %arg6[%c0_14, %c0_15], %29 {strides = array<i32>} : memref<512x128xf32, #tpu.memory_space<vmem>>, vector<512x128xf32>,
    return
  }
  func.func @transform_0(%arg0: i32) -> (i32, i32) {
    %c0_i32 = arith.constant 0 : i32
    %c0_i32_0 = arith.constant 0 : i32
    return %arg0, %c0_i32 : i32, i32
  }
  func.func @transform_1(%arg0: i32) -> (i32, i32) {
    %c0_i32 = arith.constant 0 : i32
    %c0_i32_0 = arith.constant 0 : i32
    return %arg0, %c0_i32 : i32, i32
  }
  func.func @transform_2(%arg0: i32) -> (i32, i32) {
    %c0_i32 = arith.constant 0 : i32
    %c0_i32_0 = arith.constant 0 : i32
    %c0_i32_1 = arith.constant 0 : i32
    return %c0_i32, %c0_i32_0 : i32, i32
  }
  func.func @transform_3(%arg0: i32) -> (i32, i32) {
    %c0_i32 = arith.constant 0 : i32
    %c0_i32_0 = arith.constant 0 : i32
    %c0_i32_1 = arith.constant 0 : i32
    return %c0_i32, %c0_i32_0 : i32, i32
  }
  func.func @transform_4(%arg0: i32) -> (i32, i32) {
    %c0_i32 = arith.constant 0 : i32
    %c0_i32_0 = arith.constant 0 : i32
    %c0_i32_1 = arith.constant 0 : i32
    return %c0_i32, %c0_i32_0 : i32, i32
  }
  func.func @transform_5(%arg0: i32) -> (i32, i32) {
    %c0_i32 = arith.constant 0 : i32
    %c0_i32_0 = arith.constant 0 : i32
    return %arg0, %c0_i32 : i32, i32
  }
}

</mosaic_0001>

<llo_original>
// kernel: residual_block_forward.3
$region0: #{residual_block_forward.3}
  #allocation0 [shape = 'u32[]', space=smem, size = 0x4, offset = 0x4, fixed_abs, tag = 'smem constant byte address 0x4 - core index']
  #allocation1 [shape = 'u32[144,128]{1,0:T(1,128)}', space=vmem, size = 0x12000, scoped, tag = 'internal scratch']
  %s0 = inlined_call_operand.hbm [shape: f32[512,128], index: 0, kind: input, shape index: {}]
  %s1 = inlined_call_operand.hbm [shape: f32[128,128], index: 1, kind: input, shape index: {}]
  %s2 = inlined_call_operand.hbm [shape: f32[1,128], index: 2, kind: input, shape index: {}]
  %s3 = inlined_call_operand.hbm [shape: f32[512,128], index: 3, kind: output, shape index: {0}]
  %s4 = inlined_call_operand.hbm [shape: f32[1,2,128], index: 4, kind: output, shape index: {1}]
  %5 = xla_tuple %s3, %s4
  %s6 = sld [smem:[#allocation0]]
  $region42: #{residual_block_forward.3} parent=0
    _
  %s8 = ssub.s32 1, %s6
  %s9 = scalar_select 0, %s8, %s6
  $region1: #{residual_block_forward.3} parent=0
    #allocation2 [shape = 'u8[262144]{0}', space=vmem, size = 0x40000, scoped, tag = 'input window, operand 0, single buffered']
    #allocation3 [shape = 's32[1]{0}', space=sflag, size = 0x4, scoped, tag = 'scoped memory for residual_block_forward.3']
    #allocation4 [shape = 's32[1]{0}', space=sflag, size = 0x4, scoped, tag = 'scoped memory for residual_block_forward.3']
    #allocation5 [shape = 'u8[65536]{0}', space=vmem, size = 0x10000, scoped, tag = 'input window, operand 1, single buffered']
    #allocation6 [shape = 's32[1]{0}', space=sflag, size = 0x4, scoped, tag = 'scoped memory for residual_block_forward.3']
    #allocation7 [shape = 'u8[512]{0}', space=vmem, size = 0x400, scoped, tag = 'input window, operand 2, single buffered']
    #allocation8 [shape = 'u8[262144]{0}', space=vmem, size = 0x40000, scoped, tag = 'output window, operand 0, single buffered']
    #allocation9 [shape = 'u8[1024]{0}', space=vmem, size = 0x400, scoped, tag = 'output window, operand 1, single buffered']
    #allocation10 [shape = 's32[1]{0}', space=sflag, size = 0x4, scoped, tag = 'scoped memory for residual_block_forward.3']
    %10 = vsyncpa [#allocation3], 0
    %11 = vsyncpa [#allocation6], 0
    %12 = vsyncpa [#allocation4], 0
    %13 = vsyncpa [#allocation10], 0
    // Predicated region
    $region2: #{residual_block_forward.3} parent=1 // pred_check
      _
    $region3: #{residual_block_forward.3} parent=1 // pred_check_branch
      %15 = sbr.rel (0) target = $region5
    $region4: #{residual_block_forward.3} parent=1 // pred_region
      %s17 = ssub.s32 8192, 8192
      %18 = vsyncadd [#allocation3], %s17
      %s19 = sshll.u32 [#allocation2], 4
      %s20 = int_to_ptr.vmem [resolvable:$true] %s19
      %25 = dma.hbm_to_vmem [thread:$0]  %s0, 8192, %s20, [#allocation3], 128, 128, 8
    $region5: #{residual_block_forward.3} parent=1 // pred_fallthru
      _
    // Predicated region
    $region6: #{residual_block_forward.3} parent=1 // pred_check
      _
    $region7: #{residual_block_forward.3} parent=1 // pred_check_branch
      %27 = sbr.rel (0) target = $region9
    $region8: #{residual_block_forward.3} parent=1 // pred_region
      %s29 = ssub.s32 2048, 2048
      %30 = vsyncadd [#allocation6], %s29
      %s31 = sshll.u32 [#allocation5], 4
      %s32 = int_to_ptr.vmem [resolvable:$true] %s31
      %37 = dma.hbm_to_vmem [thread:$0]  %s1, 2048, %s32, [#allocation6], 128, 128, 8
    $region9: #{residual_block_forward.3} parent=1 // pred_fallthru
      _
    // Predicated region
    $region10: #{residual_block_forward.3} parent=1 // pred_check
      _
    $region11: #{residual_block_forward.3} parent=1 // pred_check_branch
      %39 = sbr.rel (0) target = $region13
    $region12: #{residual_block_forward.3} parent=1 // pred_region
      %s41 = ssub.s32 16, 16
      %42 = vsyncadd [#allocation6], %s41
      %s44 = sshll.u32 [#allocation7], 4
      %s45 = int_to_ptr.vmem [resolvable:$true] %s44
      %47 = dma.hbm_to_vmem [thread:$0]  %s2, 16, %s45, [#allocation6]
    $region13: #{residual_block_forward.3} parent=1 // pred_fallthru
      _
    // Predicated region
    $region14: #{residual_block_forward.3} parent=1 // pred_check
      _
    $region15: #{residual_block_forward.3} parent=1 // pred_check_branch
      %49 = sbr.rel (0) target = $region17
    $region16: #{residual_block_forward.3} parent=1 // pred_region
      %50 = dma.done [#allocation3], 8192
    $region17: #{residual_block_forward.3} parent=1 // pred_fallthru
      _
    // Predicated region
    $region18: #{residual_block_forward.3} parent=1 // pred_check
      _
    $region19: #{residual_block_forward.3} parent=1 // pred_check_branch
      %52 = sbr.rel (0) target = $region21
    $region20: #{residual_block_forward.3} parent=1 // pred_region
      %53 = dma.done [#allocation6], 2048
    $region21: #{residual_block_forward.3} parent=1 // pred_fallthru
      _
    // Predicated region
    $region22: #{residual_block_forward.3} parent=1 // pred_check
      _
    $region23: #{residual_block_forward.3} parent=1 // pred_check_branch
      %55 = sbr.rel (0) target = $region25
    $region24: #{residual_block_forward.3} parent=1 // pred_region
      %56 = dma.done [#allocation6], 16
    $region25: #{residual_block_forward.3} parent=1 // pred_fallthru
      _
    %v57 = vld [vmem:[#allocation2] sm:$0xff]
    %v58 = vld [vmem:[#allocation2 + $0x8] sm:$0xff]
    %v59 = vld [vmem:[#allocation2 + $0x10] sm:$0xff]
    %v60 = vld [vmem:[#allocation2 + $0x18] sm:$0xff]
    %v61 = vld [vmem:[#allocation2 + $0x20] sm:$0xff]
    %v62 = vld [vmem:[#allocation2 + $0x28] sm:$0xff]
    %v63 = vld [vmem:[#allocation2 + $0x30] sm:$0xff]
    %v64 = vld [vmem:[#allocation2 + $0x38] sm:$0xff]
    %v65 = vld [vmem:[#allocation2 + $0x40] sm:$0xff]
    %v66 = vld [vmem:[#allocation2 + $0x48] sm:$0xff]
    %v67 = vld [vmem:[#allocation2 + $0x50] sm:$0xff]
    %v68 = vld [vmem:[#allocation2 + $0x58] sm:$0xff]
    %v69 = vld [vmem:[#allocation2 + $0x60] sm:$0xff]
    %v70 = vld [vmem:[#allocation2 + $0x68] sm:$0xff]
    %v71 = vld [vmem:[#allocation2 + $0x70] sm:$0xff]
    %v72 = vld [vmem:[#allocation2 + $0x78] sm:$0xff]
    %v73 = vld [vmem:[#allocation2 + $0x80] sm:$0xff]
    %v74 = vld [vmem:[#allocation2 + $0x88] sm:$0xff]
    %v75 = vld [vmem:[#allocation2 + $0x90] sm:$0xff]
    %v76 = vld [vmem:[#allocation2 + $0x98] sm:$0xff]
    %v77 = vld [vmem:[#allocation2 + $0xa0] sm:$0xff]
    %v78 = vld [vmem:[#allocation2 + $0xa8] sm:$0xff]
    %v79 = vld [vmem:[#allocation2 + $0xb0] sm:$0xff]
    %v80 = vld [vmem:[#allocation2 + $0xb8] sm:$0xff]
    %v81 = vld [vmem:[#allocation2 + $0xc0] sm:$0xff]
    %v82 = vld [vmem:[#allocation2 + $0xc8] sm:$0xff]
    %v83 = vld [vmem:[#allocation2 + $0xd0] sm:$0xff]
    %v84 = vld [vmem:[#allocation2 + $0xd8] sm:$0xff]
    %v85 = vld [vmem:[#allocation2 + $0xe0] sm:$0xff]
    %v86 = vld [vmem:[#allocation2 + $0xe8] sm:$0xff]
    %v87 = vld [vmem:[#allocation2 + $0xf0] sm:$0xff]
    %v88 = vld [vmem:[#allocation2 + $0xf8] sm:$0xff]
    %v89 = vld [vmem:[#allocation2 + $0x100] sm:$0xff]
    %v90 = vld [vmem:[#allocation2 + $0x108] sm:$0xff]
    %v91 = vld [vmem:[#allocation2 + $0x110] sm:$0xff]
    %v92 = vld [vmem:[#allocation2 + $0x118] sm:$0xff]
    %v93 = vld [vmem:[#allocation2 + $0x120] sm:$0xff]
    %v94 = vld [vmem:[#allocation2 + $0x128] sm:$0xff]
    %v95 = vld [vmem:[#allocation2 + $0x130] sm:$0xff]
    %v96 = vld [vmem:[#allocation2 + $0x138] sm:$0xff]
    %v97 = vld [vmem:[#allocation2 + $0x140] sm:$0xff]
    %v98 = vld [vmem:[#allocation2 + $0x148] sm:$0xff]
    %v99 = vld [vmem:[#allocation2 + $0x150] sm:$0xff]
    %v100 = vld [vmem:[#allocation2 + $0x158] sm:$0xff]
    %v101 = vld [vmem:[#allocation2 + $0x160] sm:$0xff]
    %v102 = vld [vmem:[#allocation2 + $0x168] sm:$0xff]
    %v103 = vld [vmem:[#allocation2 + $0x170] sm:$0xff]
    %v104 = vld [vmem:[#allocation2 + $0x178] sm:$0xff]
    %v105 = vld [vmem:[#allocation2 + $0x180] sm:$0xff]
    %v106 = vld [vmem:[#allocation2 + $0x188] sm:$0xff]
    %v107 = vld [vmem:[#allocation2 + $0x190] sm:$0xff]
    %v108 = vld [vmem:[#allocation2 + $0x198] sm:$0xff]
    %v109 = vld [vmem:[#allocation2 + $0x1a0] sm:$0xff]
    %v110 = vld [vmem:[#allocation2 + $0x1a8] sm:$0xff]
    %v111 = vld [vmem:[#allocation2 + $0x1b0] sm:$0xff]
    %v112 = vld [vmem:[#allocation2 + $0x1b8] sm:$0xff]
    %v113 = vld [vmem:[#allocation2 + $0x1c0] sm:$0xff]
    %v114 = vld [vmem:[#allocation2 + $0x1c8] sm:$0xff]
    %v115 = vld [vmem:[#allocation2 + $0x1d0] sm:$0xff]
    %v116 = vld [vmem:[#allocation2 + $0x1d8] sm:$0xff]
    %v117 = vld [vmem:[#allocation2 + $0x1e0] sm:$0xff]
    %v118 = vld [vmem:[#allocation2 + $0x1e8] sm:$0xff]
    %v119 = vld [vmem:[#allocation2 + $0x1f0] sm:$0xff]
    %v120 = vld [vmem:[#allocation2 + $0x1f8] sm:$0xff]
    %v121 = vld [vmem:[#allocation5] sm:$0xff]
    %v122 = vld [vmem:[#allocation5 + $0x8] sm:$0xff]
    %v123 = vld [vmem:[#allocation5 + $0x10] sm:$0xff]
    %v124 = vld [vmem:[#allocation5 + $0x18] sm:$0xff]
    %v125 = vld [vmem:[#allocation5 + $0x20] sm:$0xff]
    %v126 = vld [vmem:[#allocation5 + $0x28] sm:$0xff]
    %v127 = vld [vmem:[#allocation5 + $0x30] sm:$0xff]
    %v128 = vld [vmem:[#allocation5 + $0x38] sm:$0xff]
    %v129 = vld [vmem:[#allocation5 + $0x40] sm:$0xff]
    %v130 = vld [vmem:[#allocation5 + $0x48] sm:$0xff]
    %v131 = vld [vmem:[#allocation5 + $0x50] sm:$0xff]
    %v132 = vld [vmem:[#allocation5 + $0x58] sm:$0xff]
    %v133 = vld [vmem:[#allocation5 + $0x60] sm:$0xff]
    %v134 = vld [vmem:[#allocation5 + $0x68] sm:$0xff]
    %v135 = vld [vmem:[#allocation5 + $0x70] sm:$0xff]
    %v136 = vld [vmem:[#allocation5 + $0x78] sm:$0xff]
    %v137 = vld [vmem:[#allocation7] sm:$0x1]
    %v139 = vlaneseq
    %v140 = vshrl.u32 %v139, 7
    %v141 = vsub.s32 0, %v140
    %v142 = vrot.slane %v137, %v141
    %144 = vmatprep.subr.mxu0 0.0
    %145 = vmatpush1.msra.mxu0 %v121
    %146 = vmatprep.subr.mxu0 0.0
    %147 = vmatpush1.msra.mxu0 %v122
    %148 = vmatprep.subr.mxu0 0.0
    %149 = vmatpush1.msra.mxu0 %v123
    %150 = vmatprep.subr.mxu0 0.0
    %151 = vmatpush1.msra.mxu0 %v124
    %152 = vmatprep.subr.mxu0 0.0
    %153 = vmatpush1.msra.mxu0 %v125
    %154 = vmatprep.subr.mxu0 0.0
    %155 = vmatpush1.msra.mxu0 %v126
    %156 = vmatprep.subr.mxu0 0.0
    %157 = vmatpush1.msra.mxu0 %v127
    %158 = vmatprep.subr.mxu0 0.0
    %159 = vmatpush1.msra.mxu0 %v128
    %160 = vmatprep.subr.mxu0 0.0
    %161 = vmatpush1.msra.mxu0 %v129
    %162 = vmatprep.subr.mxu0 0.0
    %163 = vmatpush1.msra.mxu0 %v130
    %164 = vmatprep.subr.mxu0 0.0
    %165 = vmatpush1.msra.mxu0 %v131
    %166 = vmatprep.subr.mxu0 0.0
    %167 = vmatpush1.msra.mxu0 %v132
    %168 = vmatprep.subr.mxu0 0.0
    %169 = vmatpush1.msra.mxu0 %v133
    %170 = vmatprep.subr.mxu0 0.0
    %171 = vmatpush1.msra.mxu0 %v134
    %172 = vmatprep.subr.mxu0 0.0
    %173 = vmatpush1.msra.mxu0 %v135
    %174 = vmatprep.subr.mxu0 0.0
    %175 = vmatpush1.msra.mxu0 %v136
    %176 = vmatprep.subr.mxu0 0.0
    %177 = vmatpush1.msra.mxu0 0.0
    %178 = vmatprep.subr.mxu0 0.0
    %179 = vmatpush1.msra.mxu0 0.0
    %180 = vmatprep.subr.mxu0 0.0
    %181 = vmatpush1.msra.mxu0 0.0
    %182 = vmatprep.subr.mxu0 0.0
    %183 = vmatpush1.msra.mxu0 0.0
    %184 = vmatprep.subr.mxu0 0.0
    %185 = vmatpush1.msra.mxu0 0.0
    %186 = vmatprep.subr.mxu0 0.0
    %187 = vmatpush1.msra.mxu0 0.0
    %188 = vmatprep.subr.mxu0 0.0
    %189 = vmatpush1.msra.mxu0 0.0
    %190 = vmatprep.subr.mxu0 0.0
    %191 = vmatpush1.msra.mxu0 0.0
    %192 = vmatprep.subr.mxu0 0.0
    %193 = vmatpush1.msra.mxu0 0.0
    %194 = vmatprep.subr.mxu0 0.0
    %195 = vmatpush1.msra.mxu0 0.0
    %196 = vmatprep.subr.mxu0 0.0
    %197 = vmatpush1.msra.mxu0 0.0
    %198 = vmatprep.subr.mxu0 0.0
    %199 = vmatpush1.msra.mxu0 0.0
    %200 = vmatprep.subr.mxu0 0.0
    %201 = vmatpush1.msra.mxu0 0.0
    %202 = vmatprep.subr.mxu0 0.0
    %203 = vmatpush1.msra.mxu0 0.0
    %204 = vmatprep.subr.mxu0 0.0
    %205 = vmatpush1.msra.mxu0 0.0
    %206 = vmatprep.subr.mxu0 0.0
    %207 = vmatpush1.msra.mxu0 0.0
    %208 = vmatprep.mubr.f32.mxu0 0.0
    %209 = vmatmul.mubr.f32.gmra.mrb[0].mxu0 %v57
    %v210 = vpop.f32.mrb[0].mxu0
    %v211 = vadd.f32 %v142, %v210
    %v212 = vpop.f32.mrb[0].mxu0
    %213 = vmatprep.mubr.f32.mxu0 0.0
    %214 = vmatmul.mubr.f32.gmra.mrb[0].mxu0 %v58
    %v215 = vpop.f32.mrb[0].mxu0
    %v216 = vadd.f32 %v142, %v215
    %v217 = vpop.f32.mrb[0].mxu0
    %218 = vmatprep.mubr.f32.mxu0 0.0
    %219 = vmatmul.mubr.f32.gmra.mrb[0].mxu0 %v59
    %v220 = vpop.f32.mrb[0].mxu0
    %v221 = vadd.f32 %v142, %v220
    %v222 = vpop.f32.mrb[0].mxu0
    %223 = vmatprep.mubr.f32.mxu0 0.0
    %224 = vmatmul.mubr.f32.gmra.mrb[0].mxu0 %v60
    %v225 = vpop.f32.mrb[0].mxu0
    %v226 = vadd.f32 %v142, %v225
    %v227 = vpop.f32.mrb[0].mxu0
    %228 = vmatprep.mubr.f32.mxu0 0.0
    %229 = vmatmul.mubr.f32.gmra.mrb[0].mxu0 %v61
    %v230 = vpop.f32.mrb[0].mxu0
    %v231 = vadd.f32 %v142, %v230
    %v232 = vpop.f32.mrb[0].mxu0
    %233 = vmatprep.mubr.f32.mxu0 0.0
    %234 = vmatmul.mubr.f32.gmra.mrb[0].mxu0 %v62
    %v235 = vpop.f32.mrb[0].mxu0
    %v236 = vadd.f32 %v142, %v235
    %v237 = vpop.f32.mrb[0].mxu0
    %238 = vmatprep.mubr.f32.mxu0 0.0
    %239 = vmatmul.mubr.f32.gmra.mrb[0].mxu0 %v63
    %v240 = vpop.f32.mrb[0].mxu0
    %v241 = vadd.f32 %v142, %v240
    %v242 = vpop.f32.mrb[0].mxu0
    %243 = vmatprep.mubr.f32.mxu0 0.0
    %244 = vmatmul.mubr.f32.gmra.mrb[0].mxu0 %v64
    %v245 = vpop.f32.mrb[0].mxu0
    %v246 = vadd.f32 %v142, %v245
    %v247 = vpop.f32.mrb[0].mxu0
    %248 = vmatprep.mubr.f32.mxu0 0.0
    %249 = vmatmul.mubr.f32.gmra.mrb[0].mxu0 %v65
    %v250 = vpop.f32.mrb[0].mxu0
    %v251 = vadd.f32 %v142, %v250
    %v252 = vpop.f32.mrb[0].mxu0
    %253 = vmatprep.mubr.f32.mxu0 0.0
    %254 = vmatmul.mubr.f32.gmra.mrb[0].mxu0 %v66
    %v255 = vpop.f32.mrb[0].mxu0
    %v256 = vadd.f32 %v142, %v255
    %v257 = vpop.f32.mrb[0].mxu0
    %258 = vmatprep.mubr.f32.mxu0 0.0
    %259 = vmatmul.mubr.f32.gmra.mrb[0].mxu0 %v67
    %v260 = vpop.f32.mrb[0].mxu0
    %v261 = vadd.f32 %v142, %v260
    %v262 = vpop.f32.mrb[0].mxu0
    %263 = vmatprep.mubr.f32.mxu0 0.0
    %264 = vmatmul.mubr.f32.gmra.mrb[0].mxu0 %v68
    %v265 = vpop.f32.mrb[0].mxu0
    %v266 = vadd.f32 %v142, %v265
    %v267 = vpop.f32.mrb[0].mxu0
    %268 = vmatprep.mubr.f32.mxu0 0.0
    %269 = vmatmul.mubr.f32.gmra.mrb[0].mxu0 %v69
    %v270 = vpop.f32.mrb[0].mxu0
    %v271 = vadd.f32 %v142, %v270
    %v272 = vpop.f32.mrb[0].mxu0
    %273 = vmatprep.mubr.f32.mxu0 0.0
    %274 = vmatmul.mubr.f32.gmra.mrb[0].mxu0 %v70
    %v275 = vpop.f32.mrb[0].mxu0
    %v276 = vadd.f32 %v142, %v275
    %v277 = vpop.f32.mrb[0].mxu0
    %278 = vmatprep.mubr.f32.mxu0 0.0
    %279 = vmatmul.mubr.f32.gmra.mrb[0].mxu0 %v71
    %v280 = vpop.f32.mrb[0].mxu0
    %v281 = vadd.f32 %v142, %v280
    %v282 = vpop.f32.mrb[0].mxu0
    %283 = vmatprep.mubr.f32.mxu0 0.0
    %284 = vmatmul.mubr.f32.gmra.mrb[0].mxu0 %v72
    %v285 = vpop.f32.mrb[0].mxu0
    %v286 = vadd.f32 %v142, %v285
    %v287 = vpop.f32.mrb[0].mxu0
    %288 = vmatprep.mubr.f32.mxu0 0.0
    %289 = vmatmul.mubr.f32.gmra.mrb[0].mxu0 %v73
    %v290 = vpop.f32.mrb[0].mxu0
    %v291 = vadd.f32 %v142, %v290
    %v292 = vpop.f32.mrb[0].mxu0
    %293 = vmatprep.mubr.f32.mxu0 0.0
    %294 = vmatmul.mubr.f32.gmra.mrb[0].mxu0 %v74
    %v295 = vpop.f32.mrb[0].mxu0
    %v296 = vadd.f32 %v142, %v295
    %v297 = vpop.f32.mrb[0].mxu0
    %298 = vmatprep.mubr.f32.mxu0 0.0
    %299 = vmatmul.mubr.f32.gmra.mrb[0].mxu0 %v75
    %v300 = vpop.f32.mrb[0].mxu0
    %v301 = vadd.f32 %v142, %v300
    %v302 = vpop.f32.mrb[0].mxu0
    %303 = vmatprep.mubr.f32.mxu0 0.0
    %304 = vmatmul.mubr.f32.gmra.mrb[0].mxu0 %v76
    %v305 = vpop.f32.mrb[0].mxu0
    %v306 = vadd.f32 %v142, %v305
    %v307 = vpop.f32.mrb[0].mxu0
    %308 = vmatprep.mubr.f32.mxu0 0.0
    %309 = vmatmul.mubr.f32.gmra.mrb[0].mxu0 %v77
    %v310 = vpop.f32.mrb[0].mxu0
    %v311 = vadd.f32 %v142, %v310
    %v312 = vpop.f32.mrb[0].mxu0
    %313 = vmatprep.mubr.f32.mxu0 0.0
    %314 = vmatmul.mubr.f32.gmra.mrb[0].mxu0 %v78
    %v315 = vpop.f32.mrb[0].mxu0
    %v316 = vadd.f32 %v142, %v315
    %v317 = vpop.f32.mrb[0].mxu0
    %318 = vmatprep.mubr.f32.mxu0 0.0
    %319 = vmatmul.mubr.f32.gmra.mrb[0].mxu0 %v79
    %v320 = vpop.f32.mrb[0].mxu0
    %v321 = vadd.f32 %v142, %v320
    %v322 = vpop.f32.mrb[0].mxu0
    %323 = vmatprep.mubr.f32.mxu0 0.0
    %324 = vmatmul.mubr.f32.gmra.mrb[0].mxu0 %v80
    %v325 = vpop.f32.mrb[0].mxu0
    %v326 = vadd.f32 %v142, %v325
    %v327 = vpop.f32.mrb[0].mxu0
    %328 = vmatprep.mubr.f32.mxu0 0.0
    %329 = vmatmul.mubr.f32.gmra.mrb[0].mxu0 %v81
    %v330 = vpop.f32.mrb[0].mxu0
    %v331 = vadd.f32 %v142, %v330
    %v332 = vpop.f32.mrb[0].mxu0
    %333 = vmatprep.mubr.f32.mxu0 0.0
    %334 = vmatmul.mubr.f32.gmra.mrb[0].mxu0 %v82
    %v335 = vpop.f32.mrb[0].mxu0
    %v336 = vadd.f32 %v142, %v335
    %v337 = vpop.f32.mrb[0].mxu0
    %338 = vmatprep.mubr.f32.mxu0 0.0
    %339 = vmatmul.mubr.f32.gmra.mrb[0].mxu0 %v83
    %v340 = vpop.f32.mrb[0].mxu0
    %v341 = vadd.f32 %v142, %v340
    %v342 = vpop.f32.mrb[0].mxu0
    %343 = vmatprep.mubr.f32.mxu0 0.0
    %344 = vmatmul.mubr.f32.gmra.mrb[0].mxu0 %v84
    %v345 = vpop.f32.mrb[0].mxu0
    %v346 = vadd.f32 %v142, %v345
    %v347 = vpop.f32.mrb[0].mxu0
    %348 = vmatprep.mubr.f32.mxu0 0.0
    %349 = vmatmul.mubr.f32.gmra.mrb[0].mxu0 %v85
    %v350 = vpop.f32.mrb[0].mxu0
    %v351 = vadd.f32 %v142, %v350
    %v352 = vpop.f32.mrb[0].mxu0
    %353 = vmatprep.mubr.f32.mxu0 0.0
    %354 = vmatmul.mubr.f32.gmra.mrb[0].mxu0 %v86
    %v355 = vpop.f32.mrb[0].mxu0
    %v356 = vadd.f32 %v142, %v355
    %v357 = vpop.f32.mrb[0].mxu0
    %358 = vmatprep.mubr.f32.mxu0 0.0
    %359 = vmatmul.mubr.f32.gmra.mrb[0].mxu0 %v87
    %v360 = vpop.f32.mrb[0].mxu0
    %v361 = vadd.f32 %v142, %v360
    %v362 = vpop.f32.mrb[0].mxu0
    %363 = vmatprep.mubr.f32.mxu0 0.0
    %364 = vmatmul.mubr.f32.gmra.mrb[0].mxu0 %v88
    %v365 = vpop.f32.mrb[0].mxu0
    %v366 = vadd.f32 %v142, %v365
    %v367 = vpop.f32.mrb[0].mxu0
    %368 = vmatprep.mubr.f32.mxu0 0.0
    %369 = vmatmul.mubr.f32.gmra.mrb[0].mxu0 %v89
    %v370 = vpop.f32.mrb[0].mxu0
    %v371 = vadd.f32 %v142, %v370
    %v372 = vpop.f32.mrb[0].mxu0
    %373 = vmatprep.mubr.f32.mxu0 0.0
    %374 = vmatmul.mubr.f32.gmra.mrb[0].mxu0 %v90
    %v375 = vpop.f32.mrb[0].mxu0
    %v376 = vadd.f32 %v142, %v375
    %v377 = vpop.f32.mrb[0].mxu0
    %378 = vmatprep.mubr.f32.mxu0 0.0
    %379 = vmatmul.mubr.f32.gmra.mrb[0].mxu0 %v91
    %v380 = vpop.f32.mrb[0].mxu0
    %v381 = vadd.f32 %v142, %v380
    %v382 = vpop.f32.mrb[0].mxu0
    %383 = vmatprep.mubr.f32.mxu0 0.0
    %384 = vmatmul.mubr.f32.gmra.mrb[0].mxu0 %v92
    %v385 = vpop.f32.mrb[0].mxu0
    %v386 = vadd.f32 %v142, %v385
    %v387 = vpop.f32.mrb[0].mxu0
    %388 = vmatprep.mubr.f32.mxu0 0.0
    %389 = vmatmul.mubr.f32.gmra.mrb[0].mxu0 %v93
    %v390 = vpop.f32.mrb[0].mxu0
    %v391 = vadd.f32 %v142, %v390
    %v392 = vpop.f32.mrb[0].mxu0
    %393 = vmatprep.mubr.f32.mxu0 0.0
    %394 = vmatmul.mubr.f32.gmra.mrb[0].mxu0 %v94
    %v395 = vpop.f32.mrb[0].mxu0
    %v396 = vadd.f32 %v142, %v395
    %v397 = vpop.f32.mrb[0].mxu0
    %398 = vmatprep.mubr.f32.mxu0 0.0
    %399 = vmatmul.mubr.f32.gmra.mrb[0].mxu0 %v95
    %v400 = vpop.f32.mrb[0].mxu0
    %v401 = vadd.f32 %v142, %v400
    %v402 = vpop.f32.mrb[0].mxu0
    %403 = vmatprep.mubr.f32.mxu0 0.0
    %404 = vmatmul.mubr.f32.gmra.mrb[0].mxu0 %v96
    %v405 = vpop.f32.mrb[0].mxu0
    %v406 = vadd.f32 %v142, %v405
    %v407 = vpop.f32.mrb[0].mxu0
    %408 = vmatprep.mubr.f32.mxu0 0.0
    %409 = vmatmul.mubr.f32.gmra.mrb[0].mxu0 %v97
    %v410 = vpop.f32.mrb[0].mxu0
    %v411 = vadd.f32 %v142, %v410
    %v412 = vpop.f32.mrb[0].mxu0
    %413 = vmatprep.mubr.f32.mxu0 0.0
    %414 = vmatmul.mubr.f32.gmra.mrb[0].mxu0 %v98
    %v415 = vpop.f32.mrb[0].mxu0
    %v416 = vadd.f32 %v142, %v415
    %v417 = vpop.f32.mrb[0].mxu0
    %418 = vmatprep.mubr.f32.mxu0 0.0
    %419 = vmatmul.mubr.f32.gmra.mrb[0].mxu0 %v99
    %v420 = vpop.f32.mrb[0].mxu0
    %v421 = vadd.f32 %v142, %v420
    %v422 = vpop.f32.mrb[0].mxu0
    %423 = vmatprep.mubr.f32.mxu0 0.0
    %424 = vmatmul.mubr.f32.gmra.mrb[0].mxu0 %v100
    %v425 = vpop.f32.mrb[0].mxu0
    %v426 = vadd.f32 %v142, %v425
    %v427 = vpop.f32.mrb[0].mxu0
    %428 = vmatprep.mubr.f32.mxu0 0.0
    %429 = vmatmul.mubr.f32.gmra.mrb[0].mxu0 %v101
    %v430 = vpop.f32.mrb[0].mxu0
    %v431 = vadd.f32 %v142, %v430
    %v432 = vpop.f32.mrb[0].mxu0
    %433 = vmatprep.mubr.f32.mxu0 0.0
    %434 = vmatmul.mubr.f32.gmra.mrb[0].mxu0 %v102
    %v435 = vpop.f32.mrb[0].mxu0
    %v436 = vadd.f32 %v142, %v435
    %v437 = vpop.f32.mrb[0].mxu0
    %438 = vmatprep.mubr.f32.mxu0 0.0
    %439 = vmatmul.mubr.f32.gmra.mrb[0].mxu0 %v103
    %v440 = vpop.f32.mrb[0].mxu0
    %v441 = vadd.f32 %v142, %v440
    %v442 = vpop.f32.mrb[0].mxu0
    %443 = vmatprep.mubr.f32.mxu0 0.0
    %444 = vmatmul.mubr.f32.gmra.mrb[0].mxu0 %v104
    %v445 = vpop.f32.mrb[0].mxu0
    %v446 = vadd.f32 %v142, %v445
    %v447 = vpop.f32.mrb[0].mxu0
    %448 = vmatprep.mubr.f32.mxu0 0.0
    %449 = vmatmul.mubr.f32.gmra.mrb[0].mxu0 %v105
    %v450 = vpop.f32.mrb[0].mxu0
    %v451 = vadd.f32 %v142, %v450
    %v452 = vpop.f32.mrb[0].mxu0
    %453 = vmatprep.mubr.f32.mxu0 0.0
    %454 = vmatmul.mubr.f32.gmra.mrb[0].mxu0 %v106
    %v455 = vpop.f32.mrb[0].mxu0
    %v456 = vadd.f32 %v142, %v455
    %v457 = vpop.f32.mrb[0].mxu0
    %458 = vmatprep.mubr.f32.mxu0 0.0
    %459 = vmatmul.mubr.f32.gmra.mrb[0].mxu0 %v107
    %v460 = vpop.f32.mrb[0].mxu0
    %v461 = vadd.f32 %v142, %v460
    %v462 = vpop.f32.mrb[0].mxu0
    %463 = vmatprep.mubr.f32.mxu0 0.0
    %464 = vmatmul.mubr.f32.gmra.mrb[0].mxu0 %v108
    %v465 = vpop.f32.mrb[0].mxu0
    %v466 = vadd.f32 %v142, %v465
    %v467 = vpop.f32.mrb[0].mxu0
    %468 = vmatprep.mubr.f32.mxu0 0.0
    %469 = vmatmul.mubr.f32.gmra.mrb[0].mxu0 %v109
    %v470 = vpop.f32.mrb[0].mxu0
    %v471 = vadd.f32 %v142, %v470
    %v472 = vpop.f32.mrb[0].mxu0
    %473 = vmatprep.mubr.f32.mxu0 0.0
    %474 = vmatmul.mubr.f32.gmra.mrb[0].mxu0 %v110
    %v475 = vpop.f32.mrb[0].mxu0
    %v476 = vadd.f32 %v142, %v475
    %v477 = vpop.f32.mrb[0].mxu0
    %478 = vmatprep.mubr.f32.mxu0 0.0
    %479 = vmatmul.mubr.f32.gmra.mrb[0].mxu0 %v111
    %v480 = vpop.f32.mrb[0].mxu0
    %v481 = vadd.f32 %v142, %v480
    %v482 = vpop.f32.mrb[0].mxu0
    %483 = vmatprep.mubr.f32.mxu0 0.0
    %484 = vmatmul.mubr.f32.gmra.mrb[0].mxu0 %v112
    %v485 = vpop.f32.mrb[0].mxu0
    %v486 = vadd.f32 %v142, %v485
    %v487 = vpop.f32.mrb[0].mxu0
    %488 = vmatprep.mubr.f32.mxu0 0.0
    %489 = vmatmul.mubr.f32.gmra.mrb[0].mxu0 %v113
    %v490 = vpop.f32.mrb[0].mxu0
    %v491 = vadd.f32 %v142, %v490
    %v492 = vpop.f32.mrb[0].mxu0
    %493 = vmatprep.mubr.f32.mxu0 0.0
    %494 = vmatmul.mubr.f32.gmra.mrb[0].mxu0 %v114
    %v495 = vpop.f32.mrb[0].mxu0
    %v496 = vadd.f32 %v142, %v495
    %v497 = vpop.f32.mrb[0].mxu0
    %498 = vmatprep.mubr.f32.mxu0 0.0
    %499 = vmatmul.mubr.f32.gmra.mrb[0].mxu0 %v115
    %v500 = vpop.f32.mrb[0].mxu0
    %v501 = vadd.f32 %v142, %v500
    %v502 = vpop.f32.mrb[0].mxu0
    %503 = vmatprep.mubr.f32.mxu0 0.0
    %504 = vmatmul.mubr.f32.gmra.mrb[0].mxu0 %v116
    %v505 = vpop.f32.mrb[0].mxu0
    %v506 = vadd.f32 %v142, %v505
    %v507 = vpop.f32.mrb[0].mxu0
    %508 = vmatprep.mubr.f32.mxu0 0.0
    %509 = vmatmul.mubr.f32.gmra.mrb[0].mxu0 %v117
    %v510 = vpop.f32.mrb[0].mxu0
    %v511 = vadd.f32 %v142, %v510
    %v512 = vpop.f32.mrb[0].mxu0
    %513 = vmatprep.mubr.f32.mxu0 0.0
    %514 = vmatmul.mubr.f32.gmra.mrb[0].mxu0 %v118
    %v515 = vpop.f32.mrb[0].mxu0
    %v516 = vadd.f32 %v142, %v515
    %v517 = vpop.f32.mrb[0].mxu0
    %518 = vmatprep.mubr.f32.mxu0 0.0
    %519 = vmatmul.mubr.f32.gmra.mrb[0].mxu0 %v119
    %v520 = vpop.f32.mrb[0].mxu0
    %v521 = vadd.f32 %v142, %v520
    %v522 = vpop.f32.mrb[0].mxu0
    %523 = vmatprep.mubr.f32.mxu0 0.0
    %524 = vmatmul.mubr.f32.gmra.mrb[0].mxu0 %v120
    %v525 = vpop.f32.mrb[0].mxu0
    %v526 = vadd.f32 %v142, %v525
    %v527 = vpop.f32.mrb[0].mxu0
    %528 = vdwg.mxu0
    %v529 = vmax.f32 %v211, 0.0
    %v530 = vmax.f32 %v216, 0.0
    %v531 = vmax.f32 %v221, 0.0
    %v532 = vmax.f32 %v226, 0.0
    %v533 = vmax.f32 %v231, 0.0
    %v534 = vmax.f32 %v236, 0.0
    %v535 = vmax.f32 %v241, 0.0
    %v536 = vmax.f32 %v246, 0.0
    %v537 = vmax.f32 %v251, 0.0
    %v538 = vmax.f32 %v256, 0.0
    %v539 = vmax.f32 %v261, 0.0
    %v540 = vmax.f32 %v266, 0.0
    %v541 = vmax.f32 %v271, 0.0
    %v542 = vmax.f32 %v276, 0.0
    %v543 = vmax.f32 %v281, 0.0
    %v544 = vmax.f32 %v286, 0.0
    %v545 = vmax.f32 %v291, 0.0
    %v546 = vmax.f32 %v296, 0.0
    %v547 = vmax.f32 %v301, 0.0
    %v548 = vmax.f32 %v306, 0.0
    %v549 = vmax.f32 %v311, 0.0
    %v550 = vmax.f32 %v316, 0.0
    %v551 = vmax.f32 %v321, 0.0
    %v552 = vmax.f32 %v326, 0.0
    %v553 = vmax.f32 %v331, 0.0
    %v554 = vmax.f32 %v336, 0.0
    %v555 = vmax.f32 %v341, 0.0
    %v556 = vmax.f32 %v346, 0.0
    %v557 = vmax.f32 %v351, 0.0
    %v558 = vmax.f32 %v356, 0.0
    %v559 = vmax.f32 %v361, 0.0
    %v560 = vmax.f32 %v366, 0.0
    %v561 = vmax.f32 %v371, 0.0
    %v562 = vmax.f32 %v376, 0.0
    %v563 = vmax.f32 %v381, 0.0
    %v564 = vmax.f32 %v386, 0.0
    %v565 = vmax.f32 %v391, 0.0
    %v566 = vmax.f32 %v396, 0.0
    %v567 = vmax.f32 %v401, 0.0
    %v568 = vmax.f32 %v406, 0.0
    %v569 = vmax.f32 %v411, 0.0
    %v570 = vmax.f32 %v416, 0.0
    %v571 = vmax.f32 %v421, 0.0
    %v572 = vmax.f32 %v426, 0.0
    %v573 = vmax.f32 %v431, 0.0
    %v574 = vmax.f32 %v436, 0.0
    %v575 = vmax.f32 %v441, 0.0
    %v576 = vmax.f32 %v446, 0.0
    %v577 = vmax.f32 %v451, 0.0
    %v578 = vmax.f32 %v456, 0.0
    %v579 = vmax.f32 %v461, 0.0
    %v580 = vmax.f32 %v466, 0.0
    %v581 = vmax.f32 %v471, 0.0
    %v582 = vmax.f32 %v476, 0.0
    %v583 = vmax.f32 %v481, 0.0
    %v584 = vmax.f32 %v486, 0.0
    %v585 = vmax.f32 %v491, 0.0
    %v586 = vmax.f32 %v496, 0.0
    %v587 = vmax.f32 %v501, 0.0
    %v588 = vmax.f32 %v506, 0.0
    %v589 = vmax.f32 %v511, 0.0
    %v590 = vmax.f32 %v516, 0.0
    %v591 = vmax.f32 %v521, 0.0
    %v592 = vmax.f32 %v526, 0.0
    %593 = vst [vmem:[#allocation8] sm:$0xff] %v529
    %594 = vst [vmem:[#allocation8 + $0x8] sm:$0xff] %v530
    %595 = vst [vmem:[#allocation8 + $0x10] sm:$0xff] %v531
    %596 = vst [vmem:[#allocation8 + $0x18] sm:$0xff] %v532
    %597 = vst [vmem:[#allocation8 + $0x20] sm:$0xff] %v533
    %598 = vst [vmem:[#allocation8 + $0x28] sm:$0xff] %v534
    %599 = vst [vmem:[#allocation8 + $0x30] sm:$0xff] %v535
    %600 = vst [vmem:[#allocation8 + $0x38] sm:$0xff] %v536
    %601 = vst [vmem:[#allocation8 + $0x40] sm:$0xff] %v537
    %602 = vst [vmem:[#allocation8 + $0x48] sm:$0xff] %v538
    %603 = vst [vmem:[#allocation8 + $0x50] sm:$0xff] %v539
    %604 = vst [vmem:[#allocation8 + $0x58] sm:$0xff] %v540
    %605 = vst [vmem:[#allocation8 + $0x60] sm:$0xff] %v541
    %606 = vst [vmem:[#allocation8 + $0x68] sm:$0xff] %v542
    %607 = vst [vmem:[#allocation8 + $0x70] sm:$0xff] %v543
    %608 = vst [vmem:[#allocation8 + $0x78] sm:$0xff] %v544
    %609 = vst [vmem:[#allocation8 + $0x80] sm:$0xff] %v545
    %610 = vst [vmem:[#allocation8 + $0x88] sm:$0xff] %v546
    %611 = vst [vmem:[#allocation8 + $0x90] sm:$0xff] %v547
    %612 = vst [vmem:[#allocation8 + $0x98] sm:$0xff] %v548
    %613 = vst [vmem:[#allocation8 + $0xa0] sm:$0xff] %v549
    %614 = vst [vmem:[#allocation8 + $0xa8] sm:$0xff] %v550
    %615 = vst [vmem:[#allocation8 + $0xb0] sm:$0xff] %v551
    %616 = vst [vmem:[#allocation8 + $0xb8] sm:$0xff] %v552
    %617 = vst [vmem:[#allocation8 + $0xc0] sm:$0xff] %v553
    %618 = vst [vmem:[#allocation8 + $0xc8] sm:$0xff] %v554
    %619 = vst [vmem:[#allocation8 + $0xd0] sm:$0xff] %v555
    %620 = vst [vmem:[#allocation8 + $0xd8] sm:$0xff] %v556
    %621 = vst [vmem:[#allocation8 + $0xe0] sm:$0xff] %v557
    %622 = vst [vmem:[#allocation8 + $0xe8] sm:$0xff] %v558
    %623 = vst [vmem:[#allocation8 + $0xf0] sm:$0xff] %v559
    %624 = vst [vmem:[#allocation8 + $0xf8] sm:$0xff] %v560
    %625 = vst [vmem:[#allocation8 + $0x100] sm:$0xff] %v561
    %626 = vst [vmem:[#allocation8 + $0x108] sm:$0xff] %v562
    %627 = vst [vmem:[#allocation8 + $0x110] sm:$0xff] %v563
    %628 = vst [vmem:[#allocation8 + $0x118] sm:$0xff] %v564
    %629 = vst [vmem:[#allocation8 + $0x120] sm:$0xff] %v565
    %630 = vst [vmem:[#allocation8 + $0x128] sm:$0xff] %v566
    %631 = vst [vmem:[#allocation8 + $0x130] sm:$0xff] %v567
    %632 = vst [vmem:[#allocation8 + $0x138] sm:$0xff] %v568
    %633 = vst [vmem:[#allocation8 + $0x140] sm:$0xff] %v569
    %634 = vst [vmem:[#allocation8 + $0x148] sm:$0xff] %v570
    %635 = vst [vmem:[#allocation8 + $0x150] sm:$0xff] %v571
    %636 = vst [vmem:[#allocation8 + $0x158] sm:$0xff] %v572
    %637 = vst [vmem:[#allocation8 + $0x160] sm:$0xff] %v573
    %638 = vst [vmem:[#allocation8 + $0x168] sm:$0xff] %v574
    %639 = vst [vmem:[#allocation8 + $0x170] sm:$0xff] %v575
    %640 = vst [vmem:[#allocation8 + $0x178] sm:$0xff] %v576
    %641 = vst [vmem:[#allocation8 + $0x180] sm:$0xff] %v577
    %642 = vst [vmem:[#allocation8 + $0x188] sm:$0xff] %v578
    %643 = vst [vmem:[#allocation8 + $0x190] sm:$0xff] %v579
    %644 = vst [vmem:[#allocation8 + $0x198] sm:$0xff] %v580
    %645 = vst [vmem:[#allocation8 + $0x1a0] sm:$0xff] %v581
    %646 = vst [vmem:[#allocation8 + $0x1a8] sm:$0xff] %v582
    %647 = vst [vmem:[#allocation8 + $0x1b0] sm:$0xff] %v583
    %648 = vst [vmem:[#allocation8 + $0x1b8] sm:$0xff] %v584
    %649 = vst [vmem:[#allocation8 + $0x1c0] sm:$0xff] %v585
    %650 = vst [vmem:[#allocation8 + $0x1c8] sm:$0xff] %v586
    %651 = vst [vmem:[#allocation8 + $0x1d0] sm:$0xff] %v587
    %652 = vst [vmem:[#allocation8 + $0x1d8] sm:$0xff] %v588
    %653 = vst [vmem:[#allocation8 + $0x1e0] sm:$0xff] %v589
    %654 = vst [vmem:[#allocation8 + $0x1e8] sm:$0xff] %v590
    %655 = vst [vmem:[#allocation8 + $0x1f0] sm:$0xff] %v591
    %656 = vst [vmem:[#allocation8 + $0x1f8] sm:$0xff] %v592
    %v657 = vadd.f32 %v529, %v530
    %v658 = vadd.f32 %v657, %v531
    %v659 = vadd.f32 %v658, %v532
    %v660 = vadd.f32 %v659, %v533
    %v661 = vadd.f32 %v660, %v534
    %v662 = vadd.f32 %v661, %v535
    %v663 = vadd.f32 %v662, %v536
    %v664 = vadd.f32 %v663, %v537
    %v665 = vadd.f32 %v664, %v538
    %v666 = vadd.f32 %v665, %v539
    %v667 = vadd.f32 %v666, %v540
    %v668 = vadd.f32 %v667, %v541
    %v669 = vadd.f32 %v668, %v542
    %v670 = vadd.f32 %v669, %v543
    %v671 = vadd.f32 %v670, %v544
    %v672 = vadd.f32 %v671, %v545
    %v673 = vadd.f32 %v672, %v546
    %v674 = vadd.f32 %v673, %v547
    %v675 = vadd.f32 %v674, %v548
    %v676 = vadd.f32 %v675, %v549
    %v677 = vadd.f32 %v676, %v550
    %v678 = vadd.f32 %v677, %v551
    %v679 = vadd.f32 %v678, %v552
    %v680 = vadd.f32 %v679, %v553
    %v681 = vadd.f32 %v680, %v554
    %v682 = vadd.f32 %v681, %v555
    %v683 = vadd.f32 %v682, %v556
    %v684 = vadd.f32 %v683, %v557
    %v685 = vadd.f32 %v684, %v558
    %v686 = vadd.f32 %v685, %v559
    %v687 = vadd.f32 %v686, %v560
    %v688 = vadd.f32 %v687, %v561
    %v689 = vadd.f32 %v688, %v562
    %v690 = vadd.f32 %v689, %v563
    %v691 = vadd.f32 %v690, %v564
    %v692 = vadd.f32 %v691, %v565
    %v693 = vadd.f32 %v692, %v566
    %v694 = vadd.f32 %v693, %v567
    %v695 = vadd.f32 %v694, %v568
    %v696 = vadd.f32 %v695, %v569
    %v697 = vadd.f32 %v696, %v570
    %v698 = vadd.f32 %v697, %v571
    %v699 = vadd.f32 %v698, %v572
    %v700 = vadd.f32 %v699, %v573
    %v701 = vadd.f32 %v700, %v574
    %v702 = vadd.f32 %v701, %v575
    %v703 = vadd.f32 %v702, %v576
    %v704 = vadd.f32 %v703, %v577
    %v705 = vadd.f32 %v704, %v578
    %v706 = vadd.f32 %v705, %v579
    %v707 = vadd.f32 %v706, %v580
    %v708 = vadd.f32 %v707, %v581
    %v709 = vadd.f32 %v708, %v582
    %v710 = vadd.f32 %v709, %v583
    %v711 = vadd.f32 %v710, %v584
    %v712 = vadd.f32 %v711, %v585
    %v713 = vadd.f32 %v712, %v586
    %v714 = vadd.f32 %v713, %v587
    %v715 = vadd.f32 %v714, %v588
    %v716 = vadd.f32 %v715, %v589
    %v717 = vadd.f32 %v716, %v590
    %v718 = vadd.f32 %v717, %v591
    %v719 = vadd.f32 %v718, %v592
    %v720 = vrot.slane %v719, 4
    %v721 = vadd.f32 %v719, %v720
    %v722 = vrot.slane %v721, 2
    %v723 = vadd.f32 %v721, %v722
    %v724 = vrot.slane %v723, 1
    %v725 = vadd.f32 %v723, %v724
    %726 = vst [vmem:[#allocation9] sm:$0x1] %v725
    %v727 = vmul.f32 %v529, %v529
    %v728 = vmul.f32 %v530, %v530
    %v729 = vmul.f32 %v531, %v531
    %v730 = vmul.f32 %v532, %v532
    %v731 = vmul.f32 %v533, %v533
    %v732 = vmul.f32 %v534, %v534
    %v733 = vmul.f32 %v535, %v535
    %v734 = vmul.f32 %v536, %v536
    %v735 = vmul.f32 %v537, %v537
    %v736 = vmul.f32 %v538, %v538
    %v737 = vmul.f32 %v539, %v539
    %v738 = vmul.f32 %v540, %v540
    %v739 = vmul.f32 %v541, %v541
    %v740 = vmul.f32 %v542, %v542
    %v741 = vmul.f32 %v543, %v543
    %v742 = vmul.f32 %v544, %v544
    %v743 = vmul.f32 %v545, %v545
    %v744 = vmul.f32 %v546, %v546
    %v745 = vmul.f32 %v547, %v547
    %v746 = vmul.f32 %v548, %v548
    %v747 = vmul.f32 %v549, %v549
    %v748 = vmul.f32 %v550, %v550
    %v749 = vmul.f32 %v551, %v551
    %v750 = vmul.f32 %v552, %v552
    %v751 = vmul.f32 %v553, %v553
    %v752 = vmul.f32 %v554, %v554
    %v753 = vmul.f32 %v555, %v555
    %v754 = vmul.f32 %v556, %v556
    %v755 = vmul.f32 %v557, %v557
    %v756 = vmul.f32 %v558, %v558
    %v757 = vmul.f32 %v559, %v559
    %v758 = vmul.f32 %v560, %v560
    %v759 = vmul.f32 %v561, %v561
    %v760 = vmul.f32 %v562, %v562
    %v761 = vmul.f32 %v563, %v563
    %v762 = vmul.f32 %v564, %v564
    %v763 = vmul.f32 %v565, %v565
    %v764 = vmul.f32 %v566, %v566
    %v765 = vmul.f32 %v567, %v567
    %v766 = vmul.f32 %v568, %v568
    %v767 = vmul.f32 %v569, %v569
    %v768 = vmul.f32 %v570, %v570
    %v769 = vmul.f32 %v571, %v571
    %v770 = vmul.f32 %v572, %v572
    %v771 = vmul.f32 %v573, %v573
    %v772 = vmul.f32 %v574, %v574
    %v773 = vmul.f32 %v575, %v575
    %v774 = vmul.f32 %v576, %v576
    %v775 = vmul.f32 %v577, %v577
    %v776 = vmul.f32 %v578, %v578
    %v777 = vmul.f32 %v579, %v579
    %v778 = vmul.f32 %v580, %v580
    %v779 = vmul.f32 %v581, %v581
    %v780 = vmul.f32 %v582, %v582
    %v781 = vmul.f32 %v583, %v583
    %v782 = vmul.f32 %v584, %v584
    %v783 = vmul.f32 %v585, %v585
    %v784 = vmul.f32 %v586, %v586
    %v785 = vmul.f32 %v587, %v587
    %v786 = vmul.f32 %v588, %v588
    %v787 = vmul.f32 %v589, %v589
    %v788 = vmul.f32 %v590, %v590
    %v789 = vmul.f32 %v591, %v591
    %v790 = vmul.f32 %v592, %v592
    %v791 = vadd.f32 %v727, %v728
    %v792 = vadd.f32 %v791, %v729
    %v793 = vadd.f32 %v792, %v730
    %v794 = vadd.f32 %v793, %v731
    %v795 = vadd.f32 %v794, %v732
    %v796 = vadd.f32 %v795, %v733
    %v797 = vadd.f32 %v796, %v734
    %v798 = vadd.f32 %v797, %v735
    %v799 = vadd.f32 %v798, %v736
    %v800 = vadd.f32 %v799, %v737
    %v801 = vadd.f32 %v800, %v738
    %v802 = vadd.f32 %v801, %v739
    %v803 = vadd.f32 %v802, %v740
    %v804 = vadd.f32 %v803, %v741
    %v805 = vadd.f32 %v804, %v742
    %v806 = vadd.f32 %v805, %v743
    %v807 = vadd.f32 %v806, %v744
    %v808 = vadd.f32 %v807, %v745
    %v809 = vadd.f32 %v808, %v746
    %v810 = vadd.f32 %v809, %v747
    %v811 = vadd.f32 %v810, %v748
    %v812 = vadd.f32 %v811, %v749
    %v813 = vadd.f32 %v812, %v750
    %v814 = vadd.f32 %v813, %v751
    %v815 = vadd.f32 %v814, %v752
    %v816 = vadd.f32 %v815, %v753
    %v817 = vadd.f32 %v816, %v754
    %v818 = vadd.f32 %v817, %v755
    %v819 = vadd.f32 %v818, %v756
    %v820 = vadd.f32 %v819, %v757
    %v821 = vadd.f32 %v820, %v758
    %v822 = vadd.f32 %v821, %v759
    %v823 = vadd.f32 %v822, %v760
    %v824 = vadd.f32 %v823, %v761
    %v825 = vadd.f32 %v824, %v762
    %v826 = vadd.f32 %v825, %v763
    %v827 = vadd.f32 %v826, %v764
    %v828 = vadd.f32 %v827, %v765
    %v829 = vadd.f32 %v828, %v766
    %v830 = vadd.f32 %v829, %v767
    %v831 = vadd.f32 %v830, %v768
    %v832 = vadd.f32 %v831, %v769
    %v833 = vadd.f32 %v832, %v770
    %v834 = vadd.f32 %v833, %v771
    %v835 = vadd.f32 %v834, %v772
    %v836 = vadd.f32 %v835, %v773
    %v837 = vadd.f32 %v836, %v774
    %v838 = vadd.f32 %v837, %v775
    %v839 = vadd.f32 %v838, %v776
    %v840 = vadd.f32 %v839, %v777
    %v841 = vadd.f32 %v840, %v778
    %v842 = vadd.f32 %v841, %v779
    %v843 = vadd.f32 %v842, %v780
    %v844 = vadd.f32 %v843, %v781
    %v845 = vadd.f32 %v844, %v782
    %v846 = vadd.f32 %v845, %v783
    %v847 = vadd.f32 %v846, %v784
    %v848 = vadd.f32 %v847, %v785
    %v849 = vadd.f32 %v848, %v786
    %v850 = vadd.f32 %v849, %v787
    %v851 = vadd.f32 %v850, %v788
    %v852 = vadd.f32 %v851, %v789
    %v853 = vadd.f32 %v852, %v790
    %v854 = vrot.slane %v853, 4
    %v855 = vadd.f32 %v853, %v854
    %v856 = vrot.slane %v855, 2
    %v857 = vadd.f32 %v855, %v856
    %v858 = vrot.slane %v857, 1
    %v859 = vadd.f32 %v857, %v858
    %860 = vst [vmem:[#allocation9 + $0x1] sm:$0x1] %v859
    // Predicated region
    $region26: #{residual_block_forward.3} parent=1 // pred_check
      _
    $region27: #{residual_block_forward.3} parent=1 // pred_check_branch
      %862 = sbr.rel (0) target = $region29
    $region28: #{residual_block_forward.3} parent=1 // pred_region
      %s864 = ssub.s32 8192, 8192
      %865 = vsyncadd [#allocation4], %s864
      %s866 = sshll.u32 [#allocation8], 4
      %s867 = int_to_ptr.vmem [resolvable:$true] %s866
      %872 = dma.vmem_to_hbm [thread:$0]  %s867, 8192, %s3, [#allocation4], 128, 128, 8
    $region29: #{residual_block_forward.3} parent=1 // pred_fallthru
      _
    // Predicated region
    $region30: #{residual_block_forward.3} parent=1 // pred_check
      _
    $region31: #{residual_block_forward.3} parent=1 // pred_check_branch
      %874 = sbr.rel (0) target = $region33
    $region32: #{residual_block_forward.3} parent=1 // pred_region
      %s876 = ssub.s32 32, 32
      %877 = vsyncadd [#allocation10], %s876
      %s879 = sshll.u32 [#allocation9], 4
      %s880 = int_to_ptr.vmem [resolvable:$true] %s879
      %882 = dma.vmem_to_hbm [thread:$0]  %s880, 32, %s4, [#allocation10]
    $region33: #{residual_block_forward.3} parent=1 // pred_fallthru
      _
    // Predicated region
    $region34: #{residual_block_forward.3} parent=1 // pred_check
      _
    $region35: #{residual_block_forward.3} parent=1 // pred_check_branch
      %884 = sbr.rel (0) target = $region37
    $region36: #{residual_block_forward.3} parent=1 // pred_region
      %885 = dma.done [#allocation4], 8192
    $region37: #{residual_block_forward.3} parent=1 // pred_fallthru
      _
    // Predicated region
    $region38: #{residual_block_forward.3} parent=1 // pred_check
      _
    $region39: #{residual_block_forward.3} parent=1 // pred_check_branch
      %887 = sbr.rel (0) target = $region41
    $region40: #{residual_block_forward.3} parent=1 // pred_region
      %888 = dma.done [#allocation10], 32
    $region41: #{residual_block_forward.3} parent=1 // pred_fallthru
      _
    %889 = vsyncpa [#allocation3], 1
    %890 = vsyncpa [#allocation6], 1
    %891 = vsyncpa [#allocation4], 1
    %892 = vsyncpa [#allocation10], 1

// kernel: residual_block_forward.5
$region0: #{residual_block_forward.5}
  #allocation0 [shape = 'u32[]', space=smem, size = 0x4, offset = 0x4, fixed_abs, tag = 'smem constant byte address 0x4 - core index']
  #allocation1 [shape = 'u32[144,128]{1,0:T(1,128)}', space=vmem, size = 0x12000, scoped, tag = 'internal scratch']
  %s0 = inlined_call_operand.hbm [shape: f32[512,128], index: 0, kind: input, shape index: {}]
  %s1 = inlined_call_operand.hbm [shape: f32[512,128], index: 1, kind: input, shape index: {}]
  %s2 = inlined_call_operand.hbm [shape: f32[2,128], index: 2, kind: input, shape index: {}]
  %s3 = inlined_call_operand.hbm [shape: f32[1,128], index: 3, kind: input, shape index: {}]
  %s4 = inlined_call_operand.hbm [shape: f32[1,128], index: 4, kind: input, shape index: {}]
  %s5 = inlined_call_operand.hbm [shape: f32[512,128], index: 5, kind: output, shape index: {}]
  %s6 = sld [smem:[#allocation0]]
  $region50: #{residual_block_forward.5} parent=0
    _
  %s8 = ssub.s32 1, %s6
  %s9 = scalar_select 0, %s8, %s6
  $region1: #{residual_block_forward.5} parent=0
    #allocation2 [shape = 'u8[262144]{0}', space=vmem, size = 0x40000, scoped, tag = 'input window, operand 0, single buffered']
    #allocation3 [shape = 's32[1]{0}', space=sflag, size = 0x4, scoped, tag = 'scoped memory for residual_block_forward.5']
    #allocation4 [shape = 's32[1]{0}', space=sflag, size = 0x4, scoped, tag = 'scoped memory for residual_block_forward.5']
    #allocation5 [shape = 'u8[262144]{0}', space=vmem, size = 0x40000, scoped, tag = 'input window, operand 1, single buffered']
    #allocation6 [shape = 's32[1]{0}', space=sflag, size = 0x4, scoped, tag = 'scoped memory for residual_block_forward.5']
    #allocation7 [shape = 'u8[1024]{0}', space=vmem, size = 0x400, scoped, tag = 'input window, operand 2, single buffered']
    #allocation8 [shape = 'u8[512]{0}', space=vmem, size = 0x400, scoped, tag = 'input window, operand 3, single buffered']
    #allocation9 [shape = 's32[1]{0}', space=sflag, size = 0x4, scoped, tag = 'scoped memory for residual_block_forward.5']
    #allocation10 [shape = 'u8[512]{0}', space=vmem, size = 0x400, scoped, tag = 'input window, operand 4, single buffered']
    #allocation11 [shape = 'u8[262144]{0}', space=vmem, size = 0x40000, scoped, tag = 'output window, operand 0, single buffered']
    %10 = vsyncpa [#allocation3], 0
    %11 = vsyncpa [#allocation6], 0
    %12 = vsyncpa [#allocation9], 0
    %13 = vsyncpa [#allocation4], 0
    // Predicated region
    $region2: #{residual_block_forward.5} parent=1 // pred_check
      _
    $region3: #{residual_block_forward.5} parent=1 // pred_check_branch
      %15 = sbr.rel (0) target = $region5
    $region4: #{residual_block_forward.5} parent=1 // pred_region
      %s17 = ssub.s32 8192, 8192
      %18 = vsyncadd [#allocation3], %s17
      %s19 = sshll.u32 [#allocation2], 4
      %s20 = int_to_ptr.vmem [resolvable:$true] %s19
      %25 = dma.hbm_to_vmem [thread:$0]  %s0, 8192, %s20, [#allocation3], 128, 128, 8
    $region5: #{residual_block_forward.5} parent=1 // pred_fallthru
      _
    // Predicated region
    $region6: #{residual_block_forward.5} parent=1 // pred_check
      _
    $region7: #{residual_block_forward.5} parent=1 // pred_check_branch
      %27 = sbr.rel (0) target = $region9
    $region8: #{residual_block_forward.5} parent=1 // pred_region
      %s29 = ssub.s32 8192, 8192
      %30 = vsyncadd [#allocation6], %s29
      %s31 = sshll.u32 [#allocation5], 4
      %s32 = int_to_ptr.vmem [resolvable:$true] %s31
      %37 = dma.hbm_to_vmem [thread:$0]  %s1, 8192, %s32, [#allocation6], 128, 128, 8
    $region9: #{residual_block_forward.5} parent=1 // pred_fallthru
      _
    // Predicated region
    $region10: #{residual_block_forward.5} parent=1 // pred_check
      _
    $region11: #{residual_block_forward.5} parent=1 // pred_check_branch
      %39 = sbr.rel (0) target = $region13
    $region12: #{residual_block_forward.5} parent=1 // pred_region
      %s41 = ssub.s32 32, 32
      %42 = vsyncadd [#allocation6], %s41
      %s44 = sshll.u32 [#allocation7], 4
      %s45 = int_to_ptr.vmem [resolvable:$true] %s44
      %47 = dma.hbm_to_vmem [thread:$0]  %s2, 32, %s45, [#allocation6]
    $region13: #{residual_block_forward.5} parent=1 // pred_fallthru
      _
    // Predicated region
    $region14: #{residual_block_forward.5} parent=1 // pred_check
      _
    $region15: #{residual_block_forward.5} parent=1 // pred_check_branch
      %49 = sbr.rel (0) target = $region17
    $region16: #{residual_block_forward.5} parent=1 // pred_region
      %s51 = ssub.s32 16, 16
      %52 = vsyncadd [#allocation9], %s51
      %s54 = sshll.u32 [#allocation8], 4
      %s55 = int_to_ptr.vmem [resolvable:$true] %s54
      %57 = dma.hbm_to_vmem [thread:$0]  %s3, 16, %s55, [#allocation9]
    $region17: #{residual_block_forward.5} parent=1 // pred_fallthru
      _
    // Predicated region
    $region18: #{residual_block_forward.5} parent=1 // pred_check
      _
    $region19: #{residual_block_forward.5} parent=1 // pred_check_branch
      %59 = sbr.rel (0) target = $region21
    $region20: #{residual_block_forward.5} parent=1 // pred_region
      %s61 = ssub.s32 16, 16
      %62 = vsyncadd [#allocation9], %s61
      %s64 = sshll.u32 [#allocation10], 4
      %s65 = int_to_ptr.vmem [resolvable:$true] %s64
      %67 = dma.hbm_to_vmem [thread:$0]  %s4, 16, %s65, [#allocation9]
    $region21: #{residual_block_forward.5} parent=1 // pred_fallthru
      _
    // Predicated region
    $region22: #{residual_block_forward.5} parent=1 // pred_check
      _
    $region23: #{residual_block_forward.5} parent=1 // pred_check_branch
      %69 = sbr.rel (0) target = $region25
    $region24: #{residual_block_forward.5} parent=1 // pred_region
      %70 = dma.done [#allocation3], 8192
    $region25: #{residual_block_forward.5} parent=1 // pred_fallthru
      _
    // Predicated region
    $region26: #{residual_block_forward.5} parent=1 // pred_check
      _
    $region27: #{residual_block_forward.5} parent=1 // pred_check_branch
      %72 = sbr.rel (0) target = $region29
    $region28: #{residual_block_forward.5} parent=1 // pred_region
      %73 = dma.done [#allocation6], 8192
    $region29: #{residual_block_forward.5} parent=1 // pred_fallthru
      _
    // Predicated region
    $region30: #{residual_block_forward.5} parent=1 // pred_check
      _
    $region31: #{residual_block_forward.5} parent=1 // pred_check_branch
      %75 = sbr.rel (0) target = $region33
    $region32: #{residual_block_forward.5} parent=1 // pred_region
      %76 = dma.done [#allocation6], 32
    $region33: #{residual_block_forward.5} parent=1 // pred_fallthru
      _
    // Predicated region
    $region34: #{residual_block_forward.5} parent=1 // pred_check
      _
    $region35: #{residual_block_forward.5} parent=1 // pred_check_branch
      %78 = sbr.rel (0) target = $region37
    $region36: #{residual_block_forward.5} parent=1 // pred_region
      %79 = dma.done [#allocation9], 16
    $region37: #{residual_block_forward.5} parent=1 // pred_fallthru
      _
    // Predicated region
    $region38: #{residual_block_forward.5} parent=1 // pred_check
      _
    $region39: #{residual_block_forward.5} parent=1 // pred_check_branch
      %81 = sbr.rel (0) target = $region41
    $region40: #{residual_block_forward.5} parent=1 // pred_region
      %82 = dma.done [#allocation9], 16
    $region41: #{residual_block_forward.5} parent=1 // pred_fallthru
      _
    %v83 = vld [vmem:[#allocation7] sm:$0x1]
    %v84 = vmul.f32 %v83, 0.001953125
    %v85 = vld [vmem:[#allocation7 + $0x1] sm:$0x1]
    %v86 = vmul.f32 %v85, 0.001953125
    %v87 = vmul.f32 %v84, %v84
    %v88 = vsub.f32 %v86, %v87
    %v89 = vld [vmem:[#allocation8] sm:$0x1]
    %v90 = vadd.f32 %v88, 1e-05
    %v91 = vrsqrt.pop %v90
    %v92 = vmul.f32 %v89, %v91
    %v93 = vld [vmem:[#allocation10] sm:$0x1]
    %v94 = vmul.f32 %v84, %v92
    %v95 = vsub.f32 %v93, %v94
    %v96 = vld [vmem:[#allocation5] sm:$0xff]
    %v97 = vld [vmem:[#allocation5 + $0x8] sm:$0xff]
    %v98 = vld [vmem:[#allocation5 + $0x10] sm:$0xff]
    %v99 = vld [vmem:[#allocation5 + $0x18] sm:$0xff]
    %v100 = vld [vmem:[#allocation5 + $0x20] sm:$0xff]
    %v101 = vld [vmem:[#allocation5 + $0x28] sm:$0xff]
    %v102 = vld [vmem:[#allocation5 + $0x30] sm:$0xff]
    %v103 = vld [vmem:[#allocation5 + $0x38] sm:$0xff]
    %v104 = vld [vmem:[#allocation5 + $0x40] sm:$0xff]
    %v105 = vld [vmem:[#allocation5 + $0x48] sm:$0xff]
    %v106 = vld [vmem:[#allocation5 + $0x50] sm:$0xff]
    %v107 = vld [vmem:[#allocation5 + $0x58] sm:$0xff]
    %v108 = vld [vmem:[#allocation5 + $0x60] sm:$0xff]
    %v109 = vld [vmem:[#allocation5 + $0x68] sm:$0xff]
    %v110 = vld [vmem:[#allocation5 + $0x70] sm:$0xff]
    %v111 = vld [vmem:[#allocation5 + $0x78] sm:$0xff]
    %v112 = vld [vmem:[#allocation5 + $0x80] sm:$0xff]
    %v113 = vld [vmem:[#allocation5 + $0x88] sm:$0xff]
    %v114 = vld [vmem:[#allocation5 + $0x90] sm:$0xff]
    %v115 = vld [vmem:[#allocation5 + $0x98] sm:$0xff]
    %v116 = vld [vmem:[#allocation5 + $0xa0] sm:$0xff]
    %v117 = vld [vmem:[#allocation5 + $0xa8] sm:$0xff]
    %v118 = vld [vmem:[#allocation5 + $0xb0] sm:$0xff]
    %v119 = vld [vmem:[#allocation5 + $0xb8] sm:$0xff]
    %v120 = vld [vmem:[#allocation5 + $0xc0] sm:$0xff]
    %v121 = vld [vmem:[#allocation5 + $0xc8] sm:$0xff]
    %v122 = vld [vmem:[#allocation5 + $0xd0] sm:$0xff]
    %v123 = vld [vmem:[#allocation5 + $0xd8] sm:$0xff]
    %v124 = vld [vmem:[#allocation5 + $0xe0] sm:$0xff]
    %v125 = vld [vmem:[#allocation5 + $0xe8] sm:$0xff]
    %v126 = vld [vmem:[#allocation5 + $0xf0] sm:$0xff]
    %v127 = vld [vmem:[#allocation5 + $0xf8] sm:$0xff]
    %v128 = vld [vmem:[#allocation5 + $0x100] sm:$0xff]
    %v129 = vld [vmem:[#allocation5 + $0x108] sm:$0xff]
    %v130 = vld [vmem:[#allocation5 + $0x110] sm:$0xff]
    %v131 = vld [vmem:[#allocation5 + $0x118] sm:$0xff]
    %v132 = vld [vmem:[#allocation5 + $0x120] sm:$0xff]
    %v133 = vld [vmem:[#allocation5 + $0x128] sm:$0xff]
    %v134 = vld [vmem:[#allocation5 + $0x130] sm:$0xff]
    %v135 = vld [vmem:[#allocation5 + $0x138] sm:$0xff]
    %v136 = vld [vmem:[#allocation5 + $0x140] sm:$0xff]
    %v137 = vld [vmem:[#allocation5 + $0x148] sm:$0xff]
    %v138 = vld [vmem:[#allocation5 + $0x150] sm:$0xff]
    %v139 = vld [vmem:[#allocation5 + $0x158] sm:$0xff]
    %v140 = vld [vmem:[#allocation5 + $0x160] sm:$0xff]
    %v141 = vld [vmem:[#allocation5 + $0x168] sm:$0xff]
    %v142 = vld [vmem:[#allocation5 + $0x170] sm:$0xff]
    %v143 = vld [vmem:[#allocation5 + $0x178] sm:$0xff]
    %v144 = vld [vmem:[#allocation5 + $0x180] sm:$0xff]
    %v145 = vld [vmem:[#allocation5 + $0x188] sm:$0xff]
    %v146 = vld [vmem:[#allocation5 + $0x190] sm:$0xff]
    %v147 = vld [vmem:[#allocation5 + $0x198] sm:$0xff]
    %v148 = vld [vmem:[#allocation5 + $0x1a0] sm:$0xff]
    %v149 = vld [vmem:[#allocation5 + $0x1a8] sm:$0xff]
    %v150 = vld [vmem:[#allocation5 + $0x1b0] sm:$0xff]
    %v151 = vld [vmem:[#allocation5 + $0x1b8] sm:$0xff]
    %v152 = vld [vmem:[#allocation5 + $0x1c0] sm:$0xff]
    %v153 = vld [vmem:[#allocation5 + $0x1c8] sm:$0xff]
    %v154 = vld [vmem:[#allocation5 + $0x1d0] sm:$0xff]
    %v155 = vld [vmem:[#allocation5 + $0x1d8] sm:$0xff]
    %v156 = vld [vmem:[#allocation5 + $0x1e0] sm:$0xff]
    %v157 = vld [vmem:[#allocation5 + $0x1e8] sm:$0xff]
    %v158 = vld [vmem:[#allocation5 + $0x1f0] sm:$0xff]
    %v159 = vld [vmem:[#allocation5 + $0x1f8] sm:$0xff]
    %v160 = vld [vmem:[#allocation2] sm:$0xff]
    %v161 = vld [vmem:[#allocation2 + $0x8] sm:$0xff]
    %v162 = vld [vmem:[#allocation2 + $0x10] sm:$0xff]
    %v163 = vld [vmem:[#allocation2 + $0x18] sm:$0xff]
    %v164 = vld [vmem:[#allocation2 + $0x20] sm:$0xff]
    %v165 = vld [vmem:[#allocation2 + $0x28] sm:$0xff]
    %v166 = vld [vmem:[#allocation2 + $0x30] sm:$0xff]
    %v167 = vld [vmem:[#allocation2 + $0x38] sm:$0xff]
    %v168 = vld [vmem:[#allocation2 + $0x40] sm:$0xff]
    %v169 = vld [vmem:[#allocation2 + $0x48] sm:$0xff]
    %v170 = vld [vmem:[#allocation2 + $0x50] sm:$0xff]
    %v171 = vld [vmem:[#allocation2 + $0x58] sm:$0xff]
    %v172 = vld [vmem:[#allocation2 + $0x60] sm:$0xff]
    %v173 = vld [vmem:[#allocation2 + $0x68] sm:$0xff]
    %v174 = vld [vmem:[#allocation2 + $0x70] sm:$0xff]
    %v175 = vld [vmem:[#allocation2 + $0x78] sm:$0xff]
    %v176 = vld [vmem:[#allocation2 + $0x80] sm:$0xff]
    %v177 = vld [vmem:[#allocation2 + $0x88] sm:$0xff]
    %v178 = vld [vmem:[#allocation2 + $0x90] sm:$0xff]
    %v179 = vld [vmem:[#allocation2 + $0x98] sm:$0xff]
    %v180 = vld [vmem:[#allocation2 + $0xa0] sm:$0xff]
    %v181 = vld [vmem:[#allocation2 + $0xa8] sm:$0xff]
    %v182 = vld [vmem:[#allocation2 + $0xb0] sm:$0xff]
    %v183 = vld [vmem:[#allocation2 + $0xb8] sm:$0xff]
    %v184 = vld [vmem:[#allocation2 + $0xc0] sm:$0xff]
    %v185 = vld [vmem:[#allocation2 + $0xc8] sm:$0xff]
    %v186 = vld [vmem:[#allocation2 + $0xd0] sm:$0xff]
    %v187 = vld [vmem:[#allocation2 + $0xd8] sm:$0xff]
    %v188 = vld [vmem:[#allocation2 + $0xe0] sm:$0xff]
    %v189 = vld [vmem:[#allocation2 + $0xe8] sm:$0xff]
    %v190 = vld [vmem:[#allocation2 + $0xf0] sm:$0xff]
    %v191 = vld [vmem:[#allocation2 + $0xf8] sm:$0xff]
    %v192 = vld [vmem:[#allocation2 + $0x100] sm:$0xff]
    %v193 = vld [vmem:[#allocation2 + $0x108] sm:$0xff]
    %v194 = vld [vmem:[#allocation2 + $0x110] sm:$0xff]
    %v195 = vld [vmem:[#allocation2 + $0x118] sm:$0xff]
    %v196 = vld [vmem:[#allocation2 + $0x120] sm:$0xff]
    %v197 = vld [vmem:[#allocation2 + $0x128] sm:$0xff]
    %v198 = vld [vmem:[#allocation2 + $0x130] sm:$0xff]
    %v199 = vld [vmem:[#allocation2 + $0x138] sm:$0xff]
    %v200 = vld [vmem:[#allocation2 + $0x140] sm:$0xff]
    %v201 = vld [vmem:[#allocation2 + $0x148] sm:$0xff]
    %v202 = vld [vmem:[#allocation2 + $0x150] sm:$0xff]
    %v203 = vld [vmem:[#allocation2 + $0x158] sm:$0xff]
    %v204 = vld [vmem:[#allocation2 + $0x160] sm:$0xff]
    %v205 = vld [vmem:[#allocation2 + $0x168] sm:$0xff]
    %v206 = vld [vmem:[#allocation2 + $0x170] sm:$0xff]
    %v207 = vld [vmem:[#allocation2 + $0x178] sm:$0xff]
    %v208 = vld [vmem:[#allocation2 + $0x180] sm:$0xff]
    %v209 = vld [vmem:[#allocation2 + $0x188] sm:$0xff]
    %v210 = vld [vmem:[#allocation2 + $0x190] sm:$0xff]
    %v211 = vld [vmem:[#allocation2 + $0x198] sm:$0xff]
    %v212 = vld [vmem:[#allocation2 + $0x1a0] sm:$0xff]
    %v213 = vld [vmem:[#allocation2 + $0x1a8] sm:$0xff]
    %v214 = vld [vmem:[#allocation2 + $0x1b0] sm:$0xff]
    %v215 = vld [vmem:[#allocation2 + $0x1b8] sm:$0xff]
    %v216 = vld [vmem:[#allocation2 + $0x1c0] sm:$0xff]
    %v217 = vld [vmem:[#allocation2 + $0x1c8] sm:$0xff]
    %v218 = vld [vmem:[#allocation2 + $0x1d0] sm:$0xff]
    %v219 = vld [vmem:[#allocation2 + $0x1d8] sm:$0xff]
    %v220 = vld [vmem:[#allocation2 + $0x1e0] sm:$0xff]
    %v221 = vld [vmem:[#allocation2 + $0x1e8] sm:$0xff]
    %v222 = vld [vmem:[#allocation2 + $0x1f0] sm:$0xff]
    %v223 = vld [vmem:[#allocation2 + $0x1f8] sm:$0xff]
    %v225 = vlaneseq
    %v226 = vshrl.u32 %v225, 7
    %v227 = vsub.s32 0, %v226
    %v228 = vrot.slane %v92, %v227
    %v230 = vmul.f32 %v160, %v228
    %v231 = vmul.f32 %v161, %v228
    %v232 = vmul.f32 %v162, %v228
    %v233 = vmul.f32 %v163, %v228
    %v234 = vmul.f32 %v164, %v228
    %v235 = vmul.f32 %v165, %v228
    %v236 = vmul.f32 %v166, %v228
    %v237 = vmul.f32 %v167, %v228
    %v238 = vmul.f32 %v168, %v228
    %v239 = vmul.f32 %v169, %v228
    %v240 = vmul.f32 %v170, %v228
    %v241 = vmul.f32 %v171, %v228
    %v242 = vmul.f32 %v172, %v228
    %v243 = vmul.f32 %v173, %v228
    %v244 = vmul.f32 %v174, %v228
    %v245 = vmul.f32 %v175, %v228
    %v246 = vmul.f32 %v176, %v228
    %v247 = vmul.f32 %v177, %v228
    %v248 = vmul.f32 %v178, %v228
    %v249 = vmul.f32 %v179, %v228
    %v250 = vmul.f32 %v180, %v228
    %v251 = vmul.f32 %v181, %v228
    %v252 = vmul.f32 %v182, %v228
    %v253 = vmul.f32 %v183, %v228
    %v254 = vmul.f32 %v184, %v228
    %v255 = vmul.f32 %v185, %v228
    %v256 = vmul.f32 %v186, %v228
    %v257 = vmul.f32 %v187, %v228
    %v258 = vmul.f32 %v188, %v228
    %v259 = vmul.f32 %v189, %v228
    %v260 = vmul.f32 %v190, %v228
    %v261 = vmul.f32 %v191, %v228
    %v262 = vmul.f32 %v192, %v228
    %v263 = vmul.f32 %v193, %v228
    %v264 = vmul.f32 %v194, %v228
    %v265 = vmul.f32 %v195, %v228
    %v266 = vmul.f32 %v196, %v228
    %v267 = vmul.f32 %v197, %v228
    %v268 = vmul.f32 %v198, %v228
    %v269 = vmul.f32 %v199, %v228
    %v270 = vmul.f32 %v200, %v228
    %v271 = vmul.f32 %v201, %v228
    %v272 = vmul.f32 %v202, %v228
    %v273 = vmul.f32 %v203, %v228
    %v274 = vmul.f32 %v204, %v228
    %v275 = vmul.f32 %v205, %v228
    %v276 = vmul.f32 %v206, %v228
    %v277 = vmul.f32 %v207, %v228
    %v278 = vmul.f32 %v208, %v228
    %v279 = vmul.f32 %v209, %v228
    %v280 = vmul.f32 %v210, %v228
    %v281 = vmul.f32 %v211, %v228
    %v282 = vmul.f32 %v212, %v228
    %v283 = vmul.f32 %v213, %v228
    %v284 = vmul.f32 %v214, %v228
    %v285 = vmul.f32 %v215, %v228
    %v286 = vmul.f32 %v216, %v228
    %v287 = vmul.f32 %v217, %v228
    %v288 = vmul.f32 %v218, %v228
    %v289 = vmul.f32 %v219, %v228
    %v290 = vmul.f32 %v220, %v228
    %v291 = vmul.f32 %v221, %v228
    %v292 = vmul.f32 %v222, %v228
    %v293 = vmul.f32 %v223, %v228
    %v294 = vadd.f32 %v96, %v230
    %v295 = vadd.f32 %v97, %v231
    %v296 = vadd.f32 %v98, %v232
    %v297 = vadd.f32 %v99, %v233
    %v298 = vadd.f32 %v100, %v234
    %v299 = vadd.f32 %v101, %v235
    %v300 = vadd.f32 %v102, %v236
    %v301 = vadd.f32 %v103, %v237
    %v302 = vadd.f32 %v104, %v238
    %v303 = vadd.f32 %v105, %v239
    %v304 = vadd.f32 %v106, %v240
    %v305 = vadd.f32 %v107, %v241
    %v306 = vadd.f32 %v108, %v242
    %v307 = vadd.f32 %v109, %v243
    %v308 = vadd.f32 %v110, %v244
    %v309 = vadd.f32 %v111, %v245
    %v310 = vadd.f32 %v112, %v246
    %v311 = vadd.f32 %v113, %v247
    %v312 = vadd.f32 %v114, %v248
    %v313 = vadd.f32 %v115, %v249
    %v314 = vadd.f32 %v116, %v250
    %v315 = vadd.f32 %v117, %v251
    %v316 = vadd.f32 %v118, %v252
    %v317 = vadd.f32 %v119, %v253
    %v318 = vadd.f32 %v120, %v254
    %v319 = vadd.f32 %v121, %v255
    %v320 = vadd.f32 %v122, %v256
    %v321 = vadd.f32 %v123, %v257
    %v322 = vadd.f32 %v124, %v258
    %v323 = vadd.f32 %v125, %v259
    %v324 = vadd.f32 %v126, %v260
    %v325 = vadd.f32 %v127, %v261
    %v326 = vadd.f32 %v128, %v262
    %v327 = vadd.f32 %v129, %v263
    %v328 = vadd.f32 %v130, %v264
    %v329 = vadd.f32 %v131, %v265
    %v330 = vadd.f32 %v132, %v266
    %v331 = vadd.f32 %v133, %v267
    %v332 = vadd.f32 %v134, %v268
    %v333 = vadd.f32 %v135, %v269
    %v334 = vadd.f32 %v136, %v270
    %v335 = vadd.f32 %v137, %v271
    %v336 = vadd.f32 %v138, %v272
    %v337 = vadd.f32 %v139, %v273
    %v338 = vadd.f32 %v140, %v274
    %v339 = vadd.f32 %v141, %v275
    %v340 = vadd.f32 %v142, %v276
    %v341 = vadd.f32 %v143, %v277
    %v342 = vadd.f32 %v144, %v278
    %v343 = vadd.f32 %v145, %v279
    %v344 = vadd.f32 %v146, %v280
    %v345 = vadd.f32 %v147, %v281
    %v346 = vadd.f32 %v148, %v282
    %v347 = vadd.f32 %v149, %v283
    %v348 = vadd.f32 %v150, %v284
    %v349 = vadd.f32 %v151, %v285
    %v350 = vadd.f32 %v152, %v286
    %v351 = vadd.f32 %v153, %v287
    %v352 = vadd.f32 %v154, %v288
    %v353 = vadd.f32 %v155, %v289
    %v354 = vadd.f32 %v156, %v290
    %v355 = vadd.f32 %v157, %v291
    %v356 = vadd.f32 %v158, %v292
    %v357 = vadd.f32 %v159, %v293
    %v359 = vlaneseq
    %v360 = vshrl.u32 %v359, 7
    %v361 = vsub.s32 0, %v360
    %v362 = vrot.slane %v95, %v361
    %v364 = vadd.f32 %v294, %v362
    %v365 = vadd.f32 %v295, %v362
    %v366 = vadd.f32 %v296, %v362
    %v367 = vadd.f32 %v297, %v362
    %v368 = vadd.f32 %v298, %v362
    %v369 = vadd.f32 %v299, %v362
    %v370 = vadd.f32 %v300, %v362
    %v371 = vadd.f32 %v301, %v362
    %v372 = vadd.f32 %v302, %v362
    %v373 = vadd.f32 %v303, %v362
    %v374 = vadd.f32 %v304, %v362
    %v375 = vadd.f32 %v305, %v362
    %v376 = vadd.f32 %v306, %v362
    %v377 = vadd.f32 %v307, %v362
    %v378 = vadd.f32 %v308, %v362
    %v379 = vadd.f32 %v309, %v362
    %v380 = vadd.f32 %v310, %v362
    %v381 = vadd.f32 %v311, %v362
    %v382 = vadd.f32 %v312, %v362
    %v383 = vadd.f32 %v313, %v362
    %v384 = vadd.f32 %v314, %v362
    %v385 = vadd.f32 %v315, %v362
    %v386 = vadd.f32 %v316, %v362
    %v387 = vadd.f32 %v317, %v362
    %v388 = vadd.f32 %v318, %v362
    %v389 = vadd.f32 %v319, %v362
    %v390 = vadd.f32 %v320, %v362
    %v391 = vadd.f32 %v321, %v362
    %v392 = vadd.f32 %v322, %v362
    %v393 = vadd.f32 %v323, %v362
    %v394 = vadd.f32 %v324, %v362
    %v395 = vadd.f32 %v325, %v362
    %v396 = vadd.f32 %v326, %v362
    %v397 = vadd.f32 %v327, %v362
    %v398 = vadd.f32 %v328, %v362
    %v399 = vadd.f32 %v329, %v362
    %v400 = vadd.f32 %v330, %v362
    %v401 = vadd.f32 %v331, %v362
    %v402 = vadd.f32 %v332, %v362
    %v403 = vadd.f32 %v333, %v362
    %v404 = vadd.f32 %v334, %v362
    %v405 = vadd.f32 %v335, %v362
    %v406 = vadd.f32 %v336, %v362
    %v407 = vadd.f32 %v337, %v362
    %v408 = vadd.f32 %v338, %v362
    %v409 = vadd.f32 %v339, %v362
    %v410 = vadd.f32 %v340, %v362
    %v411 = vadd.f32 %v341, %v362
    %v412 = vadd.f32 %v342, %v362
    %v413 = vadd.f32 %v343, %v362
    %v414 = vadd.f32 %v344, %v362
    %v415 = vadd.f32 %v345, %v362
    %v416 = vadd.f32 %v346, %v362
    %v417 = vadd.f32 %v347, %v362
    %v418 = vadd.f32 %v348, %v362
    %v419 = vadd.f32 %v349, %v362
    %v420 = vadd.f32 %v350, %v362
    %v421 = vadd.f32 %v351, %v362
    %v422 = vadd.f32 %v352, %v362
    %v423 = vadd.f32 %v353, %v362
    %v424 = vadd.f32 %v354, %v362
    %v425 = vadd.f32 %v355, %v362
    %v426 = vadd.f32 %v356, %v362
    %v427 = vadd.f32 %v357, %v362
    %v428 = vsub.f32 0.0, %v364
    %v429 = vsub.f32 0.0, %v365
    %v430 = vsub.f32 0.0, %v366
    %v431 = vsub.f32 0.0, %v367
    %v432 = vsub.f32 0.0, %v368
    %v433 = vsub.f32 0.0, %v369
    %v434 = vsub.f32 0.0, %v370
    %v435 = vsub.f32 0.0, %v371
    %v436 = vsub.f32 0.0, %v372
    %v437 = vsub.f32 0.0, %v373
    %v438 = vsub.f32 0.0, %v374
    %v439 = vsub.f32 0.0, %v375
    %v440 = vsub.f32 0.0, %v376
    %v441 = vsub.f32 0.0, %v377
    %v442 = vsub.f32 0.0, %v378
    %v443 = vsub.f32 0.0, %v379
    %v444 = vsub.f32 0.0, %v380
    %v445 = vsub.f32 0.0, %v381
    %v446 = vsub.f32 0.0, %v382
    %v447 = vsub.f32 0.0, %v383
    %v448 = vsub.f32 0.0, %v384
    %v449 = vsub.f32 0.0, %v385
    %v450 = vsub.f32 0.0, %v386
    %v451 = vsub.f32 0.0, %v387
    %v452 = vsub.f32 0.0, %v388
    %v453 = vsub.f32 0.0, %v389
    %v454 = vsub.f32 0.0, %v390
    %v455 = vsub.f32 0.0, %v391
    %v456 = vsub.f32 0.0, %v392
    %v457 = vsub.f32 0.0, %v393
    %v458 = vsub.f32 0.0, %v394
    %v459 = vsub.f32 0.0, %v395
    %v460 = vsub.f32 0.0, %v396
    %v461 = vsub.f32 0.0, %v397
    %v462 = vsub.f32 0.0, %v398
    %v463 = vsub.f32 0.0, %v399
    %v464 = vsub.f32 0.0, %v400
    %v465 = vsub.f32 0.0, %v401
    %v466 = vsub.f32 0.0, %v402
    %v467 = vsub.f32 0.0, %v403
    %v468 = vsub.f32 0.0, %v404
    %v469 = vsub.f32 0.0, %v405
    %v470 = vsub.f32 0.0, %v406
    %v471 = vsub.f32 0.0, %v407
    %v472 = vsub.f32 0.0, %v408
    %v473 = vsub.f32 0.0, %v409
    %v474 = vsub.f32 0.0, %v410
    %v475 = vsub.f32 0.0, %v411
    %v476 = vsub.f32 0.0, %v412
    %v477 = vsub.f32 0.0, %v413
    %v478 = vsub.f32 0.0, %v414
    %v479 = vsub.f32 0.0, %v415
    %v480 = vsub.f32 0.0, %v416
    %v481 = vsub.f32 0.0, %v417
    %v482 = vsub.f32 0.0, %v418
    %v483 = vsub.f32 0.0, %v419
    %v484 = vsub.f32 0.0, %v420
    %v485 = vsub.f32 0.0, %v421
    %v486 = vsub.f32 0.0, %v422
    %v487 = vsub.f32 0.0, %v423
    %v488 = vsub.f32 0.0, %v424
    %v489 = vsub.f32 0.0, %v425
    %v490 = vsub.f32 0.0, %v426
    %v491 = vsub.f32 0.0, %v427
    %v492 = vmul.f32 %v428, 1.442695
    %v493 = vpow.pop %v492
    %v494 = vmul.f32 %v429, 1.442695
    %v495 = vpow.pop %v494
    %v496 = vmul.f32 %v430, 1.442695
    %v497 = vpow.pop %v496
    %v498 = vmul.f32 %v431, 1.442695
    %v499 = vpow.pop %v498
    %v500 = vmul.f32 %v432, 1.442695
    %v501 = vpow.pop %v500
    %v502 = vmul.f32 %v433, 1.442695
    %v503 = vpow.pop %v502
    %v504 = vmul.f32 %v434, 1.442695
    %v505 = vpow.pop %v504
    %v506 = vmul.f32 %v435, 1.442695
    %v507 = vpow.pop %v506
    %v508 = vmul.f32 %v436, 1.442695
    %v509 = vpow.pop %v508
    %v510 = vmul.f32 %v437, 1.442695
    %v511 = vpow.pop %v510
    %v512 = vmul.f32 %v438, 1.442695
    %v513 = vpow.pop %v512
    %v514 = vmul.f32 %v439, 1.442695
    %v515 = vpow.pop %v514
    %v516 = vmul.f32 %v440, 1.442695
    %v517 = vpow.pop %v516
    %v518 = vmul.f32 %v441, 1.442695
    %v519 = vpow.pop %v518
    %v520 = vmul.f32 %v442, 1.442695
    %v521 = vpow.pop %v520
    %v522 = vmul.f32 %v443, 1.442695
    %v523 = vpow.pop %v522
    %v524 = vmul.f32 %v444, 1.442695
    %v525 = vpow.pop %v524
    %v526 = vmul.f32 %v445, 1.442695
    %v527 = vpow.pop %v526
    %v528 = vmul.f32 %v446, 1.442695
    %v529 = vpow.pop %v528
    %v530 = vmul.f32 %v447, 1.442695
    %v531 = vpow.pop %v530
    %v532 = vmul.f32 %v448, 1.442695
    %v533 = vpow.pop %v532
    %v534 = vmul.f32 %v449, 1.442695
    %v535 = vpow.pop %v534
    %v536 = vmul.f32 %v450, 1.442695
    %v537 = vpow.pop %v536
    %v538 = vmul.f32 %v451, 1.442695
    %v539 = vpow.pop %v538
    %v540 = vmul.f32 %v452, 1.442695
    %v541 = vpow.pop %v540
    %v542 = vmul.f32 %v453, 1.442695
    %v543 = vpow.pop %v542
    %v544 = vmul.f32 %v454, 1.442695
    %v545 = vpow.pop %v544
    %v546 = vmul.f32 %v455, 1.442695
    %v547 = vpow.pop %v546
    %v548 = vmul.f32 %v456, 1.442695
    %v549 = vpow.pop %v548
    %v550 = vmul.f32 %v457, 1.442695
    %v551 = vpow.pop %v550
    %v552 = vmul.f32 %v458, 1.442695
    %v553 = vpow.pop %v552
    %v554 = vmul.f32 %v459, 1.442695
    %v555 = vpow.pop %v554
    %v556 = vmul.f32 %v460, 1.442695
    %v557 = vpow.pop %v556
    %v558 = vmul.f32 %v461, 1.442695
    %v559 = vpow.pop %v558
    %v560 = vmul.f32 %v462, 1.442695
    %v561 = vpow.pop %v560
    %v562 = vmul.f32 %v463, 1.442695
    %v563 = vpow.pop %v562
    %v564 = vmul.f32 %v464, 1.442695
    %v565 = vpow.pop %v564
    %v566 = vmul.f32 %v465, 1.442695
    %v567 = vpow.pop %v566
    %v568 = vmul.f32 %v466, 1.442695
    %v569 = vpow.pop %v568
    %v570 = vmul.f32 %v467, 1.442695
    %v571 = vpow.pop %v570
    %v572 = vmul.f32 %v468, 1.442695
    %v573 = vpow.pop %v572
    %v574 = vmul.f32 %v469, 1.442695
    %v575 = vpow.pop %v574
    %v576 = vmul.f32 %v470, 1.442695
    %v577 = vpow.pop %v576
    %v578 = vmul.f32 %v471, 1.442695
    %v579 = vpow.pop %v578
    %v580 = vmul.f32 %v472, 1.442695
    %v581 = vpow.pop %v580
    %v582 = vmul.f32 %v473, 1.442695
    %v583 = vpow.pop %v582
    %v584 = vmul.f32 %v474, 1.442695
    %v585 = vpow.pop %v584
    %v586 = vmul.f32 %v475, 1.442695
    %v587 = vpow.pop %v586
    %v588 = vmul.f32 %v476, 1.442695
    %v589 = vpow.pop %v588
    %v590 = vmul.f32 %v477, 1.442695
    %v591 = vpow.pop %v590
    %v592 = vmul.f32 %v478, 1.442695
    %v593 = vpow.pop %v592
    %v594 = vmul.f32 %v479, 1.442695
    %v595 = vpow.pop %v594
    %v596 = vmul.f32 %v480, 1.442695
    %v597 = vpow.pop %v596
    %v598 = vmul.f32 %v481, 1.442695
    %v599 = vpow.pop %v598
    %v600 = vmul.f32 %v482, 1.442695
    %v601 = vpow.pop %v600
    %v602 = vmul.f32 %v483, 1.442695
    %v603 = vpow.pop %v602
    %v604 = vmul.f32 %v484, 1.442695
    %v605 = vpow.pop %v604
    %v606 = vmul.f32 %v485, 1.442695
    %v607 = vpow.pop %v606
    %v608 = vmul.f32 %v486, 1.442695
    %v609 = vpow.pop %v608
    %v610 = vmul.f32 %v487, 1.442695
    %v611 = vpow.pop %v610
    %v612 = vmul.f32 %v488, 1.442695
    %v613 = vpow.pop %v612
    %v614 = vmul.f32 %v489, 1.442695
    %v615 = vpow.pop %v614
    %v616 = vmul.f32 %v490, 1.442695
    %v617 = vpow.pop %v616
    %v618 = vmul.f32 %v491, 1.442695
    %v619 = vpow.pop %v618
    %v620 = vadd.f32 %v493, 1.0
    %v621 = vadd.f32 %v495, 1.0
    %v622 = vadd.f32 %v497, 1.0
    %v623 = vadd.f32 %v499, 1.0
    %v624 = vadd.f32 %v501, 1.0
    %v625 = vadd.f32 %v503, 1.0
    %v626 = vadd.f32 %v505, 1.0
    %v627 = vadd.f32 %v507, 1.0
    %v628 = vadd.f32 %v509, 1.0
    %v629 = vadd.f32 %v511, 1.0
    %v630 = vadd.f32 %v513, 1.0
    %v631 = vadd.f32 %v515, 1.0
    %v632 = vadd.f32 %v517, 1.0
    %v633 = vadd.f32 %v519, 1.0
    %v634 = vadd.f32 %v521, 1.0
    %v635 = vadd.f32 %v523, 1.0
    %v636 = vadd.f32 %v525, 1.0
    %v637 = vadd.f32 %v527, 1.0
    %v638 = vadd.f32 %v529, 1.0
    %v639 = vadd.f32 %v531, 1.0
    %v640 = vadd.f32 %v533, 1.0
    %v641 = vadd.f32 %v535, 1.0
    %v642 = vadd.f32 %v537, 1.0
    %v643 = vadd.f32 %v539, 1.0
    %v644 = vadd.f32 %v541, 1.0
    %v645 = vadd.f32 %v543, 1.0
    %v646 = vadd.f32 %v545, 1.0
    %v647 = vadd.f32 %v547, 1.0
    %v648 = vadd.f32 %v549, 1.0
    %v649 = vadd.f32 %v551, 1.0
    %v650 = vadd.f32 %v553, 1.0
    %v651 = vadd.f32 %v555, 1.0
    %v652 = vadd.f32 %v557, 1.0
    %v653 = vadd.f32 %v559, 1.0
    %v654 = vadd.f32 %v561, 1.0
    %v655 = vadd.f32 %v563, 1.0
    %v656 = vadd.f32 %v565, 1.0
    %v657 = vadd.f32 %v567, 1.0
    %v658 = vadd.f32 %v569, 1.0
    %v659 = vadd.f32 %v571, 1.0
    %v660 = vadd.f32 %v573, 1.0
    %v661 = vadd.f32 %v575, 1.0
    %v662 = vadd.f32 %v577, 1.0
    %v663 = vadd.f32 %v579, 1.0
    %v664 = vadd.f32 %v581, 1.0
    %v665 = vadd.f32 %v583, 1.0
    %v666 = vadd.f32 %v585, 1.0
    %v667 = vadd.f32 %v587, 1.0
    %v668 = vadd.f32 %v589, 1.0
    %v669 = vadd.f32 %v591, 1.0
    %v670 = vadd.f32 %v593, 1.0
    %v671 = vadd.f32 %v595, 1.0
    %v672 = vadd.f32 %v597, 1.0
    %v673 = vadd.f32 %v599, 1.0
    %v674 = vadd.f32 %v601, 1.0
    %v675 = vadd.f32 %v603, 1.0
    %v676 = vadd.f32 %v605, 1.0
    %v677 = vadd.f32 %v607, 1.0
    %v678 = vadd.f32 %v609, 1.0
    %v679 = vadd.f32 %v611, 1.0
    %v680 = vadd.f32 %v613, 1.0
    %v681 = vadd.f32 %v615, 1.0
    %v682 = vadd.f32 %v617, 1.0
    %v683 = vadd.f32 %v619, 1.0
    %v684 = vrcp.pop %v620
    %v685 = vrcp.pop %v621
    %v686 = vrcp.pop %v622
    %v687 = vrcp.pop %v623
    %v688 = vrcp.pop %v624
    %v689 = vrcp.pop %v625
    %v690 = vrcp.pop %v626
    %v691 = vrcp.pop %v627
    %v692 = vrcp.pop %v628
    %v693 = vrcp.pop %v629
    %v694 = vrcp.pop %v630
    %v695 = vrcp.pop %v631
    %v696 = vrcp.pop %v632
    %v697 = vrcp.pop %v633
    %v698 = vrcp.pop %v634
    %v699 = vrcp.pop %v635
    %v700 = vrcp.pop %v636
    %v701 = vrcp.pop %v637
    %v702 = vrcp.pop %v638
    %v703 = vrcp.pop %v639
    %v704 = vrcp.pop %v640
    %v705 = vrcp.pop %v641
    %v706 = vrcp.pop %v642
    %v707 = vrcp.pop %v643
    %v708 = vrcp.pop %v644
    %v709 = vrcp.pop %v645
    %v710 = vrcp.pop %v646
    %v711 = vrcp.pop %v647
    %v712 = vrcp.pop %v648
    %v713 = vrcp.pop %v649
    %v714 = vrcp.pop %v650
    %v715 = vrcp.pop %v651
    %v716 = vrcp.pop %v652
    %v717 = vrcp.pop %v653
    %v718 = vrcp.pop %v654
    %v719 = vrcp.pop %v655
    %v720 = vrcp.pop %v656
    %v721 = vrcp.pop %v657
    %v722 = vrcp.pop %v658
    %v723 = vrcp.pop %v659
    %v724 = vrcp.pop %v660
    %v725 = vrcp.pop %v661
    %v726 = vrcp.pop %v662
    %v727 = vrcp.pop %v663
    %v728 = vrcp.pop %v664
    %v729 = vrcp.pop %v665
    %v730 = vrcp.pop %v666
    %v731 = vrcp.pop %v667
    %v732 = vrcp.pop %v668
    %v733 = vrcp.pop %v669
    %v734 = vrcp.pop %v670
    %v735 = vrcp.pop %v671
    %v736 = vrcp.pop %v672
    %v737 = vrcp.pop %v673
    %v738 = vrcp.pop %v674
    %v739 = vrcp.pop %v675
    %v740 = vrcp.pop %v676
    %v741 = vrcp.pop %v677
    %v742 = vrcp.pop %v678
    %v743 = vrcp.pop %v679
    %v744 = vrcp.pop %v680
    %v745 = vrcp.pop %v681
    %v746 = vrcp.pop %v682
    %v747 = vrcp.pop %v683
    %v748 = vmul.f32 %v364, %v684
    %v749 = vmul.f32 %v365, %v685
    %v750 = vmul.f32 %v366, %v686
    %v751 = vmul.f32 %v367, %v687
    %v752 = vmul.f32 %v368, %v688
    %v753 = vmul.f32 %v369, %v689
    %v754 = vmul.f32 %v370, %v690
    %v755 = vmul.f32 %v371, %v691
    %v756 = vmul.f32 %v372, %v692
    %v757 = vmul.f32 %v373, %v693
    %v758 = vmul.f32 %v374, %v694
    %v759 = vmul.f32 %v375, %v695
    %v760 = vmul.f32 %v376, %v696
    %v761 = vmul.f32 %v377, %v697
    %v762 = vmul.f32 %v378, %v698
    %v763 = vmul.f32 %v379, %v699
    %v764 = vmul.f32 %v380, %v700
    %v765 = vmul.f32 %v381, %v701
    %v766 = vmul.f32 %v382, %v702
    %v767 = vmul.f32 %v383, %v703
    %v768 = vmul.f32 %v384, %v704
    %v769 = vmul.f32 %v385, %v705
    %v770 = vmul.f32 %v386, %v706
    %v771 = vmul.f32 %v387, %v707
    %v772 = vmul.f32 %v388, %v708
    %v773 = vmul.f32 %v389, %v709
    %v774 = vmul.f32 %v390, %v710
    %v775 = vmul.f32 %v391, %v711
    %v776 = vmul.f32 %v392, %v712
    %v777 = vmul.f32 %v393, %v713
    %v778 = vmul.f32 %v394, %v714
    %v779 = vmul.f32 %v395, %v715
    %v780 = vmul.f32 %v396, %v716
    %v781 = vmul.f32 %v397, %v717
    %v782 = vmul.f32 %v398, %v718
    %v783 = vmul.f32 %v399, %v719
    %v784 = vmul.f32 %v400, %v720
    %v785 = vmul.f32 %v401, %v721
    %v786 = vmul.f32 %v402, %v722
    %v787 = vmul.f32 %v403, %v723
    %v788 = vmul.f32 %v404, %v724
    %v789 = vmul.f32 %v405, %v725
    %v790 = vmul.f32 %v406, %v726
    %v791 = vmul.f32 %v407, %v727
    %v792 = vmul.f32 %v408, %v728
    %v793 = vmul.f32 %v409, %v729
    %v794 = vmul.f32 %v410, %v730
    %v795 = vmul.f32 %v411, %v731
    %v796 = vmul.f32 %v412, %v732
    %v797 = vmul.f32 %v413, %v733
    %v798 = vmul.f32 %v414, %v734
    %v799 = vmul.f32 %v415, %v735
    %v800 = vmul.f32 %v416, %v736
    %v801 = vmul.f32 %v417, %v737
    %v802 = vmul.f32 %v418, %v738
    %v803 = vmul.f32 %v419, %v739
    %v804 = vmul.f32 %v420, %v740
    %v805 = vmul.f32 %v421, %v741
    %v806 = vmul.f32 %v422, %v742
    %v807 = vmul.f32 %v423, %v743
    %v808 = vmul.f32 %v424, %v744
    %v809 = vmul.f32 %v425, %v745
    %v810 = vmul.f32 %v426, %v746
    %v811 = vmul.f32 %v427, %v747
    %812 = vst [vmem:[#allocation11] sm:$0xff] %v748
    %813 = vst [vmem:[#allocation11 + $0x8] sm:$0xff] %v749
    %814 = vst [vmem:[#allocation11 + $0x10] sm:$0xff] %v750
    %815 = vst [vmem:[#allocation11 + $0x18] sm:$0xff] %v751
    %816 = vst [vmem:[#allocation11 + $0x20] sm:$0xff] %v752
    %817 = vst [vmem:[#allocation11 + $0x28] sm:$0xff] %v753
    %818 = vst [vmem:[#allocation11 + $0x30] sm:$0xff] %v754
    %819 = vst [vmem:[#allocation11 + $0x38] sm:$0xff] %v755
    %820 = vst [vmem:[#allocation11 + $0x40] sm:$0xff] %v756
    %821 = vst [vmem:[#allocation11 + $0x48] sm:$0xff] %v757
    %822 = vst [vmem:[#allocation11 + $0x50] sm:$0xff] %v758
    %823 = vst [vmem:[#allocation11 + $0x58] sm:$0xff] %v759
    %824 = vst [vmem:[#allocation11 + $0x60] sm:$0xff] %v760
    %825 = vst [vmem:[#allocation11 + $0x68] sm:$0xff] %v761
    %826 = vst [vmem:[#allocation11 + $0x70] sm:$0xff] %v762
    %827 = vst [vmem:[#allocation11 + $0x78] sm:$0xff] %v763
    %828 = vst [vmem:[#allocation11 + $0x80] sm:$0xff] %v764
    %829 = vst [vmem:[#allocation11 + $0x88] sm:$0xff] %v765
    %830 = vst [vmem:[#allocation11 + $0x90] sm:$0xff] %v766
    %831 = vst [vmem:[#allocation11 + $0x98] sm:$0xff] %v767
    %832 = vst [vmem:[#allocation11 + $0xa0] sm:$0xff] %v768
    %833 = vst [vmem:[#allocation11 + $0xa8] sm:$0xff] %v769
    %834 = vst [vmem:[#allocation11 + $0xb0] sm:$0xff] %v770
    %835 = vst [vmem:[#allocation11 + $0xb8] sm:$0xff] %v771
    %836 = vst [vmem:[#allocation11 + $0xc0] sm:$0xff] %v772
    %837 = vst [vmem:[#allocation11 + $0xc8] sm:$0xff] %v773
    %838 = vst [vmem:[#allocation11 + $0xd0] sm:$0xff] %v774
    %839 = vst [vmem:[#allocation11 + $0xd8] sm:$0xff] %v775
    %840 = vst [vmem:[#allocation11 + $0xe0] sm:$0xff] %v776
    %841 = vst [vmem:[#allocation11 + $0xe8] sm:$0xff] %v777
    %842 = vst [vmem:[#allocation11 + $0xf0] sm:$0xff] %v778
    %843 = vst [vmem:[#allocation11 + $0xf8] sm:$0xff] %v779
    %844 = vst [vmem:[#allocation11 + $0x100] sm:$0xff] %v780
    %845 = vst [vmem:[#allocation11 + $0x108] sm:$0xff] %v781
    %846 = vst [vmem:[#allocation11 + $0x110] sm:$0xff] %v782
    %847 = vst [vmem:[#allocation11 + $0x118] sm:$0xff] %v783
    %848 = vst [vmem:[#allocation11 + $0x120] sm:$0xff] %v784
    %849 = vst [vmem:[#allocation11 + $0x128] sm:$0xff] %v785
    %850 = vst [vmem:[#allocation11 + $0x130] sm:$0xff] %v786
    %851 = vst [vmem:[#allocation11 + $0x138] sm:$0xff] %v787
    %852 = vst [vmem:[#allocation11 + $0x140] sm:$0xff] %v788
    %853 = vst [vmem:[#allocation11 + $0x148] sm:$0xff] %v789
    %854 = vst [vmem:[#allocation11 + $0x150] sm:$0xff] %v790
    %855 = vst [vmem:[#allocation11 + $0x158] sm:$0xff] %v791
    %856 = vst [vmem:[#allocation11 + $0x160] sm:$0xff] %v792
    %857 = vst [vmem:[#allocation11 + $0x168] sm:$0xff] %v793
    %858 = vst [vmem:[#allocation11 + $0x170] sm:$0xff] %v794
    %859 = vst [vmem:[#allocation11 + $0x178] sm:$0xff] %v795
    %860 = vst [vmem:[#allocation11 + $0x180] sm:$0xff] %v796
    %861 = vst [vmem:[#allocation11 + $0x188] sm:$0xff] %v797
    %862 = vst [vmem:[#allocation11 + $0x190] sm:$0xff] %v798
    %863 = vst [vmem:[#allocation11 + $0x198] sm:$0xff] %v799
    %864 = vst [vmem:[#allocation11 + $0x1a0] sm:$0xff] %v800
    %865 = vst [vmem:[#allocation11 + $0x1a8] sm:$0xff] %v801
    %866 = vst [vmem:[#allocation11 + $0x1b0] sm:$0xff] %v802
    %867 = vst [vmem:[#allocation11 + $0x1b8] sm:$0xff] %v803
    %868 = vst [vmem:[#allocation11 + $0x1c0] sm:$0xff] %v804
    %869 = vst [vmem:[#allocation11 + $0x1c8] sm:$0xff] %v805
    %870 = vst [vmem:[#allocation11 + $0x1d0] sm:$0xff] %v806
    %871 = vst [vmem:[#allocation11 + $0x1d8] sm:$0xff] %v807
    %872 = vst [vmem:[#allocation11 + $0x1e0] sm:$0xff] %v808
    %873 = vst [vmem:[#allocation11 + $0x1e8] sm:$0xff] %v809
    %874 = vst [vmem:[#allocation11 + $0x1f0] sm:$0xff] %v810
    %875 = vst [vmem:[#allocation11 + $0x1f8] sm:$0xff] %v811
    // Predicated region
    $region42: #{residual_block_forward.5} parent=1 // pred_check
      _
    $region43: #{residual_block_forward.5} parent=1 // pred_check_branch
      %877 = sbr.rel (0) target = $region45
    $region44: #{residual_block_forward.5} parent=1 // pred_region
      %s879 = ssub.s32 8192, 8192
      %880 = vsyncadd [#allocation4], %s879
      %s881 = sshll.u32 [#allocation11], 4
      %s882 = int_to_ptr.vmem [resolvable:$true] %s881
      %887 = dma.vmem_to_hbm [thread:$0]  %s882, 8192, %s5, [#allocation4], 128, 128, 8
    $region45: #{residual_block_forward.5} parent=1 // pred_fallthru
      _
    // Predicated region
    $region46: #{residual_block_forward.5} parent=1 // pred_check
      _
    $region47: #{residual_block_forward.5} parent=1 // pred_check_branch
      %889 = sbr.rel (0) target = $region49
    $region48: #{residual_block_forward.5} parent=1 // pred_region
      %890 = dma.done [#allocation4], 8192
    $region49: #{residual_block_forward.5} parent=1 // pred_fallthru
      _
    %891 = vsyncpa [#allocation3], 1
    %892 = vsyncpa [#allocation6], 1
    %893 = vsyncpa [#allocation9], 1
    %894 = vsyncpa [#allocation4], 1

// kernel: residual_block_forward.4
$region0: #{residual_block_forward.4}
  #allocation0 [shape = 'u32[]', space=smem, size = 0x4, offset = 0x4, fixed_abs, tag = 'smem constant byte address 0x4 - core index']
  #allocation1 [shape = 'u32[144,128]{1,0:T(1,128)}', space=vmem, size = 0x12000, scoped, tag = 'internal scratch']
  #allocation2 [shape = 'f32[18,18,128]{2,1,0:T(8,128)}', space=vmem, size = 0x36000, scoped, tag = 'scratch operand']
  #allocation3 [shape = 'f32[256,128]{1,0:T(8,128)}', space=vmem, size = 0x20000, scoped, tag = 'scratch operand']
  %s0 = inlined_call_operand.hbm [shape: f32[2,16,16,128], index: 0, kind: input, shape index: {}, may-alias: {0,1,2}]
  %s1 = inlined_call_operand.hbm [shape: f32[2,16,16,128], index: 1, kind: input, shape index: {}, may-alias: {0,1,2}]
  %s2 = inlined_call_operand.hbm [shape: f32[2,16,16,128], index: 2, kind: input, shape index: {}, may-alias: {0,1,2}]
  %s3 = inlined_call_operand.hbm [shape: f32[2,128], index: 3, kind: input, shape index: {}]
  %s4 = inlined_call_operand.hbm [shape: f32[1,128], index: 4, kind: input, shape index: {}]
  %s5 = inlined_call_operand.hbm [shape: f32[1,128], index: 5, kind: input, shape index: {}]
  %s6 = inlined_call_operand.hbm [shape: f32[9,128,128], index: 6, kind: input, shape index: {}]
  %s7 = inlined_call_operand.hbm [shape: f32[2,256,128], index: 7, kind: output, shape index: {0}]
  %s8 = inlined_call_operand.hbm [shape: f32[2,2,128], index: 8, kind: output, shape index: {1}]
  %9 = xla_tuple %s7, %s8
  %s10 = sld [smem:[#allocation0]]
  $region113: #{residual_block_forward.4} parent=0
    _
  %s12 = ssub.s32 1, %s10
  %s13 = scalar_select 0, %s12, %s10
  $region1: #{residual_block_forward.4} parent=0
    #allocation4 [shape = 'u8[262144]{0}', space=vmem, size = 0x40000, scoped, tag = 'input window, operand 0']
    #allocation5 [shape = 's32[2]{0}', space=sflag, size = 0x8, scoped, tag = 'scoped memory for residual_block_forward.4']
    #allocation6 [shape = 's32[2]{0}', space=sflag, size = 0x8, scoped, tag = 'scoped memory for residual_block_forward.4']
    #allocation7 [shape = 'u8[16384]{0}', space=vmem, size = 0x4000, scoped, tag = 'input window, operand 1']
    #allocation8 [shape = 's32[2]{0}', space=sflag, size = 0x8, scoped, tag = 'scoped memory for residual_block_forward.4']
    #allocation9 [shape = 'u8[16384]{0}', space=vmem, size = 0x4000, scoped, tag = 'input window, operand 2']
    #allocation10 [shape = 'u8[1024]{0}', space=vmem, size = 0x400, scoped, tag = 'input window, operand 3, single buffered']
    #allocation11 [shape = 's32[1]{0}', space=sflag, size = 0x4, scoped, tag = 'scoped memory for residual_block_forward.4']
    #allocation12 [shape = 'u8[512]{0}', space=vmem, size = 0x400, scoped, tag = 'input window, operand 4, single buffered']
    #allocation13 [shape = 'u8[512]{0}', space=vmem, size = 0x400, scoped, tag = 'input window, operand 5, single buffered']
    #allocation14 [shape = 's32[1]{0}', space=sflag, size = 0x4, scoped, tag = 'scoped memory for residual_block_forward.4']
    #allocation15 [shape = 'u8[589824]{0}', space=vmem, size = 0x90000, scoped, tag = 'input window, operand 6, single buffered']
    #allocation16 [shape = 'u8[262144]{0}', space=vmem, size = 0x40000, scoped, tag = 'output window, operand 0']
    #allocation17 [shape = 'u8[2048]{0}', space=vmem, size = 0x800, scoped, tag = 'output window, operand 1']
    #allocation18 [shape = 's32[2]{0}', space=sflag, size = 0x8, scoped, tag = 'scoped memory for residual_block_forward.4']
    %14 = vsyncpa [#allocation5], 0
    %s15 = scalar_lea.sflag [#allocation5], 1
    %16 = vsyncpa %s15, 0
    %17 = vsyncpa [#allocation8], 0
    %s18 = scalar_lea.sflag [#allocation8], 1
    %19 = vsyncpa %s18, 0
    %20 = vsyncpa [#allocation11], 0
    %21 = vsyncpa [#allocation14], 0
    %22 = vsyncpa [#allocation6], 0
    %s23 = scalar_lea.sflag [#allocation6], 1
    %24 = vsyncpa %s23, 0
    %25 = vsyncpa [#allocation18], 0
    %s26 = scalar_lea.sflag [#allocation18], 1
    %27 = vsyncpa %s26, 0
    loop: start=0, step=1, limit=4
    $region2: #{residual_block_forward.4} parent=1 // loop_pre_header
      _
    $region3: #{residual_block_forward.4} parent=1 // loop_header
      %s29 = sphi 0, %s33
      %p30 = scmp.ge.s32.totalorder %s29, 4
      %s36 = sphi 0, %s48
      %s37 = sphi 0, %s44
      %s38 = sphi 0, %s36
      %s39 = sphi 0, %s37
      %s40 = sphi 0, %s38
      %s41 = sphi 0, %s39
      %s53 = sphi 0, %s55
      %s56 = sphi 0, %s53
      %s57 = sphi 0, %s56
      %s73 = sphi 0, %s57
      %s89 = sphi 0, %s91
      %s92 = sphi 0, %s89
      %s93 = sphi 0, %s92
      %s109 = sphi 0, %s93
      %s125 = sphi 0, %s127
      %s128 = sphi 0, %s125
      %s129 = sphi 0, %s128
      %s145 = sphi 0, %s129
      %s149 = sphi 0, %s149
      %s151 = sphi 0, %s149
      %s152 = sphi 0, %s151
      %s166 = sphi 0, %s152
      %s170 = sphi 0, %s170
      %s172 = sphi 0, %s170
      %s173 = sphi 0, %s172
      %s187 = sphi 0, %s173
      %s191 = sphi 0, %s191
      %s193 = sphi 0, %s191
      %s194 = sphi 0, %s193
      %s208 = sphi 0, %s194
      %s212 = sphi 0, %s212
      %s214 = sphi 0, %s212
      %s215 = sphi 0, %s214
      %s229 = sphi 0, %s215
      %s237 = sphi 0, %s239
      %s240 = sphi 0, %s237
      %s241 = sphi 0, %s240
      %s257 = sphi 0, %s241
      %s265 = sphi 0, %s267
      %s268 = sphi 0, %s265
      %s269 = sphi 0, %s268
      %s285 = sphi 0, %s269
    $region4: #{residual_block_forward.4} parent=1 // loop_header_branch
      %32 = sbr.rel (%p30) target = $region8
    $region5: #{residual_block_forward.4} parent=1 // loop_body
      %s34 = ssub.s32 %s29, 1
      %s35 = ssub.s32 %s29, 2
      %s42 = sadd.s32 1, %s37
      %p43 = scmp.ge.s32.totalorder %s42, 1
      %s44 = scalar_select %p43, 0, %s42
      %s45 = sadd.s32 1, %s36
      %s46 = scalar_select %p43, %s45, %s36
      %p47 = scmp.ge.s32.totalorder %s46, 2
      %s48 = scalar_select %p47, 0, %s46
      %s49 = ssub.s32 %s36, %s48
      %s50 = ssub.s32 %s37, %s44
      %s51 = sor.u32 %s49, %s50
      %p52 = scmp.eq.s32.totalorder %s51, 0
      %s54 = sadd.s32 %s53, 1
      %s55 = scalar_select %p52, %s53, %s54
      %p58 = pneg %p52
      %p59 = scmp.eq.s32.totalorder %s29, 1
      %p60 = por %p58, %p59
      %p61 = scmp.ne.s32.totalorder %s53, %s56
      %p62 = scmp.eq.s32.totalorder %s29, 0
      %p63 = por %p61, %p62
      %p64 = scmp.ne.s32.totalorder %s53, %s56
      %p65 = scmp.eq.s32.totalorder %s34, 1
      %p66 = por %p64, %p65
      %p67 = scmp.ne.s32.totalorder %s56, %s57
      %p68 = scmp.eq.s32.totalorder %s34, 0
      %p69 = por %p67, %p68
      %p70 = scmp.ne.s32.totalorder %s56, %s57
      %p71 = scmp.eq.s32.totalorder %s35, 1
      %p72 = por %p70, %p71
      %p74 = scmp.ne.s32.totalorder %s57, %s73
      %p75 = scmp.eq.s32.totalorder %s35, 0
      %p76 = por %p74, %p75
      %s77 = smul.u32 %s37, 16
      %s78 = ssub.s32 %s77, 1
      %p79 = scmp.gt.s32.totalorder %s78, 0
      %s80 = scalar_select %p79, %s78, 0
      %s81 = smul.u32 %s44, 16
      %s82 = ssub.s32 %s81, 1
      %p83 = scmp.gt.s32.totalorder %s82, 0
      %s84 = scalar_select %p83, %s82, 0
      %s85 = ssub.s32 %s36, %s48
      %s86 = ssub.s32 %s80, %s84
      %s87 = sor.u32 %s85, %s86
      %p88 = scmp.eq.s32.totalorder %s87, 0
      %s90 = sadd.s32 %s89, 1
      %s91 = scalar_select %p88, %s89, %s90
      %p94 = pneg %p88
      %p95 = scmp.eq.s32.totalorder %s29, 1
      %p96 = por %p94, %p95
      %p97 = scmp.ne.s32.totalorder %s89, %s92
      %p98 = scmp.eq.s32.totalorder %s29, 0
      %p99 = por %p97, %p98
      %p100 = scmp.ne.s32.totalorder %s89, %s92
      %p101 = scmp.eq.s32.totalorder %s34, 1
      %p102 = por %p100, %p101
      %p103 = scmp.ne.s32.totalorder %s92, %s93
      %p104 = scmp.eq.s32.totalorder %s34, 0
      %p105 = por %p103, %p104
      %p106 = scmp.ne.s32.totalorder %s92, %s93
      %p107 = scmp.eq.s32.totalorder %s35, 1
      %p108 = por %p106, %p107
      %p110 = scmp.ne.s32.totalorder %s93, %s109
      %p111 = scmp.eq.s32.totalorder %s35, 0
      %p112 = por %p110, %p111
      %s113 = smul.u32 %s37, 16
      %s114 = sadd.s32 %s113, 16
      %p115 = scmp.lt.s32.totalorder %s114, 15
      %s116 = scalar_select %p115, %s114, 15
      %s117 = smul.u32 %s44, 16
      %s118 = sadd.s32 %s117, 16
      %p119 = scmp.lt.s32.totalorder %s118, 15
      %s120 = scalar_select %p119, %s118, 15
      %s121 = ssub.s32 %s36, %s48
      %s122 = ssub.s32 %s116, %s120
      %s123 = sor.u32 %s121, %s122
      %p124 = scmp.eq.s32.totalorder %s123, 0
      %s126 = sadd.s32 %s125, 1
      %s127 = scalar_select %p124, %s125, %s126
      %p130 = pneg %p124
      %p131 = scmp.eq.s32.totalorder %s29, 1
      %p132 = por %p130, %p131
      %p133 = scmp.ne.s32.totalorder %s125, %s128
      %p134 = scmp.eq.s32.totalorder %s29, 0
      %p135 = por %p133, %p134
      %p136 = scmp.ne.s32.totalorder %s125, %s128
      %p137 = scmp.eq.s32.totalorder %s34, 1
      %p138 = por %p136, %p137
      %p139 = scmp.ne.s32.totalorder %s128, %s129
      %p140 = scmp.eq.s32.totalorder %s34, 0
      %p141 = por %p139, %p140
      %p142 = scmp.ne.s32.totalorder %s128, %s129
      %p143 = scmp.eq.s32.totalorder %s35, 1
      %p144 = por %p142, %p143
      %p146 = scmp.ne.s32.totalorder %s129, %s145
      %p147 = scmp.eq.s32.totalorder %s35, 0
      %p148 = por %p146, %p147
      %s150 = sadd.s32 %s149, 1
      %p153 = scmp.eq.s32.totalorder %s29, 1
      %p154 = scmp.ne.s32.totalorder %s149, %s151
      %p155 = scmp.eq.s32.totalorder %s29, 0
      %p156 = por %p154, %p155
      %p157 = scmp.ne.s32.totalorder %s149, %s151
      %p158 = scmp.eq.s32.totalorder %s34, 1
      %p159 = por %p157, %p158
      %p160 = scmp.ne.s32.totalorder %s151, %s152
      %p161 = scmp.eq.s32.totalorder %s34, 0
      %p162 = por %p160, %p161
      %p163 = scmp.ne.s32.totalorder %s151, %s152
      %p164 = scmp.eq.s32.totalorder %s35, 1
      %p165 = por %p163, %p164
      %p167 = scmp.ne.s32.totalorder %s152, %s166
      %p168 = scmp.eq.s32.totalorder %s35, 0
      %p169 = por %p167, %p168
      %s171 = sadd.s32 %s170, 1
      %p174 = scmp.eq.s32.totalorder %s29, 1
      %p175 = scmp.ne.s32.totalorder %s170, %s172
      %p176 = scmp.eq.s32.totalorder %s29, 0
      %p177 = por %p175, %p176
      %p178 = scmp.ne.s32.totalorder %s170, %s172
      %p179 = scmp.eq.s32.totalorder %s34, 1
      %p180 = por %p178, %p179
      %p181 = scmp.ne.s32.totalorder %s172, %s173
      %p182 = scmp.eq.s32.totalorder %s34, 0
      %p183 = por %p181, %p182
      %p184 = scmp.ne.s32.totalorder %s172, %s173
      %p185 = scmp.eq.s32.totalorder %s35, 1
      %p186 = por %p184, %p185
      %p188 = scmp.ne.s32.totalorder %s173, %s187
      %p189 = scmp.eq.s32.totalorder %s35, 0
      %p190 = por %p188, %p189
      %s192 = sadd.s32 %s191, 1
      %p195 = scmp.eq.s32.totalorder %s29, 1
      %p196 = scmp.ne.s32.totalorder %s191, %s193
      %p197 = scmp.eq.s32.totalorder %s29, 0
      %p198 = por %p196, %p197
      %p199 = scmp.ne.s32.totalorder %s191, %s193
      %p200 = scmp.eq.s32.totalorder %s34, 1
      %p201 = por %p199, %p200
      %p202 = scmp.ne.s32.totalorder %s193, %s194
      %p203 = scmp.eq.s32.totalorder %s34, 0
      %p204 = por %p202, %p203
      %p205 = scmp.ne.s32.totalorder %s193, %s194
      %p206 = scmp.eq.s32.totalorder %s35, 1
      %p207 = por %p205, %p206
      %p209 = scmp.ne.s32.totalorder %s194, %s208
      %p210 = scmp.eq.s32.totalorder %s35, 0
      %p211 = por %p209, %p210
      %s213 = sadd.s32 %s212, 1
      %p216 = scmp.eq.s32.totalorder %s29, 1
      %p217 = scmp.ne.s32.totalorder %s212, %s214
      %p218 = scmp.eq.s32.totalorder %s29, 0
      %p219 = por %p217, %p218
      %p220 = scmp.ne.s32.totalorder %s212, %s214
      %p221 = scmp.eq.s32.totalorder %s34, 1
      %p222 = por %p220, %p221
      %p223 = scmp.ne.s32.totalorder %s214, %s215
      %p224 = scmp.eq.s32.totalorder %s34, 0
      %p225 = por %p223, %p224
      %p226 = scmp.ne.s32.totalorder %s214, %s215
      %p227 = scmp.eq.s32.totalorder %s35, 1
      %p228 = por %p226, %p227
      %p230 = scmp.ne.s32.totalorder %s215, %s229
      %p231 = scmp.eq.s32.totalorder %s35, 0
      %p232 = por %p230, %p231
      %s233 = ssub.s32 %s36, %s48
      %s234 = ssub.s32 %s37, %s44
      %s235 = sor.u32 %s233, %s234
      %p236 = scmp.eq.s32.totalorder %s235, 0
      %s238 = sadd.s32 %s237, 1
      %s239 = scalar_select %p236, %s237, %s238
      %p242 = pneg %p236
      %p243 = scmp.eq.s32.totalorder %s29, 1
      %p244 = por %p242, %p243
      %p245 = scmp.ne.s32.totalorder %s237, %s240
      %p246 = scmp.eq.s32.totalorder %s29, 0
      %p247 = por %p245, %p246
      %p248 = scmp.ne.s32.totalorder %s237, %s240
      %p249 = scmp.eq.s32.totalorder %s34, 1
      %p250 = por %p248, %p249
      %p251 = scmp.ne.s32.totalorder %s240, %s241
      %p252 = scmp.eq.s32.totalorder %s34, 0
      %p253 = por %p251, %p252
      %p254 = scmp.ne.s32.totalorder %s240, %s241
      %p255 = scmp.eq.s32.totalorder %s35, 1
      %p256 = por %p254, %p255
      %p258 = scmp.ne.s32.totalorder %s241, %s257
      %p259 = scmp.eq.s32.totalorder %s35, 0
      %p260 = por %p258, %p259
      %s261 = sadd.s32 %s36, %s37
      %s262 = sadd.s32 %s48, %s44
      %s263 = ssub.s32 %s261, %s262
      %p264 = scmp.eq.s32.totalorder %s263, 0
      %s266 = sadd.s32 %s265, 1
      %s267 = scalar_select %p264, %s265, %s266
      %p270 = pneg %p264
      %p271 = scmp.eq.s32.totalorder %s29, 1
      %p272 = por %p270, %p271
      %p273 = scmp.ne.s32.totalorder %s265, %s268
      %p274 = scmp.eq.s32.totalorder %s29, 0
      %p275 = por %p273, %p274
      %p276 = scmp.ne.s32.totalorder %s265, %s268
      %p277 = scmp.eq.s32.totalorder %s34, 1
      %p278 = por %p276, %p277
      %p279 = scmp.ne.s32.totalorder %s268, %s269
      %p280 = scmp.eq.s32.totalorder %s34, 0
      %p281 = por %p279, %p280
      %p282 = scmp.ne.s32.totalorder %s268, %s269
      %p283 = scmp.eq.s32.totalorder %s35, 1
      %p284 = por %p282, %p283
      %p286 = scmp.ne.s32.totalorder %s269, %s285
      %p287 = scmp.eq.s32.totalorder %s35, 0
      %p288 = por %p286, %p287
      %p289 = scmp.le.s32.totalorder 1, %s29
      %p290 = scmp.lt.s32.totalorder %s29, 3
      %p291 = pnand %p289, %p290
      %p292 = pneg %p291
      // Predicated region
      $region9: #{residual_block_forward.4} parent=5 // pred_check
        _
      $region10: #{residual_block_forward.4} parent=5 // pred_check_branch
        %294 = sbr.rel (%p291) target = $region12
      $region11: #{residual_block_forward.4} parent=5 // pred_region
        %s295 = ssub.s32 %s29, 1
        // Predicated region
        $region13: #{residual_block_forward.4} parent=11 // pred_check
          %p296 = pneg %p162
        $region14: #{residual_block_forward.4} parent=11 // pred_check_branch
          %298 = sbr.rel (%p296) target = $region16
        $region15: #{residual_block_forward.4} parent=11 // pred_region
          %s300 = ssub.s32 32, 32
          %301 = vsyncadd [#allocation11], %s300
          %s303 = sshll.u32 [#allocation10], 4
          %s304 = int_to_ptr.vmem [resolvable:$true] %s303
          %306 = dma.hbm_to_vmem [thread:$0]  %s3, 32, %s304, [#allocation11]
        $region16: #{residual_block_forward.4} parent=11 // pred_fallthru
          _
        // Predicated region
        $region17: #{residual_block_forward.4} parent=11 // pred_check
          %p307 = pneg %p183
        $region18: #{residual_block_forward.4} parent=11 // pred_check_branch
          %309 = sbr.rel (%p307) target = $region20
        $region19: #{residual_block_forward.4} parent=11 // pred_region
          %s311 = ssub.s32 16, 16
          %312 = vsyncadd [#allocation11], %s311
          %s314 = sshll.u32 [#allocation12], 4
          %s315 = int_to_ptr.vmem [resolvable:$true] %s314
          %317 = dma.hbm_to_vmem [thread:$0]  %s4, 16, %s315, [#allocation11]
        $region20: #{residual_block_forward.4} parent=11 // pred_fallthru
          _
        // Predicated region
        $region21: #{residual_block_forward.4} parent=11 // pred_check
          %p318 = pneg %p204
        $region22: #{residual_block_forward.4} parent=11 // pred_check_branch
          %320 = sbr.rel (%p318) target = $region24
        $region23: #{residual_block_forward.4} parent=11 // pred_region
          %s322 = ssub.s32 16, 16
          %323 = vsyncadd [#allocation14], %s322
          %s325 = sshll.u32 [#allocation13], 4
          %s326 = int_to_ptr.vmem [resolvable:$true] %s325
          %328 = dma.hbm_to_vmem [thread:$0]  %s5, 16, %s326, [#allocation14]
        $region24: #{residual_block_forward.4} parent=11 // pred_fallthru
          _
        // Predicated region
        $region25: #{residual_block_forward.4} parent=11 // pred_check
          %p329 = pneg %p225
        $region26: #{residual_block_forward.4} parent=11 // pred_check_branch
          %331 = sbr.rel (%p329) target = $region28
        $region27: #{residual_block_forward.4} parent=11 // pred_region
          %s333 = ssub.s32 18432, 18432
          %334 = vsyncadd [#allocation14], %s333
          %s335 = sshll.u32 [#allocation15], 4
          %s336 = int_to_ptr.vmem [resolvable:$true] %s335
          %341 = dma.hbm_to_vmem [thread:$0]  %s6, 18432, %s336, [#allocation14], 128, 128, 8
        $region28: #{residual_block_forward.4} parent=11 // pred_fallthru
          _
      $region12: #{residual_block_forward.4} parent=5 // pred_fallthru
        _
      %p342 = scmp.lt.s32.totalorder %s29, 2
      // Predicated region
      $region29: #{residual_block_forward.4} parent=5 // pred_check
        %p343 = pneg %p342
      $region30: #{residual_block_forward.4} parent=5 // pred_check_branch
        %345 = sbr.rel (%p343) target = $region32
      $region31: #{residual_block_forward.4} parent=5 // pred_region
        // Predicated region
        $region33: #{residual_block_forward.4} parent=31 // pred_check
          %p346 = pneg %p63
        $region34: #{residual_block_forward.4} parent=31 // pred_check_branch
          %348 = sbr.rel (%p346) target = $region36
        $region35: #{residual_block_forward.4} parent=31 // pred_region
          %s349 = sand.u32 %s53, 1
          %s350 = scalar_lea.sflag [#allocation5], %s349
          %s351 = sand.u32 %s53, 1
          %s352 = smul.addr %s351, 256
          %s353 = scalar_lea.vmem [#allocation4], %s352
          %s354 = smul.u32 16, %s37
          %s356 = ssub.s32 4096, 4096
          %357 = vsyncadd %s350, %s356
          %s358 = smul.addr %s354, 2
          %s359 = smul.addr %s36, 32
          %s360 = sadd.s32 %s358, %s359
          %s361 = smul.addr %s360, 128
          %s362 = scalar_lea.hbm %s0, %s361
          %s363 = sshll.u32 %s353, 4
          %s364 = int_to_ptr.vmem [resolvable:$true] %s363
          %369 = dma.hbm_to_vmem [thread:$0]  %s362, 4096, %s364, %s350, 128, 128, 8
        $region36: #{residual_block_forward.4} parent=31 // pred_fallthru
          _
        // Predicated region
        $region37: #{residual_block_forward.4} parent=31 // pred_check
          %p370 = pneg %p99
        $region38: #{residual_block_forward.4} parent=31 // pred_check_branch
          %372 = sbr.rel (%p370) target = $region40
        $region39: #{residual_block_forward.4} parent=31 // pred_region
          %s373 = sand.u32 %s29, 1
          %s374 = scalar_lea.sflag [#allocation8], %s373
          %s375 = sand.u32 %s89, 1
          %s376 = smul.addr %s375, 16
          %s377 = scalar_lea.vmem [#allocation7], %s376
          %s378 = smul.u32 %s37, 16
          %s379 = ssub.s32 %s378, 1
          %p380 = scmp.gt.s32.totalorder %s379, 0
          %s381 = scalar_select %p380, %s379, 0
          %s383 = ssub.s32 256, 256
          %384 = vsyncadd %s374, %s383
          %s385 = smul.addr %s381, 2
          %s386 = smul.addr %s36, 32
          %s387 = sadd.s32 %s385, %s386
          %s388 = smul.addr %s387, 128
          %s389 = scalar_lea.hbm %s1, %s388
          %s390 = sshll.u32 %s377, 4
          %s391 = int_to_ptr.vmem [resolvable:$true] %s390
          %396 = dma.hbm_to_vmem [thread:$0]  %s389, 256, %s391, %s374, 128, 128, 8
        $region40: #{residual_block_forward.4} parent=31 // pred_fallthru
          _
        // Predicated region
        $region41: #{residual_block_forward.4} parent=31 // pred_check
          %p397 = pneg %p135
        $region42: #{residual_block_forward.4} parent=31 // pred_check_branch
          %399 = sbr.rel (%p397) target = $region44
        $region43: #{residual_block_forward.4} parent=31 // pred_region
          %s400 = sand.u32 %s29, 1
          %s401 = scalar_lea.sflag [#allocation8], %s400
          %s402 = sand.u32 %s125, 1
          %s403 = smul.addr %s402, 16
          %s404 = scalar_lea.vmem [#allocation9], %s403
          %s405 = smul.u32 %s37, 16
          %s406 = sadd.s32 %s405, 16
          %p407 = scmp.lt.s32.totalorder %s406, 15
          %s408 = scalar_select %p407, %s406, 15
          %s410 = ssub.s32 256, 256
          %411 = vsyncadd %s401, %s410
          %s412 = smul.addr %s408, 2
          %s413 = smul.addr %s36, 32
          %s414 = sadd.s32 %s412, %s413
          %s415 = smul.addr %s414, 128
          %s416 = scalar_lea.hbm %s2, %s415
          %s417 = sshll.u32 %s404, 4
          %s418 = int_to_ptr.vmem [resolvable:$true] %s417
          %423 = dma.hbm_to_vmem [thread:$0]  %s416, 256, %s418, %s401, 128, 128, 8
        $region44: #{residual_block_forward.4} parent=31 // pred_fallthru
          _
      $region32: #{residual_block_forward.4} parent=5 // pred_fallthru
        _
      %p424 = scmp.le.s32.totalorder 1, %s29
      %p425 = scmp.lt.s32.totalorder %s29, 3
      %p426 = pnand %p424, %p425
      %p427 = pneg %p426
      // Predicated region
      $region45: #{residual_block_forward.4} parent=5 // pred_check
        _
      $region46: #{residual_block_forward.4} parent=5 // pred_check_branch
        %429 = sbr.rel (%p426) target = $region48
      $region47: #{residual_block_forward.4} parent=5 // pred_region
        %s430 = ssub.s32 %s29, 1
        %s431 = sand.u32 %s56, 1
        %s432 = scalar_lea.sflag [#allocation5], %s431
        %s433 = sand.u32 %s56, 1
        %s434 = smul.addr %s433, 256
        %s435 = scalar_lea.vmem [#allocation4], %s434
        // Predicated region
        $region49: #{residual_block_forward.4} parent=47 // pred_check
          %p436 = pneg %p69
        $region50: #{residual_block_forward.4} parent=47 // pred_check_branch
          %438 = sbr.rel (%p436) target = $region52
        $region51: #{residual_block_forward.4} parent=47 // pred_region
          %439 = dma.done %s432, 4096
        $region52: #{residual_block_forward.4} parent=47 // pred_fallthru
          _
        %s440 = sand.u32 %s34, 1
        %s441 = scalar_lea.sflag [#allocation8], %s440
        %s442 = sand.u32 %s92, 1
        %s443 = smul.addr %s442, 16
        %s444 = scalar_lea.vmem [#allocation7], %s443
        // Predicated region
        $region53: #{residual_block_forward.4} parent=47 // pred_check
          %p445 = pneg %p105
        $region54: #{residual_block_forward.4} parent=47 // pred_check_branch
          %447 = sbr.rel (%p445) target = $region56
        $region55: #{residual_block_forward.4} parent=47 // pred_region
          %448 = dma.done %s441, 256
        $region56: #{residual_block_forward.4} parent=47 // pred_fallthru
          _
        %s449 = sand.u32 %s34, 1
        %s450 = scalar_lea.sflag [#allocation8], %s449
        %s451 = sand.u32 %s128, 1
        %s452 = smul.addr %s451, 16
        %s453 = scalar_lea.vmem [#allocation9], %s452
        // Predicated region
        $region57: #{residual_block_forward.4} parent=47 // pred_check
          %p454 = pneg %p141
        $region58: #{residual_block_forward.4} parent=47 // pred_check_branch
          %456 = sbr.rel (%p454) target = $region60
        $region59: #{residual_block_forward.4} parent=47 // pred_region
          %457 = dma.done %s450, 256
        $region60: #{residual_block_forward.4} parent=47 // pred_fallthru
          _
        // Predicated region
        $region61: #{residual_block_forward.4} parent=47 // pred_check
          %p458 = pneg %p162
        $region62: #{residual_block_forward.4} parent=47 // pred_check_branch
          %460 = sbr.rel (%p458) target = $region64
        $region63: #{residual_block_forward.4} parent=47 // pred_region
          %461 = dma.done [#allocation11], 32
        $region64: #{residual_block_forward.4} parent=47 // pred_fallthru
          _
        // Predicated region
        $region65: #{residual_block_forward.4} parent=47 // pred_check
          %p462 = pneg %p183
        $region66: #{residual_block_forward.4} parent=47 // pred_check_branch
          %464 = sbr.rel (%p462) target = $region68
        $region67: #{residual_block_forward.4} parent=47 // pred_region
          %465 = dma.done [#allocation11], 16
        $region68: #{residual_block_forward.4} parent=47 // pred_fallthru
          _
        // Predicated region
        $region69: #{residual_block_forward.4} parent=47 // pred_check
          %p466 = pneg %p204
        $region70: #{residual_block_forward.4} parent=47 // pred_check_branch
          %468 = sbr.rel (%p466) target = $region72
        $region71: #{residual_block_forward.4} parent=47 // pred_region
          %469 = dma.done [#allocation14], 16
        $region72: #{residual_block_forward.4} parent=47 // pred_fallthru
          _
        // Predicated region
        $region73: #{residual_block_forward.4} parent=47 // pred_check
          %p470 = pneg %p225
        $region74: #{residual_block_forward.4} parent=47 // pred_check_branch
          %472 = sbr.rel (%p470) target = $region76
        $region75: #{residual_block_forward.4} parent=47 // pred_region
          %473 = dma.done [#allocation14], 18432
        $region76: #{residual_block_forward.4} parent=47 // pred_fallthru
          _
        %s474 = sand.u32 %s56, 1
        %s475 = scalar_lea.sflag [#allocation5], %s474
        %s476 = sand.u32 %s56, 1
        %s477 = smul.addr %s476, 256
        %s478 = scalar_lea.vmem [#allocation4], %s477
        %p479 = pneg %p69
        %p480 = pneg %p66
        %s481 = sand.u32 %s34, 1
        %s482 = scalar_lea.sflag [#allocation8], %s481
        %s483 = sand.u32 %s92, 1
        %s484 = smul.addr %s483, 16
        %s485 = scalar_lea.vmem [#allocation7], %s484
        %p486 = pneg %p105
        %p487 = pneg %p102
        %s488 = sand.u32 %s34, 1
        %s489 = scalar_lea.sflag [#allocation8], %s488
        %s490 = sand.u32 %s128, 1
        %s491 = smul.addr %s490, 16
        %s492 = scalar_lea.vmem [#allocation9], %s491
        %p493 = pneg %p141
        %p494 = pneg %p138
        %p495 = pneg %p162
        %p496 = pneg %p159
        %p497 = pneg %p183
        %p498 = pneg %p180
        %p499 = pneg %p204
        %p500 = pneg %p201
        %p501 = pneg %p225
        %p502 = pneg %p222
        %p503 = pneg %p253
        %p504 = pneg %p250
        %s505 = sand.u32 %s240, 1
        %s506 = scalar_lea.sflag [#allocation6], %s505
        %s507 = sand.u32 %s240, 1
        %s508 = smul.addr %s507, 256
        %s509 = scalar_lea.vmem [#allocation16], %s508
        %p510 = pneg %p281
        %p511 = pneg %p278
        %s512 = sand.u32 %s268, 1
        %s513 = scalar_lea.sflag [#allocation18], %s512
        %s514 = sand.u32 %s268, 1
        %s515 = smul.addr %s514, 2
        %s516 = scalar_lea.vmem [#allocation17], %s515
        %s517 = smul.u32 16, %s39
        %s518 = smul.u32 %s39, 16
        %s519 = ssub.s32 %s518, 1
        %p520 = scmp.gt.s32.totalorder %s519, 0
        %s521 = scalar_select %p520, %s519, 0
        %s522 = smul.u32 %s39, 16
        %s523 = sadd.s32 %s522, 16
        %p524 = scmp.lt.s32.totalorder %s523, 15
        %s525 = scalar_select %p524, %s523, 15
        %s526 = smul.u32 32, %s39
        %s527 = sadd.s32 %s38, %s39
        %v528 = vld [vmem:[#allocation10] sm:$0x1]
        %v529 = vmul.f32 %v528, 0.001953125
        %v530 = vld [vmem:[#allocation10 + $0x1] sm:$0x1]
        %v531 = vmul.f32 %v530, 0.001953125
        %v532 = vmul.f32 %v529, %v529
        %v533 = vsub.f32 %v531, %v532
        %v534 = vld [vmem:[#allocation12] sm:$0x1]
        %v535 = vadd.f32 %v533, 1e-05
        %v536 = vrsqrt.pop %v535
        %v537 = vmul.f32 %v534, %v536
        %v538 = vld [vmem:[#allocation13] sm:$0x1]
        %v539 = vmul.f32 %v529, %v537
        %v540 = vsub.f32 %v538, %v539
        %541 = vst [vmem:[#allocation2] sm:$0x1] 0.0
        %542 = vst [vmem:[#allocation2 + $0x18] sm:$0x1] 0.0
        %543 = vst [vmem:[#allocation2 + $0x30] sm:$0x1] 0.0
        %544 = vst [vmem:[#allocation2 + $0x48] sm:$0x1] 0.0
        %545 = vst [vmem:[#allocation2 + $0x60] sm:$0x1] 0.0
        %546 = vst [vmem:[#allocation2 + $0x78] sm:$0x1] 0.0
        %547 = vst [vmem:[#allocation2 + $0x90] sm:$0x1] 0.0
        %548 = vst [vmem:[#allocation2 + $0xa8] sm:$0x1] 0.0
        %549 = vst [vmem:[#allocation2 + $0xc0] sm:$0x1] 0.0
        %550 = vst [vmem:[#allocation2 + $0xd8] sm:$0x1] 0.0
        %551 = vst [vmem:[#allocation2 + $0xf0] sm:$0x1] 0.0
        %552 = vst [vmem:[#allocation2 + $0x108] sm:$0x1] 0.0
        %553 = vst [vmem:[#allocation2 + $0x120] sm:$0x1] 0.0
        %554 = vst [vmem:[#allocation2 + $0x138] sm:$0x1] 0.0
        %555 = vst [vmem:[#allocation2 + $0x150] sm:$0x1] 0.0
        %556 = vst [vmem:[#allocation2 + $0x168] sm:$0x1] 0.0
        %557 = vst [vmem:[#allocation2 + $0x180] sm:$0x1] 0.0
        %558 = vst [vmem:[#allocation2 + $0x198] sm:$0x1] 0.0
        %559 = vst [vmem:[#allocation2 + $0x11] sm:$0x1] 0.0
        %560 = vst [vmem:[#allocation2 + $0x29] sm:$0x1] 0.0
        %561 = vst [vmem:[#allocation2 + $0x41] sm:$0x1] 0.0
        %562 = vst [vmem:[#allocation2 + $0x59] sm:$0x1] 0.0
        %563 = vst [vmem:[#allocation2 + $0x71] sm:$0x1] 0.0
        %564 = vst [vmem:[#allocation2 + $0x89] sm:$0x1] 0.0
        %565 = vst [vmem:[#allocation2 + $0xa1] sm:$0x1] 0.0
        %566 = vst [vmem:[#allocation2 + $0xb9] sm:$0x1] 0.0
        %567 = vst [vmem:[#allocation2 + $0xd1] sm:$0x1] 0.0
        %568 = vst [vmem:[#allocation2 + $0xe9] sm:$0x1] 0.0
        %569 = vst [vmem:[#allocation2 + $0x101] sm:$0x1] 0.0
        %570 = vst [vmem:[#allocation2 + $0x119] sm:$0x1] 0.0
        %571 = vst [vmem:[#allocation2 + $0x131] sm:$0x1] 0.0
        %572 = vst [vmem:[#allocation2 + $0x149] sm:$0x1] 0.0
        %573 = vst [vmem:[#allocation2 + $0x161] sm:$0x1] 0.0
        %574 = vst [vmem:[#allocation2 + $0x179] sm:$0x1] 0.0
        %575 = vst [vmem:[#allocation2 + $0x191] sm:$0x1] 0.0
        %576 = vst [vmem:[#allocation2 + $0x1a9] sm:$0x1] 0.0
        %v577 = vld [vmem:[%s435] sm:$0xff]
        %v578 = vld [vmem:[%s435 + $0x8] sm:$0xff]
        %v579 = vld [vmem:[%s435 + $0x10] sm:$0xff]
        %v580 = vld [vmem:[%s435 + $0x18] sm:$0xff]
        %v581 = vld [vmem:[%s435 + $0x20] sm:$0xff]
        %v582 = vld [vmem:[%s435 + $0x28] sm:$0xff]
        %v583 = vld [vmem:[%s435 + $0x30] sm:$0xff]
        %v584 = vld [vmem:[%s435 + $0x38] sm:$0xff]
        %v585 = vld [vmem:[%s435 + $0x40] sm:$0xff]
        %v586 = vld [vmem:[%s435 + $0x48] sm:$0xff]
        %v587 = vld [vmem:[%s435 + $0x50] sm:$0xff]
        %v588 = vld [vmem:[%s435 + $0x58] sm:$0xff]
        %v589 = vld [vmem:[%s435 + $0x60] sm:$0xff]
        %v590 = vld [vmem:[%s435 + $0x68] sm:$0xff]
        %v591 = vld [vmem:[%s435 + $0x70] sm:$0xff]
        %v592 = vld [vmem:[%s435 + $0x78] sm:$0xff]
        %v593 = vld [vmem:[%s435 + $0x80] sm:$0xff]
        %v594 = vld [vmem:[%s435 + $0x88] sm:$0xff]
        %v595 = vld [vmem:[%s435 + $0x90] sm:$0xff]
        %v596 = vld [vmem:[%s435 + $0x98] sm:$0xff]
        %v597 = vld [vmem:[%s435 + $0xa0] sm:$0xff]
        %v598 = vld [vmem:[%s435 + $0xa8] sm:$0xff]
        %v599 = vld [vmem:[%s435 + $0xb0] sm:$0xff]
        %v600 = vld [vmem:[%s435 + $0xb8] sm:$0xff]
        %v601 = vld [vmem:[%s435 + $0xc0] sm:$0xff]
        %v602 = vld [vmem:[%s435 + $0xc8] sm:$0xff]
        %v603 = vld [vmem:[%s435 + $0xd0] sm:$0xff]
        %v604 = vld [vmem:[%s435 + $0xd8] sm:$0xff]
        %v605 = vld [vmem:[%s435 + $0xe0] sm:$0xff]
        %v606 = vld [vmem:[%s435 + $0xe8] sm:$0xff]
        %v607 = vld [vmem:[%s435 + $0xf0] sm:$0xff]
        %v608 = vld [vmem:[%s435 + $0xf8] sm:$0xff]
        %v610 = vlaneseq
        %v611 = vshrl.u32 %v610, 7
        %v612 = vsub.s32 0, %v611
        %v613 = vrot.slane %v537, %v612
        %v615 = vmul.f32 %v577, %v613
        %v616 = vmul.f32 %v578, %v613
        %v617 = vmul.f32 %v579, %v613
        %v618 = vmul.f32 %v580, %v613
        %v619 = vmul.f32 %v581, %v613
        %v620 = vmul.f32 %v582, %v613
        %v621 = vmul.f32 %v583, %v613
        %v622 = vmul.f32 %v584, %v613
        %v623 = vmul.f32 %v585, %v613
        %v624 = vmul.f32 %v586, %v613
        %v625 = vmul.f32 %v587, %v613
        %v626 = vmul.f32 %v588, %v613
        %v627 = vmul.f32 %v589, %v613
        %v628 = vmul.f32 %v590, %v613
        %v629 = vmul.f32 %v591, %v613
        %v630 = vmul.f32 %v592, %v613
        %v631 = vmul.f32 %v593, %v613
        %v632 = vmul.f32 %v594, %v613
        %v633 = vmul.f32 %v595, %v613
        %v634 = vmul.f32 %v596, %v613
        %v635 = vmul.f32 %v597, %v613
        %v636 = vmul.f32 %v598, %v613
        %v637 = vmul.f32 %v599, %v613
        %v638 = vmul.f32 %v600, %v613
        %v639 = vmul.f32 %v601, %v613
        %v640 = vmul.f32 %v602, %v613
        %v641 = vmul.f32 %v603, %v613
        %v642 = vmul.f32 %v604, %v613
        %v643 = vmul.f32 %v605, %v613
        %v644 = vmul.f32 %v606, %v613
        %v645 = vmul.f32 %v607, %v613
        %v646 = vmul.f32 %v608, %v613
        %v648 = vlaneseq
        %v649 = vshrl.u32 %v648, 7
        %v650 = vsub.s32 0, %v649
        %v651 = vrot.slane %v540, %v650
        %v653 = vadd.f32 %v615, %v651
        %v654 = vadd.f32 %v616, %v651
        %v655 = vadd.f32 %v617, %v651
        %v656 = vadd.f32 %v618, %v651
        %v657 = vadd.f32 %v619, %v651
        %v658 = vadd.f32 %v620, %v651
        %v659 = vadd.f32 %v621, %v651
        %v660 = vadd.f32 %v622, %v651
        %v661 = vadd.f32 %v623, %v651
        %v662 = vadd.f32 %v624, %v651
        %v663 = vadd.f32 %v625, %v651
        %v664 = vadd.f32 %v626, %v651
        %v665 = vadd.f32 %v627, %v651
        %v666 = vadd.f32 %v628, %v651
        %v667 = vadd.f32 %v629, %v651
        %v668 = vadd.f32 %v630, %v651
        %v669 = vadd.f32 %v631, %v651
        %v670 = vadd.f32 %v632, %v651
        %v671 = vadd.f32 %v633, %v651
        %v672 = vadd.f32 %v634, %v651
        %v673 = vadd.f32 %v635, %v651
        %v674 = vadd.f32 %v636, %v651
        %v675 = vadd.f32 %v637, %v651
        %v676 = vadd.f32 %v638, %v651
        %v677 = vadd.f32 %v639, %v651
        %v678 = vadd.f32 %v640, %v651
        %v679 = vadd.f32 %v641, %v651
        %v680 = vadd.f32 %v642, %v651
        %v681 = vadd.f32 %v643, %v651
        %v682 = vadd.f32 %v644, %v651
        %v683 = vadd.f32 %v645, %v651
        %v684 = vadd.f32 %v646, %v651
        %s685 = scalar_lea.vmem [#allocation2], 24
        %686 = vst [vmem:[%s685 + $0x1] sm:$0xff] %v653
        %687 = vst [vmem:[%s685 + $0x9] sm:$0xff] %v654
        %688 = vst [vmem:[%s685 + $0x19] sm:$0xff] %v655
        %689 = vst [vmem:[%s685 + $0x21] sm:$0xff] %v656
        %690 = vst [vmem:[%s685 + $0x31] sm:$0xff] %v657
        %691 = vst [vmem:[%s685 + $0x39] sm:$0xff] %v658
        %692 = vst [vmem:[%s685 + $0x49] sm:$0xff] %v659
        %693 = vst [vmem:[%s685 + $0x51] sm:$0xff] %v660
        %694 = vst [vmem:[%s685 + $0x61] sm:$0xff] %v661
        %695 = vst [vmem:[%s685 + $0x69] sm:$0xff] %v662
        %696 = vst [vmem:[%s685 + $0x79] sm:$0xff] %v663
        %697 = vst [vmem:[%s685 + $0x81] sm:$0xff] %v664
        %698 = vst [vmem:[%s685 + $0x91] sm:$0xff] %v665
        %699 = vst [vmem:[%s685 + $0x99] sm:$0xff] %v666
        %700 = vst [vmem:[%s685 + $0xa9] sm:$0xff] %v667
        %701 = vst [vmem:[%s685 + $0xb1] sm:$0xff] %v668
        %702 = vst [vmem:[%s685 + $0xc1] sm:$0xff] %v669
        %703 = vst [vmem:[%s685 + $0xc9] sm:$0xff] %v670
        %704 = vst [vmem:[%s685 + $0xd9] sm:$0xff] %v671
        %705 = vst [vmem:[%s685 + $0xe1] sm:$0xff] %v672
        %706 = vst [vmem:[%s685 + $0xf1] sm:$0xff] %v673
        %707 = vst [vmem:[%s685 + $0xf9] sm:$0xff] %v674
        %708 = vst [vmem:[%s685 + $0x109] sm:$0xff] %v675
        %709 = vst [vmem:[%s685 + $0x111] sm:$0xff] %v676
        %710 = vst [vmem:[%s685 + $0x121] sm:$0xff] %v677
        %711 = vst [vmem:[%s685 + $0x129] sm:$0xff] %v678
        %712 = vst [vmem:[%s685 + $0x139] sm:$0xff] %v679
        %713 = vst [vmem:[%s685 + $0x141] sm:$0xff] %v680
        %714 = vst [vmem:[%s685 + $0x151] sm:$0xff] %v681
        %715 = vst [vmem:[%s685 + $0x159] sm:$0xff] %v682
        %716 = vst [vmem:[%s685 + $0x169] sm:$0xff] %v683
        %717 = vst [vmem:[%s685 + $0x171] sm:$0xff] %v684
        %p718 = scmp.gt.s32.totalorder %s39, 0
        // Predicated region
        $region77: #{residual_block_forward.4} parent=47 // pred_check
          %p719 = pneg %p718
        $region78: #{residual_block_forward.4} parent=47 // pred_check_branch
          %721 = sbr.rel (%p719) target = $region80
        $region79: #{residual_block_forward.4} parent=47 // pred_region
          %v722 = vld [vmem:[%s444] sm:$0xff]
          %v723 = vld [vmem:[%s444 + $0x8] sm:$0xff]
          %v724 = vmul.f32 %v722, %v613
          %v725 = vmul.f32 %v723, %v613
          %v726 = vadd.f32 %v724, %v651
          %v727 = vadd.f32 %v725, %v651
          %728 = vst [vmem:[#allocation2 + $0x1] sm:$0xff] %v726
          %729 = vst [vmem:[#allocation2 + $0x9] sm:$0xff] %v727
        $region80: #{residual_block_forward.4} parent=47 // pred_fallthru
          _
        %p730 = scmp.eq.s32.totalorder %s39, 0
        // Predicated region
        $region81: #{residual_block_forward.4} parent=47 // pred_check
          %p731 = pneg %p730
        $region82: #{residual_block_forward.4} parent=47 // pred_check_branch
          %733 = sbr.rel (%p731) target = $region84
        $region83: #{residual_block_forward.4} parent=47 // pred_region
          %734 = vst [vmem:[#allocation2] sm:$0xff] 0.0
          %735 = vst [vmem:[#allocation2 + $0x8] sm:$0xff] 0.0
          %736 = vst [vmem:[#allocation2 + $0x10] sm:$0x3] 0.0
        $region84: #{residual_block_forward.4} parent=47 // pred_fallthru
          _
        %p737 = scmp.lt.s32.totalorder %s39, 0
        // Predicated region
        $region85: #{residual_block_forward.4} parent=47 // pred_check
          %p738 = pneg %p737
        $region86: #{residual_block_forward.4} parent=47 // pred_check_branch
          %740 = sbr.rel (%p738) target = $region88
        $region87: #{residual_block_forward.4} parent=47 // pred_region
          %v741 = vld [vmem:[%s453] sm:$0xff]
          %v742 = vld [vmem:[%s453 + $0x8] sm:$0xff]
          %v743 = vmul.f32 %v741, %v613
          %v744 = vmul.f32 %v742, %v613
          %v745 = vadd.f32 %v743, %v651
          %v746 = vadd.f32 %v744, %v651
          %s747 = scalar_lea.vmem [#allocation2], 408
          %748 = vst [vmem:[%s747 + $0x1] sm:$0xff] %v745
          %749 = vst [vmem:[%s747 + $0x9] sm:$0xff] %v746
        $region88: #{residual_block_forward.4} parent=47 // pred_fallthru
          _
        // Predicated region
        $region89: #{residual_block_forward.4} parent=47 // pred_check
          %p750 = pneg %p730
        $region90: #{residual_block_forward.4} parent=47 // pred_check_branch
          %752 = sbr.rel (%p750) target = $region92
        $region91: #{residual_block_forward.4} parent=47 // pred_region
          %s753 = scalar_lea.vmem [#allocation2], 408
          %754 = vst [vmem:[%s753] sm:$0xff] 0.0
          %755 = vst [vmem:[%s753 + $0x8] sm:$0xff] 0.0
          %756 = vst [vmem:[%s753 + $0x10] sm:$0x3] 0.0
        $region92: #{residual_block_forward.4} parent=47 // pred_fallthru
          _
        %v757 = vld [vmem:[#allocation2] sm:$0xff]
        %v758 = vld [vmem:[#allocation2 + $0x8] sm:$0xff]
        %v759 = vld [vmem:[#allocation2 + $0x18] sm:$0xff]
        %v760 = vld [vmem:[#allocation2 + $0x20] sm:$0xff]
        %v761 = vld [vmem:[#allocation2 + $0x30] sm:$0xff]
        %v762 = vld [vmem:[#allocation2 + $0x38] sm:$0xff]
        %v763 = vld [vmem:[#allocation2 + $0x48] sm:$0xff]
        %v764 = vld [vmem:[#allocation2 + $0x50] sm:$0xff]
        %v765 = vld [vmem:[#allocation2 + $0x60] sm:$0xff]
        %v766 = vld [vmem:[#allocation2 + $0x68] sm:$0xff]
        %v767 = vld [vmem:[#allocation2 + $0x78] sm:$0xff]
        %v768 = vld [vmem:[#allocation2 + $0x80] sm:$0xff]
        %v769 = vld [vmem:[#allocation2 + $0x90] sm:$0xff]
        %v770 = vld [vmem:[#allocation2 + $0x98] sm:$0xff]
        %v771 = vld [vmem:[#allocation2 + $0xa8] sm:$0xff]
        %v772 = vld [vmem:[#allocation2 + $0xb0] sm:$0xff]
        %v773 = vld [vmem:[#allocation2 + $0xc0] sm:$0xff]
        %v774 = vld [vmem:[#allocation2 + $0xc8] sm:$0xff]
        %v775 = vld [vmem:[#allocation2 + $0xd8] sm:$0xff]
        %v776 = vld [vmem:[#allocation2 + $0xe0] sm:$0xff]
        %v777 = vld [vmem:[#allocation2 + $0xf0] sm:$0xff]
        %v778 = vld [vmem:[#allocation2 + $0xf8] sm:$0xff]
        %v779 = vld [vmem:[#allocation2 + $0x108] sm:$0xff]
        %v780 = vld [vmem:[#allocation2 + $0x110] sm:$0xff]
        %v781 = vld [vmem:[#allocation2 + $0x120] sm:$0xff]
        %v782 = vld [vmem:[#allocation2 + $0x128] sm:$0xff]
        %v783 = vld [vmem:[#allocation2 + $0x138] sm:$0xff]
        %v784 = vld [vmem:[#allocation2 + $0x140] sm:$0xff]
        %v785 = vld [vmem:[#allocation2 + $0x150] sm:$0xff]
        %v786 = vld [vmem:[#allocation2 + $0x158] sm:$0xff]
        %v787 = vld [vmem:[#allocation2 + $0x168] sm:$0xff]
        %v788 = vld [vmem:[#allocation2 + $0x170] sm:$0xff]
        %v789 = vld [vmem:[#allocation15] sm:$0xff]
        %v790 = vld [vmem:[#allocation15 + $0x8] sm:$0xff]
        %v791 = vld [vmem:[#allocation15 + $0x10] sm:$0xff]
        %v792 = vld [vmem:[#allocation15 + $0x18] sm:$0xff]
        %v793 = vld [vmem:[#allocation15 + $0x20] sm:$0xff]
        %v794 = vld [vmem:[#allocation15 + $0x28] sm:$0xff]
        %v795 = vld [vmem:[#allocation15 + $0x30] sm:$0xff]
        %v796 = vld [vmem:[#allocation15 + $0x38] sm:$0xff]
        %v797 = vld [vmem:[#allocation15 + $0x40] sm:$0xff]
        %v798 = vld [vmem:[#allocation15 + $0x48] sm:$0xff]
        %v799 = vld [vmem:[#allocation15 + $0x50] sm:$0xff]
        %v800 = vld [vmem:[#allocation15 + $0x58] sm:$0xff]
        %v801 = vld [vmem:[#allocation15 + $0x60] sm:$0xff]
        %v802 = vld [vmem:[#allocation15 + $0x68] sm:$0xff]
        %v803 = vld [vmem:[#allocation15 + $0x70] sm:$0xff]
        %v804 = vld [vmem:[#allocation15 + $0x78] sm:$0xff]
        %805 = vmatprep.subr.mxu0 0.0
        %806 = vmatpush1.msra.mxu0 %v789
        %807 = vmatprep.subr.mxu0 0.0
        %808 = vmatpush1.msra.mxu0 %v790
        %809 = vmatprep.subr.mxu0 0.0
        %810 = vmatpush1.msra.mxu0 %v791
        %811 = vmatprep.subr.mxu0 0.0
        %812 = vmatpush1.msra.mxu0 %v792
        %813 = vmatprep.subr.mxu0 0.0
        %814 = vmatpush1.msra.mxu0 %v793
        %815 = vmatprep.subr.mxu0 0.0
        %816 = vmatpush1.msra.mxu0 %v794
        %817 = vmatprep.subr.mxu0 0.0
        %818 = vmatpush1.msra.mxu0 %v795
        %819 = vmatprep.subr.mxu0 0.0
        %820 = vmatpush1.msra.mxu0 %v796
        %821 = vmatprep.subr.mxu0 0.0
        %822 = vmatpush1.msra.mxu0 %v797
        %823 = vmatprep.subr.mxu0 0.0
        %824 = vmatpush1.msra.mxu0 %v798
        %825 = vmatprep.subr.mxu0 0.0
        %826 = vmatpush1.msra.mxu0 %v799
        %827 = vmatprep.subr.mxu0 0.0
        %828 = vmatpush1.msra.mxu0 %v800
        %829 = vmatprep.subr.mxu0 0.0
        %830 = vmatpush1.msra.mxu0 %v801
        %831 = vmatprep.subr.mxu0 0.0
        %832 = vmatpush1.msra.mxu0 %v802
        %833 = vmatprep.subr.mxu0 0.0
        %834 = vmatpush1.msra.mxu0 %v803
        %835 = vmatprep.subr.mxu0 0.0
        %836 = vmatpush1.msra.mxu0 %v804
        %837 = vmatprep.subr.mxu0 0.0
        %838 = vmatpush1.msra.mxu0 0.0
        %839 = vmatprep.subr.mxu0 0.0
        %840 = vmatpush1.msra.mxu0 0.0
        %841 = vmatprep.subr.mxu0 0.0
        %842 = vmatpush1.msra.mxu0 0.0
        %843 = vmatprep.subr.mxu0 0.0
        %844 = vmatpush1.msra.mxu0 0.0
        %845 = vmatprep.subr.mxu0 0.0
        %846 = vmatpush1.msra.mxu0 0.0
        %847 = vmatprep.subr.mxu0 0.0
        %848 = vmatpush1.msra.mxu0 0.0
        %849 = vmatprep.subr.mxu0 0.0
        %850 = vmatpush1.msra.mxu0 0.0
        %851 = vmatprep.subr.mxu0 0.0
        %852 = vmatpush1.msra.mxu0 0.0
        %853 = vmatprep.subr.mxu0 0.0
        %854 = vmatpush1.msra.mxu0 0.0
        %855 = vmatprep.subr.mxu0 0.0
        %856 = vmatpush1.msra.mxu0 0.0
        %857 = vmatprep.subr.mxu0 0.0
        %858 = vmatpush1.msra.mxu0 0.0
        %859 = vmatprep.subr.mxu0 0.0
        %860 = vmatpush1.msra.mxu0 0.0
        %861 = vmatprep.subr.mxu0 0.0
        %862 = vmatpush1.msra.mxu0 0.0
        %863 = vmatprep.subr.mxu0 0.0
        %864 = vmatpush1.msra.mxu0 0.0
        %865 = vmatprep.subr.mxu0 0.0
        %866 = vmatpush1.msra.mxu0 0.0
        %867 = vmatprep.subr.mxu0 0.0
        %868 = vmatpush1.msra.mxu0 0.0
        %869 = vmatprep.mubr.f32.mxu0 0.0
        %870 = vmatmul.mubr.f32.gmra.mrb[0].mxu0 %v757
        %v871 = vpop.f32.mrb[0].mxu0
        %v872 = vadd.f32 0.0, %v871
        %v873 = vpop.f32.mrb[0].mxu0
        %874 = vmatprep.mubr.f32.mxu0 0.0
        %875 = vmatmul.mubr.f32.gmra.mrb[0].mxu0 %v758
        %v876 = vpop.f32.mrb[0].mxu0
        %v877 = vadd.f32 0.0, %v876
        %v878 = vpop.f32.mrb[0].mxu0
        %879 = vmatprep.mubr.f32.mxu0 0.0
        %880 = vmatmul.mubr.f32.gmra.mrb[0].mxu0 %v759
        %v881 = vpop.f32.mrb[0].mxu0
        %v882 = vadd.f32 0.0, %v881
        %v883 = vpop.f32.mrb[0].mxu0
        %884 = vmatprep.mubr.f32.mxu0 0.0
        %885 = vmatmul.mubr.f32.gmra.mrb[0].mxu0 %v760
        %v886 = vpop.f32.mrb[0].mxu0
        %v887 = vadd.f32 0.0, %v886
        %v888 = vpop.f32.mrb[0].mxu0
        %889 = vmatprep.mubr.f32.mxu0 0.0
        %890 = vmatmul.mubr.f32.gmra.mrb[0].mxu0 %v761
        %v891 = vpop.f32.mrb[0].mxu0
        %v892 = vadd.f32 0.0, %v891
        %v893 = vpop.f32.mrb[0].mxu0
        %894 = vmatprep.mubr.f32.mxu0 0.0
        %895 = vmatmul.mubr.f32.gmra.mrb[0].mxu0 %v762
        %v896 = vpop.f32.mrb[0].mxu0
        %v897 = vadd.f32 0.0, %v896
        %v898 = vpop.f32.mrb[0].mxu0
        %899 = vmatprep.mubr.f32.mxu0 0.0
        %900 = vmatmul.mubr.f32.gmra.mrb[0].mxu0 %v763
        %v901 = vpop.f32.mrb[0].mxu0
        %v902 = vadd.f32 0.0, %v901
        %v903 = vpop.f32.mrb[0].mxu0
        %904 = vmatprep.mubr.f32.mxu0 0.0
        %905 = vmatmul.mubr.f32.gmra.mrb[0].mxu0 %v764
        %v906 = vpop.f32.mrb[0].mxu0
        %v907 = vadd.f32 0.0, %v906
        %v908 = vpop.f32.mrb[0].mxu0
        %909 = vmatprep.mubr.f32.mxu0 0.0
        %910 = vmatmul.mubr.f32.gmra.mrb[0].mxu0 %v765
        %v911 = vpop.f32.mrb[0].mxu0
        %v912 = vadd.f32 0.0, %v911
        %v913 = vpop.f32.mrb[0].mxu0
        %914 = vmatprep.mubr.f32.mxu0 0.0
        %915 = vmatmul.mubr.f32.gmra.mrb[0].mxu0 %v766
        %v916 = vpop.f32.mrb[0].mxu0
        %v917 = vadd.f32 0.0, %v916
        %v918 = vpop.f32.mrb[0].mxu0
        %919 = vmatprep.mubr.f32.mxu0 0.0
        %920 = vmatmul.mubr.f32.gmra.mrb[0].mxu0 %v767
        %v921 = vpop.f32.mrb[0].mxu0
        %v922 = vadd.f32 0.0, %v921
        %v923 = vpop.f32.mrb[0].mxu0
        %924 = vmatprep.mubr.f32.mxu0 0.0
        %925 = vmatmul.mubr.f32.gmra.mrb[0].mxu0 %v768
        %v926 = vpop.f32.mrb[0].mxu0
        %v927 = vadd.f32 0.0, %v926
        %v928 = vpop.f32.mrb[0].mxu0
        %929 = vmatprep.mubr.f32.mxu0 0.0
        %930 = vmatmul.mubr.f32.gmra.mrb[0].mxu0 %v769
        %v931 = vpop.f32.mrb[0].mxu0
        %v932 = vadd.f32 0.0, %v931
        %v933 = vpop.f32.mrb[0].mxu0
        %934 = vmatprep.mubr.f32.mxu0 0.0
        %935 = vmatmul.mubr.f32.gmra.mrb[0].mxu0 %v770
        %v936 = vpop.f32.mrb[0].mxu0
        %v937 = vadd.f32 0.0, %v936
        %v938 = vpop.f32.mrb[0].mxu0
        %939 = vmatprep.mubr.f32.mxu0 0.0
        %940 = vmatmul.mubr.f32.gmra.mrb[0].mxu0 %v771
        %v941 = vpop.f32.mrb[0].mxu0
        %v942 = vadd.f32 0.0, %v941
        %v943 = vpop.f32.mrb[0].mxu0
        %944 = vmatprep.mubr.f32.mxu0 0.0
        %945 = vmatmul.mubr.f32.gmra.mrb[0].mxu0 %v772
        %v946 = vpop.f32.mrb[0].mxu0
        %v947 = vadd.f32 0.0, %v946
        %v948 = vpop.f32.mrb[0].mxu0
        %949 = vmatprep.mubr.f32.mxu0 0.0
        %950 = vmatmul.mubr.f32.gmra.mrb[0].mxu0 %v773
        %v951 = vpop.f32.mrb[0].mxu0
        %v952 = vadd.f32 0.0, %v951
        %v953 = vpop.f32.mrb[0].mxu0
        %954 = vmatprep.mubr.f32.mxu0 0.0
        %955 = vmatmul.mubr.f32.gmra.mrb[0].mxu0 %v774
        %v956 = vpop.f32.mrb[0].mxu0
        %v957 = vadd.f32 0.0, %v956
        %v958 = vpop.f32.mrb[0].mxu0
        %959 = vmatprep.mubr.f32.mxu0 0.0
        %960 = vmatmul.mubr.f32.gmra.mrb[0].mxu0 %v775
        %v961 = vpop.f32.mrb[0].mxu0
        %v962 = vadd.f32 0.0, %v961
        %v963 = vpop.f32.mrb[0].mxu0
        %964 = vmatprep.mubr.f32.mxu0 0.0
        %965 = vmatmul.mubr.f32.gmra.mrb[0].mxu0 %v776
        %v966 = vpop.f32.mrb[0].mxu0
        %v967 = vadd.f32 0.0, %v966
        %v968 = vpop.f32.mrb[0].mxu0
        %969 = vmatprep.mubr.f32.mxu0 0.0
        %970 = vmatmul.mubr.f32.gmra.mrb[0].mxu0 %v777
        %v971 = vpop.f32.mrb[0].mxu0
        %v972 = vadd.f32 0.0, %v971
        %v973 = vpop.f32.mrb[0].mxu0
        %974 = vmatprep.mubr.f32.mxu0 0.0
        %975 = vmatmul.mubr.f32.gmra.mrb[0].mxu0 %v778
        %v976 = vpop.f32.mrb[0].mxu0
        %v977 = vadd.f32 0.0, %v976
        %v978 = vpop.f32.mrb[0].mxu0
        %979 = vmatprep.mubr.f32.mxu0 0.0
        %980 = vmatmul.mubr.f32.gmra.mrb[0].mxu0 %v779
        %v981 = vpop.f32.mrb[0].mxu0
        %v982 = vadd.f32 0.0, %v981
        %v983 = vpop.f32.mrb[0].mxu0
        %984 = vmatprep.mubr.f32.mxu0 0.0
        %985 = vmatmul.mubr.f32.gmra.mrb[0].mxu0 %v780
        %v986 = vpop.f32.mrb[0].mxu0
        %v987 = vadd.f32 0.0, %v986
        %v988 = vpop.f32.mrb[0].mxu0
        %989 = vmatprep.mubr.f32.mxu0 0.0
        %990 = vmatmul.mubr.f32.gmra.mrb[0].mxu0 %v781
        %v991 = vpop.f32.mrb[0].mxu0
        %v992 = vadd.f32 0.0, %v991
        %v993 = vpop.f32.mrb[0].mxu0
        %994 = vmatprep.mubr.f32.mxu0 0.0
        %995 = vmatmul.mubr.f32.gmra.mrb[0].mxu0 %v782
        %v996 = vpop.f32.mrb[0].mxu0
        %v997 = vadd.f32 0.0, %v996
        %v998 = vpop.f32.mrb[0].mxu0
        %999 = vmatprep.mubr.f32.mxu0 0.0
        %1000 = vmatmul.mubr.f32.gmra.mrb[0].mxu0 %v783
        %v1001 = vpop.f32.mrb[0].mxu0
        %v1002 = vadd.f32 0.0, %v1001
        %v1003 = vpop.f32.mrb[0].mxu0
        %1004 = vmatprep.mubr.f32.mxu0 0.0
        %1005 = vmatmul.mubr.f32.gmra.mrb[0].mxu0 %v784
        %v1006 = vpop.f32.mrb[0].mxu0
        %v1007 = vadd.f32 0.0, %v1006
        %v1008 = vpop.f32.mrb[0].mxu0
        %1009 = vmatprep.mubr.f32.mxu0 0.0
        %1010 = vmatmul.mubr.f32.gmra.mrb[0].mxu0 %v785
        %v1011 = vpop.f32.mrb[0].mxu0
        %v1012 = vadd.f32 0.0, %v1011
        %v1013 = vpop.f32.mrb[0].mxu0
        %1014 = vmatprep.mubr.f32.mxu0 0.0
        %1015 = vmatmul.mubr.f32.gmra.mrb[0].mxu0 %v786
        %v1016 = vpop.f32.mrb[0].mxu0
        %v1017 = vadd.f32 0.0, %v1016
        %v1018 = vpop.f32.mrb[0].mxu0
        %1019 = vmatprep.mubr.f32.mxu0 0.0
        %1020 = vmatmul.mubr.f32.gmra.mrb[0].mxu0 %v787
        %v1021 = vpop.f32.mrb[0].mxu0
        %v1022 = vadd.f32 0.0, %v1021
        %v1023 = vpop.f32.mrb[0].mxu0
        %1024 = vmatprep.mubr.f32.mxu0 0.0
        %1025 = vmatmul.mubr.f32.gmra.mrb[0].mxu0 %v788
        %v1026 = vpop.f32.mrb[0].mxu0
        %v1027 = vadd.f32 0.0, %v1026
        %v1028 = vpop.f32.mrb[0].mxu0
        %1029 = vdwg.mxu0
        %1030 = vst [vmem:[#allocation3] sm:$0xff] %v872
        %1031 = vst [vmem:[#allocation3 + $0x8] sm:$0xff] %v877
        %1032 = vst [vmem:[#allocation3 + $0x10] sm:$0xff] %v882
        %1033 = vst [vmem:[#allocation3 + $0x18] sm:$0xff] %v887
        %1034 = vst [vmem:[#allocation3 + $0x20] sm:$0xff] %v892
        %1035 = vst [vmem:[#allocation3 + $0x28] sm:$0xff] %v897
        %1036 = vst [vmem:[#allocation3 + $0x30] sm:$0xff] %v902
        %1037 = vst [vmem:[#allocation3 + $0x38] sm:$0xff] %v907
        %1038 = vst [vmem:[#allocation3 + $0x40] sm:$0xff] %v912
        %1039 = vst [vmem:[#allocation3 + $0x48] sm:$0xff] %v917
        %1040 = vst [vmem:[#allocation3 + $0x50] sm:$0xff] %v922
        %1041 = vst [vmem:[#allocation3 + $0x58] sm:$0xff] %v927
        %1042 = vst [vmem:[#allocation3 + $0x60] sm:$0xff] %v932
        %1043 = vst [vmem:[#allocation3 + $0x68] sm:$0xff] %v937
        %1044 = vst [vmem:[#allocation3 + $0x70] sm:$0xff] %v942
        %1045 = vst [vmem:[#allocation3 + $0x78] sm:$0xff] %v947
        %1046 = vst [vmem:[#allocation3 + $0x80] sm:$0xff] %v952
        %1047 = vst [vmem:[#allocation3 + $0x88] sm:$0xff] %v957
        %1048 = vst [vmem:[#allocation3 + $0x90] sm:$0xff] %v962
        %1049 = vst [vmem:[#allocation3 + $0x98] sm:$0xff] %v967
        %1050 = vst [vmem:[#allocation3 + $0xa0] sm:$0xff] %v972
        %1051 = vst [vmem:[#allocation3 + $0xa8] sm:$0xff] %v977
        %1052 = vst [vmem:[#allocation3 + $0xb0] sm:$0xff] %v982
        %1053 = vst [vmem:[#allocation3 + $0xb8] sm:$0xff] %v987
        %1054 = vst [vmem:[#allocation3 + $0xc0] sm:$0xff] %v992
        %1055 = vst [vmem:[#allocation3 + $0xc8] sm:$0xff] %v997
        %1056 = vst [vmem:[#allocation3 + $0xd0] sm:$0xff] %v1002
        %1057 = vst [vmem:[#allocation3 + $0xd8] sm:$0xff] %v1007
        %1058 = vst [vmem:[#allocation3 + $0xe0] sm:$0xff] %v1012
        %1059 = vst [vmem:[#allocation3 + $0xe8] sm:$0xff] %v1017
        %1060 = vst [vmem:[#allocation3 + $0xf0] sm:$0xff] %v1022
        %1061 = vst [vmem:[#allocation3 + $0xf8] sm:$0xff] %v1027
        %v1062 = vld [vmem:[#allocation2 + $0x1] sm:$0xff]
        %v1063 = vld [vmem:[#allocation2 + $0x9] sm:$0xff]
        %v1064 = vld [vmem:[#allocation2 + $0x19] sm:$0xff]
        %v1065 = vld [vmem:[#allocation2 + $0x21] sm:$0xff]
        %v1066 = vld [vmem:[#allocation2 + $0x31] sm:$0xff]
        %v1067 = vld [vmem:[#allocation2 + $0x39] sm:$0xff]
        %v1068 = vld [vmem:[#allocation2 + $0x49] sm:$0xff]
        %v1069 = vld [vmem:[#allocation2 + $0x51] sm:$0xff]
        %v1070 = vld [vmem:[#allocation2 + $0x61] sm:$0xff]
        %v1071 = vld [vmem:[#allocation2 + $0x69] sm:$0xff]
        %v1072 = vld [vmem:[#allocation2 + $0x79] sm:$0xff]
        %v1073 = vld [vmem:[#allocation2 + $0x81] sm:$0xff]
        %v1074 = vld [vmem:[#allocation2 + $0x91] sm:$0xff]
        %v1075 = vld [vmem:[#allocation2 + $0x99] sm:$0xff]
        %v1076 = vld [vmem:[#allocation2 + $0xa9] sm:$0xff]
        %v1077 = vld [vmem:[#allocation2 + $0xb1] sm:$0xff]
        %v1078 = vld [vmem:[#allocation2 + $0xc1] sm:$0xff]
        %v1079 = vld [vmem:[#allocation2 + $0xc9] sm:$0xff]
        %v1080 = vld [vmem:[#allocation2 + $0xd9] sm:$0xff]
        %v1081 = vld [vmem:[#allocation2 + $0xe1] sm:$0xff]
        %v1082 = vld [vmem:[#allocation2 + $0xf1] sm:$0xff]
        %v1083 = vld [vmem:[#allocation2 + $0xf9] sm:$0xff]
        %v1084 = vld [vmem:[#allocation2 + $0x109] sm:$0xff]
        %v1085 = vld [vmem:[#allocation2 + $0x111] sm:$0xff]
        %v1086 = vld [vmem:[#allocation2 + $0x121] sm:$0xff]
        %v1087 = vld [vmem:[#allocation2 + $0x129] sm:$0xff]
        %v1088 = vld [vmem:[#allocation2 + $0x139] sm:$0xff]
        %v1089 = vld [vmem:[#allocation2 + $0x141] sm:$0xff]
        %v1090 = vld [vmem:[#allocation2 + $0x151] sm:$0xff]
        %v1091 = vld [vmem:[#allocation2 + $0x159] sm:$0xff]
        %v1092 = vld [vmem:[#allocation2 + $0x169] sm:$0xff]
        %v1093 = vld [vmem:[#allocation2 + $0x171] sm:$0xff]
        %s1094 = scalar_lea.vmem [#allocation15], 128
        %v1095 = vld [vmem:[%s1094] sm:$0xff]
        %v1096 = vld [vmem:[%s1094 + $0x8] sm:$0xff]
        %v1097 = vld [vmem:[%s1094 + $0x10] sm:$0xff]
        %v1098 = vld [vmem:[%s1094 + $0x18] sm:$0xff]
        %v1099 = vld [vmem:[%s1094 + $0x20] sm:$0xff]
        %v1100 = vld [vmem:[%s1094 + $0x28] sm:$0xff]
        %v1101 = vld [vmem:[%s1094 + $0x30] sm:$0xff]
        %v1102 = vld [vmem:[%s1094 + $0x38] sm:$0xff]
        %v1103 = vld [vmem:[%s1094 + $0x40] sm:$0xff]
        %v1104 = vld [vmem:[%s1094 + $0x48] sm:$0xff]
        %v1105 = vld [vmem:[%s1094 + $0x50] sm:$0xff]
        %v1106 = vld [vmem:[%s1094 + $0x58] sm:$0xff]
        %v1107 = vld [vmem:[%s1094 + $0x60] sm:$0xff]
        %v1108 = vld [vmem:[%s1094 + $0x68] sm:$0xff]
        %v1109 = vld [vmem:[%s1094 + $0x70] sm:$0xff]
        %v1110 = vld [vmem:[%s1094 + $0x78] sm:$0xff]
        %1111 = vmatprep.subr.mxu0 0.0
        %1112 = vmatpush1.msra.mxu0 %v1095
        %1113 = vmatprep.subr.mxu0 0.0
        %1114 = vmatpush1.msra.mxu0 %v1096
        %1115 = vmatprep.subr.mxu0 0.0
        %1116 = vmatpush1.msra.mxu0 %v1097
        %1117 = vmatprep.subr.mxu0 0.0
        %1118 = vmatpush1.msra.mxu0 %v1098
        %1119 = vmatprep.subr.mxu0 0.0
        %1120 = vmatpush1.msra.mxu0 %v1099
        %1121 = vmatprep.subr.mxu0 0.0
        %1122 = vmatpush1.msra.mxu0 %v1100
        %1123 = vmatprep.subr.mxu0 0.0
        %1124 = vmatpush1.msra.mxu0 %v1101
        %1125 = vmatprep.subr.mxu0 0.0
        %1126 = vmatpush1.msra.mxu0 %v1102
        %1127 = vmatprep.subr.mxu0 0.0
        %1128 = vmatpush1.msra.mxu0 %v1103
        %1129 = vmatprep.subr.mxu0 0.0
        %1130 = vmatpush1.msra.mxu0 %v1104
        %1131 = vmatprep.subr.mxu0 0.0
        %1132 = vmatpush1.msra.mxu0 %v1105
        %1133 = vmatprep.subr.mxu0 0.0
        %1134 = vmatpush1.msra.mxu0 %v1106
        %1135 = vmatprep.subr.mxu0 0.0
        %1136 = vmatpush1.msra.mxu0 %v1107
        %1137 = vmatprep.subr.mxu0 0.0
        %1138 = vmatpush1.msra.mxu0 %v1108
        %1139 = vmatprep.subr.mxu0 0.0
        %1140 = vmatpush1.msra.mxu0 %v1109
        %1141 = vmatprep.subr.mxu0 0.0
        %1142 = vmatpush1.msra.mxu0 %v1110
        %1143 = vmatprep.subr.mxu0 0.0
        %1144 = vmatpush1.msra.mxu0 0.0
        %1145 = vmatprep.subr.mxu0 0.0
        %1146 = vmatpush1.msra.mxu0 0.0
        %1147 = vmatprep.subr.mxu0 0.0
        %1148 = vmatpush1.msra.mxu0 0.0
        %1149 = vmatprep.subr.mxu0 0.0
        %1150 = vmatpush1.msra.mxu0 0.0
        %1151 = vmatprep.subr.mxu0 0.0
        %1152 = vmatpush1.msra.mxu0 0.0
        %1153 = vmatprep.subr.mxu0 0.0
        %1154 = vmatpush1.msra.mxu0 0.0
        %1155 = vmatprep.subr.mxu0 0.0
        %1156 = vmatpush1.msra.mxu0 0.0
        %1157 = vmatprep.subr.mxu0 0.0
        %1158 = vmatpush1.msra.mxu0 0.0
        %1159 = vmatprep.subr.mxu0 0.0
        %1160 = vmatpush1.msra.mxu0 0.0
        %1161 = vmatprep.subr.mxu0 0.0
        %1162 = vmatpush1.msra.mxu0 0.0
        %1163 = vmatprep.subr.mxu0 0.0
        %1164 = vmatpush1.msra.mxu0 0.0
        %1165 = vmatprep.subr.mxu0 0.0
        %1166 = vmatpush1.msra.mxu0 0.0
        %1167 = vmatprep.subr.mxu0 0.0
        %1168 = vmatpush1.msra.mxu0 0.0
        %1169 = vmatprep.subr.mxu0 0.0
        %1170 = vmatpush1.msra.mxu0 0.0
        %1171 = vmatprep.subr.mxu0 0.0
        %1172 = vmatpush1.msra.mxu0 0.0
        %1173 = vmatprep.subr.mxu0 0.0
        %1174 = vmatpush1.msra.mxu0 0.0
        %1175 = vmatprep.mubr.f32.mxu0 0.0
        %1176 = vmatmul.mubr.f32.gmra.mrb[0].mxu0 %v1062
        %v1177 = vpop.f32.mrb[0].mxu0
        %v1178 = vadd.f32 0.0, %v1177
        %v1179 = vpop.f32.mrb[0].mxu0
        %1180 = vmatprep.mubr.f32.mxu0 0.0
        %1181 = vmatmul.mubr.f32.gmra.mrb[0].mxu0 %v1063
        %v1182 = vpop.f32.mrb[0].mxu0
        %v1183 = vadd.f32 0.0, %v1182
        %v1184 = vpop.f32.mrb[0].mxu0
        %1185 = vmatprep.mubr.f32.mxu0 0.0
        %1186 = vmatmul.mubr.f32.gmra.mrb[0].mxu0 %v1064
        %v1187 = vpop.f32.mrb[0].mxu0
        %v1188 = vadd.f32 0.0, %v1187
        %v1189 = vpop.f32.mrb[0].mxu0
        %1190 = vmatprep.mubr.f32.mxu0 0.0
        %1191 = vmatmul.mubr.f32.gmra.mrb[0].mxu0 %v1065
        %v1192 = vpop.f32.mrb[0].mxu0
        %v1193 = vadd.f32 0.0, %v1192
        %v1194 = vpop.f32.mrb[0].mxu0
        %1195 = vmatprep.mubr.f32.mxu0 0.0
        %1196 = vmatmul.mubr.f32.gmra.mrb[0].mxu0 %v1066
        %v1197 = vpop.f32.mrb[0].mxu0
        %v1198 = vadd.f32 0.0, %v1197
        %v1199 = vpop.f32.mrb[0].mxu0
        %1200 = vmatprep.mubr.f32.mxu0 0.0
        %1201 = vmatmul.mubr.f32.gmra.mrb[0].mxu0 %v1067
        %v1202 = vpop.f32.mrb[0].mxu0
        %v1203 = vadd.f32 0.0, %v1202
        %v1204 = vpop.f32.mrb[0].mxu0
        %1205 = vmatprep.mubr.f32.mxu0 0.0
        %1206 = vmatmul.mubr.f32.gmra.mrb[0].mxu0 %v1068
        %v1207 = vpop.f32.mrb[0].mxu0
        %v1208 = vadd.f32 0.0, %v1207
        %v1209 = vpop.f32.mrb[0].mxu0
        %1210 = vmatprep.mubr.f32.mxu0 0.0
        %1211 = vmatmul.mubr.f32.gmra.mrb[0].mxu0 %v1069
        %v1212 = vpop.f32.mrb[0].mxu0
        %v1213 = vadd.f32 0.0, %v1212
        %v1214 = vpop.f32.mrb[0].mxu0
        %1215 = vmatprep.mubr.f32.mxu0 0.0
        %1216 = vmatmul.mubr.f32.gmra.mrb[0].mxu0 %v1070
        %v1217 = vpop.f32.mrb[0].mxu0
        %v1218 = vadd.f32 0.0, %v1217
        %v1219 = vpop.f32.mrb[0].mxu0
        %1220 = vmatprep.mubr.f32.mxu0 0.0
        %1221 = vmatmul.mubr.f32.gmra.mrb[0].mxu0 %v1071
        %v1222 = vpop.f32.mrb[0].mxu0
        %v1223 = vadd.f32 0.0, %v1222
        %v1224 = vpop.f32.mrb[0].mxu0
        %1225 = vmatprep.mubr.f32.mxu0 0.0
        %1226 = vmatmul.mubr.f32.gmra.mrb[0].mxu0 %v1072
        %v1227 = vpop.f32.mrb[0].mxu0
        %v1228 = vadd.f32 0.0, %v1227
        %v1229 = vpop.f32.mrb[0].mxu0
        %1230 = vmatprep.mubr.f32.mxu0 0.0
        %1231 = vmatmul.mubr.f32.gmra.mrb[0].mxu0 %v1073
        %v1232 = vpop.f32.mrb[0].mxu0
        %v1233 = vadd.f32 0.0, %v1232
        %v1234 = vpop.f32.mrb[0].mxu0
        %1235 = vmatprep.mubr.f32.mxu0 0.0
        %1236 = vmatmul.mubr.f32.gmra.mrb[0].mxu0 %v1074
        %v1237 = vpop.f32.mrb[0].mxu0
        %v1238 = vadd.f32 0.0, %v1237
        %v1239 = vpop.f32.mrb[0].mxu0
        %1240 = vmatprep.mubr.f32.mxu0 0.0
        %1241 = vmatmul.mubr.f32.gmra.mrb[0].mxu0 %v1075
        %v1242 = vpop.f32.mrb[0].mxu0
        %v1243 = vadd.f32 0.0, %v1242
        %v1244 = vpop.f32.mrb[0].mxu0
        %1245 = vmatprep.mubr.f32.mxu0 0.0
        %1246 = vmatmul.mubr.f32.gmra.mrb[0].mxu0 %v1076
        %v1247 = vpop.f32.mrb[0].mxu0
        %v1248 = vadd.f32 0.0, %v1247
        %v1249 = vpop.f32.mrb[0].mxu0
        %1250 = vmatprep.mubr.f32.mxu0 0.0
        %1251 = vmatmul.mubr.f32.gmra.mrb[0].mxu0 %v1077
        %v1252 = vpop.f32.mrb[0].mxu0
        %v1253 = vadd.f32 0.0, %v1252
        %v1254 = vpop.f32.mrb[0].mxu0
        %1255 = vmatprep.mubr.f32.mxu0 0.0
        %1256 = vmatmul.mubr.f32.gmra.mrb[0].mxu0 %v1078
        %v1257 = vpop.f32.mrb[0].mxu0
        %v1258 = vadd.f32 0.0, %v1257
        %v1259 = vpop.f32.mrb[0].mxu0
        %1260 = vmatprep.mubr.f32.mxu0 0.0
        %1261 = vmatmul.mubr.f32.gmra.mrb[0].mxu0 %v1079
        %v1262 = vpop.f32.mrb[0].mxu0
        %v1263 = vadd.f32 0.0, %v1262
        %v1264 = vpop.f32.mrb[0].mxu0
        %1265 = vmatprep.mubr.f32.mxu0 0.0
        %1266 = vmatmul.mubr.f32.gmra.mrb[0].mxu0 %v1080
        %v1267 = vpop.f32.mrb[0].mxu0
        %v1268 = vadd.f32 0.0, %v1267
        %v1269 = vpop.f32.mrb[0].mxu0
        %1270 = vmatprep.mubr.f32.mxu0 0.0
        %1271 = vmatmul.mubr.f32.gmra.mrb[0].mxu0 %v1081
        %v1272 = vpop.f32.mrb[0].mxu0
        %v1273 = vadd.f32 0.0, %v1272
        %v1274 = vpop.f32.mrb[0].mxu0
        %1275 = vmatprep.mubr.f32.mxu0 0.0
        %1276 = vmatmul.mubr.f32.gmra.mrb[0].mxu0 %v1082
        %v1277 = vpop.f32.mrb[0].mxu0
        %v1278 = vadd.f32 0.0, %v1277
        %v1279 = vpop.f32.mrb[0].mxu0
        %1280 = vmatprep.mubr.f32.mxu0 0.0
        %1281 = vmatmul.mubr.f32.gmra.mrb[0].mxu0 %v1083
        %v1282 = vpop.f32.mrb[0].mxu0
        %v1283 = vadd.f32 0.0, %v1282
        %v1284 = vpop.f32.mrb[0].mxu0
        %1285 = vmatprep.mubr.f32.mxu0 0.0
        %1286 = vmatmul.mubr.f32.gmra.mrb[0].mxu0 %v1084
        %v1287 = vpop.f32.mrb[0].mxu0
        %v1288 = vadd.f32 0.0, %v1287
        %v1289 = vpop.f32.mrb[0].mxu0
        %1290 = vmatprep.mubr.f32.mxu0 0.0
        %1291 = vmatmul.mubr.f32.gmra.mrb[0].mxu0 %v1085
        %v1292 = vpop.f32.mrb[0].mxu0
        %v1293 = vadd.f32 0.0, %v1292
        %v1294 = vpop.f32.mrb[0].mxu0
        %1295 = vmatprep.mubr.f32.mxu0 0.0
        %1296 = vmatmul.mubr.f32.gmra.mrb[0].mxu0 %v1086
        %v1297 = vpop.f32.mrb[0].mxu0
        %v1298 = vadd.f32 0.0, %v1297
        %v1299 = vpop.f32.mrb[0].mxu0
        %1300 = vmatprep.mubr.f32.mxu0 0.0
        %1301 = vmatmul.mubr.f32.gmra.mrb[0].mxu0 %v1087
        %v1302 = vpop.f32.mrb[0].mxu0
        %v1303 = vadd.f32 0.0, %v1302
        %v1304 = vpop.f32.mrb[0].mxu0
        %1305 = vmatprep.mubr.f32.mxu0 0.0
        %1306 = vmatmul.mubr.f32.gmra.mrb[0].mxu0 %v1088
        %v1307 = vpop.f32.mrb[0].mxu0
        %v1308 = vadd.f32 0.0, %v1307
        %v1309 = vpop.f32.mrb[0].mxu0
        %1310 = vmatprep.mubr.f32.mxu0 0.0
        %1311 = vmatmul.mubr.f32.gmra.mrb[0].mxu0 %v1089
        %v1312 = vpop.f32.mrb[0].mxu0
        %v1313 = vadd.f32 0.0, %v1312
        %v1314 = vpop.f32.mrb[0].mxu0
        %1315 = vmatprep.mubr.f32.mxu0 0.0
        %1316 = vmatmul.mubr.f32.gmra.mrb[0].mxu0 %v1090
        %v1317 = vpop.f32.mrb[0].mxu0
        %v1318 = vadd.f32 0.0, %v1317
        %v1319 = vpop.f32.mrb[0].mxu0
        %1320 = vmatprep.mubr.f32.mxu0 0.0
        %1321 = vmatmul.mubr.f32.gmra.mrb[0].mxu0 %v1091
        %v1322 = vpop.f32.mrb[0].mxu0
        %v1323 = vadd.f32 0.0, %v1322
        %v1324 = vpop.f32.mrb[0].mxu0
        %1325 = vmatprep.mubr.f32.mxu0 0.0
        %1326 = vmatmul.mubr.f32.gmra.mrb[0].mxu0 %v1092
        %v1327 = vpop.f32.mrb[0].mxu0
        %v1328 = vadd.f32 0.0, %v1327
        %v1329 = vpop.f32.mrb[0].mxu0
        %1330 = vmatprep.mubr.f32.mxu0 0.0
        %1331 = vmatmul.mubr.f32.gmra.mrb[0].mxu0 %v1093
        %v1332 = vpop.f32.mrb[0].mxu0
        %v1333 = vadd.f32 0.0, %v1332
        %v1334 = vpop.f32.mrb[0].mxu0
        %1335 = vdwg.mxu0
        %v1336 = vld [vmem:[#allocation3] sm:$0xff]
        %v1337 = vld [vmem:[#allocation3 + $0x8] sm:$0xff]
        %v1338 = vld [vmem:[#allocation3 + $0x10] sm:$0xff]
        %v1339 = vld [vmem:[#allocation3 + $0x18] sm:$0xff]
        %v1340 = vld [vmem:[#allocation3 + $0x20] sm:$0xff]
        %v1341 = vld [vmem:[#allocation3 + $0x28] sm:$0xff]
        %v1342 = vld [vmem:[#allocation3 + $0x30] sm:$0xff]
        %v1343 = vld [vmem:[#allocation3 + $0x38] sm:$0xff]
        %v1344 = vld [vmem:[#allocation3 + $0x40] sm:$0xff]
        %v1345 = vld [vmem:[#allocation3 + $0x48] sm:$0xff]
        %v1346 = vld [vmem:[#allocation3 + $0x50] sm:$0xff]
        %v1347 = vld [vmem:[#allocation3 + $0x58] sm:$0xff]
        %v1348 = vld [vmem:[#allocation3 + $0x60] sm:$0xff]
        %v1349 = vld [vmem:[#allocation3 + $0x68] sm:$0xff]
        %v1350 = vld [vmem:[#allocation3 + $0x70] sm:$0xff]
        %v1351 = vld [vmem:[#allocation3 + $0x78] sm:$0xff]
        %v1352 = vld [vmem:[#allocation3 + $0x80] sm:$0xff]
        %v1353 = vld [vmem:[#allocation3 + $0x88] sm:$0xff]
        %v1354 = vld [vmem:[#allocation3 + $0x90] sm:$0xff]
        %v1355 = vld [vmem:[#allocation3 + $0x98] sm:$0xff]
        %v1356 = vld [vmem:[#allocation3 + $0xa0] sm:$0xff]
        %v1357 = vld [vmem:[#allocation3 + $0xa8] sm:$0xff]
        %v1358 = vld [vmem:[#allocation3 + $0xb0] sm:$0xff]
        %v1359 = vld [vmem:[#allocation3 + $0xb8] sm:$0xff]
        %v1360 = vld [vmem:[#allocation3 + $0xc0] sm:$0xff]
        %v1361 = vld [vmem:[#allocation3 + $0xc8] sm:$0xff]
        %v1362 = vld [vmem:[#allocation3 + $0xd0] sm:$0xff]
        %v1363 = vld [vmem:[#allocation3 + $0xd8] sm:$0xff]
        %v1364 = vld [vmem:[#allocation3 + $0xe0] sm:$0xff]
        %v1365 = vld [vmem:[#allocation3 + $0xe8] sm:$0xff]
        %v1366 = vld [vmem:[#allocation3 + $0xf0] sm:$0xff]
        %v1367 = vld [vmem:[#allocation3 + $0xf8] sm:$0xff]
        %v1368 = vadd.f32 %v1336, %v1178
        %v1369 = vadd.f32 %v1337, %v1183
        %v1370 = vadd.f32 %v1338, %v1188
        %v1371 = vadd.f32 %v1339, %v1193
        %v1372 = vadd.f32 %v1340, %v1198
        %v1373 = vadd.f32 %v1341, %v1203
        %v1374 = vadd.f32 %v1342, %v1208
        %v1375 = vadd.f32 %v1343, %v1213
        %v1376 = vadd.f32 %v1344, %v1218
        %v1377 = vadd.f32 %v1345, %v1223
        %v1378 = vadd.f32 %v1346, %v1228
        %v1379 = vadd.f32 %v1347, %v1233
        %v1380 = vadd.f32 %v1348, %v1238
        %v1381 = vadd.f32 %v1349, %v1243
        %v1382 = vadd.f32 %v1350, %v1248
        %v1383 = vadd.f32 %v1351, %v1253
        %v1384 = vadd.f32 %v1352, %v1258
        %v1385 = vadd.f32 %v1353, %v1263
        %v1386 = vadd.f32 %v1354, %v1268
        %v1387 = vadd.f32 %v1355, %v1273
        %v1388 = vadd.f32 %v1356, %v1278
        %v1389 = vadd.f32 %v1357, %v1283
        %v1390 = vadd.f32 %v1358, %v1288
        %v1391 = vadd.f32 %v1359, %v1293
        %v1392 = vadd.f32 %v1360, %v1298
        %v1393 = vadd.f32 %v1361, %v1303
        %v1394 = vadd.f32 %v1362, %v1308
        %v1395 = vadd.f32 %v1363, %v1313
        %v1396 = vadd.f32 %v1364, %v1318
        %v1397 = vadd.f32 %v1365, %v1323
        %v1398 = vadd.f32 %v1366, %v1328
        %v1399 = vadd.f32 %v1367, %v1333
        %1400 = vst [vmem:[#allocation3] sm:$0xff] %v1368
        %1401 = vst [vmem:[#allocation3 + $0x8] sm:$0xff] %v1369
        %1402 = vst [vmem:[#allocation3 + $0x10] sm:$0xff] %v1370
        %1403 = vst [vmem:[#allocation3 + $0x18] sm:$0xff] %v1371
        %1404 = vst [vmem:[#allocation3 + $0x20] sm:$0xff] %v1372
        %1405 = vst [vmem:[#allocation3 + $0x28] sm:$0xff] %v1373
        %1406 = vst [vmem:[#allocation3 + $0x30] sm:$0xff] %v1374
        %1407 = vst [vmem:[#allocation3 + $0x38] sm:$0xff] %v1375
        %1408 = vst [vmem:[#allocation3 + $0x40] sm:$0xff] %v1376
        %1409 = vst [vmem:[#allocation3 + $0x48] sm:$0xff] %v1377
        %1410 = vst [vmem:[#allocation3 + $0x50] sm:$0xff] %v1378
        %1411 = vst [vmem:[#allocation3 + $0x58] sm:$0xff] %v1379
        %1412 = vst [vmem:[#allocation3 + $0x60] sm:$0xff] %v1380
        %1413 = vst [vmem:[#allocation3 + $0x68] sm:$0xff] %v1381
        %1414 = vst [vmem:[#allocation3 + $0x70] sm:$0xff] %v1382
        %1415 = vst [vmem:[#allocation3 + $0x78] sm:$0xff] %v1383
        %1416 = vst [vmem:[#allocation3 + $0x80] sm:$0xff] %v1384
        %1417 = vst [vmem:[#allocation3 + $0x88] sm:$0xff] %v1385
        %1418 = vst [vmem:[#allocation3 + $0x90] sm:$0xff] %v1386
        %1419 = vst [vmem:[#allocation3 + $0x98] sm:$0xff] %v1387
        %1420 = vst [vmem:[#allocation3 + $0xa0] sm:$0xff] %v1388
        %1421 = vst [vmem:[#allocation3 + $0xa8] sm:$0xff] %v1389
        %1422 = vst [vmem:[#allocation3 + $0xb0] sm:$0xff] %v1390
        %1423 = vst [vmem:[#allocation3 + $0xb8] sm:$0xff] %v1391
        %1424 = vst [vmem:[#allocation3 + $0xc0] sm:$0xff] %v1392
        %1425 = vst [vmem:[#allocation3 + $0xc8] sm:$0xff] %v1393
        %1426 = vst [vmem:[#allocation3 + $0xd0] sm:$0xff] %v1394
        %1427 = vst [vmem:[#allocation3 + $0xd8] sm:$0xff] %v1395
        %1428 = vst [vmem:[#allocation3 + $0xe0] sm:$0xff] %v1396
        %1429 = vst [vmem:[#allocation3 + $0xe8] sm:$0xff] %v1397
        %1430 = vst [vmem:[#allocation3 + $0xf0] sm:$0xff] %v1398
        %1431 = vst [vmem:[#allocation3 + $0xf8] sm:$0xff] %v1399
        %v1432 = vld [vmem:[#allocation2 + $0x2] sm:$0xff]
        %v1433 = vld [vmem:[#allocation2 + $0xa] sm:$0xff]
        %v1434 = vld [vmem:[#allocation2 + $0x1a] sm:$0xff]
        %v1435 = vld [vmem:[#allocation2 + $0x22] sm:$0xff]
        %v1436 = vld [vmem:[#allocation2 + $0x32] sm:$0xff]
        %v1437 = vld [vmem:[#allocation2 + $0x3a] sm:$0xff]
        %v1438 = vld [vmem:[#allocation2 + $0x4a] sm:$0xff]
        %v1439 = vld [vmem:[#allocation2 + $0x52] sm:$0xff]
        %v1440 = vld [vmem:[#allocation2 + $0x62] sm:$0xff]
        %v1441 = vld [vmem:[#allocation2 + $0x6a] sm:$0xff]
        %v1442 = vld [vmem:[#allocation2 + $0x7a] sm:$0xff]
        %v1443 = vld [vmem:[#allocation2 + $0x82] sm:$0xff]
        %v1444 = vld [vmem:[#allocation2 + $0x92] sm:$0xff]
        %v1445 = vld [vmem:[#allocation2 + $0x9a] sm:$0xff]
        %v1446 = vld [vmem:[#allocation2 + $0xaa] sm:$0xff]
        %v1447 = vld [vmem:[#allocation2 + $0xb2] sm:$0xff]
        %v1448 = vld [vmem:[#allocation2 + $0xc2] sm:$0xff]
        %v1449 = vld [vmem:[#allocation2 + $0xca] sm:$0xff]
        %v1450 = vld [vmem:[#allocation2 + $0xda] sm:$0xff]
        %v1451 = vld [vmem:[#allocation2 + $0xe2] sm:$0xff]
        %v1452 = vld [vmem:[#allocation2 + $0xf2] sm:$0xff]
        %v1453 = vld [vmem:[#allocation2 + $0xfa] sm:$0xff]
        %v1454 = vld [vmem:[#allocation2 + $0x10a] sm:$0xff]
        %v1455 = vld [vmem:[#allocation2 + $0x112] sm:$0xff]
        %v1456 = vld [vmem:[#allocation2 + $0x122] sm:$0xff]
        %v1457 = vld [vmem:[#allocation2 + $0x12a] sm:$0xff]
        %v1458 = vld [vmem:[#allocation2 + $0x13a] sm:$0xff]
        %v1459 = vld [vmem:[#allocation2 + $0x142] sm:$0xff]
        %v1460 = vld [vmem:[#allocation2 + $0x152] sm:$0xff]
        %v1461 = vld [vmem:[#allocation2 + $0x15a] sm:$0xff]
        %v1462 = vld [vmem:[#allocation2 + $0x16a] sm:$0xff]
        %v1463 = vld [vmem:[#allocation2 + $0x172] sm:$0xff]
        %s1464 = scalar_lea.vmem [#allocation15], 256
        %v1465 = vld [vmem:[%s1464] sm:$0xff]
        %v1466 = vld [vmem:[%s1464 + $0x8] sm:$0xff]
        %v1467 = vld [vmem:[%s1464 + $0x10] sm:$0xff]
        %v1468 = vld [vmem:[%s1464 + $0x18] sm:$0xff]
        %v1469 = vld [vmem:[%s1464 + $0x20] sm:$0xff]
        %v1470 = vld [vmem:[%s1464 + $0x28] sm:$0xff]
        %v1471 = vld [vmem:[%s1464 + $0x30] sm:$0xff]
        %v1472 = vld [vmem:[%s1464 + $0x38] sm:$0xff]
        %v1473 = vld [vmem:[%s1464 + $0x40] sm:$0xff]
        %v1474 = vld [vmem:[%s1464 + $0x48] sm:$0xff]
        %v1475 = vld [vmem:[%s1464 + $0x50] sm:$0xff]
        %v1476 = vld [vmem:[%s1464 + $0x58] sm:$0xff]
        %v1477 = vld [vmem:[%s1464 + $0x60] sm:$0xff]
        %v1478 = vld [vmem:[%s1464 + $0x68] sm:$0xff]
        %v1479 = vld [vmem:[%s1464 + $0x70] sm:$0xff]
        %v1480 = vld [vmem:[%s1464 + $0x78] sm:$0xff]
        %1481 = vmatprep.subr.mxu0 0.0
        %1482 = vmatpush1.msra.mxu0 %v1465
        %1483 = vmatprep.subr.mxu0 0.0
        %1484 = vmatpush1.msra.mxu0 %v1466
        %1485 = vmatprep.subr.mxu0 0.0
        %1486 = vmatpush1.msra.mxu0 %v1467
        %1487 = vmatprep.subr.mxu0 0.0
        %1488 = vmatpush1.msra.mxu0 %v1468
        %1489 = vmatprep.subr.mxu0 0.0
        %1490 = vmatpush1.msra.mxu0 %v1469
        %1491 = vmatprep.subr.mxu0 0.0
        %1492 = vmatpush1.msra.mxu0 %v1470
        %1493 = vmatprep.subr.mxu0 0.0
        %1494 = vmatpush1.msra.mxu0 %v1471
        %1495 = vmatprep.subr.mxu0 0.0
        %1496 = vmatpush1.msra.mxu0 %v1472
        %1497 = vmatprep.subr.mxu0 0.0
        %1498 = vmatpush1.msra.mxu0 %v1473
        %1499 = vmatprep.subr.mxu0 0.0
        %1500 = vmatpush1.msra.mxu0 %v1474
        %1501 = vmatprep.subr.mxu0 0.0
        %1502 = vmatpush1.msra.mxu0 %v1475
        %1503 = vmatprep.subr.mxu0 0.0
        %1504 = vmatpush1.msra.mxu0 %v1476
        %1505 = vmatprep.subr.mxu0 0.0
        %1506 = vmatpush1.msra.mxu0 %v1477
        %1507 = vmatprep.subr.mxu0 0.0
        %1508 = vmatpush1.msra.mxu0 %v1478
        %1509 = vmatprep.subr.mxu0 0.0
        %1510 = vmatpush1.msra.mxu0 %v1479
        %1511 = vmatprep.subr.mxu0 0.0
        %1512 = vmatpush1.msra.mxu0 %v1480
        %1513 = vmatprep.subr.mxu0 0.0
        %1514 = vmatpush1.msra.mxu0 0.0
        %1515 = vmatprep.subr.mxu0 0.0
        %1516 = vmatpush1.msra.mxu0 0.0
        %1517 = vmatprep.subr.mxu0 0.0
        %1518 = vmatpush1.msra.mxu0 0.0
        %1519 = vmatprep.subr.mxu0 0.0
        %1520 = vmatpush1.msra.mxu0 0.0
        %1521 = vmatprep.subr.mxu0 0.0
        %1522 = vmatpush1.msra.mxu0 0.0
        %1523 = vmatprep.subr.mxu0 0.0
        %1524 = vmatpush1.msra.mxu0 0.0
        %1525 = vmatprep.subr.mxu0 0.0
        %1526 = vmatpush1.msra.mxu0 0.0
        %1527 = vmatprep.subr.mxu0 0.0
        %1528 = vmatpush1.msra.mxu0 0.0
        %1529 = vmatprep.subr.mxu0 0.0
        %1530 = vmatpush1.msra.mxu0 0.0
        %1531 = vmatprep.subr.mxu0 0.0
        %1532 = vmatpush1.msra.mxu0 0.0
        %1533 = vmatprep.subr.mxu0 0.0
        %1534 = vmatpush1.msra.mxu0 0.0
        %1535 = vmatprep.subr.mxu0 0.0
        %1536 = vmatpush1.msra.mxu0 0.0
        %1537 = vmatprep.subr.mxu0 0.0
        %1538 = vmatpush1.msra.mxu0 0.0
        %1539 = vmatprep.subr.mxu0 0.0
        %1540 = vmatpush1.msra.mxu0 0.0
        %1541 = vmatprep.subr.mxu0 0.0
        %1542 = vmatpush1.msra.mxu0 0.0
        %1543 = vmatprep.subr.mxu0 0.0
        %1544 = vmatpush1.msra.mxu0 0.0
        %1545 = vmatprep.mubr.f32.mxu0 0.0
        %1546 = vmatmul.mubr.f32.gmra.mrb[0].mxu0 %v1432
        %v1547 = vpop.f32.mrb[0].mxu0
        %v1548 = vadd.f32 0.0, %v1547
        %v1549 = vpop.f32.mrb[0].mxu0
        %1550 = vmatprep.mubr.f32.mxu0 0.0
        %1551 = vmatmul.mubr.f32.gmra.mrb[0].mxu0 %v1433
        %v1552 = vpop.f32.mrb[0].mxu0
        %v1553 = vadd.f32 0.0, %v1552
        %v1554 = vpop.f32.mrb[0].mxu0
        %1555 = vmatprep.mubr.f32.mxu0 0.0
        %1556 = vmatmul.mubr.f32.gmra.mrb[0].mxu0 %v1434
        %v1557 = vpop.f32.mrb[0].mxu0
        %v1558 = vadd.f32 0.0, %v1557
        %v1559 = vpop.f32.mrb[0].mxu0
        %1560 = vmatprep.mubr.f32.mxu0 0.0
        %1561 = vmatmul.mubr.f32.gmra.mrb[0].mxu0 %v1435
        %v1562 = vpop.f32.mrb[0].mxu0
        %v1563 = vadd.f32 0.0, %v1562
        %v1564 = vpop.f32.mrb[0].mxu0
        %1565 = vmatprep.mubr.f32.mxu0 0.0
        %1566 = vmatmul.mubr.f32.gmra.mrb[0].mxu0 %v1436
        %v1567 = vpop.f32.mrb[0].mxu0
        %v1568 = vadd.f32 0.0, %v1567
        %v1569 = vpop.f32.mrb[0].mxu0
        %1570 = vmatprep.mubr.f32.mxu0 0.0
        %1571 = vmatmul.mubr.f32.gmra.mrb[0].mxu0 %v1437
        %v1572 = vpop.f32.mrb[0].mxu0
        %v1573 = vadd.f32 0.0, %v1572
        %v1574 = vpop.f32.mrb[0].mxu0
        %1575 = vmatprep.mubr.f32.mxu0 0.0
        %1576 = vmatmul.mubr.f32.gmra.mrb[0].mxu0 %v1438
        %v1577 = vpop.f32.mrb[0].mxu0
        %v1578 = vadd.f32 0.0, %v1577
        %v1579 = vpop.f32.mrb[0].mxu0
        %1580 = vmatprep.mubr.f32.mxu0 0.0
        %1581 = vmatmul.mubr.f32.gmra.mrb[0].mxu0 %v1439
        %v1582 = vpop.f32.mrb[0].mxu0
        %v1583 = vadd.f32 0.0, %v1582
        %v1584 = vpop.f32.mrb[0].mxu0
        %1585 = vmatprep.mubr.f32.mxu0 0.0
        %1586 = vmatmul.mubr.f32.gmra.mrb[0].mxu0 %v1440
        %v1587 = vpop.f32.mrb[0].mxu0
        %v1588 = vadd.f32 0.0, %v1587
        %v1589 = vpop.f32.mrb[0].mxu0
        %1590 = vmatprep.mubr.f32.mxu0 0.0
        %1591 = vmatmul.mubr.f32.gmra.mrb[0].mxu0 %v1441
        %v1592 = vpop.f32.mrb[0].mxu0
        %v1593 = vadd.f32 0.0, %v1592
        %v1594 = vpop.f32.mrb[0].mxu0
        %1595 = vmatprep.mubr.f32.mxu0 0.0
        %1596 = vmatmul.mubr.f32.gmra.mrb[0].mxu0 %v1442
        %v1597 = vpop.f32.mrb[0].mxu0
        %v1598 = vadd.f32 0.0, %v1597
        %v1599 = vpop.f32.mrb[0].mxu0
        %1600 = vmatprep.mubr.f32.mxu0 0.0
        %1601 = vmatmul.mubr.f32.gmra.mrb[0].mxu0 %v1443
        %v1602 = vpop.f32.mrb[0].mxu0
        %v1603 = vadd.f32 0.0, %v1602
        %v1604 = vpop.f32.mrb[0].mxu0
        %1605 = vmatprep.mubr.f32.mxu0 0.0
        %1606 = vmatmul.mubr.f32.gmra.mrb[0].mxu0 %v1444
        %v1607 = vpop.f32.mrb[0].mxu0
        %v1608 = vadd.f32 0.0, %v1607
        %v1609 = vpop.f32.mrb[0].mxu0
        %1610 = vmatprep.mubr.f32.mxu0 0.0
        %1611 = vmatmul.mubr.f32.gmra.mrb[0].mxu0 %v1445
        %v1612 = vpop.f32.mrb[0].mxu0
        %v1613 = vadd.f32 0.0, %v1612
        %v1614 = vpop.f32.mrb[0].mxu0
        %1615 = vmatprep.mubr.f32.mxu0 0.0
        %1616 = vmatmul.mubr.f32.gmra.mrb[0].mxu0 %v1446
        %v1617 = vpop.f32.mrb[0].mxu0
        %v1618 = vadd.f32 0.0, %v1617
        %v1619 = vpop.f32.mrb[0].mxu0
        %1620 = vmatprep.mubr.f32.mxu0 0.0
        %1621 = vmatmul.mubr.f32.gmra.mrb[0].mxu0 %v1447
        %v1622 = vpop.f32.mrb[0].mxu0
        %v1623 = vadd.f32 0.0, %v1622
        %v1624 = vpop.f32.mrb[0].mxu0
        %1625 = vmatprep.mubr.f32.mxu0 0.0
        %1626 = vmatmul.mubr.f32.gmra.mrb[0].mxu0 %v1448
        %v1627 = vpop.f32.mrb[0].mxu0
        %v1628 = vadd.f32 0.0, %v1627
        %v1629 = vpop.f32.mrb[0].mxu0
        %1630 = vmatprep.mubr.f32.mxu0 0.0
        %1631 = vmatmul.mubr.f32.gmra.mrb[0].mxu0 %v1449
        %v1632 = vpop.f32.mrb[0].mxu0
        %v1633 = vadd.f32 0.0, %v1632
        %v1634 = vpop.f32.mrb[0].mxu0
        %1635 = vmatprep.mubr.f32.mxu0 0.0
        %1636 = vmatmul.mubr.f32.gmra.mrb[0].mxu0 %v1450
        %v1637 = vpop.f32.mrb[0].mxu0
        %v1638 = vadd.f32 0.0, %v1637
        %v1639 = vpop.f32.mrb[0].mxu0
        %1640 = vmatprep.mubr.f32.mxu0 0.0
        %1641 = vmatmul.mubr.f32.gmra.mrb[0].mxu0 %v1451
        %v1642 = vpop.f32.mrb[0].mxu0
        %v1643 = vadd.f32 0.0, %v1642
        %v1644 = vpop.f32.mrb[0].mxu0
        %1645 = vmatprep.mubr.f32.mxu0 0.0
        %1646 = vmatmul.mubr.f32.gmra.mrb[0].mxu0 %v1452
        %v1647 = vpop.f32.mrb[0].mxu0
        %v1648 = vadd.f32 0.0, %v1647
        %v1649 = vpop.f32.mrb[0].mxu0
        %1650 = vmatprep.mubr.f32.mxu0 0.0
        %1651 = vmatmul.mubr.f32.gmra.mrb[0].mxu0 %v1453
        %v1652 = vpop.f32.mrb[0].mxu0
        %v1653 = vadd.f32 0.0, %v1652
        %v1654 = vpop.f32.mrb[0].mxu0
        %1655 = vmatprep.mubr.f32.mxu0 0.0
        %1656 = vmatmul.mubr.f32.gmra.mrb[0].mxu0 %v1454
        %v1657 = vpop.f32.mrb[0].mxu0
        %v1658 = vadd.f32 0.0, %v1657
        %v1659 = vpop.f32.mrb[0].mxu0
        %1660 = vmatprep.mubr.f32.mxu0 0.0
        %1661 = vmatmul.mubr.f32.gmra.mrb[0].mxu0 %v1455
        %v1662 = vpop.f32.mrb[0].mxu0
        %v1663 = vadd.f32 0.0, %v1662
        %v1664 = vpop.f32.mrb[0].mxu0
        %1665 = vmatprep.mubr.f32.mxu0 0.0
        %1666 = vmatmul.mubr.f32.gmra.mrb[0].mxu0 %v1456
        %v1667 = vpop.f32.mrb[0].mxu0
        %v1668 = vadd.f32 0.0, %v1667
        %v1669 = vpop.f32.mrb[0].mxu0
        %1670 = vmatprep.mubr.f32.mxu0 0.0
        %1671 = vmatmul.mubr.f32.gmra.mrb[0].mxu0 %v1457
        %v1672 = vpop.f32.mrb[0].mxu0
        %v1673 = vadd.f32 0.0, %v1672
        %v1674 = vpop.f32.mrb[0].mxu0
        %1675 = vmatprep.mubr.f32.mxu0 0.0
        %1676 = vmatmul.mubr.f32.gmra.mrb[0].mxu0 %v1458
        %v1677 = vpop.f32.mrb[0].mxu0
        %v1678 = vadd.f32 0.0, %v1677
        %v1679 = vpop.f32.mrb[0].mxu0
        %1680 = vmatprep.mubr.f32.mxu0 0.0
        %1681 = vmatmul.mubr.f32.gmra.mrb[0].mxu0 %v1459
        %v1682 = vpop.f32.mrb[0].mxu0
        %v1683 = vadd.f32 0.0, %v1682
        %v1684 = vpop.f32.mrb[0].mxu0
        %1685 = vmatprep.mubr.f32.mxu0 0.0
        %1686 = vmatmul.mubr.f32.gmra.mrb[0].mxu0 %v1460
        %v1687 = vpop.f32.mrb[0].mxu0
        %v1688 = vadd.f32 0.0, %v1687
        %v1689 = vpop.f32.mrb[0].mxu0
        %1690 = vmatprep.mubr.f32.mxu0 0.0
        %1691 = vmatmul.mubr.f32.gmra.mrb[0].mxu0 %v1461
        %v1692 = vpop.f32.mrb[0].mxu0
        %v1693 = vadd.f32 0.0, %v1692
        %v1694 = vpop.f32.mrb[0].mxu0
        %1695 = vmatprep.mubr.f32.mxu0 0.0
        %1696 = vmatmul.mubr.f32.gmra.mrb[0].mxu0 %v1462
        %v1697 = vpop.f32.mrb[0].mxu0
        %v1698 = vadd.f32 0.0, %v1697
        %v1699 = vpop.f32.mrb[0].mxu0
        %1700 = vmatprep.mubr.f32.mxu0 0.0
        %1701 = vmatmul.mubr.f32.gmra.mrb[0].mxu0 %v1463
        %v1702 = vpop.f32.mrb[0].mxu0
        %v1703 = vadd.f32 0.0, %v1702
        %v1704 = vpop.f32.mrb[0].mxu0
        %1705 = vdwg.mxu0
        %v1706 = vld [vmem:[#allocation3] sm:$0xff]
        %v1707 = vld [vmem:[#allocation3 + $0x8] sm:$0xff]
        %v1708 = vld [vmem:[#allocation3 + $0x10] sm:$0xff]
        %v1709 = vld [vmem:[#allocation3 + $0x18] sm:$0xff]
        %v1710 = vld [vmem:[#allocation3 + $0x20] sm:$0xff]
        %v1711 = vld [vmem:[#allocation3 + $0x28] sm:$0xff]
        %v1712 = vld [vmem:[#allocation3 + $0x30] sm:$0xff]
        %v1713 = vld [vmem:[#allocation3 + $0x38] sm:$0xff]
        %v1714 = vld [vmem:[#allocation3 + $0x40] sm:$0xff]
        %v1715 = vld [vmem:[#allocation3 + $0x48] sm:$0xff]
        %v1716 = vld [vmem:[#allocation3 + $0x50] sm:$0xff]
        %v1717 = vld [vmem:[#allocation3 + $0x58] sm:$0xff]
        %v1718 = vld [vmem:[#allocation3 + $0x60] sm:$0xff]
        %v1719 = vld [vmem:[#allocation3 + $0x68] sm:$0xff]
        %v1720 = vld [vmem:[#allocation3 + $0x70] sm:$0xff]
        %v1721 = vld [vmem:[#allocation3 + $0x78] sm:$0xff]
        %v1722 = vld [vmem:[#allocation3 + $0x80] sm:$0xff]
        %v1723 = vld [vmem:[#allocation3 + $0x88] sm:$0xff]
        %v1724 = vld [vmem:[#allocation3 + $0x90] sm:$0xff]
        %v1725 = vld [vmem:[#allocation3 + $0x98] sm:$0xff]
        %v1726 = vld [vmem:[#allocation3 + $0xa0] sm:$0xff]
        %v1727 = vld [vmem:[#allocation3 + $0xa8] sm:$0xff]
        %v1728 = vld [vmem:[#allocation3 + $0xb0] sm:$0xff]
        %v1729 = vld [vmem:[#allocation3 + $0xb8] sm:$0xff]
        %v1730 = vld [vmem:[#allocation3 + $0xc0] sm:$0xff]
        %v1731 = vld [vmem:[#allocation3 + $0xc8] sm:$0xff]
        %v1732 = vld [vmem:[#allocation3 + $0xd0] sm:$0xff]
        %v1733 = vld [vmem:[#allocation3 + $0xd8] sm:$0xff]
        %v1734 = vld [vmem:[#allocation3 + $0xe0] sm:$0xff]
        %v1735 = vld [vmem:[#allocation3 + $0xe8] sm:$0xff]
        %v1736 = vld [vmem:[#allocation3 + $0xf0] sm:$0xff]
        %v1737 = vld [vmem:[#allocation3 + $0xf8] sm:$0xff]
        %v1738 = vadd.f32 %v1706, %v1548
        %v1739 = vadd.f32 %v1707, %v1553
        %v1740 = vadd.f32 %v1708, %v1558
        %v1741 = vadd.f32 %v1709, %v1563
        %v1742 = vadd.f32 %v1710, %v1568
        %v1743 = vadd.f32 %v1711, %v1573
        %v1744 = vadd.f32 %v1712, %v1578
        %v1745 = vadd.f32 %v1713, %v1583
        %v1746 = vadd.f32 %v1714, %v1588
        %v1747 = vadd.f32 %v1715, %v1593
        %v1748 = vadd.f32 %v1716, %v1598
        %v1749 = vadd.f32 %v1717, %v1603
        %v1750 = vadd.f32 %v1718, %v1608
        %v1751 = vadd.f32 %v1719, %v1613
        %v1752 = vadd.f32 %v1720, %v1618
        %v1753 = vadd.f32 %v1721, %v1623
        %v1754 = vadd.f32 %v1722, %v1628
        %v1755 = vadd.f32 %v1723, %v1633
        %v1756 = vadd.f32 %v1724, %v1638
        %v1757 = vadd.f32 %v1725, %v1643
        %v1758 = vadd.f32 %v1726, %v1648
        %v1759 = vadd.f32 %v1727, %v1653
        %v1760 = vadd.f32 %v1728, %v1658
        %v1761 = vadd.f32 %v1729, %v1663
        %v1762 = vadd.f32 %v1730, %v1668
        %v1763 = vadd.f32 %v1731, %v1673
        %v1764 = vadd.f32 %v1732, %v1678
        %v1765 = vadd.f32 %v1733, %v1683
        %v1766 = vadd.f32 %v1734, %v1688
        %v1767 = vadd.f32 %v1735, %v1693
        %v1768 = vadd.f32 %v1736, %v1698
        %v1769 = vadd.f32 %v1737, %v1703
        %1770 = vst [vmem:[#allocation3] sm:$0xff] %v1738
        %1771 = vst [vmem:[#allocation3 + $0x8] sm:$0xff] %v1739
        %1772 = vst [vmem:[#allocation3 + $0x10] sm:$0xff] %v1740
        %1773 = vst [vmem:[#allocation3 + $0x18] sm:$0xff] %v1741
        %1774 = vst [vmem:[#allocation3 + $0x20] sm:$0xff] %v1742
        %1775 = vst [vmem:[#allocation3 + $0x28] sm:$0xff] %v1743
        %1776 = vst [vmem:[#allocation3 + $0x30] sm:$0xff] %v1744
        %1777 = vst [vmem:[#allocation3 + $0x38] sm:$0xff] %v1745
        %1778 = vst [vmem:[#allocation3 + $0x40] sm:$0xff] %v1746
        %1779 = vst [vmem:[#allocation3 + $0x48] sm:$0xff] %v1747
        %1780 = vst [vmem:[#allocation3 + $0x50] sm:$0xff] %v1748
        %1781 = vst [vmem:[#allocation3 + $0x58] sm:$0xff] %v1749
        %1782 = vst [vmem:[#allocation3 + $0x60] sm:$0xff] %v1750
        %1783 = vst [vmem:[#allocation3 + $0x68] sm:$0xff] %v1751
        %1784 = vst [vmem:[#allocation3 + $0x70] sm:$0xff] %v1752
        %1785 = vst [vmem:[#allocation3 + $0x78] sm:$0xff] %v1753
        %1786 = vst [vmem:[#allocation3 + $0x80] sm:$0xff] %v1754
        %1787 = vst [vmem:[#allocation3 + $0x88] sm:$0xff] %v1755
        %1788 = vst [vmem:[#allocation3 + $0x90] sm:$0xff] %v1756
        %1789 = vst [vmem:[#allocation3 + $0x98] sm:$0xff] %v1757
        %1790 = vst [vmem:[#allocation3 + $0xa0] sm:$0xff] %v1758
        %1791 = vst [vmem:[#allocation3 + $0xa8] sm:$0xff] %v1759
        %1792 = vst [vmem:[#allocation3 + $0xb0] sm:$0xff] %v1760
        %1793 = vst [vmem:[#allocation3 + $0xb8] sm:$0xff] %v1761
        %1794 = vst [vmem:[#allocation3 + $0xc0] sm:$0xff] %v1762
        %1795 = vst [vmem:[#allocation3 + $0xc8] sm:$0xff] %v1763
        %1796 = vst [vmem:[#allocation3 + $0xd0] sm:$0xff] %v1764
        %1797 = vst [vmem:[#allocation3 + $0xd8] sm:$0xff] %v1765
        %1798 = vst [vmem:[#allocation3 + $0xe0] sm:$0xff] %v1766
        %1799 = vst [vmem:[#allocation3 + $0xe8] sm:$0xff] %v1767
        %1800 = vst [vmem:[#allocation3 + $0xf0] sm:$0xff] %v1768
        %1801 = vst [vmem:[#allocation3 + $0xf8] sm:$0xff] %v1769
        %v1802 = vld [vmem:[%s685] sm:$0xff]
        %v1803 = vld [vmem:[%s685 + $0x8] sm:$0xff]
        %v1804 = vld [vmem:[%s685 + $0x18] sm:$0xff]
        %v1805 = vld [vmem:[%s685 + $0x20] sm:$0xff]
        %v1806 = vld [vmem:[%s685 + $0x30] sm:$0xff]
        %v1807 = vld [vmem:[%s685 + $0x38] sm:$0xff]
        %v1808 = vld [vmem:[%s685 + $0x48] sm:$0xff]
        %v1809 = vld [vmem:[%s685 + $0x50] sm:$0xff]
        %v1810 = vld [vmem:[%s685 + $0x60] sm:$0xff]
        %v1811 = vld [vmem:[%s685 + $0x68] sm:$0xff]
        %v1812 = vld [vmem:[%s685 + $0x78] sm:$0xff]
        %v1813 = vld [vmem:[%s685 + $0x80] sm:$0xff]
        %v1814 = vld [vmem:[%s685 + $0x90] sm:$0xff]
        %v1815 = vld [vmem:[%s685 + $0x98] sm:$0xff]
        %v1816 = vld [vmem:[%s685 + $0xa8] sm:$0xff]
        %v1817 = vld [vmem:[%s685 + $0xb0] sm:$0xff]
        %v1818 = vld [vmem:[%s685 + $0xc0] sm:$0xff]
        %v1819 = vld [vmem:[%s685 + $0xc8] sm:$0xff]
        %v1820 = vld [vmem:[%s685 + $0xd8] sm:$0xff]
        %v1821 = vld [vmem:[%s685 + $0xe0] sm:$0xff]
        %v1822 = vld [vmem:[%s685 + $0xf0] sm:$0xff]
        %v1823 = vld [vmem:[%s685 + $0xf8] sm:$0xff]
        %v1824 = vld [vmem:[%s685 + $0x108] sm:$0xff]
        %v1825 = vld [vmem:[%s685 + $0x110] sm:$0xff]
        %v1826 = vld [vmem:[%s685 + $0x120] sm:$0xff]
        %v1827 = vld [vmem:[%s685 + $0x128] sm:$0xff]
        %v1828 = vld [vmem:[%s685 + $0x138] sm:$0xff]
        %v1829 = vld [vmem:[%s685 + $0x140] sm:$0xff]
        %v1830 = vld [vmem:[%s685 + $0x150] sm:$0xff]
        %v1831 = vld [vmem:[%s685 + $0x158] sm:$0xff]
        %v1832 = vld [vmem:[%s685 + $0x168] sm:$0xff]
        %v1833 = vld [vmem:[%s685 + $0x170] sm:$0xff]
        %s1834 = scalar_lea.vmem [#allocation15], 384
        %v1835 = vld [vmem:[%s1834] sm:$0xff]
        %v1836 = vld [vmem:[%s1834 + $0x8] sm:$0xff]
        %v1837 = vld [vmem:[%s1834 + $0x10] sm:$0xff]
        %v1838 = vld [vmem:[%s1834 + $0x18] sm:$0xff]
        %v1839 = vld [vmem:[%s1834 + $0x20] sm:$0xff]
        %v1840 = vld [vmem:[%s1834 + $0x28] sm:$0xff]
        %v1841 = vld [vmem:[%s1834 + $0x30] sm:$0xff]
        %v1842 = vld [vmem:[%s1834 + $0x38] sm:$0xff]
        %v1843 = vld [vmem:[%s1834 + $0x40] sm:$0xff]
        %v1844 = vld [vmem:[%s1834 + $0x48] sm:$0xff]
        %v1845 = vld [vmem:[%s1834 + $0x50] sm:$0xff]
        %v1846 = vld [vmem:[%s1834 + $0x58] sm:$0xff]
        %v1847 = vld [vmem:[%s1834 + $0x60] sm:$0xff]
        %v1848 = vld [vmem:[%s1834 + $0x68] sm:$0xff]
        %v1849 = vld [vmem:[%s1834 + $0x70] sm:$0xff]
        %v1850 = vld [vmem:[%s1834 + $0x78] sm:$0xff]
        %1851 = vmatprep.subr.mxu0 0.0
        %1852 = vmatpush1.msra.mxu0 %v1835
        %1853 = vmatprep.subr.mxu0 0.0
        %1854 = vmatpush1.msra.mxu0 %v1836
        %1855 = vmatprep.subr.mxu0 0.0
        %1856 = vmatpush1.msra.mxu0 %v1837
        %1857 = vmatprep.subr.mxu0 0.0
        %1858 = vmatpush1.msra.mxu0 %v1838
        %1859 = vmatprep.subr.mxu0 0.0
        %1860 = vmatpush1.msra.mxu0 %v1839
        %1861 = vmatprep.subr.mxu0 0.0
        %1862 = vmatpush1.msra.mxu0 %v1840
        %1863 = vmatprep.subr.mxu0 0.0
        %1864 = vmatpush1.msra.mxu0 %v1841
        %1865 = vmatprep.subr.mxu0 0.0
        %1866 = vmatpush1.msra.mxu0 %v1842
        %1867 = vmatprep.subr.mxu0 0.0
        %1868 = vmatpush1.msra.mxu0 %v1843
        %1869 = vmatprep.subr.mxu0 0.0
        %1870 = vmatpush1.msra.mxu0 %v1844
        %1871 = vmatprep.subr.mxu0 0.0
        %1872 = vmatpush1.msra.mxu0 %v1845
        %1873 = vmatprep.subr.mxu0 0.0
        %1874 = vmatpush1.msra.mxu0 %v1846
        %1875 = vmatprep.subr.mxu0 0.0
        %1876 = vmatpush1.msra.mxu0 %v1847
        %1877 = vmatprep.subr.mxu0 0.0
        %1878 = vmatpush1.msra.mxu0 %v1848
        %1879 = vmatprep.subr.mxu0 0.0
        %1880 = vmatpush1.msra.mxu0 %v1849
        %1881 = vmatprep.subr.mxu0 0.0
        %1882 = vmatpush1.msra.mxu0 %v1850
        %1883 = vmatprep.subr.mxu0 0.0
        %1884 = vmatpush1.msra.mxu0 0.0
        %1885 = vmatprep.subr.mxu0 0.0
        %1886 = vmatpush1.msra.mxu0 0.0
        %1887 = vmatprep.subr.mxu0 0.0
        %1888 = vmatpush1.msra.mxu0 0.0
        %1889 = vmatprep.subr.mxu0 0.0
        %1890 = vmatpush1.msra.mxu0 0.0
        %1891 = vmatprep.subr.mxu0 0.0
        %1892 = vmatpush1.msra.mxu0 0.0
        %1893 = vmatprep.subr.mxu0 0.0
        %1894 = vmatpush1.msra.mxu0 0.0
        %1895 = vmatprep.subr.mxu0 0.0
        %1896 = vmatpush1.msra.mxu0 0.0
        %1897 = vmatprep.subr.mxu0 0.0
        %1898 = vmatpush1.msra.mxu0 0.0
        %1899 = vmatprep.subr.mxu0 0.0
        %1900 = vmatpush1.msra.mxu0 0.0
        %1901 = vmatprep.subr.mxu0 0.0
        %1902 = vmatpush1.msra.mxu0 0.0
        %1903 = vmatprep.subr.mxu0 0.0
        %1904 = vmatpush1.msra.mxu0 0.0
        %1905 = vmatprep.subr.mxu0 0.0
        %1906 = vmatpush1.msra.mxu0 0.0
        %1907 = vmatprep.subr.mxu0 0.0
        %1908 = vmatpush1.msra.mxu0 0.0
        %1909 = vmatprep.subr.mxu0 0.0
        %1910 = vmatpush1.msra.mxu0 0.0
        %1911 = vmatprep.subr.mxu0 0.0
        %1912 = vmatpush1.msra.mxu0 0.0
        %1913 = vmatprep.subr.mxu0 0.0
        %1914 = vmatpush1.msra.mxu0 0.0
        %1915 = vmatprep.mubr.f32.mxu0 0.0
        %1916 = vmatmul.mubr.f32.gmra.mrb[0].mxu0 %v1802
        %v1917 = vpop.f32.mrb[0].mxu0
        %v1918 = vadd.f32 0.0, %v1917
        %v1919 = vpop.f32.mrb[0].mxu0
        %1920 = vmatprep.mubr.f32.mxu0 0.0
        %1921 = vmatmul.mubr.f32.gmra.mrb[0].mxu0 %v1803
        %v1922 = vpop.f32.mrb[0].mxu0
        %v1923 = vadd.f32 0.0, %v1922
        %v1924 = vpop.f32.mrb[0].mxu0
        %1925 = vmatprep.mubr.f32.mxu0 0.0
        %1926 = vmatmul.mubr.f32.gmra.mrb[0].mxu0 %v1804
        %v1927 = vpop.f32.mrb[0].mxu0
        %v1928 = vadd.f32 0.0, %v1927
        %v1929 = vpop.f32.mrb[0].mxu0
        %1930 = vmatprep.mubr.f32.mxu0 0.0
        %1931 = vmatmul.mubr.f32.gmra.mrb[0].mxu0 %v1805
        %v1932 = vpop.f32.mrb[0].mxu0
        %v1933 = vadd.f32 0.0, %v1932
        %v1934 = vpop.f32.mrb[0].mxu0
        %1935 = vmatprep.mubr.f32.mxu0 0.0
        %1936 = vmatmul.mubr.f32.gmra.mrb[0].mxu0 %v1806
        %v1937 = vpop.f32.mrb[0].mxu0
        %v1938 = vadd.f32 0.0, %v1937
        %v1939 = vpop.f32.mrb[0].mxu0
        %1940 = vmatprep.mubr.f32.mxu0 0.0
        %1941 = vmatmul.mubr.f32.gmra.mrb[0].mxu0 %v1807
        %v1942 = vpop.f32.mrb[0].mxu0
        %v1943 = vadd.f32 0.0, %v1942
        %v1944 = vpop.f32.mrb[0].mxu0
        %1945 = vmatprep.mubr.f32.mxu0 0.0
        %1946 = vmatmul.mubr.f32.gmra.mrb[0].mxu0 %v1808
        %v1947 = vpop.f32.mrb[0].mxu0
        %v1948 = vadd.f32 0.0, %v1947
        %v1949 = vpop.f32.mrb[0].mxu0
        %1950 = vmatprep.mubr.f32.mxu0 0.0
        %1951 = vmatmul.mubr.f32.gmra.mrb[0].mxu0 %v1809
        %v1952 = vpop.f32.mrb[0].mxu0
        %v1953 = vadd.f32 0.0, %v1952
        %v1954 = vpop.f32.mrb[0].mxu0
        %1955 = vmatprep.mubr.f32.mxu0 0.0
        %1956 = vmatmul.mubr.f32.gmra.mrb[0].mxu0 %v1810
        %v1957 = vpop.f32.mrb[0].mxu0
        %v1958 = vadd.f32 0.0, %v1957
        %v1959 = vpop.f32.mrb[0].mxu0
        %1960 = vmatprep.mubr.f32.mxu0 0.0
        %1961 = vmatmul.mubr.f32.gmra.mrb[0].mxu0 %v1811
        %v1962 = vpop.f32.mrb[0].mxu0
        %v1963 = vadd.f32 0.0, %v1962
        %v1964 = vpop.f32.mrb[0].mxu0
        %1965 = vmatprep.mubr.f32.mxu0 0.0
        %1966 = vmatmul.mubr.f32.gmra.mrb[0].mxu0 %v1812
        %v1967 = vpop.f32.mrb[0].mxu0
        %v1968 = vadd.f32 0.0, %v1967
        %v1969 = vpop.f32.mrb[0].mxu0
        %1970 = vmatprep.mubr.f32.mxu0 0.0
        %1971 = vmatmul.mubr.f32.gmra.mrb[0].mxu0 %v1813
        %v1972 = vpop.f32.mrb[0].mxu0
        %v1973 = vadd.f32 0.0, %v1972
        %v1974 = vpop.f32.mrb[0].mxu0
        %1975 = vmatprep.mubr.f32.mxu0 0.0
        %1976 = vmatmul.mubr.f32.gmra.mrb[0].mxu0 %v1814
        %v1977 = vpop.f32.mrb[0].mxu0
        %v1978 = vadd.f32 0.0, %v1977
        %v1979 = vpop.f32.mrb[0].mxu0
        %1980 = vmatprep.mubr.f32.mxu0 0.0
        %1981 = vmatmul.mubr.f32.gmra.mrb[0].mxu0 %v1815
        %v1982 = vpop.f32.mrb[0].mxu0
        %v1983 = vadd.f32 0.0, %v1982
        %v1984 = vpop.f32.mrb[0].mxu0
        %1985 = vmatprep.mubr.f32.mxu0 0.0
        %1986 = vmatmul.mubr.f32.gmra.mrb[0].mxu0 %v1816
        %v1987 = vpop.f32.mrb[0].mxu0
        %v1988 = vadd.f32 0.0, %v1987
        %v1989 = vpop.f32.mrb[0].mxu0
        %1990 = vmatprep.mubr.f32.mxu0 0.0
        %1991 = vmatmul.mubr.f32.gmra.mrb[0].mxu0 %v1817
        %v1992 = vpop.f32.mrb[0].mxu0
        %v1993 = vadd.f32 0.0, %v1992
        %v1994 = vpop.f32.mrb[0].mxu0
        %1995 = vmatprep.mubr.f32.mxu0 0.0
        %1996 = vmatmul.mubr.f32.gmra.mrb[0].mxu0 %v1818
        %v1997 = vpop.f32.mrb[0].mxu0
        %v1998 = vadd.f32 0.0, %v1997
        %v1999 = vpop.f32.mrb[0].mxu0
        %2000 = vmatprep.mubr.f32.mxu0 0.0
        %2001 = vmatmul.mubr.f32.gmra.mrb[0].mxu0 %v1819
        %v2002 = vpop.f32.mrb[0].mxu0
        %v2003 = vadd.f32 0.0, %v2002
        %v2004 = vpop.f32.mrb[0].mxu0
        %2005 = vmatprep.mubr.f32.mxu0 0.0
        %2006 = vmatmul.mubr.f32.gmra.mrb[0].mxu0 %v1820
        %v2007 = vpop.f32.mrb[0].mxu0
        %v2008 = vadd.f32 0.0, %v2007
        %v2009 = vpop.f32.mrb[0].mxu0
        %2010 = vmatprep.mubr.f32.mxu0 0.0
        %2011 = vmatmul.mubr.f32.gmra.mrb[0].mxu0 %v1821
        %v2012 = vpop.f32.mrb[0].mxu0
        %v2013 = vadd.f32 0.0, %v2012
        %v2014 = vpop.f32.mrb[0].mxu0
        %2015 = vmatprep.mubr.f32.mxu0 0.0
        %2016 = vmatmul.mubr.f32.gmra.mrb[0].mxu0 %v1822
        %v2017 = vpop.f32.mrb[0].mxu0
        %v2018 = vadd.f32 0.0, %v2017
        %v2019 = vpop.f32.mrb[0].mxu0
        %2020 = vmatprep.mubr.f32.mxu0 0.0
        %2021 = vmatmul.mubr.f32.gmra.mrb[0].mxu0 %v1823
        %v2022 = vpop.f32.mrb[0].mxu0
        %v2023 = vadd.f32 0.0, %v2022
        %v2024 = vpop.f32.mrb[0].mxu0
        %2025 = vmatprep.mubr.f32.mxu0 0.0
        %2026 = vmatmul.mubr.f32.gmra.mrb[0].mxu0 %v1824
        %v2027 = vpop.f32.mrb[0].mxu0
        %v2028 = vadd.f32 0.0, %v2027
        %v2029 = vpop.f32.mrb[0].mxu0
        %2030 = vmatprep.mubr.f32.mxu0 0.0
        %2031 = vmatmul.mubr.f32.gmra.mrb[0].mxu0 %v1825
        %v2032 = vpop.f32.mrb[0].mxu0
        %v2033 = vadd.f32 0.0, %v2032
        %v2034 = vpop.f32.mrb[0].mxu0
        %2035 = vmatprep.mubr.f32.mxu0 0.0
        %2036 = vmatmul.mubr.f32.gmra.mrb[0].mxu0 %v1826
        %v2037 = vpop.f32.mrb[0].mxu0
        %v2038 = vadd.f32 0.0, %v2037
        %v2039 = vpop.f32.mrb[0].mxu0
        %2040 = vmatprep.mubr.f32.mxu0 0.0
        %2041 = vmatmul.mubr.f32.gmra.mrb[0].mxu0 %v1827
        %v2042 = vpop.f32.mrb[0].mxu0
        %v2043 = vadd.f32 0.0, %v2042
        %v2044 = vpop.f32.mrb[0].mxu0
        %2045 = vmatprep.mubr.f32.mxu0 0.0
        %2046 = vmatmul.mubr.f32.gmra.mrb[0].mxu0 %v1828
        %v2047 = vpop.f32.mrb[0].mxu0
        %v2048 = vadd.f32 0.0, %v2047
        %v2049 = vpop.f32.mrb[0].mxu0
        %2050 = vmatprep.mubr.f32.mxu0 0.0
        %2051 = vmatmul.mubr.f32.gmra.mrb[0].mxu0 %v1829
        %v2052 = vpop.f32.mrb[0].mxu0
        %v2053 = vadd.f32 0.0, %v2052
        %v2054 = vpop.f32.mrb[0].mxu0
        %2055 = vmatprep.mubr.f32.mxu0 0.0
        %2056 = vmatmul.mubr.f32.gmra.mrb[0].mxu0 %v1830
        %v2057 = vpop.f32.mrb[0].mxu0
        %v2058 = vadd.f32 0.0, %v2057
        %v2059 = vpop.f32.mrb[0].mxu0
        %2060 = vmatprep.mubr.f32.mxu0 0.0
        %2061 = vmatmul.mubr.f32.gmra.mrb[0].mxu0 %v1831
        %v2062 = vpop.f32.mrb[0].mxu0
        %v2063 = vadd.f32 0.0, %v2062
        %v2064 = vpop.f32.mrb[0].mxu0
        %2065 = vmatprep.mubr.f32.mxu0 0.0
        %2066 = vmatmul.mubr.f32.gmra.mrb[0].mxu0 %v1832
        %v2067 = vpop.f32.mrb[0].mxu0
        %v2068 = vadd.f32 0.0, %v2067
        %v2069 = vpop.f32.mrb[0].mxu0
        %2070 = vmatprep.mubr.f32.mxu0 0.0
        %2071 = vmatmul.mubr.f32.gmra.mrb[0].mxu0 %v1833
        %v2072 = vpop.f32.mrb[0].mxu0
        %v2073 = vadd.f32 0.0, %v2072
        %v2074 = vpop.f32.mrb[0].mxu0
        %2075 = vdwg.mxu0
        %v2076 = vld [vmem:[#allocation3] sm:$0xff]
        %v2077 = vld [vmem:[#allocation3 + $0x8] sm:$0xff]
        %v2078 = vld [vmem:[#allocation3 + $0x10] sm:$0xff]
        %v2079 = vld [vmem:[#allocation3 + $0x18] sm:$0xff]
        %v2080 = vld [vmem:[#allocation3 + $0x20] sm:$0xff]
        %v2081 = vld [vmem:[#allocation3 + $0x28] sm:$0xff]
        %v2082 = vld [vmem:[#allocation3 + $0x30] sm:$0xff]
        %v2083 = vld [vmem:[#allocation3 + $0x38] sm:$0xff]
        %v2084 = vld [vmem:[#allocation3 + $0x40] sm:$0xff]
        %v2085 = vld [vmem:[#allocation3 + $0x48] sm:$0xff]
        %v2086 = vld [vmem:[#allocation3 + $0x50] sm:$0xff]
        %v2087 = vld [vmem:[#allocation3 + $0x58] sm:$0xff]
        %v2088 = vld [vmem:[#allocation3 + $0x60] sm:$0xff]
        %v2089 = vld [vmem:[#allocation3 + $0x68] sm:$0xff]
        %v2090 = vld [vmem:[#allocation3 + $0x70] sm:$0xff]
        %v2091 = vld [vmem:[#allocation3 + $0x78] sm:$0xff]
        %v2092 = vld [vmem:[#allocation3 + $0x80] sm:$0xff]
        %v2093 = vld [vmem:[#allocation3 + $0x88] sm:$0xff]
        %v2094 = vld [vmem:[#allocation3 + $0x90] sm:$0xff]
        %v2095 = vld [vmem:[#allocation3 + $0x98] sm:$0xff]
        %v2096 = vld [vmem:[#allocation3 + $0xa0] sm:$0xff]
        %v2097 = vld [vmem:[#allocation3 + $0xa8] sm:$0xff]
        %v2098 = vld [vmem:[#allocation3 + $0xb0] sm:$0xff]
        %v2099 = vld [vmem:[#allocation3 + $0xb8] sm:$0xff]
        %v2100 = vld [vmem:[#allocation3 + $0xc0] sm:$0xff]
        %v2101 = vld [vmem:[#allocation3 + $0xc8] sm:$0xff]
        %v2102 = vld [vmem:[#allocation3 + $0xd0] sm:$0xff]
        %v2103 = vld [vmem:[#allocation3 + $0xd8] sm:$0xff]
        %v2104 = vld [vmem:[#allocation3 + $0xe0] sm:$0xff]
        %v2105 = vld [vmem:[#allocation3 + $0xe8] sm:$0xff]
        %v2106 = vld [vmem:[#allocation3 + $0xf0] sm:$0xff]
        %v2107 = vld [vmem:[#allocation3 + $0xf8] sm:$0xff]
        %v2108 = vadd.f32 %v2076, %v1918
        %v2109 = vadd.f32 %v2077, %v1923
        %v2110 = vadd.f32 %v2078, %v1928
        %v2111 = vadd.f32 %v2079, %v1933
        %v2112 = vadd.f32 %v2080, %v1938
        %v2113 = vadd.f32 %v2081, %v1943
        %v2114 = vadd.f32 %v2082, %v1948
        %v2115 = vadd.f32 %v2083, %v1953
        %v2116 = vadd.f32 %v2084, %v1958
        %v2117 = vadd.f32 %v2085, %v1963
        %v2118 = vadd.f32 %v2086, %v1968
        %v2119 = vadd.f32 %v2087, %v1973
        %v2120 = vadd.f32 %v2088, %v1978
        %v2121 = vadd.f32 %v2089, %v1983
        %v2122 = vadd.f32 %v2090, %v1988
        %v2123 = vadd.f32 %v2091, %v1993
        %v2124 = vadd.f32 %v2092, %v1998
        %v2125 = vadd.f32 %v2093, %v2003
        %v2126 = vadd.f32 %v2094, %v2008
        %v2127 = vadd.f32 %v2095, %v2013
        %v2128 = vadd.f32 %v2096, %v2018
        %v2129 = vadd.f32 %v2097, %v2023
        %v2130 = vadd.f32 %v2098, %v2028
        %v2131 = vadd.f32 %v2099, %v2033
        %v2132 = vadd.f32 %v2100, %v2038
        %v2133 = vadd.f32 %v2101, %v2043
        %v2134 = vadd.f32 %v2102, %v2048
        %v2135 = vadd.f32 %v2103, %v2053
        %v2136 = vadd.f32 %v2104, %v2058
        %v2137 = vadd.f32 %v2105, %v2063
        %v2138 = vadd.f32 %v2106, %v2068
        %v2139 = vadd.f32 %v2107, %v2073
        %2140 = vst [vmem:[#allocation3] sm:$0xff] %v2108
        %2141 = vst [vmem:[#allocation3 + $0x8] sm:$0xff] %v2109
        %2142 = vst [vmem:[#allocation3 + $0x10] sm:$0xff] %v2110
        %2143 = vst [vmem:[#allocation3 + $0x18] sm:$0xff] %v2111
        %2144 = vst [vmem:[#allocation3 + $0x20] sm:$0xff] %v2112
        %2145 = vst [vmem:[#allocation3 + $0x28] sm:$0xff] %v2113
        %2146 = vst [vmem:[#allocation3 + $0x30] sm:$0xff] %v2114
        %2147 = vst [vmem:[#allocation3 + $0x38] sm:$0xff] %v2115
        %2148 = vst [vmem:[#allocation3 + $0x40] sm:$0xff] %v2116
        %2149 = vst [vmem:[#allocation3 + $0x48] sm:$0xff] %v2117
        %2150 = vst [vmem:[#allocation3 + $0x50] sm:$0xff] %v2118
        %2151 = vst [vmem:[#allocation3 + $0x58] sm:$0xff] %v2119
        %2152 = vst [vmem:[#allocation3 + $0x60] sm:$0xff] %v2120
        %2153 = vst [vmem:[#allocation3 + $0x68] sm:$0xff] %v2121
        %2154 = vst [vmem:[#allocation3 + $0x70] sm:$0xff] %v2122
        %2155 = vst [vmem:[#allocation3 + $0x78] sm:$0xff] %v2123
        %2156 = vst [vmem:[#allocation3 + $0x80] sm:$0xff] %v2124
        %2157 = vst [vmem:[#allocation3 + $0x88] sm:$0xff] %v2125
        %2158 = vst [vmem:[#allocation3 + $0x90] sm:$0xff] %v2126
        %2159 = vst [vmem:[#allocation3 + $0x98] sm:$0xff] %v2127
        %2160 = vst [vmem:[#allocation3 + $0xa0] sm:$0xff] %v2128
        %2161 = vst [vmem:[#allocation3 + $0xa8] sm:$0xff] %v2129
        %2162 = vst [vmem:[#allocation3 + $0xb0] sm:$0xff] %v2130
        %2163 = vst [vmem:[#allocation3 + $0xb8] sm:$0xff] %v2131
        %2164 = vst [vmem:[#allocation3 + $0xc0] sm:$0xff] %v2132
        %2165 = vst [vmem:[#allocation3 + $0xc8] sm:$0xff] %v2133
        %2166 = vst [vmem:[#allocation3 + $0xd0] sm:$0xff] %v2134
        %2167 = vst [vmem:[#allocation3 + $0xd8] sm:$0xff] %v2135
        %2168 = vst [vmem:[#allocation3 + $0xe0] sm:$0xff] %v2136
        %2169 = vst [vmem:[#allocation3 + $0xe8] sm:$0xff] %v2137
        %2170 = vst [vmem:[#allocation3 + $0xf0] sm:$0xff] %v2138
        %2171 = vst [vmem:[#allocation3 + $0xf8] sm:$0xff] %v2139
        %v2172 = vld [vmem:[%s685 + $0x1] sm:$0xff]
        %v2173 = vld [vmem:[%s685 + $0x9] sm:$0xff]
        %v2174 = vld [vmem:[%s685 + $0x19] sm:$0xff]
        %v2175 = vld [vmem:[%s685 + $0x21] sm:$0xff]
        %v2176 = vld [vmem:[%s685 + $0x31] sm:$0xff]
        %v2177 = vld [vmem:[%s685 + $0x39] sm:$0xff]
        %v2178 = vld [vmem:[%s685 + $0x49] sm:$0xff]
        %v2179 = vld [vmem:[%s685 + $0x51] sm:$0xff]
        %v2180 = vld [vmem:[%s685 + $0x61] sm:$0xff]
        %v2181 = vld [vmem:[%s685 + $0x69] sm:$0xff]
        %v2182 = vld [vmem:[%s685 + $0x79] sm:$0xff]
        %v2183 = vld [vmem:[%s685 + $0x81] sm:$0xff]
        %v2184 = vld [vmem:[%s685 + $0x91] sm:$0xff]
        %v2185 = vld [vmem:[%s685 + $0x99] sm:$0xff]
        %v2186 = vld [vmem:[%s685 + $0xa9] sm:$0xff]
        %v2187 = vld [vmem:[%s685 + $0xb1] sm:$0xff]
        %v2188 = vld [vmem:[%s685 + $0xc1] sm:$0xff]
        %v2189 = vld [vmem:[%s685 + $0xc9] sm:$0xff]
        %v2190 = vld [vmem:[%s685 + $0xd9] sm:$0xff]
        %v2191 = vld [vmem:[%s685 + $0xe1] sm:$0xff]
        %v2192 = vld [vmem:[%s685 + $0xf1] sm:$0xff]
        %v2193 = vld [vmem:[%s685 + $0xf9] sm:$0xff]
        %v2194 = vld [vmem:[%s685 + $0x109] sm:$0xff]
        %v2195 = vld [vmem:[%s685 + $0x111] sm:$0xff]
        %v2196 = vld [vmem:[%s685 + $0x121] sm:$0xff]
        %v2197 = vld [vmem:[%s685 + $0x129] sm:$0xff]
        %v2198 = vld [vmem:[%s685 + $0x139] sm:$0xff]
        %v2199 = vld [vmem:[%s685 + $0x141] sm:$0xff]
        %v2200 = vld [vmem:[%s685 + $0x151] sm:$0xff]
        %v2201 = vld [vmem:[%s685 + $0x159] sm:$0xff]
        %v2202 = vld [vmem:[%s685 + $0x169] sm:$0xff]
        %v2203 = vld [vmem:[%s685 + $0x171] sm:$0xff]
        %s2204 = scalar_lea.vmem [#allocation15], 512
        %v2205 = vld [vmem:[%s2204] sm:$0xff]
        %v2206 = vld [vmem:[%s2204 + $0x8] sm:$0xff]
        %v2207 = vld [vmem:[%s2204 + $0x10] sm:$0xff]
        %v2208 = vld [vmem:[%s2204 + $0x18] sm:$0xff]
        %v2209 = vld [vmem:[%s2204 + $0x20] sm:$0xff]
        %v2210 = vld [vmem:[%s2204 + $0x28] sm:$0xff]
        %v2211 = vld [vmem:[%s2204 + $0x30] sm:$0xff]
        %v2212 = vld [vmem:[%s2204 + $0x38] sm:$0xff]
        %v2213 = vld [vmem:[%s2204 + $0x40] sm:$0xff]
        %v2214 = vld [vmem:[%s2204 + $0x48] sm:$0xff]
        %v2215 = vld [vmem:[%s2204 + $0x50] sm:$0xff]
        %v2216 = vld [vmem:[%s2204 + $0x58] sm:$0xff]
        %v2217 = vld [vmem:[%s2204 + $0x60] sm:$0xff]
        %v2218 = vld [vmem:[%s2204 + $0x68] sm:$0xff]
        %v2219 = vld [vmem:[%s2204 + $0x70] sm:$0xff]
        %v2220 = vld [vmem:[%s2204 + $0x78] sm:$0xff]
        %2221 = vmatprep.subr.mxu0 0.0
        %2222 = vmatpush1.msra.mxu0 %v2205
        %2223 = vmatprep.subr.mxu0 0.0
        %2224 = vmatpush1.msra.mxu0 %v2206
        %2225 = vmatprep.subr.mxu0 0.0
        %2226 = vmatpush1.msra.mxu0 %v2207
        %2227 = vmatprep.subr.mxu0 0.0
        %2228 = vmatpush1.msra.mxu0 %v2208
        %2229 = vmatprep.subr.mxu0 0.0
        %2230 = vmatpush1.msra.mxu0 %v2209
        %2231 = vmatprep.subr.mxu0 0.0
        %2232 = vmatpush1.msra.mxu0 %v2210
        %2233 = vmatprep.subr.mxu0 0.0
        %2234 = vmatpush1.msra.mxu0 %v2211
        %2235 = vmatprep.subr.mxu0 0.0
        %2236 = vmatpush1.msra.mxu0 %v2212
        %2237 = vmatprep.subr.mxu0 0.0
        %2238 = vmatpush1.msra.mxu0 %v2213
        %2239 = vmatprep.subr.mxu0 0.0
        %2240 = vmatpush1.msra.mxu0 %v2214
        %2241 = vmatprep.subr.mxu0 0.0
        %2242 = vmatpush1.msra.mxu0 %v2215
        %2243 = vmatprep.subr.mxu0 0.0
        %2244 = vmatpush1.msra.mxu0 %v2216
        %2245 = vmatprep.subr.mxu0 0.0
        %2246 = vmatpush1.msra.mxu0 %v2217
        %2247 = vmatprep.subr.mxu0 0.0
        %2248 = vmatpush1.msra.mxu0 %v2218
        %2249 = vmatprep.subr.mxu0 0.0
        %2250 = vmatpush1.msra.mxu0 %v2219
        %2251 = vmatprep.subr.mxu0 0.0
        %2252 = vmatpush1.msra.mxu0 %v2220
        %2253 = vmatprep.subr.mxu0 0.0
        %2254 = vmatpush1.msra.mxu0 0.0
        %2255 = vmatprep.subr.mxu0 0.0
        %2256 = vmatpush1.msra.mxu0 0.0
        %2257 = vmatprep.subr.mxu0 0.0
        %2258 = vmatpush1.msra.mxu0 0.0
        %2259 = vmatprep.subr.mxu0 0.0
        %2260 = vmatpush1.msra.mxu0 0.0
        %2261 = vmatprep.subr.mxu0 0.0
        %2262 = vmatpush1.msra.mxu0 0.0
        %2263 = vmatprep.subr.mxu0 0.0
        %2264 = vmatpush1.msra.mxu0 0.0
        %2265 = vmatprep.subr.mxu0 0.0
        %2266 = vmatpush1.msra.mxu0 0.0
        %2267 = vmatprep.subr.mxu0 0.0
        %2268 = vmatpush1.msra.mxu0 0.0
        %2269 = vmatprep.subr.mxu0 0.0
        %2270 = vmatpush1.msra.mxu0 0.0
        %2271 = vmatprep.subr.mxu0 0.0
        %2272 = vmatpush1.msra.mxu0 0.0
        %2273 = vmatprep.subr.mxu0 0.0
        %2274 = vmatpush1.msra.mxu0 0.0
        %2275 = vmatprep.subr.mxu0 0.0
        %2276 = vmatpush1.msra.mxu0 0.0
        %2277 = vmatprep.subr.mxu0 0.0
        %2278 = vmatpush1.msra.mxu0 0.0
        %2279 = vmatprep.subr.mxu0 0.0
        %2280 = vmatpush1.msra.mxu0 0.0
        %2281 = vmatprep.subr.mxu0 0.0
        %2282 = vmatpush1.msra.mxu0 0.0
        %2283 = vmatprep.subr.mxu0 0.0
        %2284 = vmatpush1.msra.mxu0 0.0
        %2285 = vmatprep.mubr.f32.mxu0 0.0
        %2286 = vmatmul.mubr.f32.gmra.mrb[0].mxu0 %v2172
        %v2287 = vpop.f32.mrb[0].mxu0
        %v2288 = vadd.f32 0.0, %v2287
        %v2289 = vpop.f32.mrb[0].mxu0
        %2290 = vmatprep.mubr.f32.mxu0 0.0
        %2291 = vmatmul.mubr.f32.gmra.mrb[0].mxu0 %v2173
        %v2292 = vpop.f32.mrb[0].mxu0
        %v2293 = vadd.f32 0.0, %v2292
        %v2294 = vpop.f32.mrb[0].mxu0
        %2295 = vmatprep.mubr.f32.mxu0 0.0
        %2296 = vmatmul.mubr.f32.gmra.mrb[0].mxu0 %v2174
        %v2297 = vpop.f32.mrb[0].mxu0
        %v2298 = vadd.f32 0.0, %v2297
        %v2299 = vpop.f32.mrb[0].mxu0
        %2300 = vmatprep.mubr.f32.mxu0 0.0
        %2301 = vmatmul.mubr.f32.gmra.mrb[0].mxu0 %v2175
        %v2302 = vpop.f32.mrb[0].mxu0
        %v2303 = vadd.f32 0.0, %v2302
        %v2304 = vpop.f32.mrb[0].mxu0
        %2305 = vmatprep.mubr.f32.mxu0 0.0
        %2306 = vmatmul.mubr.f32.gmra.mrb[0].mxu0 %v2176
        %v2307 = vpop.f32.mrb[0].mxu0
        %v2308 = vadd.f32 0.0, %v2307
        %v2309 = vpop.f32.mrb[0].mxu0
        %2310 = vmatprep.mubr.f32.mxu0 0.0
        %2311 = vmatmul.mubr.f32.gmra.mrb[0].mxu0 %v2177
        %v2312 = vpop.f32.mrb[0].mxu0
        %v2313 = vadd.f32 0.0, %v2312
        %v2314 = vpop.f32.mrb[0].mxu0
        %2315 = vmatprep.mubr.f32.mxu0 0.0
        %2316 = vmatmul.mubr.f32.gmra.mrb[0].mxu0 %v2178
        %v2317 = vpop.f32.mrb[0].mxu0
        %v2318 = vadd.f32 0.0, %v2317
        %v2319 = vpop.f32.mrb[0].mxu0
        %2320 = vmatprep.mubr.f32.mxu0 0.0
        %2321 = vmatmul.mubr.f32.gmra.mrb[0].mxu0 %v2179
        %v2322 = vpop.f32.mrb[0].mxu0
        %v2323 = vadd.f32 0.0, %v2322
        %v2324 = vpop.f32.mrb[0].mxu0
        %2325 = vmatprep.mubr.f32.mxu0 0.0
        %2326 = vmatmul.mubr.f32.gmra.mrb[0].mxu0 %v2180
        %v2327 = vpop.f32.mrb[0].mxu0
        %v2328 = vadd.f32 0.0, %v2327
        %v2329 = vpop.f32.mrb[0].mxu0
        %2330 = vmatprep.mubr.f32.mxu0 0.0
        %2331 = vmatmul.mubr.f32.gmra.mrb[0].mxu0 %v2181
        %v2332 = vpop.f32.mrb[0].mxu0
        %v2333 = vadd.f32 0.0, %v2332
        %v2334 = vpop.f32.mrb[0].mxu0
        %2335 = vmatprep.mubr.f32.mxu0 0.0
        %2336 = vmatmul.mubr.f32.gmra.mrb[0].mxu0 %v2182
        %v2337 = vpop.f32.mrb[0].mxu0
        %v2338 = vadd.f32 0.0, %v2337
        %v2339 = vpop.f32.mrb[0].mxu0
        %2340 = vmatprep.mubr.f32.mxu0 0.0
        %2341 = vmatmul.mubr.f32.gmra.mrb[0].mxu0 %v2183
        %v2342 = vpop.f32.mrb[0].mxu0
        %v2343 = vadd.f32 0.0, %v2342
        %v2344 = vpop.f32.mrb[0].mxu0
        %2345 = vmatprep.mubr.f32.mxu0 0.0
        %2346 = vmatmul.mubr.f32.gmra.mrb[0].mxu0 %v2184
        %v2347 = vpop.f32.mrb[0].mxu0
        %v2348 = vadd.f32 0.0, %v2347
        %v2349 = vpop.f32.mrb[0].mxu0
        %2350 = vmatprep.mubr.f32.mxu0 0.0
        %2351 = vmatmul.mubr.f32.gmra.mrb[0].mxu0 %v2185
        %v2352 = vpop.f32.mrb[0].mxu0
        %v2353 = vadd.f32 0.0, %v2352
        %v2354 = vpop.f32.mrb[0].mxu0
        %2355 = vmatprep.mubr.f32.mxu0 0.0
        %2356 = vmatmul.mubr.f32.gmra.mrb[0].mxu0 %v2186
        %v2357 = vpop.f32.mrb[0].mxu0
        %v2358 = vadd.f32 0.0, %v2357
        %v2359 = vpop.f32.mrb[0].mxu0
        %2360 = vmatprep.mubr.f32.mxu0 0.0
        %2361 = vmatmul.mubr.f32.gmra.mrb[0].mxu0 %v2187
        %v2362 = vpop.f32.mrb[0].mxu0
        %v2363 = vadd.f32 0.0, %v2362
        %v2364 = vpop.f32.mrb[0].mxu0
        %2365 = vmatprep.mubr.f32.mxu0 0.0
        %2366 = vmatmul.mubr.f32.gmra.mrb[0].mxu0 %v2188
        %v2367 = vpop.f32.mrb[0].mxu0
        %v2368 = vadd.f32 0.0, %v2367
        %v2369 = vpop.f32.mrb[0].mxu0
        %2370 = vmatprep.mubr.f32.mxu0 0.0
        %2371 = vmatmul.mubr.f32.gmra.mrb[0].mxu0 %v2189
        %v2372 = vpop.f32.mrb[0].mxu0
        %v2373 = vadd.f32 0.0, %v2372
        %v2374 = vpop.f32.mrb[0].mxu0
        %2375 = vmatprep.mubr.f32.mxu0 0.0
        %2376 = vmatmul.mubr.f32.gmra.mrb[0].mxu0 %v2190
        %v2377 = vpop.f32.mrb[0].mxu0
        %v2378 = vadd.f32 0.0, %v2377
        %v2379 = vpop.f32.mrb[0].mxu0
        %2380 = vmatprep.mubr.f32.mxu0 0.0
        %2381 = vmatmul.mubr.f32.gmra.mrb[0].mxu0 %v2191
        %v2382 = vpop.f32.mrb[0].mxu0
        %v2383 = vadd.f32 0.0, %v2382
        %v2384 = vpop.f32.mrb[0].mxu0
        %2385 = vmatprep.mubr.f32.mxu0 0.0
        %2386 = vmatmul.mubr.f32.gmra.mrb[0].mxu0 %v2192
        %v2387 = vpop.f32.mrb[0].mxu0
        %v2388 = vadd.f32 0.0, %v2387
        %v2389 = vpop.f32.mrb[0].mxu0
        %2390 = vmatprep.mubr.f32.mxu0 0.0
        %2391 = vmatmul.mubr.f32.gmra.mrb[0].mxu0 %v2193
        %v2392 = vpop.f32.mrb[0].mxu0
        %v2393 = vadd.f32 0.0, %v2392
        %v2394 = vpop.f32.mrb[0].mxu0
        %2395 = vmatprep.mubr.f32.mxu0 0.0
        %2396 = vmatmul.mubr.f32.gmra.mrb[0].mxu0 %v2194
        %v2397 = vpop.f32.mrb[0].mxu0
        %v2398 = vadd.f32 0.0, %v2397
        %v2399 = vpop.f32.mrb[0].mxu0
        %2400 = vmatprep.mubr.f32.mxu0 0.0
        %2401 = vmatmul.mubr.f32.gmra.mrb[0].mxu0 %v2195
        %v2402 = vpop.f32.mrb[0].mxu0
        %v2403 = vadd.f32 0.0, %v2402
        %v2404 = vpop.f32.mrb[0].mxu0
        %2405 = vmatprep.mubr.f32.mxu0 0.0
        %2406 = vmatmul.mubr.f32.gmra.mrb[0].mxu0 %v2196
        %v2407 = vpop.f32.mrb[0].mxu0
        %v2408 = vadd.f32 0.0, %v2407
        %v2409 = vpop.f32.mrb[0].mxu0
        %2410 = vmatprep.mubr.f32.mxu0 0.0
        %2411 = vmatmul.mubr.f32.gmra.mrb[0].mxu0 %v2197
        %v2412 = vpop.f32.mrb[0].mxu0
        %v2413 = vadd.f32 0.0, %v2412
        %v2414 = vpop.f32.mrb[0].mxu0
        %2415 = vmatprep.mubr.f32.mxu0 0.0
        %2416 = vmatmul.mubr.f32.gmra.mrb[0].mxu0 %v2198
        %v2417 = vpop.f32.mrb[0].mxu0
        %v2418 = vadd.f32 0.0, %v2417
        %v2419 = vpop.f32.mrb[0].mxu0
        %2420 = vmatprep.mubr.f32.mxu0 0.0
        %2421 = vmatmul.mubr.f32.gmra.mrb[0].mxu0 %v2199
        %v2422 = vpop.f32.mrb[0].mxu0
        %v2423 = vadd.f32 0.0, %v2422
        %v2424 = vpop.f32.mrb[0].mxu0
        %2425 = vmatprep.mubr.f32.mxu0 0.0
        %2426 = vmatmul.mubr.f32.gmra.mrb[0].mxu0 %v2200
        %v2427 = vpop.f32.mrb[0].mxu0
        %v2428 = vadd.f32 0.0, %v2427
        %v2429 = vpop.f32.mrb[0].mxu0
        %2430 = vmatprep.mubr.f32.mxu0 0.0
        %2431 = vmatmul.mubr.f32.gmra.mrb[0].mxu0 %v2201
        %v2432 = vpop.f32.mrb[0].mxu0
        %v2433 = vadd.f32 0.0, %v2432
        %v2434 = vpop.f32.mrb[0].mxu0
        %2435 = vmatprep.mubr.f32.mxu0 0.0
        %2436 = vmatmul.mubr.f32.gmra.mrb[0].mxu0 %v2202
        %v2437 = vpop.f32.mrb[0].mxu0
        %v2438 = vadd.f32 0.0, %v2437
        %v2439 = vpop.f32.mrb[0].mxu0
        %2440 = vmatprep.mubr.f32.mxu0 0.0
        %2441 = vmatmul.mubr.f32.gmra.mrb[0].mxu0 %v2203
        %v2442 = vpop.f32.mrb[0].mxu0
        %v2443 = vadd.f32 0.0, %v2442
        %v2444 = vpop.f32.mrb[0].mxu0
        %2445 = vdwg.mxu0
        %v2446 = vld [vmem:[#allocation3] sm:$0xff]
        %v2447 = vld [vmem:[#allocation3 + $0x8] sm:$0xff]
        %v2448 = vld [vmem:[#allocation3 + $0x10] sm:$0xff]
        %v2449 = vld [vmem:[#allocation3 + $0x18] sm:$0xff]
        %v2450 = vld [vmem:[#allocation3 + $0x20] sm:$0xff]
        %v2451 = vld [vmem:[#allocation3 + $0x28] sm:$0xff]
        %v2452 = vld [vmem:[#allocation3 + $0x30] sm:$0xff]
        %v2453 = vld [vmem:[#allocation3 + $0x38] sm:$0xff]
        %v2454 = vld [vmem:[#allocation3 + $0x40] sm:$0xff]
        %v2455 = vld [vmem:[#allocation3 + $0x48] sm:$0xff]
        %v2456 = vld [vmem:[#allocation3 + $0x50] sm:$0xff]
        %v2457 = vld [vmem:[#allocation3 + $0x58] sm:$0xff]
        %v2458 = vld [vmem:[#allocation3 + $0x60] sm:$0xff]
        %v2459 = vld [vmem:[#allocation3 + $0x68] sm:$0xff]
        %v2460 = vld [vmem:[#allocation3 + $0x70] sm:$0xff]
        %v2461 = vld [vmem:[#allocation3 + $0x78] sm:$0xff]
        %v2462 = vld [vmem:[#allocation3 + $0x80] sm:$0xff]
        %v2463 = vld [vmem:[#allocation3 + $0x88] sm:$0xff]
        %v2464 = vld [vmem:[#allocation3 + $0x90] sm:$0xff]
        %v2465 = vld [vmem:[#allocation3 + $0x98] sm:$0xff]
        %v2466 = vld [vmem:[#allocation3 + $0xa0] sm:$0xff]
        %v2467 = vld [vmem:[#allocation3 + $0xa8] sm:$0xff]
        %v2468 = vld [vmem:[#allocation3 + $0xb0] sm:$0xff]
        %v2469 = vld [vmem:[#allocation3 + $0xb8] sm:$0xff]
        %v2470 = vld [vmem:[#allocation3 + $0xc0] sm:$0xff]
        %v2471 = vld [vmem:[#allocation3 + $0xc8] sm:$0xff]
        %v2472 = vld [vmem:[#allocation3 + $0xd0] sm:$0xff]
        %v2473 = vld [vmem:[#allocation3 + $0xd8] sm:$0xff]
        %v2474 = vld [vmem:[#allocation3 + $0xe0] sm:$0xff]
        %v2475 = vld [vmem:[#allocation3 + $0xe8] sm:$0xff]
        %v2476 = vld [vmem:[#allocation3 + $0xf0] sm:$0xff]
        %v2477 = vld [vmem:[#allocation3 + $0xf8] sm:$0xff]
        %v2478 = vadd.f32 %v2446, %v2288
        %v2479 = vadd.f32 %v2447, %v2293
        %v2480 = vadd.f32 %v2448, %v2298
        %v2481 = vadd.f32 %v2449, %v2303
        %v2482 = vadd.f32 %v2450, %v2308
        %v2483 = vadd.f32 %v2451, %v2313
        %v2484 = vadd.f32 %v2452, %v2318
        %v2485 = vadd.f32 %v2453, %v2323
        %v2486 = vadd.f32 %v2454, %v2328
        %v2487 = vadd.f32 %v2455, %v2333
        %v2488 = vadd.f32 %v2456, %v2338
        %v2489 = vadd.f32 %v2457, %v2343
        %v2490 = vadd.f32 %v2458, %v2348
        %v2491 = vadd.f32 %v2459, %v2353
        %v2492 = vadd.f32 %v2460, %v2358
        %v2493 = vadd.f32 %v2461, %v2363
        %v2494 = vadd.f32 %v2462, %v2368
        %v2495 = vadd.f32 %v2463, %v2373
        %v2496 = vadd.f32 %v2464, %v2378
        %v2497 = vadd.f32 %v2465, %v2383
        %v2498 = vadd.f32 %v2466, %v2388
        %v2499 = vadd.f32 %v2467, %v2393
        %v2500 = vadd.f32 %v2468, %v2398
        %v2501 = vadd.f32 %v2469, %v2403
        %v2502 = vadd.f32 %v2470, %v2408
        %v2503 = vadd.f32 %v2471, %v2413
        %v2504 = vadd.f32 %v2472, %v2418
        %v2505 = vadd.f32 %v2473, %v2423
        %v2506 = vadd.f32 %v2474, %v2428
        %v2507 = vadd.f32 %v2475, %v2433
        %v2508 = vadd.f32 %v2476, %v2438
        %v2509 = vadd.f32 %v2477, %v2443
        %2510 = vst [vmem:[#allocation3] sm:$0xff] %v2478
        %2511 = vst [vmem:[#allocation3 + $0x8] sm:$0xff] %v2479
        %2512 = vst [vmem:[#allocation3 + $0x10] sm:$0xff] %v2480
        %2513 = vst [vmem:[#allocation3 + $0x18] sm:$0xff] %v2481
        %2514 = vst [vmem:[#allocation3 + $0x20] sm:$0xff] %v2482
        %2515 = vst [vmem:[#allocation3 + $0x28] sm:$0xff] %v2483
        %2516 = vst [vmem:[#allocation3 + $0x30] sm:$0xff] %v2484
        %2517 = vst [vmem:[#allocation3 + $0x38] sm:$0xff] %v2485
        %2518 = vst [vmem:[#allocation3 + $0x40] sm:$0xff] %v2486
        %2519 = vst [vmem:[#allocation3 + $0x48] sm:$0xff] %v2487
        %2520 = vst [vmem:[#allocation3 + $0x50] sm:$0xff] %v2488
        %2521 = vst [vmem:[#allocation3 + $0x58] sm:$0xff] %v2489
        %2522 = vst [vmem:[#allocation3 + $0x60] sm:$0xff] %v2490
        %2523 = vst [vmem:[#allocation3 + $0x68] sm:$0xff] %v2491
        %2524 = vst [vmem:[#allocation3 + $0x70] sm:$0xff] %v2492
        %2525 = vst [vmem:[#allocation3 + $0x78] sm:$0xff] %v2493
        %2526 = vst [vmem:[#allocation3 + $0x80] sm:$0xff] %v2494
        %2527 = vst [vmem:[#allocation3 + $0x88] sm:$0xff] %v2495
        %2528 = vst [vmem:[#allocation3 + $0x90] sm:$0xff] %v2496
        %2529 = vst [vmem:[#allocation3 + $0x98] sm:$0xff] %v2497
        %2530 = vst [vmem:[#allocation3 + $0xa0] sm:$0xff] %v2498
        %2531 = vst [vmem:[#allocation3 + $0xa8] sm:$0xff] %v2499
        %2532 = vst [vmem:[#allocation3 + $0xb0] sm:$0xff] %v2500
        %2533 = vst [vmem:[#allocation3 + $0xb8] sm:$0xff] %v2501
        %2534 = vst [vmem:[#allocation3 + $0xc0] sm:$0xff] %v2502
        %2535 = vst [vmem:[#allocation3 + $0xc8] sm:$0xff] %v2503
        %2536 = vst [vmem:[#allocation3 + $0xd0] sm:$0xff] %v2504
        %2537 = vst [vmem:[#allocation3 + $0xd8] sm:$0xff] %v2505
        %2538 = vst [vmem:[#allocation3 + $0xe0] sm:$0xff] %v2506
        %2539 = vst [vmem:[#allocation3 + $0xe8] sm:$0xff] %v2507
        %2540 = vst [vmem:[#allocation3 + $0xf0] sm:$0xff] %v2508
        %2541 = vst [vmem:[#allocation3 + $0xf8] sm:$0xff] %v2509
        %v2542 = vld [vmem:[%s685 + $0x2] sm:$0xff]
        %v2543 = vld [vmem:[%s685 + $0xa] sm:$0xff]
        %v2544 = vld [vmem:[%s685 + $0x1a] sm:$0xff]
        %v2545 = vld [vmem:[%s685 + $0x22] sm:$0xff]
        %v2546 = vld [vmem:[%s685 + $0x32] sm:$0xff]
        %v2547 = vld [vmem:[%s685 + $0x3a] sm:$0xff]
        %v2548 = vld [vmem:[%s685 + $0x4a] sm:$0xff]
        %v2549 = vld [vmem:[%s685 + $0x52] sm:$0xff]
        %v2550 = vld [vmem:[%s685 + $0x62] sm:$0xff]
        %v2551 = vld [vmem:[%s685 + $0x6a] sm:$0xff]
        %v2552 = vld [vmem:[%s685 + $0x7a] sm:$0xff]
        %v2553 = vld [vmem:[%s685 + $0x82] sm:$0xff]
        %v2554 = vld [vmem:[%s685 + $0x92] sm:$0xff]
        %v2555 = vld [vmem:[%s685 + $0x9a] sm:$0xff]
        %v2556 = vld [vmem:[%s685 + $0xaa] sm:$0xff]
        %v2557 = vld [vmem:[%s685 + $0xb2] sm:$0xff]
        %v2558 = vld [vmem:[%s685 + $0xc2] sm:$0xff]
        %v2559 = vld [vmem:[%s685 + $0xca] sm:$0xff]
        %v2560 = vld [vmem:[%s685 + $0xda] sm:$0xff]
        %v2561 = vld [vmem:[%s685 + $0xe2] sm:$0xff]
        %v2562 = vld [vmem:[%s685 + $0xf2] sm:$0xff]
        %v2563 = vld [vmem:[%s685 + $0xfa] sm:$0xff]
        %v2564 = vld [vmem:[%s685 + $0x10a] sm:$0xff]
        %v2565 = vld [vmem:[%s685 + $0x112] sm:$0xff]
        %v2566 = vld [vmem:[%s685 + $0x122] sm:$0xff]
        %v2567 = vld [vmem:[%s685 + $0x12a] sm:$0xff]
        %v2568 = vld [vmem:[%s685 + $0x13a] sm:$0xff]
        %v2569 = vld [vmem:[%s685 + $0x142] sm:$0xff]
        %v2570 = vld [vmem:[%s685 + $0x152] sm:$0xff]
        %v2571 = vld [vmem:[%s685 + $0x15a] sm:$0xff]
        %v2572 = vld [vmem:[%s685 + $0x16a] sm:$0xff]
        %v2573 = vld [vmem:[%s685 + $0x172] sm:$0xff]
        %s2574 = scalar_lea.vmem [#allocation15], 640
        %v2575 = vld [vmem:[%s2574] sm:$0xff]
        %v2576 = vld [vmem:[%s2574 + $0x8] sm:$0xff]
        %v2577 = vld [vmem:[%s2574 + $0x10] sm:$0xff]
        %v2578 = vld [vmem:[%s2574 + $0x18] sm:$0xff]
        %v2579 = vld [vmem:[%s2574 + $0x20] sm:$0xff]
        %v2580 = vld [vmem:[%s2574 + $0x28] sm:$0xff]
        %v2581 = vld [vmem:[%s2574 + $0x30] sm:$0xff]
        %v2582 = vld [vmem:[%s2574 + $0x38] sm:$0xff]
        %v2583 = vld [vmem:[%s2574 + $0x40] sm:$0xff]
        %v2584 = vld [vmem:[%s2574 + $0x48] sm:$0xff]
        %v2585 = vld [vmem:[%s2574 + $0x50] sm:$0xff]
        %v2586 = vld [vmem:[%s2574 + $0x58] sm:$0xff]
        %v2587 = vld [vmem:[%s2574 + $0x60] sm:$0xff]
        %v2588 = vld [vmem:[%s2574 + $0x68] sm:$0xff]
        %v2589 = vld [vmem:[%s2574 + $0x70] sm:$0xff]
        %v2590 = vld [vmem:[%s2574 + $0x78] sm:$0xff]
        %2591 = vmatprep.subr.mxu0 0.0
        %2592 = vmatpush1.msra.mxu0 %v2575
        %2593 = vmatprep.subr.mxu0 0.0
        %2594 = vmatpush1.msra.mxu0 %v2576
        %2595 = vmatprep.subr.mxu0 0.0
        %2596 = vmatpush1.msra.mxu0 %v2577
        %2597 = vmatprep.subr.mxu0 0.0
        %2598 = vmatpush1.msra.mxu0 %v2578
        %2599 = vmatprep.subr.mxu0 0.0
        %2600 = vmatpush1.msra.mxu0 %v2579
        %2601 = vmatprep.subr.mxu0 0.0
        %2602 = vmatpush1.msra.mxu0 %v2580
        %2603 = vmatprep.subr.mxu0 0.0
        %2604 = vmatpush1.msra.mxu0 %v2581
        %2605 = vmatprep.subr.mxu0 0.0
        %2606 = vmatpush1.msra.mxu0 %v2582
        %2607 = vmatprep.subr.mxu0 0.0
        %2608 = vmatpush1.msra.mxu0 %v2583
        %2609 = vmatprep.subr.mxu0 0.0
        %2610 = vmatpush1.msra.mxu0 %v2584
        %2611 = vmatprep.subr.mxu0 0.0
        %2612 = vmatpush1.msra.mxu0 %v2585
        %2613 = vmatprep.subr.mxu0 0.0
        %2614 = vmatpush1.msra.mxu0 %v2586
        %2615 = vmatprep.subr.mxu0 0.0
        %2616 = vmatpush1.msra.mxu0 %v2587
        %2617 = vmatprep.subr.mxu0 0.0
        %2618 = vmatpush1.msra.mxu0 %v2588
        %2619 = vmatprep.subr.mxu0 0.0
        %2620 = vmatpush1.msra.mxu0 %v2589
        %2621 = vmatprep.subr.mxu0 0.0
        %2622 = vmatpush1.msra.mxu0 %v2590
        %2623 = vmatprep.subr.mxu0 0.0
        %2624 = vmatpush1.msra.mxu0 0.0
        %2625 = vmatprep.subr.mxu0 0.0
        %2626 = vmatpush1.msra.mxu0 0.0
        %2627 = vmatprep.subr.mxu0 0.0
        %2628 = vmatpush1.msra.mxu0 0.0
        %2629 = vmatprep.subr.mxu0 0.0
        %2630 = vmatpush1.msra.mxu0 0.0
        %2631 = vmatprep.subr.mxu0 0.0
        %2632 = vmatpush1.msra.mxu0 0.0
        %2633 = vmatprep.subr.mxu0 0.0
        %2634 = vmatpush1.msra.mxu0 0.0
        %2635 = vmatprep.subr.mxu0 0.0
        %2636 = vmatpush1.msra.mxu0 0.0
        %2637 = vmatprep.subr.mxu0 0.0
        %2638 = vmatpush1.msra.mxu0 0.0
        %2639 = vmatprep.subr.mxu0 0.0
        %2640 = vmatpush1.msra.mxu0 0.0
        %2641 = vmatprep.subr.mxu0 0.0
        %2642 = vmatpush1.msra.mxu0 0.0
        %2643 = vmatprep.subr.mxu0 0.0
        %2644 = vmatpush1.msra.mxu0 0.0
        %2645 = vmatprep.subr.mxu0 0.0
        %2646 = vmatpush1.msra.mxu0 0.0
        %2647 = vmatprep.subr.mxu0 0.0
        %2648 = vmatpush1.msra.mxu0 0.0
        %2649 = vmatprep.subr.mxu0 0.0
        %2650 = vmatpush1.msra.mxu0 0.0
        %2651 = vmatprep.subr.mxu0 0.0
        %2652 = vmatpush1.msra.mxu0 0.0
        %2653 = vmatprep.subr.mxu0 0.0
        %2654 = vmatpush1.msra.mxu0 0.0
        %2655 = vmatprep.mubr.f32.mxu0 0.0
        %2656 = vmatmul.mubr.f32.gmra.mrb[0].mxu0 %v2542
        %v2657 = vpop.f32.mrb[0].mxu0
        %v2658 = vadd.f32 0.0, %v2657
        %v2659 = vpop.f32.mrb[0].mxu0
        %2660 = vmatprep.mubr.f32.mxu0 0.0
        %2661 = vmatmul.mubr.f32.gmra.mrb[0].mxu0 %v2543
        %v2662 = vpop.f32.mrb[0].mxu0
        %v2663 = vadd.f32 0.0, %v2662
        %v2664 = vpop.f32.mrb[0].mxu0
        %2665 = vmatprep.mubr.f32.mxu0 0.0
        %2666 = vmatmul.mubr.f32.gmra.mrb[0].mxu0 %v2544
        %v2667 = vpop.f32.mrb[0].mxu0
        %v2668 = vadd.f32 0.0, %v2667
        %v2669 = vpop.f32.mrb[0].mxu0
        %2670 = vmatprep.mubr.f32.mxu0 0.0
        %2671 = vmatmul.mubr.f32.gmra.mrb[0].mxu0 %v2545
        %v2672 = vpop.f32.mrb[0].mxu0
        %v2673 = vadd.f32 0.0, %v2672
        %v2674 = vpop.f32.mrb[0].mxu0
        %2675 = vmatprep.mubr.f32.mxu0 0.0
        %2676 = vmatmul.mubr.f32.gmra.mrb[0].mxu0 %v2546
        %v2677 = vpop.f32.mrb[0].mxu0
        %v2678 = vadd.f32 0.0, %v2677
        %v2679 = vpop.f32.mrb[0].mxu0
        %2680 = vmatprep.mubr.f32.mxu0 0.0
        %2681 = vmatmul.mubr.f32.gmra.mrb[0].mxu0 %v2547
        %v2682 = vpop.f32.mrb[0].mxu0
        %v2683 = vadd.f32 0.0, %v2682
        %v2684 = vpop.f32.mrb[0].mxu0
        %2685 = vmatprep.mubr.f32.mxu0 0.0
        %2686 = vmatmul.mubr.f32.gmra.mrb[0].mxu0 %v2548
        %v2687 = vpop.f32.mrb[0].mxu0
        %v2688 = vadd.f32 0.0, %v2687
        %v2689 = vpop.f32.mrb[0].mxu0
        %2690 = vmatprep.mubr.f32.mxu0 0.0
        %2691 = vmatmul.mubr.f32.gmra.mrb[0].mxu0 %v2549
        %v2692 = vpop.f32.mrb[0].mxu0
        %v2693 = vadd.f32 0.0, %v2692
        %v2694 = vpop.f32.mrb[0].mxu0
        %2695 = vmatprep.mubr.f32.mxu0 0.0
        %2696 = vmatmul.mubr.f32.gmra.mrb[0].mxu0 %v2550
        %v2697 = vpop.f32.mrb[0].mxu0
        %v2698 = vadd.f32 0.0, %v2697
        %v2699 = vpop.f32.mrb[0].mxu0
        %2700 = vmatprep.mubr.f32.mxu0 0.0
        %2701 = vmatmul.mubr.f32.gmra.mrb[0].mxu0 %v2551
        %v2702 = vpop.f32.mrb[0].mxu0
        %v2703 = vadd.f32 0.0, %v2702
        %v2704 = vpop.f32.mrb[0].mxu0
        %2705 = vmatprep.mubr.f32.mxu0 0.0
        %2706 = vmatmul.mubr.f32.gmra.mrb[0].mxu0 %v2552
        %v2707 = vpop.f32.mrb[0].mxu0
        %v2708 = vadd.f32 0.0, %v2707
        %v2709 = vpop.f32.mrb[0].mxu0
        %2710 = vmatprep.mubr.f32.mxu0 0.0
        %2711 = vmatmul.mubr.f32.gmra.mrb[0].mxu0 %v2553
        %v2712 = vpop.f32.mrb[0].mxu0
        %v2713 = vadd.f32 0.0, %v2712
        %v2714 = vpop.f32.mrb[0].mxu0
        %2715 = vmatprep.mubr.f32.mxu0 0.0
        %2716 = vmatmul.mubr.f32.gmra.mrb[0].mxu0 %v2554
        %v2717 = vpop.f32.mrb[0].mxu0
        %v2718 = vadd.f32 0.0, %v2717
        %v2719 = vpop.f32.mrb[0].mxu0
        %2720 = vmatprep.mubr.f32.mxu0 0.0
        %2721 = vmatmul.mubr.f32.gmra.mrb[0].mxu0 %v2555
        %v2722 = vpop.f32.mrb[0].mxu0
        %v2723 = vadd.f32 0.0, %v2722
        %v2724 = vpop.f32.mrb[0].mxu0
        %2725 = vmatprep.mubr.f32.mxu0 0.0
        %2726 = vmatmul.mubr.f32.gmra.mrb[0].mxu0 %v2556
        %v2727 = vpop.f32.mrb[0].mxu0
        %v2728 = vadd.f32 0.0, %v2727
        %v2729 = vpop.f32.mrb[0].mxu0
        %2730 = vmatprep.mubr.f32.mxu0 0.0
        %2731 = vmatmul.mubr.f32.gmra.mrb[0].mxu0 %v2557
        %v2732 = vpop.f32.mrb[0].mxu0
        %v2733 = vadd.f32 0.0, %v2732
        %v2734 = vpop.f32.mrb[0].mxu0
        %2735 = vmatprep.mubr.f32.mxu0 0.0
        %2736 = vmatmul.mubr.f32.gmra.mrb[0].mxu0 %v2558
        %v2737 = vpop.f32.mrb[0].mxu0
        %v2738 = vadd.f32 0.0, %v2737
        %v2739 = vpop.f32.mrb[0].mxu0
        %2740 = vmatprep.mubr.f32.mxu0 0.0
        %2741 = vmatmul.mubr.f32.gmra.mrb[0].mxu0 %v2559
        %v2742 = vpop.f32.mrb[0].mxu0
        %v2743 = vadd.f32 0.0, %v2742
        %v2744 = vpop.f32.mrb[0].mxu0
        %2745 = vmatprep.mubr.f32.mxu0 0.0
        %2746 = vmatmul.mubr.f32.gmra.mrb[0].mxu0 %v2560
        %v2747 = vpop.f32.mrb[0].mxu0
        %v2748 = vadd.f32 0.0, %v2747
        %v2749 = vpop.f32.mrb[0].mxu0
        %2750 = vmatprep.mubr.f32.mxu0 0.0
        %2751 = vmatmul.mubr.f32.gmra.mrb[0].mxu0 %v2561
        %v2752 = vpop.f32.mrb[0].mxu0
        %v2753 = vadd.f32 0.0, %v2752
        %v2754 = vpop.f32.mrb[0].mxu0
        %2755 = vmatprep.mubr.f32.mxu0 0.0
        %2756 = vmatmul.mubr.f32.gmra.mrb[0].mxu0 %v2562
        %v2757 = vpop.f32.mrb[0].mxu0
        %v2758 = vadd.f32 0.0, %v2757
        %v2759 = vpop.f32.mrb[0].mxu0
        %2760 = vmatprep.mubr.f32.mxu0 0.0
        %2761 = vmatmul.mubr.f32.gmra.mrb[0].mxu0 %v2563
        %v2762 = vpop.f32.mrb[0].mxu0
        %v2763 = vadd.f32 0.0, %v2762
        %v2764 = vpop.f32.mrb[0].mxu0
        %2765 = vmatprep.mubr.f32.mxu0 0.0
        %2766 = vmatmul.mubr.f32.gmra.mrb[0].mxu0 %v2564
        %v2767 = vpop.f32.mrb[0].mxu0
        %v2768 = vadd.f32 0.0, %v2767
        %v2769 = vpop.f32.mrb[0].mxu0
        %2770 = vmatprep.mubr.f32.mxu0 0.0
        %2771 = vmatmul.mubr.f32.gmra.mrb[0].mxu0 %v2565
        %v2772 = vpop.f32.mrb[0].mxu0
        %v2773 = vadd.f32 0.0, %v2772
        %v2774 = vpop.f32.mrb[0].mxu0
        %2775 = vmatprep.mubr.f32.mxu0 0.0
        %2776 = vmatmul.mubr.f32.gmra.mrb[0].mxu0 %v2566
        %v2777 = vpop.f32.mrb[0].mxu0
        %v2778 = vadd.f32 0.0, %v2777
        %v2779 = vpop.f32.mrb[0].mxu0
        %2780 = vmatprep.mubr.f32.mxu0 0.0
        %2781 = vmatmul.mubr.f32.gmra.mrb[0].mxu0 %v2567
        %v2782 = vpop.f32.mrb[0].mxu0
        %v2783 = vadd.f32 0.0, %v2782
        %v2784 = vpop.f32.mrb[0].mxu0
        %2785 = vmatprep.mubr.f32.mxu0 0.0
        %2786 = vmatmul.mubr.f32.gmra.mrb[0].mxu0 %v2568
        %v2787 = vpop.f32.mrb[0].mxu0
        %v2788 = vadd.f32 0.0, %v2787
        %v2789 = vpop.f32.mrb[0].mxu0
        %2790 = vmatprep.mubr.f32.mxu0 0.0
        %2791 = vmatmul.mubr.f32.gmra.mrb[0].mxu0 %v2569
        %v2792 = vpop.f32.mrb[0].mxu0
        %v2793 = vadd.f32 0.0, %v2792
        %v2794 = vpop.f32.mrb[0].mxu0
        %2795 = vmatprep.mubr.f32.mxu0 0.0
        %2796 = vmatmul.mubr.f32.gmra.mrb[0].mxu0 %v2570
        %v2797 = vpop.f32.mrb[0].mxu0
        %v2798 = vadd.f32 0.0, %v2797
        %v2799 = vpop.f32.mrb[0].mxu0
        %2800 = vmatprep.mubr.f32.mxu0 0.0
        %2801 = vmatmul.mubr.f32.gmra.mrb[0].mxu0 %v2571
        %v2802 = vpop.f32.mrb[0].mxu0
        %v2803 = vadd.f32 0.0, %v2802
        %v2804 = vpop.f32.mrb[0].mxu0
        %2805 = vmatprep.mubr.f32.mxu0 0.0
        %2806 = vmatmul.mubr.f32.gmra.mrb[0].mxu0 %v2572
        %v2807 = vpop.f32.mrb[0].mxu0
        %v2808 = vadd.f32 0.0, %v2807
        %v2809 = vpop.f32.mrb[0].mxu0
        %2810 = vmatprep.mubr.f32.mxu0 0.0
        %2811 = vmatmul.mubr.f32.gmra.mrb[0].mxu0 %v2573
        %v2812 = vpop.f32.mrb[0].mxu0
        %v2813 = vadd.f32 0.0, %v2812
        %v2814 = vpop.f32.mrb[0].mxu0
        %2815 = vdwg.mxu0
        %v2816 = vld [vmem:[#allocation3] sm:$0xff]
        %v2817 = vld [vmem:[#allocation3 + $0x8] sm:$0xff]
        %v2818 = vld [vmem:[#allocation3 + $0x10] sm:$0xff]
        %v2819 = vld [vmem:[#allocation3 + $0x18] sm:$0xff]
        %v2820 = vld [vmem:[#allocation3 + $0x20] sm:$0xff]
        %v2821 = vld [vmem:[#allocation3 + $0x28] sm:$0xff]
        %v2822 = vld [vmem:[#allocation3 + $0x30] sm:$0xff]
        %v2823 = vld [vmem:[#allocation3 + $0x38] sm:$0xff]
        %v2824 = vld [vmem:[#allocation3 + $0x40] sm:$0xff]
        %v2825 = vld [vmem:[#allocation3 + $0x48] sm:$0xff]
        %v2826 = vld [vmem:[#allocation3 + $0x50] sm:$0xff]
        %v2827 = vld [vmem:[#allocation3 + $0x58] sm:$0xff]
        %v2828 = vld [vmem:[#allocation3 + $0x60] sm:$0xff]
        %v2829 = vld [vmem:[#allocation3 + $0x68] sm:$0xff]
        %v2830 = vld [vmem:[#allocation3 + $0x70] sm:$0xff]
        %v2831 = vld [vmem:[#allocation3 + $0x78] sm:$0xff]
        %v2832 = vld [vmem:[#allocation3 + $0x80] sm:$0xff]
        %v2833 = vld [vmem:[#allocation3 + $0x88] sm:$0xff]
        %v2834 = vld [vmem:[#allocation3 + $0x90] sm:$0xff]
        %v2835 = vld [vmem:[#allocation3 + $0x98] sm:$0xff]
        %v2836 = vld [vmem:[#allocation3 + $0xa0] sm:$0xff]
        %v2837 = vld [vmem:[#allocation3 + $0xa8] sm:$0xff]
        %v2838 = vld [vmem:[#allocation3 + $0xb0] sm:$0xff]
        %v2839 = vld [vmem:[#allocation3 + $0xb8] sm:$0xff]
        %v2840 = vld [vmem:[#allocation3 + $0xc0] sm:$0xff]
        %v2841 = vld [vmem:[#allocation3 + $0xc8] sm:$0xff]
        %v2842 = vld [vmem:[#allocation3 + $0xd0] sm:$0xff]
        %v2843 = vld [vmem:[#allocation3 + $0xd8] sm:$0xff]
        %v2844 = vld [vmem:[#allocation3 + $0xe0] sm:$0xff]
        %v2845 = vld [vmem:[#allocation3 + $0xe8] sm:$0xff]
        %v2846 = vld [vmem:[#allocation3 + $0xf0] sm:$0xff]
        %v2847 = vld [vmem:[#allocation3 + $0xf8] sm:$0xff]
        %v2848 = vadd.f32 %v2816, %v2658
        %v2849 = vadd.f32 %v2817, %v2663
        %v2850 = vadd.f32 %v2818, %v2668
        %v2851 = vadd.f32 %v2819, %v2673
        %v2852 = vadd.f32 %v2820, %v2678
        %v2853 = vadd.f32 %v2821, %v2683
        %v2854 = vadd.f32 %v2822, %v2688
        %v2855 = vadd.f32 %v2823, %v2693
        %v2856 = vadd.f32 %v2824, %v2698
        %v2857 = vadd.f32 %v2825, %v2703
        %v2858 = vadd.f32 %v2826, %v2708
        %v2859 = vadd.f32 %v2827, %v2713
        %v2860 = vadd.f32 %v2828, %v2718
        %v2861 = vadd.f32 %v2829, %v2723
        %v2862 = vadd.f32 %v2830, %v2728
        %v2863 = vadd.f32 %v2831, %v2733
        %v2864 = vadd.f32 %v2832, %v2738
        %v2865 = vadd.f32 %v2833, %v2743
        %v2866 = vadd.f32 %v2834, %v2748
        %v2867 = vadd.f32 %v2835, %v2753
        %v2868 = vadd.f32 %v2836, %v2758
        %v2869 = vadd.f32 %v2837, %v2763
        %v2870 = vadd.f32 %v2838, %v2768
        %v2871 = vadd.f32 %v2839, %v2773
        %v2872 = vadd.f32 %v2840, %v2778
        %v2873 = vadd.f32 %v2841, %v2783
        %v2874 = vadd.f32 %v2842, %v2788
        %v2875 = vadd.f32 %v2843, %v2793
        %v2876 = vadd.f32 %v2844, %v2798
        %v2877 = vadd.f32 %v2845, %v2803
        %v2878 = vadd.f32 %v2846, %v2808
        %v2879 = vadd.f32 %v2847, %v2813
        %2880 = vst [vmem:[#allocation3] sm:$0xff] %v2848
        %2881 = vst [vmem:[#allocation3 + $0x8] sm:$0xff] %v2849
        %2882 = vst [vmem:[#allocation3 + $0x10] sm:$0xff] %v2850
        %2883 = vst [vmem:[#allocation3 + $0x18] sm:$0xff] %v2851
        %2884 = vst [vmem:[#allocation3 + $0x20] sm:$0xff] %v2852
        %2885 = vst [vmem:[#allocation3 + $0x28] sm:$0xff] %v2853
        %2886 = vst [vmem:[#allocation3 + $0x30] sm:$0xff] %v2854
        %2887 = vst [vmem:[#allocation3 + $0x38] sm:$0xff] %v2855
        %2888 = vst [vmem:[#allocation3 + $0x40] sm:$0xff] %v2856
        %2889 = vst [vmem:[#allocation3 + $0x48] sm:$0xff] %v2857
        %2890 = vst [vmem:[#allocation3 + $0x50] sm:$0xff] %v2858
        %2891 = vst [vmem:[#allocation3 + $0x58] sm:$0xff] %v2859
        %2892 = vst [vmem:[#allocation3 + $0x60] sm:$0xff] %v2860
        %2893 = vst [vmem:[#allocation3 + $0x68] sm:$0xff] %v2861
        %2894 = vst [vmem:[#allocation3 + $0x70] sm:$0xff] %v2862
        %2895 = vst [vmem:[#allocation3 + $0x78] sm:$0xff] %v2863
        %2896 = vst [vmem:[#allocation3 + $0x80] sm:$0xff] %v2864
        %2897 = vst [vmem:[#allocation3 + $0x88] sm:$0xff] %v2865
        %2898 = vst [vmem:[#allocation3 + $0x90] sm:$0xff] %v2866
        %2899 = vst [vmem:[#allocation3 + $0x98] sm:$0xff] %v2867
        %2900 = vst [vmem:[#allocation3 + $0xa0] sm:$0xff] %v2868
        %2901 = vst [vmem:[#allocation3 + $0xa8] sm:$0xff] %v2869
        %2902 = vst [vmem:[#allocation3 + $0xb0] sm:$0xff] %v2870
        %2903 = vst [vmem:[#allocation3 + $0xb8] sm:$0xff] %v2871
        %2904 = vst [vmem:[#allocation3 + $0xc0] sm:$0xff] %v2872
        %2905 = vst [vmem:[#allocation3 + $0xc8] sm:$0xff] %v2873
        %2906 = vst [vmem:[#allocation3 + $0xd0] sm:$0xff] %v2874
        %2907 = vst [vmem:[#allocation3 + $0xd8] sm:$0xff] %v2875
        %2908 = vst [vmem:[#allocation3 + $0xe0] sm:$0xff] %v2876
        %2909 = vst [vmem:[#allocation3 + $0xe8] sm:$0xff] %v2877
        %2910 = vst [vmem:[#allocation3 + $0xf0] sm:$0xff] %v2878
        %2911 = vst [vmem:[#allocation3 + $0xf8] sm:$0xff] %v2879
        %s2912 = scalar_lea.vmem [#allocation2], 48
        %v2913 = vld [vmem:[%s2912] sm:$0xff]
        %v2914 = vld [vmem:[%s2912 + $0x8] sm:$0xff]
        %v2915 = vld [vmem:[%s2912 + $0x18] sm:$0xff]
        %v2916 = vld [vmem:[%s2912 + $0x20] sm:$0xff]
        %v2917 = vld [vmem:[%s2912 + $0x30] sm:$0xff]
        %v2918 = vld [vmem:[%s2912 + $0x38] sm:$0xff]
        %v2919 = vld [vmem:[%s2912 + $0x48] sm:$0xff]
        %v2920 = vld [vmem:[%s2912 + $0x50] sm:$0xff]
        %v2921 = vld [vmem:[%s2912 + $0x60] sm:$0xff]
        %v2922 = vld [vmem:[%s2912 + $0x68] sm:$0xff]
        %v2923 = vld [vmem:[%s2912 + $0x78] sm:$0xff]
        %v2924 = vld [vmem:[%s2912 + $0x80] sm:$0xff]
        %v2925 = vld [vmem:[%s2912 + $0x90] sm:$0xff]
        %v2926 = vld [vmem:[%s2912 + $0x98] sm:$0xff]
        %v2927 = vld [vmem:[%s2912 + $0xa8] sm:$0xff]
        %v2928 = vld [vmem:[%s2912 + $0xb0] sm:$0xff]
        %v2929 = vld [vmem:[%s2912 + $0xc0] sm:$0xff]
        %v2930 = vld [vmem:[%s2912 + $0xc8] sm:$0xff]
        %v2931 = vld [vmem:[%s2912 + $0xd8] sm:$0xff]
        %v2932 = vld [vmem:[%s2912 + $0xe0] sm:$0xff]
        %v2933 = vld [vmem:[%s2912 + $0xf0] sm:$0xff]
        %v2934 = vld [vmem:[%s2912 + $0xf8] sm:$0xff]
        %v2935 = vld [vmem:[%s2912 + $0x108] sm:$0xff]
        %v2936 = vld [vmem:[%s2912 + $0x110] sm:$0xff]
        %v2937 = vld [vmem:[%s2912 + $0x120] sm:$0xff]
        %v2938 = vld [vmem:[%s2912 + $0x128] sm:$0xff]
        %v2939 = vld [vmem:[%s2912 + $0x138] sm:$0xff]
        %v2940 = vld [vmem:[%s2912 + $0x140] sm:$0xff]
        %v2941 = vld [vmem:[%s2912 + $0x150] sm:$0xff]
        %v2942 = vld [vmem:[%s2912 + $0x158] sm:$0xff]
        %v2943 = vld [vmem:[%s2912 + $0x168] sm:$0xff]
        %v2944 = vld [vmem:[%s2912 + $0x170] sm:$0xff]
        %s2945 = scalar_lea.vmem [#allocation15], 768
        %v2946 = vld [vmem:[%s2945] sm:$0xff]
        %v2947 = vld [vmem:[%s2945 + $0x8] sm:$0xff]
        %v2948 = vld [vmem:[%s2945 + $0x10] sm:$0xff]
        %v2949 = vld [vmem:[%s2945 + $0x18] sm:$0xff]
        %v2950 = vld [vmem:[%s2945 + $0x20] sm:$0xff]
        %v2951 = vld [vmem:[%s2945 + $0x28] sm:$0xff]
        %v2952 = vld [vmem:[%s2945 + $0x30] sm:$0xff]
        %v2953 = vld [vmem:[%s2945 + $0x38] sm:$0xff]
        %v2954 = vld [vmem:[%s2945 + $0x40] sm:$0xff]
        %v2955 = vld [vmem:[%s2945 + $0x48] sm:$0xff]
        %v2956 = vld [vmem:[%s2945 + $0x50] sm:$0xff]
        %v2957 = vld [vmem:[%s2945 + $0x58] sm:$0xff]
        %v2958 = vld [vmem:[%s2945 + $0x60] sm:$0xff]
        %v2959 = vld [vmem:[%s2945 + $0x68] sm:$0xff]
        %v2960 = vld [vmem:[%s2945 + $0x70] sm:$0xff]
        %v2961 = vld [vmem:[%s2945 + $0x78] sm:$0xff]
        %2962 = vmatprep.subr.mxu0 0.0
        %2963 = vmatpush1.msra.mxu0 %v2946
        %2964 = vmatprep.subr.mxu0 0.0
        %2965 = vmatpush1.msra.mxu0 %v2947
        %2966 = vmatprep.subr.mxu0 0.0
        %2967 = vmatpush1.msra.mxu0 %v2948
        %2968 = vmatprep.subr.mxu0 0.0
        %2969 = vmatpush1.msra.mxu0 %v2949
        %2970 = vmatprep.subr.mxu0 0.0
        %2971 = vmatpush1.msra.mxu0 %v2950
        %2972 = vmatprep.subr.mxu0 0.0
        %2973 = vmatpush1.msra.mxu0 %v2951
        %2974 = vmatprep.subr.mxu0 0.0
        %2975 = vmatpush1.msra.mxu0 %v2952
        %2976 = vmatprep.subr.mxu0 0.0
        %2977 = vmatpush1.msra.mxu0 %v2953
        %2978 = vmatprep.subr.mxu0 0.0
        %2979 = vmatpush1.msra.mxu0 %v2954
        %2980 = vmatprep.subr.mxu0 0.0
        %2981 = vmatpush1.msra.mxu0 %v2955
        %2982 = vmatprep.subr.mxu0 0.0
        %2983 = vmatpush1.msra.mxu0 %v2956
        %2984 = vmatprep.subr.mxu0 0.0
        %2985 = vmatpush1.msra.mxu0 %v2957
        %2986 = vmatprep.subr.mxu0 0.0
        %2987 = vmatpush1.msra.mxu0 %v2958
        %2988 = vmatprep.subr.mxu0 0.0
        %2989 = vmatpush1.msra.mxu0 %v2959
        %2990 = vmatprep.subr.mxu0 0.0
        %2991 = vmatpush1.msra.mxu0 %v2960
        %2992 = vmatprep.subr.mxu0 0.0
        %2993 = vmatpush1.msra.mxu0 %v2961
        %2994 = vmatprep.subr.mxu0 0.0
        %2995 = vmatpush1.msra.mxu0 0.0
        %2996 = vmatprep.subr.mxu0 0.0
        %2997 = vmatpush1.msra.mxu0 0.0
        %2998 = vmatprep.subr.mxu0 0.0
        %2999 = vmatpush1.msra.mxu0 0.0
        %3000 = vmatprep.subr.mxu0 0.0
        %3001 = vmatpush1.msra.mxu0 0.0
        %3002 = vmatprep.subr.mxu0 0.0
        %3003 = vmatpush1.msra.mxu0 0.0
        %3004 = vmatprep.subr.mxu0 0.0
        %3005 = vmatpush1.msra.mxu0 0.0
        %3006 = vmatprep.subr.mxu0 0.0
        %3007 = vmatpush1.msra.mxu0 0.0
        %3008 = vmatprep.subr.mxu0 0.0
        %3009 = vmatpush1.msra.mxu0 0.0
        %3010 = vmatprep.subr.mxu0 0.0
        %3011 = vmatpush1.msra.mxu0 0.0
        %3012 = vmatprep.subr.mxu0 0.0
        %3013 = vmatpush1.msra.mxu0 0.0
        %3014 = vmatprep.subr.mxu0 0.0
        %3015 = vmatpush1.msra.mxu0 0.0
        %3016 = vmatprep.subr.mxu0 0.0
        %3017 = vmatpush1.msra.mxu0 0.0
        %3018 = vmatprep.subr.mxu0 0.0
        %3019 = vmatpush1.msra.mxu0 0.0
        %3020 = vmatprep.subr.mxu0 0.0
        %3021 = vmatpush1.msra.mxu0 0.0
        %3022 = vmatprep.subr.mxu0 0.0
        %3023 = vmatpush1.msra.mxu0 0.0
        %3024 = vmatprep.subr.mxu0 0.0
        %3025 = vmatpush1.msra.mxu0 0.0
        %3026 = vmatprep.mubr.f32.mxu0 0.0
        %3027 = vmatmul.mubr.f32.gmra.mrb[0].mxu0 %v2913
        %v3028 = vpop.f32.mrb[0].mxu0
        %v3029 = vadd.f32 0.0, %v3028
        %v3030 = vpop.f32.mrb[0].mxu0
        %3031 = vmatprep.mubr.f32.mxu0 0.0
        %3032 = vmatmul.mubr.f32.gmra.mrb[0].mxu0 %v2914
        %v3033 = vpop.f32.mrb[0].mxu0
        %v3034 = vadd.f32 0.0, %v3033
        %v3035 = vpop.f32.mrb[0].mxu0
        %3036 = vmatprep.mubr.f32.mxu0 0.0
        %3037 = vmatmul.mubr.f32.gmra.mrb[0].mxu0 %v2915
        %v3038 = vpop.f32.mrb[0].mxu0
        %v3039 = vadd.f32 0.0, %v3038
        %v3040 = vpop.f32.mrb[0].mxu0
        %3041 = vmatprep.mubr.f32.mxu0 0.0
        %3042 = vmatmul.mubr.f32.gmra.mrb[0].mxu0 %v2916
        %v3043 = vpop.f32.mrb[0].mxu0
        %v3044 = vadd.f32 0.0, %v3043
        %v3045 = vpop.f32.mrb[0].mxu0
        %3046 = vmatprep.mubr.f32.mxu0 0.0
        %3047 = vmatmul.mubr.f32.gmra.mrb[0].mxu0 %v2917
        %v3048 = vpop.f32.mrb[0].mxu0
        %v3049 = vadd.f32 0.0, %v3048
        %v3050 = vpop.f32.mrb[0].mxu0
        %3051 = vmatprep.mubr.f32.mxu0 0.0
        %3052 = vmatmul.mubr.f32.gmra.mrb[0].mxu0 %v2918
        %v3053 = vpop.f32.mrb[0].mxu0
        %v3054 = vadd.f32 0.0, %v3053
        %v3055 = vpop.f32.mrb[0].mxu0
        %3056 = vmatprep.mubr.f32.mxu0 0.0
        %3057 = vmatmul.mubr.f32.gmra.mrb[0].mxu0 %v2919
        %v3058 = vpop.f32.mrb[0].mxu0
        %v3059 = vadd.f32 0.0, %v3058
        %v3060 = vpop.f32.mrb[0].mxu0
        %3061 = vmatprep.mubr.f32.mxu0 0.0
        %3062 = vmatmul.mubr.f32.gmra.mrb[0].mxu0 %v2920
        %v3063 = vpop.f32.mrb[0].mxu0
        %v3064 = vadd.f32 0.0, %v3063
        %v3065 = vpop.f32.mrb[0].mxu0
        %3066 = vmatprep.mubr.f32.mxu0 0.0
        %3067 = vmatmul.mubr.f32.gmra.mrb[0].mxu0 %v2921
        %v3068 = vpop.f32.mrb[0].mxu0
        %v3069 = vadd.f32 0.0, %v3068
        %v3070 = vpop.f32.mrb[0].mxu0
        %3071 = vmatprep.mubr.f32.mxu0 0.0
        %3072 = vmatmul.mubr.f32.gmra.mrb[0].mxu0 %v2922
        %v3073 = vpop.f32.mrb[0].mxu0
        %v3074 = vadd.f32 0.0, %v3073
        %v3075 = vpop.f32.mrb[0].mxu0
        %3076 = vmatprep.mubr.f32.mxu0 0.0
        %3077 = vmatmul.mubr.f32.gmra.mrb[0].mxu0 %v2923
        %v3078 = vpop.f32.mrb[0].mxu0
        %v3079 = vadd.f32 0.0, %v3078
        %v3080 = vpop.f32.mrb[0].mxu0
        %3081 = vmatprep.mubr.f32.mxu0 0.0
        %3082 = vmatmul.mubr.f32.gmra.mrb[0].mxu0 %v2924
        %v3083 = vpop.f32.mrb[0].mxu0
        %v3084 = vadd.f32 0.0, %v3083
        %v3085 = vpop.f32.mrb[0].mxu0
        %3086 = vmatprep.mubr.f32.mxu0 0.0
        %3087 = vmatmul.mubr.f32.gmra.mrb[0].mxu0 %v2925
        %v3088 = vpop.f32.mrb[0].mxu0
        %v3089 = vadd.f32 0.0, %v3088
        %v3090 = vpop.f32.mrb[0].mxu0
        %3091 = vmatprep.mubr.f32.mxu0 0.0
        %3092 = vmatmul.mubr.f32.gmra.mrb[0].mxu0 %v2926
        %v3093 = vpop.f32.mrb[0].mxu0
        %v3094 = vadd.f32 0.0, %v3093
        %v3095 = vpop.f32.mrb[0].mxu0
        %3096 = vmatprep.mubr.f32.mxu0 0.0
        %3097 = vmatmul.mubr.f32.gmra.mrb[0].mxu0 %v2927
        %v3098 = vpop.f32.mrb[0].mxu0
        %v3099 = vadd.f32 0.0, %v3098
        %v3100 = vpop.f32.mrb[0].mxu0
        %3101 = vmatprep.mubr.f32.mxu0 0.0
        %3102 = vmatmul.mubr.f32.gmra.mrb[0].mxu0 %v2928
        %v3103 = vpop.f32.mrb[0].mxu0
        %v3104 = vadd.f32 0.0, %v3103
        %v3105 = vpop.f32.mrb[0].mxu0
        %3106 = vmatprep.mubr.f32.mxu0 0.0
        %3107 = vmatmul.mubr.f32.gmra.mrb[0].mxu0 %v2929
        %v3108 = vpop.f32.mrb[0].mxu0
        %v3109 = vadd.f32 0.0, %v3108
        %v3110 = vpop.f32.mrb[0].mxu0
        %3111 = vmatprep.mubr.f32.mxu0 0.0
        %3112 = vmatmul.mubr.f32.gmra.mrb[0].mxu0 %v2930
        %v3113 = vpop.f32.mrb[0].mxu0
        %v3114 = vadd.f32 0.0, %v3113
        %v3115 = vpop.f32.mrb[0].mxu0
        %3116 = vmatprep.mubr.f32.mxu0 0.0
        %3117 = vmatmul.mubr.f32.gmra.mrb[0].mxu0 %v2931
        %v3118 = vpop.f32.mrb[0].mxu0
        %v3119 = vadd.f32 0.0, %v3118
        %v3120 = vpop.f32.mrb[0].mxu0
        %3121 = vmatprep.mubr.f32.mxu0 0.0
        %3122 = vmatmul.mubr.f32.gmra.mrb[0].mxu0 %v2932
        %v3123 = vpop.f32.mrb[0].mxu0
        %v3124 = vadd.f32 0.0, %v3123
        %v3125 = vpop.f32.mrb[0].mxu0
        %3126 = vmatprep.mubr.f32.mxu0 0.0
        %3127 = vmatmul.mubr.f32.gmra.mrb[0].mxu0 %v2933
        %v3128 = vpop.f32.mrb[0].mxu0
        %v3129 = vadd.f32 0.0, %v3128
        %v3130 = vpop.f32.mrb[0].mxu0
        %3131 = vmatprep.mubr.f32.mxu0 0.0
        %3132 = vmatmul.mubr.f32.gmra.mrb[0].mxu0 %v2934
        %v3133 = vpop.f32.mrb[0].mxu0
        %v3134 = vadd.f32 0.0, %v3133
        %v3135 = vpop.f32.mrb[0].mxu0
        %3136 = vmatprep.mubr.f32.mxu0 0.0
        %3137 = vmatmul.mubr.f32.gmra.mrb[0].mxu0 %v2935
        %v3138 = vpop.f32.mrb[0].mxu0
        %v3139 = vadd.f32 0.0, %v3138
        %v3140 = vpop.f32.mrb[0].mxu0
        %3141 = vmatprep.mubr.f32.mxu0 0.0
        %3142 = vmatmul.mubr.f32.gmra.mrb[0].mxu0 %v2936
        %v3143 = vpop.f32.mrb[0].mxu0
        %v3144 = vadd.f32 0.0, %v3143
        %v3145 = vpop.f32.mrb[0].mxu0
        %3146 = vmatprep.mubr.f32.mxu0 0.0
        %3147 = vmatmul.mubr.f32.gmra.mrb[0].mxu0 %v2937
        %v3148 = vpop.f32.mrb[0].mxu0
        %v3149 = vadd.f32 0.0, %v3148
        %v3150 = vpop.f32.mrb[0].mxu0
        %3151 = vmatprep.mubr.f32.mxu0 0.0
        %3152 = vmatmul.mubr.f32.gmra.mrb[0].mxu0 %v2938
        %v3153 = vpop.f32.mrb[0].mxu0
        %v3154 = vadd.f32 0.0, %v3153
        %v3155 = vpop.f32.mrb[0].mxu0
        %3156 = vmatprep.mubr.f32.mxu0 0.0
        %3157 = vmatmul.mubr.f32.gmra.mrb[0].mxu0 %v2939
        %v3158 = vpop.f32.mrb[0].mxu0
        %v3159 = vadd.f32 0.0, %v3158
        %v3160 = vpop.f32.mrb[0].mxu0
        %3161 = vmatprep.mubr.f32.mxu0 0.0
        %3162 = vmatmul.mubr.f32.gmra.mrb[0].mxu0 %v2940
        %v3163 = vpop.f32.mrb[0].mxu0
        %v3164 = vadd.f32 0.0, %v3163
        %v3165 = vpop.f32.mrb[0].mxu0
        %3166 = vmatprep.mubr.f32.mxu0 0.0
        %3167 = vmatmul.mubr.f32.gmra.mrb[0].mxu0 %v2941
        %v3168 = vpop.f32.mrb[0].mxu0
        %v3169 = vadd.f32 0.0, %v3168
        %v3170 = vpop.f32.mrb[0].mxu0
        %3171 = vmatprep.mubr.f32.mxu0 0.0
        %3172 = vmatmul.mubr.f32.gmra.mrb[0].mxu0 %v2942
        %v3173 = vpop.f32.mrb[0].mxu0
        %v3174 = vadd.f32 0.0, %v3173
        %v3175 = vpop.f32.mrb[0].mxu0
        %3176 = vmatprep.mubr.f32.mxu0 0.0
        %3177 = vmatmul.mubr.f32.gmra.mrb[0].mxu0 %v2943
        %v3178 = vpop.f32.mrb[0].mxu0
        %v3179 = vadd.f32 0.0, %v3178
        %v3180 = vpop.f32.mrb[0].mxu0
        %3181 = vmatprep.mubr.f32.mxu0 0.0
        %3182 = vmatmul.mubr.f32.gmra.mrb[0].mxu0 %v2944
        %v3183 = vpop.f32.mrb[0].mxu0
        %v3184 = vadd.f32 0.0, %v3183
        %v3185 = vpop.f32.mrb[0].mxu0
        %3186 = vdwg.mxu0
        %v3187 = vld [vmem:[#allocation3] sm:$0xff]
        %v3188 = vld [vmem:[#allocation3 + $0x8] sm:$0xff]
        %v3189 = vld [vmem:[#allocation3 + $0x10] sm:$0xff]
        %v3190 = vld [vmem:[#allocation3 + $0x18] sm:$0xff]
        %v3191 = vld [vmem:[#allocation3 + $0x20] sm:$0xff]
        %v3192 = vld [vmem:[#allocation3 + $0x28] sm:$0xff]
        %v3193 = vld [vmem:[#allocation3 + $0x30] sm:$0xff]
        %v3194 = vld [vmem:[#allocation3 + $0x38] sm:$0xff]
        %v3195 = vld [vmem:[#allocation3 + $0x40] sm:$0xff]
        %v3196 = vld [vmem:[#allocation3 + $0x48] sm:$0xff]
        %v3197 = vld [vmem:[#allocation3 + $0x50] sm:$0xff]
        %v3198 = vld [vmem:[#allocation3 + $0x58] sm:$0xff]
        %v3199 = vld [vmem:[#allocation3 + $0x60] sm:$0xff]
        %v3200 = vld [vmem:[#allocation3 + $0x68] sm:$0xff]
        %v3201 = vld [vmem:[#allocation3 + $0x70] sm:$0xff]
        %v3202 = vld [vmem:[#allocation3 + $0x78] sm:$0xff]
        %v3203 = vld [vmem:[#allocation3 + $0x80] sm:$0xff]
        %v3204 = vld [vmem:[#allocation3 + $0x88] sm:$0xff]
        %v3205 = vld [vmem:[#allocation3 + $0x90] sm:$0xff]
        %v3206 = vld [vmem:[#allocation3 + $0x98] sm:$0xff]
        %v3207 = vld [vmem:[#allocation3 + $0xa0] sm:$0xff]
        %v3208 = vld [vmem:[#allocation3 + $0xa8] sm:$0xff]
        %v3209 = vld [vmem:[#allocation3 + $0xb0] sm:$0xff]
        %v3210 = vld [vmem:[#allocation3 + $0xb8] sm:$0xff]
        %v3211 = vld [vmem:[#allocation3 + $0xc0] sm:$0xff]
        %v3212 = vld [vmem:[#allocation3 + $0xc8] sm:$0xff]
        %v3213 = vld [vmem:[#allocation3 + $0xd0] sm:$0xff]
        %v3214 = vld [vmem:[#allocation3 + $0xd8] sm:$0xff]
        %v3215 = vld [vmem:[#allocation3 + $0xe0] sm:$0xff]
        %v3216 = vld [vmem:[#allocation3 + $0xe8] sm:$0xff]
        %v3217 = vld [vmem:[#allocation3 + $0xf0] sm:$0xff]
        %v3218 = vld [vmem:[#allocation3 + $0xf8] sm:$0xff]
        %v3219 = vadd.f32 %v3187, %v3029
        %v3220 = vadd.f32 %v3188, %v3034
        %v3221 = vadd.f32 %v3189, %v3039
        %v3222 = vadd.f32 %v3190, %v3044
        %v3223 = vadd.f32 %v3191, %v3049
        %v3224 = vadd.f32 %v3192, %v3054
        %v3225 = vadd.f32 %v3193, %v3059
        %v3226 = vadd.f32 %v3194, %v3064
        %v3227 = vadd.f32 %v3195, %v3069
        %v3228 = vadd.f32 %v3196, %v3074
        %v3229 = vadd.f32 %v3197, %v3079
        %v3230 = vadd.f32 %v3198, %v3084
        %v3231 = vadd.f32 %v3199, %v3089
        %v3232 = vadd.f32 %v3200, %v3094
        %v3233 = vadd.f32 %v3201, %v3099
        %v3234 = vadd.f32 %v3202, %v3104
        %v3235 = vadd.f32 %v3203, %v3109
        %v3236 = vadd.f32 %v3204, %v3114
        %v3237 = vadd.f32 %v3205, %v3119
        %v3238 = vadd.f32 %v3206, %v3124
        %v3239 = vadd.f32 %v3207, %v3129
        %v3240 = vadd.f32 %v3208, %v3134
        %v3241 = vadd.f32 %v3209, %v3139
        %v3242 = vadd.f32 %v3210, %v3144
        %v3243 = vadd.f32 %v3211, %v3149
        %v3244 = vadd.f32 %v3212, %v3154
        %v3245 = vadd.f32 %v3213, %v3159
        %v3246 = vadd.f32 %v3214, %v3164
        %v3247 = vadd.f32 %v3215, %v3169
        %v3248 = vadd.f32 %v3216, %v3174
        %v3249 = vadd.f32 %v3217, %v3179
        %v3250 = vadd.f32 %v3218, %v3184
        %3251 = vst [vmem:[#allocation3] sm:$0xff] %v3219
        %3252 = vst [vmem:[#allocation3 + $0x8] sm:$0xff] %v3220
        %3253 = vst [vmem:[#allocation3 + $0x10] sm:$0xff] %v3221
        %3254 = vst [vmem:[#allocation3 + $0x18] sm:$0xff] %v3222
        %3255 = vst [vmem:[#allocation3 + $0x20] sm:$0xff] %v3223
        %3256 = vst [vmem:[#allocation3 + $0x28] sm:$0xff] %v3224
        %3257 = vst [vmem:[#allocation3 + $0x30] sm:$0xff] %v3225
        %3258 = vst [vmem:[#allocation3 + $0x38] sm:$0xff] %v3226
        %3259 = vst [vmem:[#allocation3 + $0x40] sm:$0xff] %v3227
        %3260 = vst [vmem:[#allocation3 + $0x48] sm:$0xff] %v3228
        %3261 = vst [vmem:[#allocation3 + $0x50] sm:$0xff] %v3229
        %3262 = vst [vmem:[#allocation3 + $0x58] sm:$0xff] %v3230
        %3263 = vst [vmem:[#allocation3 + $0x60] sm:$0xff] %v3231
        %3264 = vst [vmem:[#allocation3 + $0x68] sm:$0xff] %v3232
        %3265 = vst [vmem:[#allocation3 + $0x70] sm:$0xff] %v3233
        %3266 = vst [vmem:[#allocation3 + $0x78] sm:$0xff] %v3234
        %3267 = vst [vmem:[#allocation3 + $0x80] sm:$0xff] %v3235
        %3268 = vst [vmem:[#allocation3 + $0x88] sm:$0xff] %v3236
        %3269 = vst [vmem:[#allocation3 + $0x90] sm:$0xff] %v3237
        %3270 = vst [vmem:[#allocation3 + $0x98] sm:$0xff] %v3238
        %3271 = vst [vmem:[#allocation3 + $0xa0] sm:$0xff] %v3239
        %3272 = vst [vmem:[#allocation3 + $0xa8] sm:$0xff] %v3240
        %3273 = vst [vmem:[#allocation3 + $0xb0] sm:$0xff] %v3241
        %3274 = vst [vmem:[#allocation3 + $0xb8] sm:$0xff] %v3242
        %3275 = vst [vmem:[#allocation3 + $0xc0] sm:$0xff] %v3243
        %3276 = vst [vmem:[#allocation3 + $0xc8] sm:$0xff] %v3244
        %3277 = vst [vmem:[#allocation3 + $0xd0] sm:$0xff] %v3245
        %3278 = vst [vmem:[#allocation3 + $0xd8] sm:$0xff] %v3246
        %3279 = vst [vmem:[#allocation3 + $0xe0] sm:$0xff] %v3247
        %3280 = vst [vmem:[#allocation3 + $0xe8] sm:$0xff] %v3248
        %3281 = vst [vmem:[#allocation3 + $0xf0] sm:$0xff] %v3249
        %3282 = vst [vmem:[#allocation3 + $0xf8] sm:$0xff] %v3250
        %v3283 = vld [vmem:[%s2912 + $0x1] sm:$0xff]
        %v3284 = vld [vmem:[%s2912 + $0x9] sm:$0xff]
        %v3285 = vld [vmem:[%s2912 + $0x19] sm:$0xff]
        %v3286 = vld [vmem:[%s2912 + $0x21] sm:$0xff]
        %v3287 = vld [vmem:[%s2912 + $0x31] sm:$0xff]
        %v3288 = vld [vmem:[%s2912 + $0x39] sm:$0xff]
        %v3289 = vld [vmem:[%s2912 + $0x49] sm:$0xff]
        %v3290 = vld [vmem:[%s2912 + $0x51] sm:$0xff]
        %v3291 = vld [vmem:[%s2912 + $0x61] sm:$0xff]
        %v3292 = vld [vmem:[%s2912 + $0x69] sm:$0xff]
        %v3293 = vld [vmem:[%s2912 + $0x79] sm:$0xff]
        %v3294 = vld [vmem:[%s2912 + $0x81] sm:$0xff]
        %v3295 = vld [vmem:[%s2912 + $0x91] sm:$0xff]
        %v3296 = vld [vmem:[%s2912 + $0x99] sm:$0xff]
        %v3297 = vld [vmem:[%s2912 + $0xa9] sm:$0xff]
        %v3298 = vld [vmem:[%s2912 + $0xb1] sm:$0xff]
        %v3299 = vld [vmem:[%s2912 + $0xc1] sm:$0xff]
        %v3300 = vld [vmem:[%s2912 + $0xc9] sm:$0xff]
        %v3301 = vld [vmem:[%s2912 + $0xd9] sm:$0xff]
        %v3302 = vld [vmem:[%s2912 + $0xe1] sm:$0xff]
        %v3303 = vld [vmem:[%s2912 + $0xf1] sm:$0xff]
        %v3304 = vld [vmem:[%s2912 + $0xf9] sm:$0xff]
        %v3305 = vld [vmem:[%s2912 + $0x109] sm:$0xff]
        %v3306 = vld [vmem:[%s2912 + $0x111] sm:$0xff]
        %v3307 = vld [vmem:[%s2912 + $0x121] sm:$0xff]
        %v3308 = vld [vmem:[%s2912 + $0x129] sm:$0xff]
        %v3309 = vld [vmem:[%s2912 + $0x139] sm:$0xff]
        %v3310 = vld [vmem:[%s2912 + $0x141] sm:$0xff]
        %v3311 = vld [vmem:[%s2912 + $0x151] sm:$0xff]
        %v3312 = vld [vmem:[%s2912 + $0x159] sm:$0xff]
        %v3313 = vld [vmem:[%s2912 + $0x169] sm:$0xff]
        %v3314 = vld [vmem:[%s2912 + $0x171] sm:$0xff]
        %s3315 = scalar_lea.vmem [#allocation15], 896
        %v3316 = vld [vmem:[%s3315] sm:$0xff]
        %v3317 = vld [vmem:[%s3315 + $0x8] sm:$0xff]
        %v3318 = vld [vmem:[%s3315 + $0x10] sm:$0xff]
        %v3319 = vld [vmem:[%s3315 + $0x18] sm:$0xff]
        %v3320 = vld [vmem:[%s3315 + $0x20] sm:$0xff]
        %v3321 = vld [vmem:[%s3315 + $0x28] sm:$0xff]
        %v3322 = vld [vmem:[%s3315 + $0x30] sm:$0xff]
        %v3323 = vld [vmem:[%s3315 + $0x38] sm:$0xff]
        %v3324 = vld [vmem:[%s3315 + $0x40] sm:$0xff]
        %v3325 = vld [vmem:[%s3315 + $0x48] sm:$0xff]
        %v3326 = vld [vmem:[%s3315 + $0x50] sm:$0xff]
        %v3327 = vld [vmem:[%s3315 + $0x58] sm:$0xff]
        %v3328 = vld [vmem:[%s3315 + $0x60] sm:$0xff]
        %v3329 = vld [vmem:[%s3315 + $0x68] sm:$0xff]
        %v3330 = vld [vmem:[%s3315 + $0x70] sm:$0xff]
        %v3331 = vld [vmem:[%s3315 + $0x78] sm:$0xff]
        %3332 = vmatprep.subr.mxu0 0.0
        %3333 = vmatpush1.msra.mxu0 %v3316
        %3334 = vmatprep.subr.mxu0 0.0
        %3335 = vmatpush1.msra.mxu0 %v3317
        %3336 = vmatprep.subr.mxu0 0.0
        %3337 = vmatpush1.msra.mxu0 %v3318
        %3338 = vmatprep.subr.mxu0 0.0
        %3339 = vmatpush1.msra.mxu0 %v3319
        %3340 = vmatprep.subr.mxu0 0.0
        %3341 = vmatpush1.msra.mxu0 %v3320
        %3342 = vmatprep.subr.mxu0 0.0
        %3343 = vmatpush1.msra.mxu0 %v3321
        %3344 = vmatprep.subr.mxu0 0.0
        %3345 = vmatpush1.msra.mxu0 %v3322
        %3346 = vmatprep.subr.mxu0 0.0
        %3347 = vmatpush1.msra.mxu0 %v3323
        %3348 = vmatprep.subr.mxu0 0.0
        %3349 = vmatpush1.msra.mxu0 %v3324
        %3350 = vmatprep.subr.mxu0 0.0
        %3351 = vmatpush1.msra.mxu0 %v3325
        %3352 = vmatprep.subr.mxu0 0.0
        %3353 = vmatpush1.msra.mxu0 %v3326
        %3354 = vmatprep.subr.mxu0 0.0
        %3355 = vmatpush1.msra.mxu0 %v3327
        %3356 = vmatprep.subr.mxu0 0.0
        %3357 = vmatpush1.msra.mxu0 %v3328
        %3358 = vmatprep.subr.mxu0 0.0
        %3359 = vmatpush1.msra.mxu0 %v3329
        %3360 = vmatprep.subr.mxu0 0.0
        %3361 = vmatpush1.msra.mxu0 %v3330
        %3362 = vmatprep.subr.mxu0 0.0
        %3363 = vmatpush1.msra.mxu0 %v3331
        %3364 = vmatprep.subr.mxu0 0.0
        %3365 = vmatpush1.msra.mxu0 0.0
        %3366 = vmatprep.subr.mxu0 0.0
        %3367 = vmatpush1.msra.mxu0 0.0
        %3368 = vmatprep.subr.mxu0 0.0
        %3369 = vmatpush1.msra.mxu0 0.0
        %3370 = vmatprep.subr.mxu0 0.0
        %3371 = vmatpush1.msra.mxu0 0.0
        %3372 = vmatprep.subr.mxu0 0.0
        %3373 = vmatpush1.msra.mxu0 0.0
        %3374 = vmatprep.subr.mxu0 0.0
        %3375 = vmatpush1.msra.mxu0 0.0
        %3376 = vmatprep.subr.mxu0 0.0
        %3377 = vmatpush1.msra.mxu0 0.0
        %3378 = vmatprep.subr.mxu0 0.0
        %3379 = vmatpush1.msra.mxu0 0.0
        %3380 = vmatprep.subr.mxu0 0.0
        %3381 = vmatpush1.msra.mxu0 0.0
        %3382 = vmatprep.subr.mxu0 0.0
        %3383 = vmatpush1.msra.mxu0 0.0
        %3384 = vmatprep.subr.mxu0 0.0
        %3385 = vmatpush1.msra.mxu0 0.0
        %3386 = vmatprep.subr.mxu0 0.0
        %3387 = vmatpush1.msra.mxu0 0.0
        %3388 = vmatprep.subr.mxu0 0.0
        %3389 = vmatpush1.msra.mxu0 0.0
        %3390 = vmatprep.subr.mxu0 0.0
        %3391 = vmatpush1.msra.mxu0 0.0
        %3392 = vmatprep.subr.mxu0 0.0
        %3393 = vmatpush1.msra.mxu0 0.0
        %3394 = vmatprep.subr.mxu0 0.0
        %3395 = vmatpush1.msra.mxu0 0.0
        %3396 = vmatprep.mubr.f32.mxu0 0.0
        %3397 = vmatmul.mubr.f32.gmra.mrb[0].mxu0 %v3283
        %v3398 = vpop.f32.mrb[0].mxu0
        %v3399 = vadd.f32 0.0, %v3398
        %v3400 = vpop.f32.mrb[0].mxu0
        %3401 = vmatprep.mubr.f32.mxu0 0.0
        %3402 = vmatmul.mubr.f32.gmra.mrb[0].mxu0 %v3284
        %v3403 = vpop.f32.mrb[0].mxu0
        %v3404 = vadd.f32 0.0, %v3403
        %v3405 = vpop.f32.mrb[0].mxu0
        %3406 = vmatprep.mubr.f32.mxu0 0.0
        %3407 = vmatmul.mubr.f32.gmra.mrb[0].mxu0 %v3285
        %v3408 = vpop.f32.mrb[0].mxu0
        %v3409 = vadd.f32 0.0, %v3408
        %v3410 = vpop.f32.mrb[0].mxu0
        %3411 = vmatprep.mubr.f32.mxu0 0.0
        %3412 = vmatmul.mubr.f32.gmra.mrb[0].mxu0 %v3286
        %v3413 = vpop.f32.mrb[0].mxu0
        %v3414 = vadd.f32 0.0, %v3413
        %v3415 = vpop.f32.mrb[0].mxu0
        %3416 = vmatprep.mubr.f32.mxu0 0.0
        %3417 = vmatmul.mubr.f32.gmra.mrb[0].mxu0 %v3287
        %v3418 = vpop.f32.mrb[0].mxu0
        %v3419 = vadd.f32 0.0, %v3418
        %v3420 = vpop.f32.mrb[0].mxu0
        %3421 = vmatprep.mubr.f32.mxu0 0.0
        %3422 = vmatmul.mubr.f32.gmra.mrb[0].mxu0 %v3288
        %v3423 = vpop.f32.mrb[0].mxu0
        %v3424 = vadd.f32 0.0, %v3423
        %v3425 = vpop.f32.mrb[0].mxu0
        %3426 = vmatprep.mubr.f32.mxu0 0.0
        %3427 = vmatmul.mubr.f32.gmra.mrb[0].mxu0 %v3289
        %v3428 = vpop.f32.mrb[0].mxu0
        %v3429 = vadd.f32 0.0, %v3428
        %v3430 = vpop.f32.mrb[0].mxu0
        %3431 = vmatprep.mubr.f32.mxu0 0.0
        %3432 = vmatmul.mubr.f32.gmra.mrb[0].mxu0 %v3290
        %v3433 = vpop.f32.mrb[0].mxu0
        %v3434 = vadd.f32 0.0, %v3433
        %v3435 = vpop.f32.mrb[0].mxu0
        %3436 = vmatprep.mubr.f32.mxu0 0.0
        %3437 = vmatmul.mubr.f32.gmra.mrb[0].mxu0 %v3291
        %v3438 = vpop.f32.mrb[0].mxu0
        %v3439 = vadd.f32 0.0, %v3438
        %v3440 = vpop.f32.mrb[0].mxu0
        %3441 = vmatprep.mubr.f32.mxu0 0.0
        %3442 = vmatmul.mubr.f32.gmra.mrb[0].mxu0 %v3292
        %v3443 = vpop.f32.mrb[0].mxu0
        %v3444 = vadd.f32 0.0, %v3443
        %v3445 = vpop.f32.mrb[0].mxu0
        %3446 = vmatprep.mubr.f32.mxu0 0.0
        %3447 = vmatmul.mubr.f32.gmra.mrb[0].mxu0 %v3293
        %v3448 = vpop.f32.mrb[0].mxu0
        %v3449 = vadd.f32 0.0, %v3448
        %v3450 = vpop.f32.mrb[0].mxu0
        %3451 = vmatprep.mubr.f32.mxu0 0.0
        %3452 = vmatmul.mubr.f32.gmra.mrb[0].mxu0 %v3294
        %v3453 = vpop.f32.mrb[0].mxu0
        %v3454 = vadd.f32 0.0, %v3453
        %v3455 = vpop.f32.mrb[0].mxu0
        %3456 = vmatprep.mubr.f32.mxu0 0.0
        %3457 = vmatmul.mubr.f32.gmra.mrb[0].mxu0 %v3295
        %v3458 = vpop.f32.mrb[0].mxu0
        %v3459 = vadd.f32 0.0, %v3458
        %v3460 = vpop.f32.mrb[0].mxu0
        %3461 = vmatprep.mubr.f32.mxu0 0.0
        %3462 = vmatmul.mubr.f32.gmra.mrb[0].mxu0 %v3296
        %v3463 = vpop.f32.mrb[0].mxu0
        %v3464 = vadd.f32 0.0, %v3463
        %v3465 = vpop.f32.mrb[0].mxu0
        %3466 = vmatprep.mubr.f32.mxu0 0.0
        %3467 = vmatmul.mubr.f32.gmra.mrb[0].mxu0 %v3297
        %v3468 = vpop.f32.mrb[0].mxu0
        %v3469 = vadd.f32 0.0, %v3468
        %v3470 = vpop.f32.mrb[0].mxu0
        %3471 = vmatprep.mubr.f32.mxu0 0.0
        %3472 = vmatmul.mubr.f32.gmra.mrb[0].mxu0 %v3298
        %v3473 = vpop.f32.mrb[0].mxu0
        %v3474 = vadd.f32 0.0, %v3473
        %v3475 = vpop.f32.mrb[0].mxu0
        %3476 = vmatprep.mubr.f32.mxu0 0.0
        %3477 = vmatmul.mubr.f32.gmra.mrb[0].mxu0 %v3299
        %v3478 = vpop.f32.mrb[0].mxu0
        %v3479 = vadd.f32 0.0, %v3478
        %v3480 = vpop.f32.mrb[0].mxu0
        %3481 = vmatprep.mubr.f32.mxu0 0.0
        %3482 = vmatmul.mubr.f32.gmra.mrb[0].mxu0 %v3300
        %v3483 = vpop.f32.mrb[0].mxu0
        %v3484 = vadd.f32 0.0, %v3483
        %v3485 = vpop.f32.mrb[0].mxu0
        %3486 = vmatprep.mubr.f32.mxu0 0.0
        %3487 = vmatmul.mubr.f32.gmra.mrb[0].mxu0 %v3301
        %v3488 = vpop.f32.mrb[0].mxu0
        %v3489 = vadd.f32 0.0, %v3488
        %v3490 = vpop.f32.mrb[0].mxu0
        %3491 = vmatprep.mubr.f32.mxu0 0.0
        %3492 = vmatmul.mubr.f32.gmra.mrb[0].mxu0 %v3302
        %v3493 = vpop.f32.mrb[0].mxu0
        %v3494 = vadd.f32 0.0, %v3493
        %v3495 = vpop.f32.mrb[0].mxu0
        %3496 = vmatprep.mubr.f32.mxu0 0.0
        %3497 = vmatmul.mubr.f32.gmra.mrb[0].mxu0 %v3303
        %v3498 = vpop.f32.mrb[0].mxu0
        %v3499 = vadd.f32 0.0, %v3498
        %v3500 = vpop.f32.mrb[0].mxu0
        %3501 = vmatprep.mubr.f32.mxu0 0.0
        %3502 = vmatmul.mubr.f32.gmra.mrb[0].mxu0 %v3304
        %v3503 = vpop.f32.mrb[0].mxu0
        %v3504 = vadd.f32 0.0, %v3503
        %v3505 = vpop.f32.mrb[0].mxu0
        %3506 = vmatprep.mubr.f32.mxu0 0.0
        %3507 = vmatmul.mubr.f32.gmra.mrb[0].mxu0 %v3305
        %v3508 = vpop.f32.mrb[0].mxu0
        %v3509 = vadd.f32 0.0, %v3508
        %v3510 = vpop.f32.mrb[0].mxu0
        %3511 = vmatprep.mubr.f32.mxu0 0.0
        %3512 = vmatmul.mubr.f32.gmra.mrb[0].mxu0 %v3306
        %v3513 = vpop.f32.mrb[0].mxu0
        %v3514 = vadd.f32 0.0, %v3513
        %v3515 = vpop.f32.mrb[0].mxu0
        %3516 = vmatprep.mubr.f32.mxu0 0.0
        %3517 = vmatmul.mubr.f32.gmra.mrb[0].mxu0 %v3307
        %v3518 = vpop.f32.mrb[0].mxu0
        %v3519 = vadd.f32 0.0, %v3518
        %v3520 = vpop.f32.mrb[0].mxu0
        %3521 = vmatprep.mubr.f32.mxu0 0.0
        %3522 = vmatmul.mubr.f32.gmra.mrb[0].mxu0 %v3308
        %v3523 = vpop.f32.mrb[0].mxu0
        %v3524 = vadd.f32 0.0, %v3523
        %v3525 = vpop.f32.mrb[0].mxu0
        %3526 = vmatprep.mubr.f32.mxu0 0.0
        %3527 = vmatmul.mubr.f32.gmra.mrb[0].mxu0 %v3309
        %v3528 = vpop.f32.mrb[0].mxu0
        %v3529 = vadd.f32 0.0, %v3528
        %v3530 = vpop.f32.mrb[0].mxu0
        %3531 = vmatprep.mubr.f32.mxu0 0.0
        %3532 = vmatmul.mubr.f32.gmra.mrb[0].mxu0 %v3310
        %v3533 = vpop.f32.mrb[0].mxu0
        %v3534 = vadd.f32 0.0, %v3533
        %v3535 = vpop.f32.mrb[0].mxu0
        %3536 = vmatprep.mubr.f32.mxu0 0.0
        %3537 = vmatmul.mubr.f32.gmra.mrb[0].mxu0 %v3311
        %v3538 = vpop.f32.mrb[0].mxu0
        %v3539 = vadd.f32 0.0, %v3538
        %v3540 = vpop.f32.mrb[0].mxu0
        %3541 = vmatprep.mubr.f32.mxu0 0.0
        %3542 = vmatmul.mubr.f32.gmra.mrb[0].mxu0 %v3312
        %v3543 = vpop.f32.mrb[0].mxu0
        %v3544 = vadd.f32 0.0, %v3543
        %v3545 = vpop.f32.mrb[0].mxu0
        %3546 = vmatprep.mubr.f32.mxu0 0.0
        %3547 = vmatmul.mubr.f32.gmra.mrb[0].mxu0 %v3313
        %v3548 = vpop.f32.mrb[0].mxu0
        %v3549 = vadd.f32 0.0, %v3548
        %v3550 = vpop.f32.mrb[0].mxu0
        %3551 = vmatprep.mubr.f32.mxu0 0.0
        %3552 = vmatmul.mubr.f32.gmra.mrb[0].mxu0 %v3314
        %v3553 = vpop.f32.mrb[0].mxu0
        %v3554 = vadd.f32 0.0, %v3553
        %v3555 = vpop.f32.mrb[0].mxu0
        %3556 = vdwg.mxu0
        %v3557 = vld [vmem:[#allocation3] sm:$0xff]
        %v3558 = vld [vmem:[#allocation3 + $0x8] sm:$0xff]
        %v3559 = vld [vmem:[#allocation3 + $0x10] sm:$0xff]
        %v3560 = vld [vmem:[#allocation3 + $0x18] sm:$0xff]
        %v3561 = vld [vmem:[#allocation3 + $0x20] sm:$0xff]
        %v3562 = vld [vmem:[#allocation3 + $0x28] sm:$0xff]
        %v3563 = vld [vmem:[#allocation3 + $0x30] sm:$0xff]
        %v3564 = vld [vmem:[#allocation3 + $0x38] sm:$0xff]
        %v3565 = vld [vmem:[#allocation3 + $0x40] sm:$0xff]
        %v3566 = vld [vmem:[#allocation3 + $0x48] sm:$0xff]
        %v3567 = vld [vmem:[#allocation3 + $0x50] sm:$0xff]
        %v3568 = vld [vmem:[#allocation3 + $0x58] sm:$0xff]
        %v3569 = vld [vmem:[#allocation3 + $0x60] sm:$0xff]
        %v3570 = vld [vmem:[#allocation3 + $0x68] sm:$0xff]
        %v3571 = vld [vmem:[#allocation3 + $0x70] sm:$0xff]
        %v3572 = vld [vmem:[#allocation3 + $0x78] sm:$0xff]
        %v3573 = vld [vmem:[#allocation3 + $0x80] sm:$0xff]
        %v3574 = vld [vmem:[#allocation3 + $0x88] sm:$0xff]
        %v3575 = vld [vmem:[#allocation3 + $0x90] sm:$0xff]
        %v3576 = vld [vmem:[#allocation3 + $0x98] sm:$0xff]
        %v3577 = vld [vmem:[#allocation3 + $0xa0] sm:$0xff]
        %v3578 = vld [vmem:[#allocation3 + $0xa8] sm:$0xff]
        %v3579 = vld [vmem:[#allocation3 + $0xb0] sm:$0xff]
        %v3580 = vld [vmem:[#allocation3 + $0xb8] sm:$0xff]
        %v3581 = vld [vmem:[#allocation3 + $0xc0] sm:$0xff]
        %v3582 = vld [vmem:[#allocation3 + $0xc8] sm:$0xff]
        %v3583 = vld [vmem:[#allocation3 + $0xd0] sm:$0xff]
        %v3584 = vld [vmem:[#allocation3 + $0xd8] sm:$0xff]
        %v3585 = vld [vmem:[#allocation3 + $0xe0] sm:$0xff]
        %v3586 = vld [vmem:[#allocation3 + $0xe8] sm:$0xff]
        %v3587 = vld [vmem:[#allocation3 + $0xf0] sm:$0xff]
        %v3588 = vld [vmem:[#allocation3 + $0xf8] sm:$0xff]
        %v3589 = vadd.f32 %v3557, %v3399
        %v3590 = vadd.f32 %v3558, %v3404
        %v3591 = vadd.f32 %v3559, %v3409
        %v3592 = vadd.f32 %v3560, %v3414
        %v3593 = vadd.f32 %v3561, %v3419
        %v3594 = vadd.f32 %v3562, %v3424
        %v3595 = vadd.f32 %v3563, %v3429
        %v3596 = vadd.f32 %v3564, %v3434
        %v3597 = vadd.f32 %v3565, %v3439
        %v3598 = vadd.f32 %v3566, %v3444
        %v3599 = vadd.f32 %v3567, %v3449
        %v3600 = vadd.f32 %v3568, %v3454
        %v3601 = vadd.f32 %v3569, %v3459
        %v3602 = vadd.f32 %v3570, %v3464
        %v3603 = vadd.f32 %v3571, %v3469
        %v3604 = vadd.f32 %v3572, %v3474
        %v3605 = vadd.f32 %v3573, %v3479
        %v3606 = vadd.f32 %v3574, %v3484
        %v3607 = vadd.f32 %v3575, %v3489
        %v3608 = vadd.f32 %v3576, %v3494
        %v3609 = vadd.f32 %v3577, %v3499
        %v3610 = vadd.f32 %v3578, %v3504
        %v3611 = vadd.f32 %v3579, %v3509
        %v3612 = vadd.f32 %v3580, %v3514
        %v3613 = vadd.f32 %v3581, %v3519
        %v3614 = vadd.f32 %v3582, %v3524
        %v3615 = vadd.f32 %v3583, %v3529
        %v3616 = vadd.f32 %v3584, %v3534
        %v3617 = vadd.f32 %v3585, %v3539
        %v3618 = vadd.f32 %v3586, %v3544
        %v3619 = vadd.f32 %v3587, %v3549
        %v3620 = vadd.f32 %v3588, %v3554
        %3621 = vst [vmem:[#allocation3] sm:$0xff] %v3589
        %3622 = vst [vmem:[#allocation3 + $0x8] sm:$0xff] %v3590
        %3623 = vst [vmem:[#allocation3 + $0x10] sm:$0xff] %v3591
        %3624 = vst [vmem:[#allocation3 + $0x18] sm:$0xff] %v3592
        %3625 = vst [vmem:[#allocation3 + $0x20] sm:$0xff] %v3593
        %3626 = vst [vmem:[#allocation3 + $0x28] sm:$0xff] %v3594
        %3627 = vst [vmem:[#allocation3 + $0x30] sm:$0xff] %v3595
        %3628 = vst [vmem:[#allocation3 + $0x38] sm:$0xff] %v3596
        %3629 = vst [vmem:[#allocation3 + $0x40] sm:$0xff] %v3597
        %3630 = vst [vmem:[#allocation3 + $0x48] sm:$0xff] %v3598
        %3631 = vst [vmem:[#allocation3 + $0x50] sm:$0xff] %v3599
        %3632 = vst [vmem:[#allocation3 + $0x58] sm:$0xff] %v3600
        %3633 = vst [vmem:[#allocation3 + $0x60] sm:$0xff] %v3601
        %3634 = vst [vmem:[#allocation3 + $0x68] sm:$0xff] %v3602
        %3635 = vst [vmem:[#allocation3 + $0x70] sm:$0xff] %v3603
        %3636 = vst [vmem:[#allocation3 + $0x78] sm:$0xff] %v3604
        %3637 = vst [vmem:[#allocation3 + $0x80] sm:$0xff] %v3605
        %3638 = vst [vmem:[#allocation3 + $0x88] sm:$0xff] %v3606
        %3639 = vst [vmem:[#allocation3 + $0x90] sm:$0xff] %v3607
        %3640 = vst [vmem:[#allocation3 + $0x98] sm:$0xff] %v3608
        %3641 = vst [vmem:[#allocation3 + $0xa0] sm:$0xff] %v3609
        %3642 = vst [vmem:[#allocation3 + $0xa8] sm:$0xff] %v3610
        %3643 = vst [vmem:[#allocation3 + $0xb0] sm:$0xff] %v3611
        %3644 = vst [vmem:[#allocation3 + $0xb8] sm:$0xff] %v3612
        %3645 = vst [vmem:[#allocation3 + $0xc0] sm:$0xff] %v3613
        %3646 = vst [vmem:[#allocation3 + $0xc8] sm:$0xff] %v3614
        %3647 = vst [vmem:[#allocation3 + $0xd0] sm:$0xff] %v3615
        %3648 = vst [vmem:[#allocation3 + $0xd8] sm:$0xff] %v3616
        %3649 = vst [vmem:[#allocation3 + $0xe0] sm:$0xff] %v3617
        %3650 = vst [vmem:[#allocation3 + $0xe8] sm:$0xff] %v3618
        %3651 = vst [vmem:[#allocation3 + $0xf0] sm:$0xff] %v3619
        %3652 = vst [vmem:[#allocation3 + $0xf8] sm:$0xff] %v3620
        %v3653 = vld [vmem:[%s2912 + $0x2] sm:$0xff]
        %v3654 = vld [vmem:[%s2912 + $0xa] sm:$0xff]
        %v3655 = vld [vmem:[%s2912 + $0x1a] sm:$0xff]
        %v3656 = vld [vmem:[%s2912 + $0x22] sm:$0xff]
        %v3657 = vld [vmem:[%s2912 + $0x32] sm:$0xff]
        %v3658 = vld [vmem:[%s2912 + $0x3a] sm:$0xff]
        %v3659 = vld [vmem:[%s2912 + $0x4a] sm:$0xff]
        %v3660 = vld [vmem:[%s2912 + $0x52] sm:$0xff]
        %v3661 = vld [vmem:[%s2912 + $0x62] sm:$0xff]
        %v3662 = vld [vmem:[%s2912 + $0x6a] sm:$0xff]
        %v3663 = vld [vmem:[%s2912 + $0x7a] sm:$0xff]
        %v3664 = vld [vmem:[%s2912 + $0x82] sm:$0xff]
        %v3665 = vld [vmem:[%s2912 + $0x92] sm:$0xff]
        %v3666 = vld [vmem:[%s2912 + $0x9a] sm:$0xff]
        %v3667 = vld [vmem:[%s2912 + $0xaa] sm:$0xff]
        %v3668 = vld [vmem:[%s2912 + $0xb2] sm:$0xff]
        %v3669 = vld [vmem:[%s2912 + $0xc2] sm:$0xff]
        %v3670 = vld [vmem:[%s2912 + $0xca] sm:$0xff]
        %v3671 = vld [vmem:[%s2912 + $0xda] sm:$0xff]
        %v3672 = vld [vmem:[%s2912 + $0xe2] sm:$0xff]
        %v3673 = vld [vmem:[%s2912 + $0xf2] sm:$0xff]
        %v3674 = vld [vmem:[%s2912 + $0xfa] sm:$0xff]
        %v3675 = vld [vmem:[%s2912 + $0x10a] sm:$0xff]
        %v3676 = vld [vmem:[%s2912 + $0x112] sm:$0xff]
        %v3677 = vld [vmem:[%s2912 + $0x122] sm:$0xff]
        %v3678 = vld [vmem:[%s2912 + $0x12a] sm:$0xff]
        %v3679 = vld [vmem:[%s2912 + $0x13a] sm:$0xff]
        %v3680 = vld [vmem:[%s2912 + $0x142] sm:$0xff]
        %v3681 = vld [vmem:[%s2912 + $0x152] sm:$0xff]
        %v3682 = vld [vmem:[%s2912 + $0x15a] sm:$0xff]
        %v3683 = vld [vmem:[%s2912 + $0x16a] sm:$0xff]
        %v3684 = vld [vmem:[%s2912 + $0x172] sm:$0xff]
        %s3685 = scalar_lea.vmem [#allocation15], 1024
        %v3686 = vld [vmem:[%s3685] sm:$0xff]
        %v3687 = vld [vmem:[%s3685 + $0x8] sm:$0xff]
        %v3688 = vld [vmem:[%s3685 + $0x10] sm:$0xff]
        %v3689 = vld [vmem:[%s3685 + $0x18] sm:$0xff]
        %v3690 = vld [vmem:[%s3685 + $0x20] sm:$0xff]
        %v3691 = vld [vmem:[%s3685 + $0x28] sm:$0xff]
        %v3692 = vld [vmem:[%s3685 + $0x30] sm:$0xff]
        %v3693 = vld [vmem:[%s3685 + $0x38] sm:$0xff]
        %v3694 = vld [vmem:[%s3685 + $0x40] sm:$0xff]
        %v3695 = vld [vmem:[%s3685 + $0x48] sm:$0xff]
        %v3696 = vld [vmem:[%s3685 + $0x50] sm:$0xff]
        %v3697 = vld [vmem:[%s3685 + $0x58] sm:$0xff]
        %v3698 = vld [vmem:[%s3685 + $0x60] sm:$0xff]
        %v3699 = vld [vmem:[%s3685 + $0x68] sm:$0xff]
        %v3700 = vld [vmem:[%s3685 + $0x70] sm:$0xff]
        %v3701 = vld [vmem:[%s3685 + $0x78] sm:$0xff]
        %3702 = vmatprep.subr.mxu0 0.0
        %3703 = vmatpush1.msra.mxu0 %v3686
        %3704 = vmatprep.subr.mxu0 0.0
        %3705 = vmatpush1.msra.mxu0 %v3687
        %3706 = vmatprep.subr.mxu0 0.0
        %3707 = vmatpush1.msra.mxu0 %v3688
        %3708 = vmatprep.subr.mxu0 0.0
        %3709 = vmatpush1.msra.mxu0 %v3689
        %3710 = vmatprep.subr.mxu0 0.0
        %3711 = vmatpush1.msra.mxu0 %v3690
        %3712 = vmatprep.subr.mxu0 0.0
        %3713 = vmatpush1.msra.mxu0 %v3691
        %3714 = vmatprep.subr.mxu0 0.0
        %3715 = vmatpush1.msra.mxu0 %v3692
        %3716 = vmatprep.subr.mxu0 0.0
        %3717 = vmatpush1.msra.mxu0 %v3693
        %3718 = vmatprep.subr.mxu0 0.0
        %3719 = vmatpush1.msra.mxu0 %v3694
        %3720 = vmatprep.subr.mxu0 0.0
        %3721 = vmatpush1.msra.mxu0 %v3695
        %3722 = vmatprep.subr.mxu0 0.0
        %3723 = vmatpush1.msra.mxu0 %v3696
        %3724 = vmatprep.subr.mxu0 0.0
        %3725 = vmatpush1.msra.mxu0 %v3697
        %3726 = vmatprep.subr.mxu0 0.0
        %3727 = vmatpush1.msra.mxu0 %v3698
        %3728 = vmatprep.subr.mxu0 0.0
        %3729 = vmatpush1.msra.mxu0 %v3699
        %3730 = vmatprep.subr.mxu0 0.0
        %3731 = vmatpush1.msra.mxu0 %v3700
        %3732 = vmatprep.subr.mxu0 0.0
        %3733 = vmatpush1.msra.mxu0 %v3701
        %3734 = vmatprep.subr.mxu0 0.0
        %3735 = vmatpush1.msra.mxu0 0.0
        %3736 = vmatprep.subr.mxu0 0.0
        %3737 = vmatpush1.msra.mxu0 0.0
        %3738 = vmatprep.subr.mxu0 0.0
        %3739 = vmatpush1.msra.mxu0 0.0
        %3740 = vmatprep.subr.mxu0 0.0
        %3741 = vmatpush1.msra.mxu0 0.0
        %3742 = vmatprep.subr.mxu0 0.0
        %3743 = vmatpush1.msra.mxu0 0.0
        %3744 = vmatprep.subr.mxu0 0.0
        %3745 = vmatpush1.msra.mxu0 0.0
        %3746 = vmatprep.subr.mxu0 0.0
        %3747 = vmatpush1.msra.mxu0 0.0
        %3748 = vmatprep.subr.mxu0 0.0
        %3749 = vmatpush1.msra.mxu0 0.0
        %3750 = vmatprep.subr.mxu0 0.0
        %3751 = vmatpush1.msra.mxu0 0.0
        %3752 = vmatprep.subr.mxu0 0.0
        %3753 = vmatpush1.msra.mxu0 0.0
        %3754 = vmatprep.subr.mxu0 0.0
        %3755 = vmatpush1.msra.mxu0 0.0
        %3756 = vmatprep.subr.mxu0 0.0
        %3757 = vmatpush1.msra.mxu0 0.0
        %3758 = vmatprep.subr.mxu0 0.0
        %3759 = vmatpush1.msra.mxu0 0.0
        %3760 = vmatprep.subr.mxu0 0.0
        %3761 = vmatpush1.msra.mxu0 0.0
        %3762 = vmatprep.subr.mxu0 0.0
        %3763 = vmatpush1.msra.mxu0 0.0
        %3764 = vmatprep.subr.mxu0 0.0
        %3765 = vmatpush1.msra.mxu0 0.0
        %3766 = vmatprep.mubr.f32.mxu0 0.0
        %3767 = vmatmul.mubr.f32.gmra.mrb[0].mxu0 %v3653
        %v3768 = vpop.f32.mrb[0].mxu0
        %v3769 = vadd.f32 0.0, %v3768
        %v3770 = vpop.f32.mrb[0].mxu0
        %3771 = vmatprep.mubr.f32.mxu0 0.0
        %3772 = vmatmul.mubr.f32.gmra.mrb[0].mxu0 %v3654
        %v3773 = vpop.f32.mrb[0].mxu0
        %v3774 = vadd.f32 0.0, %v3773
        %v3775 = vpop.f32.mrb[0].mxu0
        %3776 = vmatprep.mubr.f32.mxu0 0.0
        %3777 = vmatmul.mubr.f32.gmra.mrb[0].mxu0 %v3655
        %v3778 = vpop.f32.mrb[0].mxu0
        %v3779 = vadd.f32 0.0, %v3778
        %v3780 = vpop.f32.mrb[0].mxu0
        %3781 = vmatprep.mubr.f32.mxu0 0.0
        %3782 = vmatmul.mubr.f32.gmra.mrb[0].mxu0 %v3656
        %v3783 = vpop.f32.mrb[0].mxu0
        %v3784 = vadd.f32 0.0, %v3783
        %v3785 = vpop.f32.mrb[0].mxu0
        %3786 = vmatprep.mubr.f32.mxu0 0.0
        %3787 = vmatmul.mubr.f32.gmra.mrb[0].mxu0 %v3657
        %v3788 = vpop.f32.mrb[0].mxu0
        %v3789 = vadd.f32 0.0, %v3788
        %v3790 = vpop.f32.mrb[0].mxu0
        %3791 = vmatprep.mubr.f32.mxu0 0.0
        %3792 = vmatmul.mubr.f32.gmra.mrb[0].mxu0 %v3658
        %v3793 = vpop.f32.mrb[0].mxu0
        %v3794 = vadd.f32 0.0, %v3793
        %v3795 = vpop.f32.mrb[0].mxu0
        %3796 = vmatprep.mubr.f32.mxu0 0.0
        %3797 = vmatmul.mubr.f32.gmra.mrb[0].mxu0 %v3659
        %v3798 = vpop.f32.mrb[0].mxu0
        %v3799 = vadd.f32 0.0, %v3798
        %v3800 = vpop.f32.mrb[0].mxu0
        %3801 = vmatprep.mubr.f32.mxu0 0.0
        %3802 = vmatmul.mubr.f32.gmra.mrb[0].mxu0 %v3660
        %v3803 = vpop.f32.mrb[0].mxu0
        %v3804 = vadd.f32 0.0, %v3803
        %v3805 = vpop.f32.mrb[0].mxu0
        %3806 = vmatprep.mubr.f32.mxu0 0.0
        %3807 = vmatmul.mubr.f32.gmra.mrb[0].mxu0 %v3661
        %v3808 = vpop.f32.mrb[0].mxu0
        %v3809 = vadd.f32 0.0, %v3808
        %v3810 = vpop.f32.mrb[0].mxu0
        %3811 = vmatprep.mubr.f32.mxu0 0.0
        %3812 = vmatmul.mubr.f32.gmra.mrb[0].mxu0 %v3662
        %v3813 = vpop.f32.mrb[0].mxu0
        %v3814 = vadd.f32 0.0, %v3813
        %v3815 = vpop.f32.mrb[0].mxu0
        %3816 = vmatprep.mubr.f32.mxu0 0.0
        %3817 = vmatmul.mubr.f32.gmra.mrb[0].mxu0 %v3663
        %v3818 = vpop.f32.mrb[0].mxu0
        %v3819 = vadd.f32 0.0, %v3818
        %v3820 = vpop.f32.mrb[0].mxu0
        %3821 = vmatprep.mubr.f32.mxu0 0.0
        %3822 = vmatmul.mubr.f32.gmra.mrb[0].mxu0 %v3664
        %v3823 = vpop.f32.mrb[0].mxu0
        %v3824 = vadd.f32 0.0, %v3823
        %v3825 = vpop.f32.mrb[0].mxu0
        %3826 = vmatprep.mubr.f32.mxu0 0.0
        %3827 = vmatmul.mubr.f32.gmra.mrb[0].mxu0 %v3665
        %v3828 = vpop.f32.mrb[0].mxu0
        %v3829 = vadd.f32 0.0, %v3828
        %v3830 = vpop.f32.mrb[0].mxu0
        %3831 = vmatprep.mubr.f32.mxu0 0.0
        %3832 = vmatmul.mubr.f32.gmra.mrb[0].mxu0 %v3666
        %v3833 = vpop.f32.mrb[0].mxu0
        %v3834 = vadd.f32 0.0, %v3833
        %v3835 = vpop.f32.mrb[0].mxu0
        %3836 = vmatprep.mubr.f32.mxu0 0.0
        %3837 = vmatmul.mubr.f32.gmra.mrb[0].mxu0 %v3667
        %v3838 = vpop.f32.mrb[0].mxu0
        %v3839 = vadd.f32 0.0, %v3838
        %v3840 = vpop.f32.mrb[0].mxu0
        %3841 = vmatprep.mubr.f32.mxu0 0.0
        %3842 = vmatmul.mubr.f32.gmra.mrb[0].mxu0 %v3668
        %v3843 = vpop.f32.mrb[0].mxu0
        %v3844 = vadd.f32 0.0, %v3843
        %v3845 = vpop.f32.mrb[0].mxu0
        %3846 = vmatprep.mubr.f32.mxu0 0.0
        %3847 = vmatmul.mubr.f32.gmra.mrb[0].mxu0 %v3669
        %v3848 = vpop.f32.mrb[0].mxu0
        %v3849 = vadd.f32 0.0, %v3848
        %v3850 = vpop.f32.mrb[0].mxu0
        %3851 = vmatprep.mubr.f32.mxu0 0.0
        %3852 = vmatmul.mubr.f32.gmra.mrb[0].mxu0 %v3670
        %v3853 = vpop.f32.mrb[0].mxu0
        %v3854 = vadd.f32 0.0, %v3853
        %v3855 = vpop.f32.mrb[0].mxu0
        %3856 = vmatprep.mubr.f32.mxu0 0.0
        %3857 = vmatmul.mubr.f32.gmra.mrb[0].mxu0 %v3671
        %v3858 = vpop.f32.mrb[0].mxu0
        %v3859 = vadd.f32 0.0, %v3858
        %v3860 = vpop.f32.mrb[0].mxu0
        %3861 = vmatprep.mubr.f32.mxu0 0.0
        %3862 = vmatmul.mubr.f32.gmra.mrb[0].mxu0 %v3672
        %v3863 = vpop.f32.mrb[0].mxu0
        %v3864 = vadd.f32 0.0, %v3863
        %v3865 = vpop.f32.mrb[0].mxu0
        %3866 = vmatprep.mubr.f32.mxu0 0.0
        %3867 = vmatmul.mubr.f32.gmra.mrb[0].mxu0 %v3673
        %v3868 = vpop.f32.mrb[0].mxu0
        %v3869 = vadd.f32 0.0, %v3868
        %v3870 = vpop.f32.mrb[0].mxu0
        %3871 = vmatprep.mubr.f32.mxu0 0.0
        %3872 = vmatmul.mubr.f32.gmra.mrb[0].mxu0 %v3674
        %v3873 = vpop.f32.mrb[0].mxu0
        %v3874 = vadd.f32 0.0, %v3873
        %v3875 = vpop.f32.mrb[0].mxu0
        %3876 = vmatprep.mubr.f32.mxu0 0.0
        %3877 = vmatmul.mubr.f32.gmra.mrb[0].mxu0 %v3675
        %v3878 = vpop.f32.mrb[0].mxu0
        %v3879 = vadd.f32 0.0, %v3878
        %v3880 = vpop.f32.mrb[0].mxu0
        %3881 = vmatprep.mubr.f32.mxu0 0.0
        %3882 = vmatmul.mubr.f32.gmra.mrb[0].mxu0 %v3676
        %v3883 = vpop.f32.mrb[0].mxu0
        %v3884 = vadd.f32 0.0, %v3883
        %v3885 = vpop.f32.mrb[0].mxu0
        %3886 = vmatprep.mubr.f32.mxu0 0.0
        %3887 = vmatmul.mubr.f32.gmra.mrb[0].mxu0 %v3677
        %v3888 = vpop.f32.mrb[0].mxu0
        %v3889 = vadd.f32 0.0, %v3888
        %v3890 = vpop.f32.mrb[0].mxu0
        %3891 = vmatprep.mubr.f32.mxu0 0.0
        %3892 = vmatmul.mubr.f32.gmra.mrb[0].mxu0 %v3678
        %v3893 = vpop.f32.mrb[0].mxu0
        %v3894 = vadd.f32 0.0, %v3893
        %v3895 = vpop.f32.mrb[0].mxu0
        %3896 = vmatprep.mubr.f32.mxu0 0.0
        %3897 = vmatmul.mubr.f32.gmra.mrb[0].mxu0 %v3679
        %v3898 = vpop.f32.mrb[0].mxu0
        %v3899 = vadd.f32 0.0, %v3898
        %v3900 = vpop.f32.mrb[0].mxu0
        %3901 = vmatprep.mubr.f32.mxu0 0.0
        %3902 = vmatmul.mubr.f32.gmra.mrb[0].mxu0 %v3680
        %v3903 = vpop.f32.mrb[0].mxu0
        %v3904 = vadd.f32 0.0, %v3903
        %v3905 = vpop.f32.mrb[0].mxu0
        %3906 = vmatprep.mubr.f32.mxu0 0.0
        %3907 = vmatmul.mubr.f32.gmra.mrb[0].mxu0 %v3681
        %v3908 = vpop.f32.mrb[0].mxu0
        %v3909 = vadd.f32 0.0, %v3908
        %v3910 = vpop.f32.mrb[0].mxu0
        %3911 = vmatprep.mubr.f32.mxu0 0.0
        %3912 = vmatmul.mubr.f32.gmra.mrb[0].mxu0 %v3682
        %v3913 = vpop.f32.mrb[0].mxu0
        %v3914 = vadd.f32 0.0, %v3913
        %v3915 = vpop.f32.mrb[0].mxu0
        %3916 = vmatprep.mubr.f32.mxu0 0.0
        %3917 = vmatmul.mubr.f32.gmra.mrb[0].mxu0 %v3683
        %v3918 = vpop.f32.mrb[0].mxu0
        %v3919 = vadd.f32 0.0, %v3918
        %v3920 = vpop.f32.mrb[0].mxu0
        %3921 = vmatprep.mubr.f32.mxu0 0.0
        %3922 = vmatmul.mubr.f32.gmra.mrb[0].mxu0 %v3684
        %v3923 = vpop.f32.mrb[0].mxu0
        %v3924 = vadd.f32 0.0, %v3923
        %v3925 = vpop.f32.mrb[0].mxu0
        %3926 = vdwg.mxu0
        %v3927 = vld [vmem:[#allocation3] sm:$0xff]
        %v3928 = vld [vmem:[#allocation3 + $0x8] sm:$0xff]
        %v3929 = vld [vmem:[#allocation3 + $0x10] sm:$0xff]
        %v3930 = vld [vmem:[#allocation3 + $0x18] sm:$0xff]
        %v3931 = vld [vmem:[#allocation3 + $0x20] sm:$0xff]
        %v3932 = vld [vmem:[#allocation3 + $0x28] sm:$0xff]
        %v3933 = vld [vmem:[#allocation3 + $0x30] sm:$0xff]
        %v3934 = vld [vmem:[#allocation3 + $0x38] sm:$0xff]
        %v3935 = vld [vmem:[#allocation3 + $0x40] sm:$0xff]
        %v3936 = vld [vmem:[#allocation3 + $0x48] sm:$0xff]
        %v3937 = vld [vmem:[#allocation3 + $0x50] sm:$0xff]
        %v3938 = vld [vmem:[#allocation3 + $0x58] sm:$0xff]
        %v3939 = vld [vmem:[#allocation3 + $0x60] sm:$0xff]
        %v3940 = vld [vmem:[#allocation3 + $0x68] sm:$0xff]
        %v3941 = vld [vmem:[#allocation3 + $0x70] sm:$0xff]
        %v3942 = vld [vmem:[#allocation3 + $0x78] sm:$0xff]
        %v3943 = vld [vmem:[#allocation3 + $0x80] sm:$0xff]
        %v3944 = vld [vmem:[#allocation3 + $0x88] sm:$0xff]
        %v3945 = vld [vmem:[#allocation3 + $0x90] sm:$0xff]
        %v3946 = vld [vmem:[#allocation3 + $0x98] sm:$0xff]
        %v3947 = vld [vmem:[#allocation3 + $0xa0] sm:$0xff]
        %v3948 = vld [vmem:[#allocation3 + $0xa8] sm:$0xff]
        %v3949 = vld [vmem:[#allocation3 + $0xb0] sm:$0xff]
        %v3950 = vld [vmem:[#allocation3 + $0xb8] sm:$0xff]
        %v3951 = vld [vmem:[#allocation3 + $0xc0] sm:$0xff]
        %v3952 = vld [vmem:[#allocation3 + $0xc8] sm:$0xff]
        %v3953 = vld [vmem:[#allocation3 + $0xd0] sm:$0xff]
        %v3954 = vld [vmem:[#allocation3 + $0xd8] sm:$0xff]
        %v3955 = vld [vmem:[#allocation3 + $0xe0] sm:$0xff]
        %v3956 = vld [vmem:[#allocation3 + $0xe8] sm:$0xff]
        %v3957 = vld [vmem:[#allocation3 + $0xf0] sm:$0xff]
        %v3958 = vld [vmem:[#allocation3 + $0xf8] sm:$0xff]
        %v3959 = vadd.f32 %v3927, %v3769
        %v3960 = vadd.f32 %v3928, %v3774
        %v3961 = vadd.f32 %v3929, %v3779
        %v3962 = vadd.f32 %v3930, %v3784
        %v3963 = vadd.f32 %v3931, %v3789
        %v3964 = vadd.f32 %v3932, %v3794
        %v3965 = vadd.f32 %v3933, %v3799
        %v3966 = vadd.f32 %v3934, %v3804
        %v3967 = vadd.f32 %v3935, %v3809
        %v3968 = vadd.f32 %v3936, %v3814
        %v3969 = vadd.f32 %v3937, %v3819
        %v3970 = vadd.f32 %v3938, %v3824
        %v3971 = vadd.f32 %v3939, %v3829
        %v3972 = vadd.f32 %v3940, %v3834
        %v3973 = vadd.f32 %v3941, %v3839
        %v3974 = vadd.f32 %v3942, %v3844
        %v3975 = vadd.f32 %v3943, %v3849
        %v3976 = vadd.f32 %v3944, %v3854
        %v3977 = vadd.f32 %v3945, %v3859
        %v3978 = vadd.f32 %v3946, %v3864
        %v3979 = vadd.f32 %v3947, %v3869
        %v3980 = vadd.f32 %v3948, %v3874
        %v3981 = vadd.f32 %v3949, %v3879
        %v3982 = vadd.f32 %v3950, %v3884
        %v3983 = vadd.f32 %v3951, %v3889
        %v3984 = vadd.f32 %v3952, %v3894
        %v3985 = vadd.f32 %v3953, %v3899
        %v3986 = vadd.f32 %v3954, %v3904
        %v3987 = vadd.f32 %v3955, %v3909
        %v3988 = vadd.f32 %v3956, %v3914
        %v3989 = vadd.f32 %v3957, %v3919
        %v3990 = vadd.f32 %v3958, %v3924
        %3991 = vst [vmem:[#allocation3] sm:$0xff] %v3959
        %3992 = vst [vmem:[#allocation3 + $0x8] sm:$0xff] %v3960
        %3993 = vst [vmem:[#allocation3 + $0x10] sm:$0xff] %v3961
        %3994 = vst [vmem:[#allocation3 + $0x18] sm:$0xff] %v3962
        %3995 = vst [vmem:[#allocation3 + $0x20] sm:$0xff] %v3963
        %3996 = vst [vmem:[#allocation3 + $0x28] sm:$0xff] %v3964
        %3997 = vst [vmem:[#allocation3 + $0x30] sm:$0xff] %v3965
        %3998 = vst [vmem:[#allocation3 + $0x38] sm:$0xff] %v3966
        %3999 = vst [vmem:[#allocation3 + $0x40] sm:$0xff] %v3967
        %4000 = vst [vmem:[#allocation3 + $0x48] sm:$0xff] %v3968
        %4001 = vst [vmem:[#allocation3 + $0x50] sm:$0xff] %v3969
        %4002 = vst [vmem:[#allocation3 + $0x58] sm:$0xff] %v3970
        %4003 = vst [vmem:[#allocation3 + $0x60] sm:$0xff] %v3971
        %4004 = vst [vmem:[#allocation3 + $0x68] sm:$0xff] %v3972
        %4005 = vst [vmem:[#allocation3 + $0x70] sm:$0xff] %v3973
        %4006 = vst [vmem:[#allocation3 + $0x78] sm:$0xff] %v3974
        %4007 = vst [vmem:[#allocation3 + $0x80] sm:$0xff] %v3975
        %4008 = vst [vmem:[#allocation3 + $0x88] sm:$0xff] %v3976
        %4009 = vst [vmem:[#allocation3 + $0x90] sm:$0xff] %v3977
        %4010 = vst [vmem:[#allocation3 + $0x98] sm:$0xff] %v3978
        %4011 = vst [vmem:[#allocation3 + $0xa0] sm:$0xff] %v3979
        %4012 = vst [vmem:[#allocation3 + $0xa8] sm:$0xff] %v3980
        %4013 = vst [vmem:[#allocation3 + $0xb0] sm:$0xff] %v3981
        %4014 = vst [vmem:[#allocation3 + $0xb8] sm:$0xff] %v3982
        %4015 = vst [vmem:[#allocation3 + $0xc0] sm:$0xff] %v3983
        %4016 = vst [vmem:[#allocation3 + $0xc8] sm:$0xff] %v3984
        %4017 = vst [vmem:[#allocation3 + $0xd0] sm:$0xff] %v3985
        %4018 = vst [vmem:[#allocation3 + $0xd8] sm:$0xff] %v3986
        %4019 = vst [vmem:[#allocation3 + $0xe0] sm:$0xff] %v3987
        %4020 = vst [vmem:[#allocation3 + $0xe8] sm:$0xff] %v3988
        %4021 = vst [vmem:[#allocation3 + $0xf0] sm:$0xff] %v3989
        %4022 = vst [vmem:[#allocation3 + $0xf8] sm:$0xff] %v3990
        %v4023 = vld [vmem:[#allocation3] sm:$0xff]
        %v4024 = vld [vmem:[#allocation3 + $0x8] sm:$0xff]
        %v4025 = vld [vmem:[#allocation3 + $0x10] sm:$0xff]
        %v4026 = vld [vmem:[#allocation3 + $0x18] sm:$0xff]
        %v4027 = vld [vmem:[#allocation3 + $0x20] sm:$0xff]
        %v4028 = vld [vmem:[#allocation3 + $0x28] sm:$0xff]
        %v4029 = vld [vmem:[#allocation3 + $0x30] sm:$0xff]
        %v4030 = vld [vmem:[#allocation3 + $0x38] sm:$0xff]
        %v4031 = vld [vmem:[#allocation3 + $0x40] sm:$0xff]
        %v4032 = vld [vmem:[#allocation3 + $0x48] sm:$0xff]
        %v4033 = vld [vmem:[#allocation3 + $0x50] sm:$0xff]
        %v4034 = vld [vmem:[#allocation3 + $0x58] sm:$0xff]
        %v4035 = vld [vmem:[#allocation3 + $0x60] sm:$0xff]
        %v4036 = vld [vmem:[#allocation3 + $0x68] sm:$0xff]
        %v4037 = vld [vmem:[#allocation3 + $0x70] sm:$0xff]
        %v4038 = vld [vmem:[#allocation3 + $0x78] sm:$0xff]
        %v4039 = vld [vmem:[#allocation3 + $0x80] sm:$0xff]
        %v4040 = vld [vmem:[#allocation3 + $0x88] sm:$0xff]
        %v4041 = vld [vmem:[#allocation3 + $0x90] sm:$0xff]
        %v4042 = vld [vmem:[#allocation3 + $0x98] sm:$0xff]
        %v4043 = vld [vmem:[#allocation3 + $0xa0] sm:$0xff]
        %v4044 = vld [vmem:[#allocation3 + $0xa8] sm:$0xff]
        %v4045 = vld [vmem:[#allocation3 + $0xb0] sm:$0xff]
        %v4046 = vld [vmem:[#allocation3 + $0xb8] sm:$0xff]
        %v4047 = vld [vmem:[#allocation3 + $0xc0] sm:$0xff]
        %v4048 = vld [vmem:[#allocation3 + $0xc8] sm:$0xff]
        %v4049 = vld [vmem:[#allocation3 + $0xd0] sm:$0xff]
        %v4050 = vld [vmem:[#allocation3 + $0xd8] sm:$0xff]
        %v4051 = vld [vmem:[#allocation3 + $0xe0] sm:$0xff]
        %v4052 = vld [vmem:[#allocation3 + $0xe8] sm:$0xff]
        %v4053 = vld [vmem:[#allocation3 + $0xf0] sm:$0xff]
        %v4054 = vld [vmem:[#allocation3 + $0xf8] sm:$0xff]
        %4055 = vst [vmem:[%s509] sm:$0xff] %v4023
        %4056 = vst [vmem:[%s509 + $0x8] sm:$0xff] %v4024
        %4057 = vst [vmem:[%s509 + $0x10] sm:$0xff] %v4025
        %4058 = vst [vmem:[%s509 + $0x18] sm:$0xff] %v4026
        %4059 = vst [vmem:[%s509 + $0x20] sm:$0xff] %v4027
        %4060 = vst [vmem:[%s509 + $0x28] sm:$0xff] %v4028
        %4061 = vst [vmem:[%s509 + $0x30] sm:$0xff] %v4029
        %4062 = vst [vmem:[%s509 + $0x38] sm:$0xff] %v4030
        %4063 = vst [vmem:[%s509 + $0x40] sm:$0xff] %v4031
        %4064 = vst [vmem:[%s509 + $0x48] sm:$0xff] %v4032
        %4065 = vst [vmem:[%s509 + $0x50] sm:$0xff] %v4033
        %4066 = vst [vmem:[%s509 + $0x58] sm:$0xff] %v4034
        %4067 = vst [vmem:[%s509 + $0x60] sm:$0xff] %v4035
        %4068 = vst [vmem:[%s509 + $0x68] sm:$0xff] %v4036
        %4069 = vst [vmem:[%s509 + $0x70] sm:$0xff] %v4037
        %4070 = vst [vmem:[%s509 + $0x78] sm:$0xff] %v4038
        %4071 = vst [vmem:[%s509 + $0x80] sm:$0xff] %v4039
        %4072 = vst [vmem:[%s509 + $0x88] sm:$0xff] %v4040
        %4073 = vst [vmem:[%s509 + $0x90] sm:$0xff] %v4041
        %4074 = vst [vmem:[%s509 + $0x98] sm:$0xff] %v4042
        %4075 = vst [vmem:[%s509 + $0xa0] sm:$0xff] %v4043
        %4076 = vst [vmem:[%s509 + $0xa8] sm:$0xff] %v4044
        %4077 = vst [vmem:[%s509 + $0xb0] sm:$0xff] %v4045
        %4078 = vst [vmem:[%s509 + $0xb8] sm:$0xff] %v4046
        %4079 = vst [vmem:[%s509 + $0xc0] sm:$0xff] %v4047
        %4080 = vst [vmem:[%s509 + $0xc8] sm:$0xff] %v4048
        %4081 = vst [vmem:[%s509 + $0xd0] sm:$0xff] %v4049
        %4082 = vst [vmem:[%s509 + $0xd8] sm:$0xff] %v4050
        %4083 = vst [vmem:[%s509 + $0xe0] sm:$0xff] %v4051
        %4084 = vst [vmem:[%s509 + $0xe8] sm:$0xff] %v4052
        %4085 = vst [vmem:[%s509 + $0xf0] sm:$0xff] %v4053
        %4086 = vst [vmem:[%s509 + $0xf8] sm:$0xff] %v4054
        %v4087 = vadd.f32 %v4023, %v4024
        %v4088 = vadd.f32 %v4087, %v4025
        %v4089 = vadd.f32 %v4088, %v4026
        %v4090 = vadd.f32 %v4089, %v4027
        %v4091 = vadd.f32 %v4090, %v4028
        %v4092 = vadd.f32 %v4091, %v4029
        %v4093 = vadd.f32 %v4092, %v4030
        %v4094 = vadd.f32 %v4093, %v4031
        %v4095 = vadd.f32 %v4094, %v4032
        %v4096 = vadd.f32 %v4095, %v4033
        %v4097 = vadd.f32 %v4096, %v4034
        %v4098 = vadd.f32 %v4097, %v4035
        %v4099 = vadd.f32 %v4098, %v4036
        %v4100 = vadd.f32 %v4099, %v4037
        %v4101 = vadd.f32 %v4100, %v4038
        %v4102 = vadd.f32 %v4101, %v4039
        %v4103 = vadd.f32 %v4102, %v4040
        %v4104 = vadd.f32 %v4103, %v4041
        %v4105 = vadd.f32 %v4104, %v4042
        %v4106 = vadd.f32 %v4105, %v4043
        %v4107 = vadd.f32 %v4106, %v4044
        %v4108 = vadd.f32 %v4107, %v4045
        %v4109 = vadd.f32 %v4108, %v4046
        %v4110 = vadd.f32 %v4109, %v4047
        %v4111 = vadd.f32 %v4110, %v4048
        %v4112 = vadd.f32 %v4111, %v4049
        %v4113 = vadd.f32 %v4112, %v4050
        %v4114 = vadd.f32 %v4113, %v4051
        %v4115 = vadd.f32 %v4114, %v4052
        %v4116 = vadd.f32 %v4115, %v4053
        %v4117 = vadd.f32 %v4116, %v4054
        %v4118 = vrot.slane %v4117, 4
        %v4119 = vadd.f32 %v4117, %v4118
        %v4120 = vrot.slane %v4119, 2
        %v4121 = vadd.f32 %v4119, %v4120
        %v4122 = vrot.slane %v4121, 1
        %v4123 = vadd.f32 %v4121, %v4122
        %4124 = vst [vmem:[%s516] sm:$0x1] %v4123
        %v4125 = vmul.f32 %v4023, %v4023
        %v4126 = vmul.f32 %v4024, %v4024
        %v4127 = vmul.f32 %v4025, %v4025
        %v4128 = vmul.f32 %v4026, %v4026
        %v4129 = vmul.f32 %v4027, %v4027
        %v4130 = vmul.f32 %v4028, %v4028
        %v4131 = vmul.f32 %v4029, %v4029
        %v4132 = vmul.f32 %v4030, %v4030
        %v4133 = vmul.f32 %v4031, %v4031
        %v4134 = vmul.f32 %v4032, %v4032
        %v4135 = vmul.f32 %v4033, %v4033
        %v4136 = vmul.f32 %v4034, %v4034
        %v4137 = vmul.f32 %v4035, %v4035
        %v4138 = vmul.f32 %v4036, %v4036
        %v4139 = vmul.f32 %v4037, %v4037
        %v4140 = vmul.f32 %v4038, %v4038
        %v4141 = vmul.f32 %v4039, %v4039
        %v4142 = vmul.f32 %v4040, %v4040
        %v4143 = vmul.f32 %v4041, %v4041
        %v4144 = vmul.f32 %v4042, %v4042
        %v4145 = vmul.f32 %v4043, %v4043
        %v4146 = vmul.f32 %v4044, %v4044
        %v4147 = vmul.f32 %v4045, %v4045
        %v4148 = vmul.f32 %v4046, %v4046
        %v4149 = vmul.f32 %v4047, %v4047
        %v4150 = vmul.f32 %v4048, %v4048
        %v4151 = vmul.f32 %v4049, %v4049
        %v4152 = vmul.f32 %v4050, %v4050
        %v4153 = vmul.f32 %v4051, %v4051
        %v4154 = vmul.f32 %v4052, %v4052
        %v4155 = vmul.f32 %v4053, %v4053
        %v4156 = vmul.f32 %v4054, %v4054
        %v4157 = vadd.f32 %v4125, %v4126
        %v4158 = vadd.f32 %v4157, %v4127
        %v4159 = vadd.f32 %v4158, %v4128
        %v4160 = vadd.f32 %v4159, %v4129
        %v4161 = vadd.f32 %v4160, %v4130
        %v4162 = vadd.f32 %v4161, %v4131
        %v4163 = vadd.f32 %v4162, %v4132
        %v4164 = vadd.f32 %v4163, %v4133
        %v4165 = vadd.f32 %v4164, %v4134
        %v4166 = vadd.f32 %v4165, %v4135
        %v4167 = vadd.f32 %v4166, %v4136
        %v4168 = vadd.f32 %v4167, %v4137
        %v4169 = vadd.f32 %v4168, %v4138
        %v4170 = vadd.f32 %v4169, %v4139
        %v4171 = vadd.f32 %v4170, %v4140
        %v4172 = vadd.f32 %v4171, %v4141
        %v4173 = vadd.f32 %v4172, %v4142
        %v4174 = vadd.f32 %v4173, %v4143
        %v4175 = vadd.f32 %v4174, %v4144
        %v4176 = vadd.f32 %v4175, %v4145
        %v4177 = vadd.f32 %v4176, %v4146
        %v4178 = vadd.f32 %v4177, %v4147
        %v4179 = vadd.f32 %v4178, %v4148
        %v4180 = vadd.f32 %v4179, %v4149
        %v4181 = vadd.f32 %v4180, %v4150
        %v4182 = vadd.f32 %v4181, %v4151
        %v4183 = vadd.f32 %v4182, %v4152
        %v4184 = vadd.f32 %v4183, %v4153
        %v4185 = vadd.f32 %v4184, %v4154
        %v4186 = vadd.f32 %v4185, %v4155
        %v4187 = vadd.f32 %v4186, %v4156
        %v4188 = vrot.slane %v4187, 4
        %v4189 = vadd.f32 %v4187, %v4188
        %v4190 = vrot.slane %v4189, 2
        %v4191 = vadd.f32 %v4189, %v4190
        %v4192 = vrot.slane %v4191, 1
        %v4193 = vadd.f32 %v4191, %v4192
        %4194 = vst [vmem:[%s516 + $0x1] sm:$0x1] %v4193
        %s4195 = sand.u32 %s240, 1
        %s4196 = scalar_lea.sflag [#allocation6], %s4195
        %s4197 = sand.u32 %s240, 1
        %s4198 = smul.addr %s4197, 256
        %s4199 = scalar_lea.vmem [#allocation16], %s4198
        %s4200 = sand.u32 %s268, 1
        %s4201 = scalar_lea.sflag [#allocation18], %s4200
        %s4202 = sand.u32 %s268, 1
        %s4203 = smul.addr %s4202, 2
        %s4204 = scalar_lea.vmem [#allocation17], %s4203
        // Predicated region
        $region93: #{residual_block_forward.4} parent=47 // pred_check
          %p4205 = pneg %p250
        $region94: #{residual_block_forward.4} parent=47 // pred_check_branch
          %4207 = sbr.rel (%p4205) target = $region96
        $region95: #{residual_block_forward.4} parent=47 // pred_region
          %s4208 = smul.u32 32, %s39
          %s4210 = ssub.s32 4096, 4096
          %4211 = vsyncadd %s4196, %s4210
          %s4212 = smul.addr %s38, 32
          %s4213 = sadd.s32 %s4208, %s4212
          %s4214 = smul.addr %s4213, 128
          %s4215 = scalar_lea.hbm %s7, %s4214
          %s4216 = sshll.u32 %s4199, 4
          %s4217 = int_to_ptr.vmem [resolvable:$true] %s4216
          %4222 = dma.vmem_to_hbm [thread:$0]  %s4217, 4096, %s4215, %s4196, 128, 128, 8
        $region96: #{residual_block_forward.4} parent=47 // pred_fallthru
          _
        // Predicated region
        $region97: #{residual_block_forward.4} parent=47 // pred_check
          %p4223 = pneg %p278
        $region98: #{residual_block_forward.4} parent=47 // pred_check_branch
          %4225 = sbr.rel (%p4223) target = $region100
        $region99: #{residual_block_forward.4} parent=47 // pred_region
          %s4226 = sadd.s32 %s38, %s39
          %s4228 = ssub.s32 32, 32
          %4229 = vsyncadd %s4201, %s4228
          %s4230 = smul.addr %s4226, 32
          %s4231 = scalar_lea.hbm %s8, %s4230
          %s4233 = sshll.u32 %s4204, 4
          %s4234 = int_to_ptr.vmem [resolvable:$true] %s4233
          %4236 = dma.vmem_to_hbm [thread:$0]  %s4234, 32, %s4231, %s4201
        $region100: #{residual_block_forward.4} parent=47 // pred_fallthru
          _
      $region48: #{residual_block_forward.4} parent=5 // pred_fallthru
        _
      %p4237 = scmp.le.s32.totalorder 2, %s29
      // Predicated region
      $region101: #{residual_block_forward.4} parent=5 // pred_check
        %p4238 = pneg %p4237
      $region102: #{residual_block_forward.4} parent=5 // pred_check_branch
        %4240 = sbr.rel (%p4238) target = $region104
      $region103: #{residual_block_forward.4} parent=5 // pred_region
        %s4241 = ssub.s32 %s29, 2
        // Predicated region
        $region105: #{residual_block_forward.4} parent=103 // pred_check
          %p4242 = pneg %p256
        $region106: #{residual_block_forward.4} parent=103 // pred_check_branch
          %4244 = sbr.rel (%p4242) target = $region108
        $region107: #{residual_block_forward.4} parent=103 // pred_region
          %s4245 = sand.u32 %s241, 1
          %s4246 = scalar_lea.sflag [#allocation6], %s4245
          %s4247 = sand.u32 %s241, 1
          %s4248 = smul.addr %s4247, 256
          %s4249 = scalar_lea.vmem [#allocation16], %s4248
          %4250 = dma.done %s4246, 4096
        $region108: #{residual_block_forward.4} parent=103 // pred_fallthru
          _
        // Predicated region
        $region109: #{residual_block_forward.4} parent=103 // pred_check
          %p4251 = pneg %p284
        $region110: #{residual_block_forward.4} parent=103 // pred_check_branch
          %4253 = sbr.rel (%p4251) target = $region112
        $region111: #{residual_block_forward.4} parent=103 // pred_region
          %s4254 = sand.u32 %s269, 1
          %s4255 = scalar_lea.sflag [#allocation18], %s4254
          %s4256 = sand.u32 %s269, 1
          %s4257 = smul.addr %s4256, 2
          %s4258 = scalar_lea.vmem [#allocation17], %s4257
          %4259 = dma.done %s4255, 32
        $region112: #{residual_block_forward.4} parent=103 // pred_fallthru
          _
      $region104: #{residual_block_forward.4} parent=5 // pred_fallthru
        _
    $region6: #{residual_block_forward.4} parent=1 // loop_footer
      %s33 = sadd.s32 1, %s29
    $region7: #{residual_block_forward.4} parent=1 // loop_footer_branch
      %28 = sbr.rel target = $region3
    $region8: #{residual_block_forward.4} parent=1 // loop_exit
      _
    %4260 = vsyncpa [#allocation5], 1
    %s4261 = scalar_lea.sflag [#allocation5], 1
    %4262 = vsyncpa %s4261, 1
    %4263 = vsyncpa [#allocation8], 1
    %s4264 = scalar_lea.sflag [#allocation8], 1
    %4265 = vsyncpa %s4264, 1
    %4266 = vsyncpa [#allocation11], 1
    %4267 = vsyncpa [#allocation14], 1
    %4268 = vsyncpa [#allocation6], 1
    %s4269 = scalar_lea.sflag [#allocation6], 1
    %4270 = vsyncpa %s4269, 1
    %4271 = vsyncpa [#allocation18], 1
    %s4272 = scalar_lea.sflag [#allocation18], 1
    %4273 = vsyncpa %s4272, 1

</llo_original>
